<compile_context>
chip_gen: v7x
topology: tpu7x:2x2x1
jax: 0.10.0
libtpu: 0.0.40
codegen_flags: <defaults>
</compile_context>

<pallas_src>
import functools
import math

import jax
import jax.numpy as jnp
from jax import lax
from jax.experimental import pallas as pl
from jax.experimental.pallas import tpu as pltpu

_EPS = 1e-5
_NEG_INF = -1e9

_PARALLEL1 = pltpu.CompilerParams(dimension_semantics=("parallel",))
_PARALLEL2 = pltpu.CompilerParams(dimension_semantics=("parallel", "parallel"))


def _row_tile(n, target=256):
    # Full block for small N (demo), 256-row tiles (multiple of 8/16) otherwise.
    return n if n <= target else target


def _layernorm(z, g, b, eps):
    mean = jnp.mean(z, axis=-1, keepdims=True)
    var = jnp.mean((z - mean) ** 2, axis=-1, keepdims=True)
    return (z - mean) * lax.rsqrt(var + eps) * g + b


# ----------------------------------------------------------------------------
# Pallas kernels
# ----------------------------------------------------------------------------
def _qkv_proj_kernel(x_ref, pos_ref, wq_ref, wk_ref, wv_ref, b_ref,
                     q_ref, k_ref, v_ref):
    # Self-attention projections: q = (x+pos)Wq, k = (x+pos)Wk, v = x Wv.
    x = x_ref[...]
    b = b_ref[...]                     # (3, D) f32
    xqk = (x + pos_ref[...]).astype(jnp.bfloat16)
    xv = x.astype(jnp.bfloat16)
    q = jnp.dot(xqk, wq_ref[...], preferred_element_type=jnp.float32) + b[0:1]
    k = jnp.dot(xqk, wk_ref[...], preferred_element_type=jnp.float32) + b[1:2]
    v = jnp.dot(xv, wv_ref[...], preferred_element_type=jnp.float32) + b[2:3]
    q_ref[...] = q.astype(q_ref.dtype)
    k_ref[...] = k.astype(k_ref.dtype)
    v_ref[...] = v.astype(v_ref.dtype)


def _q_proj_kernel(x_ref, pos_ref, w_ref, b_ref, o_ref):
    xq = (x_ref[...] + pos_ref[...]).astype(jnp.bfloat16)
    y = jnp.dot(xq, w_ref[...], preferred_element_type=jnp.float32) + b_ref[...]
    o_ref[...] = y.astype(o_ref.dtype)


def _kv_proj_kernel(x_ref, pos_ref, wk_ref, wv_ref, b_ref, k_ref, v_ref):
    # Cross-attention K/V: k = (mem+pos)Wk, v = mem Wv.
    x = x_ref[...]
    b = b_ref[...]                     # (2, D) f32
    xk = (x + pos_ref[...]).astype(jnp.bfloat16)
    xv = x.astype(jnp.bfloat16)
    k = jnp.dot(xk, wk_ref[...], preferred_element_type=jnp.float32) + b[0:1]
    v = jnp.dot(xv, wv_ref[...], preferred_element_type=jnp.float32) + b[1:2]
    k_ref[...] = k.astype(k_ref.dtype)
    v_ref[...] = v.astype(v_ref.dtype)


def _attn_kernel(q_ref, k_ref, v_ref, bias_ref, o_ref, *, nhead, scale):
    # One (batch, query-tile) step; all heads processed, output last dim = D.
    q = q_ref[0]          # (TQ, D) bf16
    k = k_ref[0]          # (S , D) bf16
    v = v_ref[0]          # (S , D) bf16
    bias = bias_ref[0]    # (1 , S) f32 additive key-padding bias
    d = q.shape[-1]
    dh = d // nhead
    outs = []
    for h in range(nhead):
        lo, hi = h * dh, (h + 1) * dh
        # Contract last dims directly: no explicit K transpose.
        s = lax.dot_general(q[:, lo:hi], k[:, lo:hi],
                            (((1,), (1,)), ((), ())),
                            preferred_element_type=jnp.float32)
        s = s * scale + bias
        m = jnp.max(s, axis=-1, keepdims=True)
        p = jnp.exp(s - m)
        denom = jnp.sum(p, axis=-1, keepdims=True)
        inv = pl.reciprocal(denom, approx=True)          # EUP, frees VALU
        outs.append(jnp.dot((p * inv).astype(jnp.bfloat16), v[:, lo:hi],
                            preferred_element_type=jnp.float32))
    o_ref[0] = jnp.concatenate(outs, axis=-1)            # lane-dense (TQ, D) store


def _proj_add_ln_kernel(x_ref, res_ref, w_ref, b_ref, g_ref, beta_ref, o_ref,
                        *, eps):
    # LayerNorm(res + x @ Wo + bo)  -- attention out-projection epilogue
    y = jnp.dot(x_ref[...].astype(jnp.bfloat16), w_ref[...],
                preferred_element_type=jnp.float32) + b_ref[...]
    z = res_ref[...] + y
    o_ref[...] = _layernorm(z, g_ref[...], beta_ref[...], eps)


def _ffn_ln_kernel(x_ref, w1_ref, b1_ref, w2_ref, b2_ref, g_ref, beta_ref,
                   o_ref, *, eps):
    # LayerNorm(x + W2 @ relu(W1 @ x))  -- whole FFN block fused
    x = x_ref[...]
    h = jnp.dot(x.astype(jnp.bfloat16), w1_ref[...],
                preferred_element_type=jnp.float32) + b1_ref[...]
    h = jnp.maximum(h, 0.0)
    y = jnp.dot(h.astype(jnp.bfloat16), w2_ref[...],
                preferred_element_type=jnp.float32) + b2_ref[...]
    z = x + y
    o_ref[...] = _layernorm(z, g_ref[...], beta_ref[...], eps)


def _ln_kernel(x_ref, g_ref, b_ref, o_ref, *, eps):
    o_ref[...] = _layernorm(x_ref[...], g_ref[...], b_ref[...], eps)


# ----------------------------------------------------------------------------
# pallas_call wrappers (row-tiled, pipelined, parallel grids)
# ----------------------------------------------------------------------------
def qkv_proj(x, pos, wq, wk, wv, b3):
    n, d = x.shape
    tm = _row_tile(n)
    row_in = pl.BlockSpec((tm, d), lambda i: (i, 0))
    w_spec = pl.BlockSpec((d, d), lambda i: (0, 0))
    return pl.pallas_call(
        _qkv_proj_kernel,
        out_shape=[jax.ShapeDtypeStruct((n, d), jnp.bfloat16)] * 3,
        grid=(pl.cdiv(n, tm),),
        in_specs=[row_in, row_in, w_spec, w_spec, w_spec,
                  pl.BlockSpec((3, d), lambda i: (0, 0))],
        out_specs=[row_in, row_in, row_in],
        compiler_params=_PARALLEL1,
    )(x, pos, wq, wk, wv, b3)


def q_proj(x, pos, w, b):
    n, d = x.shape
    tm = _row_tile(n)
    row = pl.BlockSpec((tm, d), lambda i: (i, 0))
    return pl.pallas_call(
        _q_proj_kernel,
        out_shape=jax.ShapeDtypeStruct((n, d), jnp.bfloat16),
        grid=(pl.cdiv(n, tm),),
        in_specs=[row, row,
                  pl.BlockSpec((d, d), lambda i: (0, 0)),
                  pl.BlockSpec((1, d), lambda i: (0, 0))],
        out_specs=row,
        compiler_params=_PARALLEL1,
    )(x, pos, w, b)


def kv_proj(x, pos, wk, wv, b2):
    n, d = x.shape
    tm = _row_tile(n)
    row = pl.BlockSpec((tm, d), lambda i: (i, 0))
    w_spec = pl.BlockSpec((d, d), lambda i: (0, 0))
    return pl.pallas_call(
        _kv_proj_kernel,
        out_shape=[jax.ShapeDtypeStruct((n, d), jnp.bfloat16)] * 2,
        grid=(pl.cdiv(n, tm),),
        in_specs=[row, row, w_spec, w_spec,
                  pl.BlockSpec((2, d), lambda i: (0, 0))],
        out_specs=[row, row],
        compiler_params=_PARALLEL1,
    )(x, pos, wk, wv, b2)


def attention(q, k, v, key_bias, nhead):
    # q: (B, Lq, D) bf16; k, v: (B, S, D) bf16; key_bias: (B, 1, S) f32
    b, lq, d = q.shape
    s = k.shape[1]
    tq = _row_tile(lq)
    scale = 1.0 / math.sqrt(d // nhead)
    return pl.pallas_call(
        functools.partial(_attn_kernel, nhead=nhead, scale=scale),
        out_shape=jax.ShapeDtypeStruct((b, lq, d), jnp.float32),
        grid=(b, pl.cdiv(lq, tq)),
        in_specs=[
            pl.BlockSpec((1, tq, d), lambda i, j: (i, j, 0)),
            pl.BlockSpec((1, s, d), lambda i, j: (i, 0, 0)),
            pl.BlockSpec((1, s, d), lambda i, j: (i, 0, 0)),
            pl.BlockSpec((1, 1, s), lambda i, j: (i, 0, 0)),
        ],
        out_specs=pl.BlockSpec((1, tq, d), lambda i, j: (i, j, 0)),
        compiler_params=_PARALLEL2,
    )(q, k, v, key_bias)


def proj_add_ln(x, res, w, b, g, beta, eps=_EPS):
    n, d = x.shape
    tm = _row_tile(n)
    row = pl.BlockSpec((tm, d), lambda i: (i, 0))
    vec = pl.BlockSpec((1, d), lambda i: (0, 0))
    return pl.pallas_call(
        functools.partial(_proj_add_ln_kernel, eps=eps),
        out_shape=jax.ShapeDtypeStruct((n, d), jnp.float32),
        grid=(pl.cdiv(n, tm),),
        in_specs=[row, row, pl.BlockSpec((d, d), lambda i: (0, 0)),
                  vec, vec, vec],
        out_specs=row,
        compiler_params=_PARALLEL1,
    )(x, res, w, b, g, beta)


def ffn_ln(x, w1, b1, w2, b2, g, beta, eps=_EPS):
    n, d = x.shape
    f = w1.shape[1]
    tm = _row_tile(n)
    row = pl.BlockSpec((tm, d), lambda i: (i, 0))
    vec_d = pl.BlockSpec((1, d), lambda i: (0, 0))
    return pl.pallas_call(
        functools.partial(_ffn_ln_kernel, eps=eps),
        out_shape=jax.ShapeDtypeStruct((n, d), jnp.float32),
        grid=(pl.cdiv(n, tm),),
        in_specs=[row,
                  pl.BlockSpec((d, f), lambda i: (0, 0)),
                  pl.BlockSpec((1, f), lambda i: (0, 0)),
                  pl.BlockSpec((f, d), lambda i: (0, 0)),
                  vec_d, vec_d, vec_d],
        out_specs=row,
        compiler_params=_PARALLEL1,
    )(x, w1, b1, w2, b2, g, beta)


def layernorm(x, g, b, eps=_EPS):
    n, d = x.shape
    tm = _row_tile(n)
    row = pl.BlockSpec((tm, d), lambda i: (i, 0))
    vec = pl.BlockSpec((1, d), lambda i: (0, 0))
    return pl.pallas_call(
        functools.partial(_ln_kernel, eps=eps),
        out_shape=jax.ShapeDtypeStruct((n, d), jnp.float32),
        grid=(pl.cdiv(n, tm),),
        in_specs=[row, vec, vec],
        out_specs=row,
        compiler_params=_PARALLEL1,
    )(x, g, b)


# ----------------------------------------------------------------------------
# Transformer layers (post-norm, normalize_before=False, activation='relu')
# ----------------------------------------------------------------------------
def encoder_layer(src, pos, key_bias, p, nhead):
    b, l, d = src.shape
    a = p["attn"]
    src2d = src.reshape(b * l, d)
    pos2d = pos.reshape(b * l, d)
    q, k, v = qkv_proj(src2d, pos2d, a["wq"], a["wk"], a["wv"], a["b_qkv"])
    attn = attention(q.reshape(b, l, d), k.reshape(b, l, d),
                     v.reshape(b, l, d), key_bias, nhead)
    src2d = proj_add_ln(attn.reshape(b * l, d), src2d,
                        a["wo"], a["bo"], p["ln1_g"], p["ln1_b"])
    src2d = ffn_ln(src2d, p["w1"], p["b1"], p["w2"], p["b2"],
                   p["ln2_g"], p["ln2_b"])
    return src2d.reshape(b, l, d)


def decoder_layer(tgt, memory, pos, query_pos, mem_key_bias, zero_bias, p, nhead):
    b, nq, d = tgt.shape
    l = memory.shape[1]
    tgt2d = tgt.reshape(b * nq, d)
    qpos2d = query_pos.reshape(b * nq, d)
    mem2d = memory.reshape(b * l, d)
    pos2d = pos.reshape(b * l, d)

    # --- self-attention ---
    sa = p["self_attn"]
    q, k, v = qkv_proj(tgt2d, qpos2d, sa["wq"], sa["wk"], sa["wv"], sa["b_qkv"])
    attn = attention(q.reshape(b, nq, d), k.reshape(b, nq, d),
                     v.reshape(b, nq, d), zero_bias, nhead)
    tgt2d = proj_add_ln(attn.reshape(b * nq, d), tgt2d,
                        sa["wo"], sa["bo"], p["ln1_g"], p["ln1_b"])

    # --- cross-attention ---
    ca = p["cross_attn"]
    qc = q_proj(tgt2d, qpos2d, ca["wq"], ca["bq"])
    kc, vc = kv_proj(mem2d, pos2d, ca["wk"], ca["wv"], ca["b_kv"])
    attn = attention(qc.reshape(b, nq, d), kc.reshape(b, l, d),
                     vc.reshape(b, l, d), mem_key_bias, nhead)
    tgt2d = proj_add_ln(attn.reshape(b * nq, d), tgt2d,
                        ca["wo"], ca["bo"], p["ln2_g"], p["ln2_b"])

    # --- feed-forward ---
    tgt2d = ffn_ln(tgt2d, p["w1"], p["b1"], p["w2"], p["b2"],
                   p["ln3_g"], p["ln3_b"])
    return tgt2d.reshape(b, nq, d)


def transformer_forward(params, src, mask, query_embed, pos_embed, nhead):
    bs, c, h, w = src.shape
    hw = h * w
    # batch-first internal layout: (B, L, D)
    src_seq = src.reshape(bs, c, hw).transpose(0, 2, 1)
    pos_seq = pos_embed.reshape(bs, c, hw).transpose(0, 2, 1)
    nq = query_embed.shape[0]
    qpos = jnp.broadcast_to(query_embed[None, :, :], (bs, nq, c))
    tgt = jnp.zeros((bs, nq, c), jnp.float32)

    mask_flat = mask.reshape(bs, hw)
    key_bias = jnp.where(mask_flat, jnp.float32(_NEG_INF),
                         jnp.float32(0.0))[:, None, :]      # (B, 1, HW)
    zero_bias = jnp.zeros((bs, 1, nq), jnp.float32)

    memory = src_seq
    for lp in params["enc_layers"]:
        memory = encoder_layer(memory, pos_seq, key_bias, lp, nhead)

    out = tgt
    for lp in params["dec_layers"]:
        out = decoder_layer(out, memory, pos_seq, qpos, key_bias, zero_bias,
                            lp, nhead)

    out2d = layernorm(out.reshape(bs * nq, c),
                      params["dec_norm_g"], params["dec_norm_b"])
    hs = out2d.reshape(bs, nq, c)[None]                      # (1, B, Nq, D)
    mem_out = memory.transpose(0, 2, 1).reshape(bs, c, h, w)
    return hs, mem_out


# ----------------------------------------------------------------------------
# Parameter init: xavier-uniform matrices (like the module), then pre-transpose
# to (din, dout) and cast matmul weights to bf16 once at setup.
# ----------------------------------------------------------------------------
def _xavier(key, shape):
    fan_out, fan_in = shape
    limit = math.sqrt(6.0 / (fan_in + fan_out))
    return jax.random.uniform(key, shape, jnp.float32, -limit, limit)


def _prep_mha(key, d):
    k1, k2 = jax.random.split(key)
    in_w = _xavier(k1, (3 * d, d))
    in_b = jnp.zeros((3 * d,), jnp.float32)
    out_w = _xavier(k2, (d, d))
    out_b = jnp.zeros((d,), jnp.float32)
    return dict(
        wq=jnp.asarray(in_w[:d].T, jnp.bfloat16),
        wk=jnp.asarray(in_w[d:2 * d].T, jnp.bfloat16),
        wv=jnp.asarray(in_w[2 * d:].T, jnp.bfloat16),
        b_qkv=in_b.reshape(3, d),
        bq=in_b[:d].reshape(1, d),
        b_kv=in_b[d:].reshape(2, d),
        wo=jnp.asarray(out_w.T, jnp.bfloat16),
        bo=out_b.reshape(1, d),
    )


def _prep_ffn_ln(key, d, f, n_ln):
    k1, k2 = jax.random.split(key)
    p = dict(
        w1=jnp.asarray(_xavier(k1, (f, d)).T, jnp.bfloat16),
        b1=jnp.zeros((1, f), jnp.float32),
        w2=jnp.asarray(_xavier(k2, (d, f)).T, jnp.bfloat16),
        b2=jnp.zeros((1, d), jnp.float32),
    )
    for i in range(1, n_ln + 1):
        p[f"ln{i}_g"] = jnp.ones((1, d), jnp.float32)
        p[f"ln{i}_b"] = jnp.zeros((1, d), jnp.float32)
    return p


def init_transformer(key, d, nhead, f, n_enc, n_dec):
    keys = jax.random.split(key, n_enc + n_dec)
    enc_layers = []
    for i in range(n_enc):
        ka, kb = jax.random.split(keys[i])
        lp = dict(attn=_prep_mha(ka, d))
        lp.update(_prep_ffn_ln(kb, d, f, n_ln=2))
        enc_layers.append(lp)
    dec_layers = []
    for i in range(n_dec):
        ka, kb, kc = jax.random.split(keys[n_enc + i], 3)
        lp = dict(self_attn=_prep_mha(ka, d), cross_attn=_prep_mha(kb, d))
        lp.update(_prep_ffn_ln(kc, d, f, n_ln=3))
        dec_layers.append(lp)
    return dict(enc_layers=enc_layers, dec_layers=dec_layers,
                dec_norm_g=jnp.ones((1, d), jnp.float32),
                dec_norm_b=jnp.zeros((1, d), jnp.float32))


# ----------------------------------------------------------------------------
if __name__ == "__main__":
    D_MODEL, NHEAD, DIM_FF = 128, 4, 256
    N_ENC, N_DEC = 2, 2
    BS, H, W = 2, 8, 8
    NUM_QUERIES = 16

    root = jax.random.PRNGKey(0)
    kparam, ksrc, kpos, kq = jax.random.split(root, 4)

    params = init_transformer(kparam, D_MODEL, NHEAD, DIM_FF, N_ENC, N_DEC)

    src = jax.random.normal(ksrc, (BS, D_MODEL, H, W), jnp.float32)
    pos_embed = jax.random.normal(kpos, (BS, D_MODEL, H, W), jnp.float32)
    query_embed = jax.random.normal(kq, (NUM_QUERIES, D_MODEL), jnp.float32)
    # key-padding mask: pad the last spatial column of each image
    mask = jnp.zeros((BS, H, W), jnp.bool_).at[:, :, -1].set(True)

    fwd = jax.jit(functools.partial(transformer_forward, nhead=NHEAD))
    hs, mem = fwd(params, src, mask, query_embed, pos_embed)
    jax.block_until_ready((hs, mem))

    assert hs.shape == (1, BS, NUM_QUERIES, D_MODEL), hs.shape
    assert mem.shape == (BS, D_MODEL, H, W), mem.shape
    assert bool(jnp.all(jnp.isfinite(hs))) and bool(jnp.all(jnp.isfinite(mem)))
    print("KERNEL_OK")
</pallas_src>

<mosaic_0001>
module attributes {stable_mosaic.version = 11 : i64} {
  func.func @_attn_kernel(%arg0: i32, %arg1: i32, %arg2: memref<1x64x128xbf16, #tpu.memory_space<vmem>>, %arg3: memref<1x64x128xbf16, #tpu.memory_space<vmem>>, %arg4: memref<1x64x128xbf16, #tpu.memory_space<vmem>>, %arg5: memref<1x1x64xf32, #tpu.memory_space<vmem>>, %arg6: memref<1x64x128xf32, #tpu.memory_space<vmem>>) attributes {dimension_semantics = [#tpu.dimension_semantics<parallel>, #tpu.dimension_semantics<parallel>], iteration_bounds = array<i64: 2, 1>, scalar_prefetch = 0 : i64, scratch_operands = 0 : i64, tpu.core_type = #tpu.core_type<tc>, window_params = [{transform_indices = @transform_0, window_bounds = array<i64: 1, 64, 128>}, {transform_indices = @transform_1, window_bounds = array<i64: 1, 64, 128>}, {transform_indices = @transform_2, window_bounds = array<i64: 1, 64, 128>}, {transform_indices = @transform_3, window_bounds = array<i64: 1, 1, 64>}, {transform_indices = @transform_4, window_bounds = array<i64: 1, 64, 128>}]} {
    %c0 = arith.constant 0 : index
    %c0_0 = arith.constant 0 : index
    %c0_1 = arith.constant 0 : index
    %0 = vector.load %arg2[%c0, %c0_0, %c0_1] : memref<1x64x128xbf16, #tpu.memory_space<vmem>>, vector<1x64x128xbf16>
    %1 = vector.shape_cast %0 : vector<1x64x128xbf16> to vector<64x128xbf16>
    %c0_2 = arith.constant 0 : index
    %c0_3 = arith.constant 0 : index
    %c0_4 = arith.constant 0 : index
    %2 = vector.load %arg3[%c0_2, %c0_3, %c0_4] : memref<1x64x128xbf16, #tpu.memory_space<vmem>>, vector<1x64x128xbf16>
    %3 = vector.shape_cast %2 : vector<1x64x128xbf16> to vector<64x128xbf16>
    %c0_5 = arith.constant 0 : index
    %c0_6 = arith.constant 0 : index
    %c0_7 = arith.constant 0 : index
    %4 = vector.load %arg4[%c0_5, %c0_6, %c0_7] : memref<1x64x128xbf16, #tpu.memory_space<vmem>>, vector<1x64x128xbf16>
    %5 = vector.shape_cast %4 : vector<1x64x128xbf16> to vector<64x128xbf16>
    %c0_8 = arith.constant 0 : index
    %c0_9 = arith.constant 0 : index
    %c0_10 = arith.constant 0 : index
    %6 = vector.load %arg5[%c0_8, %c0_9, %c0_10] : memref<1x1x64xf32, #tpu.memory_space<vmem>>, vector<1x1x64xf32>
    %7 = vector.shape_cast %6 : vector<1x1x64xf32> to vector<1x64xf32>
    %8 = vector.extract_strided_slice %1 {offsets = [0, 0], sizes = [64, 32], strides = [1, 1]} : vector<64x128xbf16> to vector<64x32xbf16>
    %9 = vector.extract_strided_slice %3 {offsets = [0, 0], sizes = [64, 32], strides = [1, 1]} : vector<64x128xbf16> to vector<64x32xbf16>
    %cst = arith.constant dense<0.000000e+00> : vector<64x64xf32>
    %10 = tpu.matmul %8, %9, %cst {dimension_numbers = #tpu.dot_dimension_numbers<[1], [1], [0], [0], [0, 0, 1, 0], [], []>} : vector<64x32xbf16>, vector<64x32xbf16>, vector<64x64xf32> -> vector<64x64xf32>
    %cst_11 = arith.constant 0.176776692 : f32
    %11 = vector.broadcast %cst_11 : f32 to vector<64x64xf32>
    %12 = arith.mulf %10, %11 : vector<64x64xf32>
    %13 = vector.broadcast %7 : vector<1x64xf32> to vector<64x64xf32>
    %14 = arith.addf %12, %13 : vector<64x64xf32>
    %cst_12 = arith.constant dense<0xFF800000> : vector<64xf32>
    %15 = vector.multi_reduction <maximumf>, %14, %cst_12 [1] : vector<64x64xf32> to vector<64xf32>
    %16 = vector.shape_cast %15 : vector<64xf32> to vector<64x1xf32>
    %17 = vector.broadcast %16 : vector<64x1xf32> to vector<64x64xf32>
    %18 = arith.subf %14, %17 : vector<64x64xf32>
    %19 = math.exp %18 : vector<64x64xf32>
    %cst_13 = arith.constant dense<0.000000e+00> : vector<64xf32>
    %20 = vector.multi_reduction <add>, %19, %cst_13 [1] : vector<64x64xf32> to vector<64xf32>
    %21 = vector.shape_cast %20 : vector<64xf32> to vector<64x1xf32>
    %22 = tpu.reciprocal %21 {approx = true} : vector<64x1xf32> -> vector<64x1xf32>
    %23 = vector.broadcast %22 : vector<64x1xf32> to vector<64x64xf32>
    %24 = arith.mulf %19, %23 : vector<64x64xf32>
    %25 = arith.truncf %24 : vector<64x64xf32> to vector<64x64xbf16>
    %26 = vector.extract_strided_slice %5 {offsets = [0, 0], sizes = [64, 32], strides = [1, 1]} : vector<64x128xbf16> to vector<64x32xbf16>
    %cst_14 = arith.constant dense<0.000000e+00> : vector<64x32xf32>
    %27 = tpu.matmul %25, %26, %cst_14 {dimension_numbers = #tpu.dot_dimension_numbers<[1], [0], [0], [1], [0, 0, 1, 1], [], []>} : vector<64x64xbf16>, vector<64x32xbf16>, vector<64x32xf32> -> vector<64x32xf32>
    %28 = vector.extract_strided_slice %1 {offsets = [0, 32], sizes = [64, 32], strides = [1, 1]} : vector<64x128xbf16> to vector<64x32xbf16>
    %29 = vector.extract_strided_slice %3 {offsets = [0, 32], sizes = [64, 32], strides = [1, 1]} : vector<64x128xbf16> to vector<64x32xbf16>
    %cst_15 = arith.constant dense<0.000000e+00> : vector<64x64xf32>
    %30 = tpu.matmul %28, %29, %cst_15 {dimension_numbers = #tpu.dot_dimension_numbers<[1], [1], [0], [0], [0, 0, 1, 0], [], []>} : vector<64x32xbf16>, vector<64x32xbf16>, vector<64x64xf32> -> vector<64x64xf32>
    %cst_16 = arith.constant 0.176776692 : f32
    %31 = vector.broadcast %cst_16 : f32 to vector<64x64xf32>
    %32 = arith.mulf %30, %31 : vector<64x64xf32>
    %33 = vector.broadcast %7 : vector<1x64xf32> to vector<64x64xf32>
    %34 = arith.addf %32, %33 : vector<64x64xf32>
    %cst_17 = arith.constant dense<0xFF800000> : vector<64xf32>
    %35 = vector.multi_reduction <maximumf>, %34, %cst_17 [1] : vector<64x64xf32> to vector<64xf32>
    %36 = vector.shape_cast %35 : vector<64xf32> to vector<64x1xf32>
    %37 = vector.broadcast %36 : vector<64x1xf32> to vector<64x64xf32>
    %38 = arith.subf %34, %37 : vector<64x64xf32>
    %39 = math.exp %38 : vector<64x64xf32>
    %cst_18 = arith.constant dense<0.000000e+00> : vector<64xf32>
    %40 = vector.multi_reduction <add>, %39, %cst_18 [1] : vector<64x64xf32> to vector<64xf32>
    %41 = vector.shape_cast %40 : vector<64xf32> to vector<64x1xf32>
    %42 = tpu.reciprocal %41 {approx = true} : vector<64x1xf32> -> vector<64x1xf32>
    %43 = vector.broadcast %42 : vector<64x1xf32> to vector<64x64xf32>
    %44 = arith.mulf %39, %43 : vector<64x64xf32>
    %45 = arith.truncf %44 : vector<64x64xf32> to vector<64x64xbf16>
    %46 = vector.extract_strided_slice %5 {offsets = [0, 32], sizes = [64, 32], strides = [1, 1]} : vector<64x128xbf16> to vector<64x32xbf16>
    %cst_19 = arith.constant dense<0.000000e+00> : vector<64x32xf32>
    %47 = tpu.matmul %45, %46, %cst_19 {dimension_numbers = #tpu.dot_dimension_numbers<[1], [0], [0], [1], [0, 0, 1, 1], [], []>} : vector<64x64xbf16>, vector<64x32xbf16>, vector<64x32xf32> -> vector<64x32xf32>
    %48 = vector.extract_strided_slice %1 {offsets = [0, 64], sizes = [64, 32], strides = [1, 1]} : vector<64x128xbf16> to vector<64x32xbf16>
    %49 = vector.extract_strided_slice %3 {offsets = [0, 64], sizes = [64, 32], strides = [1, 1]} : vector<64x128xbf16> to vector<64x32xbf16>
    %cst_20 = arith.constant dense<0.000000e+00> : vector<64x64xf32>
    %50 = tpu.matmul %48, %49, %cst_20 {dimension_numbers = #tpu.dot_dimension_numbers<[1], [1], [0], [0], [0, 0, 1, 0], [], []>} : vector<64x32xbf16>, vector<64x32xbf16>, vector<64x64xf32> -> vector<64x64xf32>
    %cst_21 = arith.constant 0.176776692 : f32
    %51 = vector.broadcast %cst_21 : f32 to vector<64x64xf32>
    %52 = arith.mulf %50, %51 : vector<64x64xf32>
    %53 = vector.broadcast %7 : vector<1x64xf32> to vector<64x64xf32>
    %54 = arith.addf %52, %53 : vector<64x64xf32>
    %cst_22 = arith.constant dense<0xFF800000> : vector<64xf32>
    %55 = vector.multi_reduction <maximumf>, %54, %cst_22 [1] : vector<64x64xf32> to vector<64xf32>
    %56 = vector.shape_cast %55 : vector<64xf32> to vector<64x1xf32>
    %57 = vector.broadcast %56 : vector<64x1xf32> to vector<64x64xf32>
    %58 = arith.subf %54, %57 : vector<64x64xf32>
    %59 = math.exp %58 : vector<64x64xf32>
    %cst_23 = arith.constant dense<0.000000e+00> : vector<64xf32>
    %60 = vector.multi_reduction <add>, %59, %cst_23 [1] : vector<64x64xf32> to vector<64xf32>
    %61 = vector.shape_cast %60 : vector<64xf32> to vector<64x1xf32>
    %62 = tpu.reciprocal %61 {approx = true} : vector<64x1xf32> -> vector<64x1xf32>
    %63 = vector.broadcast %62 : vector<64x1xf32> to vector<64x64xf32>
    %64 = arith.mulf %59, %63 : vector<64x64xf32>
    %65 = arith.truncf %64 : vector<64x64xf32> to vector<64x64xbf16>
    %66 = vector.extract_strided_slice %5 {offsets = [0, 64], sizes = [64, 32], strides = [1, 1]} : vector<64x128xbf16> to vector<64x32xbf16>
    %cst_24 = arith.constant dense<0.000000e+00> : vector<64x32xf32>
    %67 = tpu.matmul %65, %66, %cst_24 {dimension_numbers = #tpu.dot_dimension_numbers<[1], [0], [0], [1], [0, 0, 1, 1], [], []>} : vector<64x64xbf16>, vector<64x32xbf16>, vector<64x32xf32> -> vector<64x32xf32>
    %68 = vector.extract_strided_slice %1 {offsets = [0, 96], sizes = [64, 32], strides = [1, 1]} : vector<64x128xbf16> to vector<64x32xbf16>
    %69 = vector.extract_strided_slice %3 {offsets = [0, 96], sizes = [64, 32], strides = [1, 1]} : vector<64x128xbf16> to vector<64x32xbf16>
    %cst_25 = arith.constant dense<0.000000e+00> : vector<64x64xf32>
    %70 = tpu.matmul %68, %69, %cst_25 {dimension_numbers = #tpu.dot_dimension_numbers<[1], [1], [0], [0], [0, 0, 1, 0], [], []>} : vector<64x32xbf16>, vector<64x32xbf16>, vector<64x64xf32> -> vector<64x64xf32>
    %cst_26 = arith.constant 0.176776692 : f32
    %71 = vector.broadcast %cst_26 : f32 to vector<64x64xf32>
    %72 = arith.mulf %70, %71 : vector<64x64xf32>
    %73 = vector.broadcast %7 : vector<1x64xf32> to vector<64x64xf32>
    %74 = arith.addf %72, %73 : vector<64x64xf32>
    %cst_27 = arith.constant dense<0xFF800000> : vector<64xf32>
    %75 = vector.multi_reduction <maximumf>, %74, %cst_27 [1] : vector<64x64xf32> to vector<64xf32>
    %76 = vector.shape_cast %75 : vector<64xf32> to vector<64x1xf32>
    %77 = vector.broadcast %76 : vector<64x1xf32> to vector<64x64xf32>
    %78 = arith.subf %74, %77 : vector<64x64xf32>
    %79 = math.exp %78 : vector<64x64xf32>
    %cst_28 = arith.constant dense<0.000000e+00> : vector<64xf32>
    %80 = vector.multi_reduction <add>, %79, %cst_28 [1] : vector<64x64xf32> to vector<64xf32>
    %81 = vector.shape_cast %80 : vector<64xf32> to vector<64x1xf32>
    %82 = tpu.reciprocal %81 {approx = true} : vector<64x1xf32> -> vector<64x1xf32>
    %83 = vector.broadcast %82 : vector<64x1xf32> to vector<64x64xf32>
    %84 = arith.mulf %79, %83 : vector<64x64xf32>
    %85 = arith.truncf %84 : vector<64x64xf32> to vector<64x64xbf16>
    %86 = vector.extract_strided_slice %5 {offsets = [0, 96], sizes = [64, 32], strides = [1, 1]} : vector<64x128xbf16> to vector<64x32xbf16>
    %cst_29 = arith.constant dense<0.000000e+00> : vector<64x32xf32>
    %87 = tpu.matmul %85, %86, %cst_29 {dimension_numbers = #tpu.dot_dimension_numbers<[1], [0], [0], [1], [0, 0, 1, 1], [], []>} : vector<64x64xbf16>, vector<64x32xbf16>, vector<64x32xf32> -> vector<64x32xf32>
    %88 = tpu.concatenate %27, %47, %67, %87 in 1 : vector<64x32xf32>, vector<64x32xf32>, vector<64x32xf32>, vector<64x32xf32> -> vector<64x128xf32>
    %c0_30 = arith.constant 0 : index
    %c0_31 = arith.constant 0 : index
    %c0_32 = arith.constant 0 : index
    %89 = vector.load %arg6[%c0_30, %c0_31, %c0_32] : memref<1x64x128xf32, #tpu.memory_space<vmem>>, vector<1x64x128xf32>
    %90 = vector.shape_cast %89 : vector<1x64x128xf32> to vector<64x128xf32>
    %91 = vector.shape_cast %88 : vector<64x128xf32> to vector<1x64x128xf32>
    tpu.vector_store %arg6[%c0_30, %c0_31, %c0_32], %91 {strides = array<i32>} : memref<1x64x128xf32, #tpu.memory_space<vmem>>, vector<1x64x128xf32>,
    return
  }
  func.func @transform_0(%arg0: i32, %arg1: i32) -> (i32, i32, i32) {
    %c0_i32 = arith.constant 0 : i32
    %c0_i32_0 = arith.constant 0 : i32
    return %arg0, %arg1, %c0_i32 : i32, i32, i32
  }
  func.func @transform_1(%arg0: i32, %arg1: i32) -> (i32, i32, i32) {
    %c0_i32 = arith.constant 0 : i32
    %c0_i32_0 = arith.constant 0 : i32
    %c0_i32_1 = arith.constant 0 : i32
    return %arg0, %c0_i32, %c0_i32_0 : i32, i32, i32
  }
  func.func @transform_2(%arg0: i32, %arg1: i32) -> (i32, i32, i32) {
    %c0_i32 = arith.constant 0 : i32
    %c0_i32_0 = arith.constant 0 : i32
    %c0_i32_1 = arith.constant 0 : i32
    return %arg0, %c0_i32, %c0_i32_0 : i32, i32, i32
  }
  func.func @transform_3(%arg0: i32, %arg1: i32) -> (i32, i32, i32) {
    %c0_i32 = arith.constant 0 : i32
    %c0_i32_0 = arith.constant 0 : i32
    %c0_i32_1 = arith.constant 0 : i32
    return %arg0, %c0_i32, %c0_i32_0 : i32, i32, i32
  }
  func.func @transform_4(%arg0: i32, %arg1: i32) -> (i32, i32, i32) {
    %c0_i32 = arith.constant 0 : i32
    %c0_i32_0 = arith.constant 0 : i32
    return %arg0, %arg1, %c0_i32 : i32, i32, i32
  }
}

module attributes {stable_mosaic.version = 11 : i64} {
  func.func @_qkv_proj_kernel(%arg0: i32, %arg1: memref<128x128xf32, #tpu.memory_space<vmem>>, %arg2: memref<128x128xf32, #tpu.memory_space<vmem>>, %arg3: memref<128x128xbf16, #tpu.memory_space<vmem>>, %arg4: memref<128x128xbf16, #tpu.memory_space<vmem>>, %arg5: memref<128x128xbf16, #tpu.memory_space<vmem>>, %arg6: memref<3x128xf32, #tpu.memory_space<vmem>>, %arg7: memref<128x128xbf16, #tpu.memory_space<vmem>>, %arg8: memref<128x128xbf16, #tpu.memory_space<vmem>>, %arg9: memref<128x128xbf16, #tpu.memory_space<vmem>>) attributes {dimension_semantics = [#tpu.dimension_semantics<parallel>], iteration_bounds = array<i64: 1>, scalar_prefetch = 0 : i64, scratch_operands = 0 : i64, tpu.core_type = #tpu.core_type<tc>, window_params = [{transform_indices = @transform_0, window_bounds = array<i64: 128, 128>}, {transform_indices = @transform_1, window_bounds = array<i64: 128, 128>}, {pipeline_mode = #tpu.pipeline_mode<synchronous>, transform_indices = @transform_2, window_bounds = array<i64: 128, 128>}, {pipeline_mode = #tpu.pipeline_mode<synchronous>, transform_indices = @transform_3, window_bounds = array<i64: 128, 128>}, {pipeline_mode = #tpu.pipeline_mode<synchronous>, transform_indices = @transform_4, window_bounds = array<i64: 128, 128>}, {pipeline_mode = #tpu.pipeline_mode<synchronous>, transform_indices = @transform_5, window_bounds = array<i64: 3, 128>}, {transform_indices = @transform_6, window_bounds = array<i64: 128, 128>}, {transform_indices = @transform_7, window_bounds = array<i64: 128, 128>}, {transform_indices = @transform_8, window_bounds = array<i64: 128, 128>}]} {
    %c0 = arith.constant 0 : index
    %c0_0 = arith.constant 0 : index
    %0 = vector.load %arg1[%c0, %c0_0] : memref<128x128xf32, #tpu.memory_space<vmem>>, vector<128x128xf32>
    %c0_1 = arith.constant 0 : index
    %c0_2 = arith.constant 0 : index
    %1 = vector.load %arg6[%c0_1, %c0_2] : memref<3x128xf32, #tpu.memory_space<vmem>>, vector<3x128xf32>
    %c0_3 = arith.constant 0 : index
    %c0_4 = arith.constant 0 : index
    %2 = vector.load %arg2[%c0_3, %c0_4] : memref<128x128xf32, #tpu.memory_space<vmem>>, vector<128x128xf32>
    %3 = arith.addf %0, %2 : vector<128x128xf32>
    %4 = arith.truncf %3 : vector<128x128xf32> to vector<128x128xbf16>
    %5 = arith.truncf %0 : vector<128x128xf32> to vector<128x128xbf16>
    %c0_5 = arith.constant 0 : index
    %c0_6 = arith.constant 0 : index
    %6 = vector.load %arg3[%c0_5, %c0_6] : memref<128x128xbf16, #tpu.memory_space<vmem>>, vector<128x128xbf16>
    %cst = arith.constant dense<0.000000e+00> : vector<128x128xf32>
    %7 = tpu.matmul %4, %6, %cst {dimension_numbers = #tpu.dot_dimension_numbers<[1], [0], [0], [1], [0, 0, 1, 1], [], []>} : vector<128x128xbf16>, vector<128x128xbf16>, vector<128x128xf32> -> vector<128x128xf32>
    %8 = vector.extract_strided_slice %1 {offsets = [0, 0], sizes = [1, 128], strides = [1, 1]} : vector<3x128xf32> to vector<1x128xf32>
    %9 = vector.broadcast %8 : vector<1x128xf32> to vector<128x128xf32>
    %10 = arith.addf %7, %9 : vector<128x128xf32>
    %c0_7 = arith.constant 0 : index
    %c0_8 = arith.constant 0 : index
    %11 = vector.load %arg4[%c0_7, %c0_8] : memref<128x128xbf16, #tpu.memory_space<vmem>>, vector<128x128xbf16>
    %cst_9 = arith.constant dense<0.000000e+00> : vector<128x128xf32>
    %12 = tpu.matmul %4, %11, %cst_9 {dimension_numbers = #tpu.dot_dimension_numbers<[1], [0], [0], [1], [0, 0, 1, 1], [], []>} : vector<128x128xbf16>, vector<128x128xbf16>, vector<128x128xf32> -> vector<128x128xf32>
    %13 = vector.extract_strided_slice %1 {offsets = [1, 0], sizes = [1, 128], strides = [1, 1]} : vector<3x128xf32> to vector<1x128xf32>
    %14 = vector.broadcast %13 : vector<1x128xf32> to vector<128x128xf32>
    %15 = arith.addf %12, %14 : vector<128x128xf32>
    %c0_10 = arith.constant 0 : index
    %c0_11 = arith.constant 0 : index
    %16 = vector.load %arg5[%c0_10, %c0_11] : memref<128x128xbf16, #tpu.memory_space<vmem>>, vector<128x128xbf16>
    %cst_12 = arith.constant dense<0.000000e+00> : vector<128x128xf32>
    %17 = tpu.matmul %5, %16, %cst_12 {dimension_numbers = #tpu.dot_dimension_numbers<[1], [0], [0], [1], [0, 0, 1, 1], [], []>} : vector<128x128xbf16>, vector<128x128xbf16>, vector<128x128xf32> -> vector<128x128xf32>
    %18 = vector.extract_strided_slice %1 {offsets = [2, 0], sizes = [1, 128], strides = [1, 1]} : vector<3x128xf32> to vector<1x128xf32>
    %19 = vector.broadcast %18 : vector<1x128xf32> to vector<128x128xf32>
    %20 = arith.addf %17, %19 : vector<128x128xf32>
    %21 = arith.truncf %10 : vector<128x128xf32> to vector<128x128xbf16>
    %c0_13 = arith.constant 0 : index
    %c0_14 = arith.constant 0 : index
    %22 = vector.load %arg7[%c0_13, %c0_14] : memref<128x128xbf16, #tpu.memory_space<vmem>>, vector<128x128xbf16>
    tpu.vector_store %arg7[%c0_13, %c0_14], %21 {strides = array<i32>} : memref<128x128xbf16, #tpu.memory_space<vmem>>, vector<128x128xbf16>,
    %23 = arith.truncf %15 : vector<128x128xf32> to vector<128x128xbf16>
    %c0_15 = arith.constant 0 : index
    %c0_16 = arith.constant 0 : index
    %24 = vector.load %arg8[%c0_15, %c0_16] : memref<128x128xbf16, #tpu.memory_space<vmem>>, vector<128x128xbf16>
    tpu.vector_store %arg8[%c0_15, %c0_16], %23 {strides = array<i32>} : memref<128x128xbf16, #tpu.memory_space<vmem>>, vector<128x128xbf16>,
    %25 = arith.truncf %20 : vector<128x128xf32> to vector<128x128xbf16>
    %c0_17 = arith.constant 0 : index
    %c0_18 = arith.constant 0 : index
    %26 = vector.load %arg9[%c0_17, %c0_18] : memref<128x128xbf16, #tpu.memory_space<vmem>>, vector<128x128xbf16>
    tpu.vector_store %arg9[%c0_17, %c0_18], %25 {strides = array<i32>} : memref<128x128xbf16, #tpu.memory_space<vmem>>, vector<128x128xbf16>,
    return
  }
  func.func @transform_0(%arg0: i32) -> (i32, i32) {
    %c0_i32 = arith.constant 0 : i32
    %c0_i32_0 = arith.constant 0 : i32
    return %arg0, %c0_i32 : i32, i32
  }
  func.func @transform_1(%arg0: i32) -> (i32, i32) {
    %c0_i32 = arith.constant 0 : i32
    %c0_i32_0 = arith.constant 0 : i32
    return %arg0, %c0_i32 : i32, i32
  }
  func.func @transform_2(%arg0: i32) -> (i32, i32) {
    %c0_i32 = arith.constant 0 : i32
    %c0_i32_0 = arith.constant 0 : i32
    %c0_i32_1 = arith.constant 0 : i32
    return %c0_i32, %c0_i32_0 : i32, i32
  }
  func.func @transform_3(%arg0: i32) -> (i32, i32) {
    %c0_i32 = arith.constant 0 : i32
    %c0_i32_0 = arith.constant 0 : i32
    %c0_i32_1 = arith.constant 0 : i32
    return %c0_i32, %c0_i32_0 : i32, i32
  }
  func.func @transform_4(%arg0: i32) -> (i32, i32) {
    %c0_i32 = arith.constant 0 : i32
    %c0_i32_0 = arith.constant 0 : i32
    %c0_i32_1 = arith.constant 0 : i32
    return %c0_i32, %c0_i32_0 : i32, i32
  }
  func.func @transform_5(%arg0: i32) -> (i32, i32) {
    %c0_i32 = arith.constant 0 : i32
    %c0_i32_0 = arith.constant 0 : i32
    %c0_i32_1 = arith.constant 0 : i32
    return %c0_i32, %c0_i32_0 : i32, i32
  }
  func.func @transform_6(%arg0: i32) -> (i32, i32) {
    %c0_i32 = arith.constant 0 : i32
    %c0_i32_0 = arith.constant 0 : i32
    return %arg0, %c0_i32 : i32, i32
  }
  func.func @transform_7(%arg0: i32) -> (i32, i32) {
    %c0_i32 = arith.constant 0 : i32
    %c0_i32_0 = arith.constant 0 : i32
    return %arg0, %c0_i32 : i32, i32
  }
  func.func @transform_8(%arg0: i32) -> (i32, i32) {
    %c0_i32 = arith.constant 0 : i32
    %c0_i32_0 = arith.constant 0 : i32
    return %arg0, %c0_i32 : i32, i32
  }
}

module attributes {stable_mosaic.version = 11 : i64} {
  func.func @_proj_add_ln_kernel(%arg0: i32, %arg1: memref<128x128xf32, #tpu.memory_space<vmem>>, %arg2: memref<128x128xf32, #tpu.memory_space<vmem>>, %arg3: memref<128x128xbf16, #tpu.memory_space<vmem>>, %arg4: memref<1x128xf32, #tpu.memory_space<vmem>>, %arg5: memref<1x128xf32, #tpu.memory_space<vmem>>, %arg6: memref<1x128xf32, #tpu.memory_space<vmem>>, %arg7: memref<128x128xf32, #tpu.memory_space<vmem>>) attributes {dimension_semantics = [#tpu.dimension_semantics<parallel>], iteration_bounds = array<i64: 1>, scalar_prefetch = 0 : i64, scratch_operands = 0 : i64, tpu.core_type = #tpu.core_type<tc>, window_params = [{transform_indices = @transform_0, window_bounds = array<i64: 128, 128>}, {transform_indices = @transform_1, window_bounds = array<i64: 128, 128>}, {pipeline_mode = #tpu.pipeline_mode<synchronous>, transform_indices = @transform_2, window_bounds = array<i64: 128, 128>}, {pipeline_mode = #tpu.pipeline_mode<synchronous>, transform_indices = @transform_3, window_bounds = array<i64: 1, 128>}, {pipeline_mode = #tpu.pipeline_mode<synchronous>, transform_indices = @transform_4, window_bounds = array<i64: 1, 128>}, {pipeline_mode = #tpu.pipeline_mode<synchronous>, transform_indices = @transform_5, window_bounds = array<i64: 1, 128>}, {transform_indices = @transform_6, window_bounds = array<i64: 128, 128>}]} {
    %c0 = arith.constant 0 : index
    %c0_0 = arith.constant 0 : index
    %0 = vector.load %arg1[%c0, %c0_0] : memref<128x128xf32, #tpu.memory_space<vmem>>, vector<128x128xf32>
    %1 = arith.truncf %0 : vector<128x128xf32> to vector<128x128xbf16>
    %c0_1 = arith.constant 0 : index
    %c0_2 = arith.constant 0 : index
    %2 = vector.load %arg3[%c0_1, %c0_2] : memref<128x128xbf16, #tpu.memory_space<vmem>>, vector<128x128xbf16>
    %cst = arith.constant dense<0.000000e+00> : vector<128x128xf32>
    %3 = tpu.matmul %1, %2, %cst {dimension_numbers = #tpu.dot_dimension_numbers<[1], [0], [0], [1], [0, 0, 1, 1], [], []>} : vector<128x128xbf16>, vector<128x128xbf16>, vector<128x128xf32> -> vector<128x128xf32>
    %c0_3 = arith.constant 0 : index
    %c0_4 = arith.constant 0 : index
    %4 = vector.load %arg4[%c0_3, %c0_4] : memref<1x128xf32, #tpu.memory_space<vmem>>, vector<1x128xf32>
    %5 = vector.broadcast %4 : vector<1x128xf32> to vector<128x128xf32>
    %6 = arith.addf %3, %5 : vector<128x128xf32>
    %c0_5 = arith.constant 0 : index
    %c0_6 = arith.constant 0 : index
    %7 = vector.load %arg2[%c0_5, %c0_6] : memref<128x128xf32, #tpu.memory_space<vmem>>, vector<128x128xf32>
    %8 = arith.addf %7, %6 : vector<128x128xf32>
    %c0_7 = arith.constant 0 : index
    %c0_8 = arith.constant 0 : index
    %9 = vector.load %arg5[%c0_7, %c0_8] : memref<1x128xf32, #tpu.memory_space<vmem>>, vector<1x128xf32>
    %c0_9 = arith.constant 0 : index
    %c0_10 = arith.constant 0 : index
    %10 = vector.load %arg6[%c0_9, %c0_10] : memref<1x128xf32, #tpu.memory_space<vmem>>, vector<1x128xf32>
    %cst_11 = arith.constant dense<0.000000e+00> : vector<128xf32>
    %11 = vector.multi_reduction <add>, %8, %cst_11 [1] : vector<128x128xf32> to vector<128xf32>
    %12 = vector.shape_cast %11 : vector<128xf32> to vector<128x1xf32>
    %cst_12 = arith.constant 1.280000e+02 : f32
    %13 = vector.broadcast %cst_12 : f32 to vector<128x1xf32>
    %14 = arith.divf %12, %13 : vector<128x1xf32>
    %15 = vector.broadcast %14 : vector<128x1xf32> to vector<128x128xf32>
    %16 = arith.subf %8, %15 : vector<128x128xf32>
    %17 = arith.mulf %16, %16 : vector<128x128xf32>
    %cst_13 = arith.constant dense<0.000000e+00> : vector<128xf32>
    %18 = vector.multi_reduction <add>, %17, %cst_13 [1] : vector<128x128xf32> to vector<128xf32>
    %19 = vector.shape_cast %18 : vector<128xf32> to vector<128x1xf32>
    %cst_14 = arith.constant 1.280000e+02 : f32
    %20 = vector.broadcast %cst_14 : f32 to vector<128x1xf32>
    %21 = arith.divf %19, %20 : vector<128x1xf32>
    %22 = vector.broadcast %14 : vector<128x1xf32> to vector<128x128xf32>
    %23 = arith.subf %8, %22 : vector<128x128xf32>
    %cst_15 = arith.constant 9.99999974E-6 : f32
    %24 = vector.broadcast %cst_15 : f32 to vector<128x1xf32>
    %25 = arith.addf %21, %24 : vector<128x1xf32>
    %26 = math.rsqrt %25 : vector<128x1xf32>
    %27 = vector.broadcast %26 : vector<128x1xf32> to vector<128x128xf32>
    %28 = arith.mulf %23, %27 : vector<128x128xf32>
    %29 = vector.broadcast %9 : vector<1x128xf32> to vector<128x128xf32>
    %30 = arith.mulf %28, %29 : vector<128x128xf32>
    %31 = vector.broadcast %10 : vector<1x128xf32> to vector<128x128xf32>
    %32 = arith.addf %30, %31 : vector<128x128xf32>
    %c0_16 = arith.constant 0 : index
    %c0_17 = arith.constant 0 : index
    %33 = vector.load %arg7[%c0_16, %c0_17] : memref<128x128xf32, #tpu.memory_space<vmem>>, vector<128x128xf32>
    tpu.vector_store %arg7[%c0_16, %c0_17], %32 {strides = array<i32>} : memref<128x128xf32, #tpu.memory_space<vmem>>, vector<128x128xf32>,
    return
  }
  func.func @transform_0(%arg0: i32) -> (i32, i32) {
    %c0_i32 = arith.constant 0 : i32
    %c0_i32_0 = arith.constant 0 : i32
    return %arg0, %c0_i32 : i32, i32
  }
  func.func @transform_1(%arg0: i32) -> (i32, i32) {
    %c0_i32 = arith.constant 0 : i32
    %c0_i32_0 = arith.constant 0 : i32
    return %arg0, %c0_i32 : i32, i32
  }
  func.func @transform_2(%arg0: i32) -> (i32, i32) {
    %c0_i32 = arith.constant 0 : i32
    %c0_i32_0 = arith.constant 0 : i32
    %c0_i32_1 = arith.constant 0 : i32
    return %c0_i32, %c0_i32_0 : i32, i32
  }
  func.func @transform_3(%arg0: i32) -> (i32, i32) {
    %c0_i32 = arith.constant 0 : i32
    %c0_i32_0 = arith.constant 0 : i32
    %c0_i32_1 = arith.constant 0 : i32
    return %c0_i32, %c0_i32_0 : i32, i32
  }
  func.func @transform_4(%arg0: i32) -> (i32, i32) {
    %c0_i32 = arith.constant 0 : i32
    %c0_i32_0 = arith.constant 0 : i32
    %c0_i32_1 = arith.constant 0 : i32
    return %c0_i32, %c0_i32_0 : i32, i32
  }
  func.func @transform_5(%arg0: i32) -> (i32, i32) {
    %c0_i32 = arith.constant 0 : i32
    %c0_i32_0 = arith.constant 0 : i32
    %c0_i32_1 = arith.constant 0 : i32
    return %c0_i32, %c0_i32_0 : i32, i32
  }
  func.func @transform_6(%arg0: i32) -> (i32, i32) {
    %c0_i32 = arith.constant 0 : i32
    %c0_i32_0 = arith.constant 0 : i32
    return %arg0, %c0_i32 : i32, i32
  }
}

module attributes {stable_mosaic.version = 11 : i64} {
  func.func @_ffn_ln_kernel(%arg0: i32, %arg1: memref<128x128xf32, #tpu.memory_space<vmem>>, %arg2: memref<128x256xbf16, #tpu.memory_space<vmem>>, %arg3: memref<1x256xf32, #tpu.memory_space<vmem>>, %arg4: memref<256x128xbf16, #tpu.memory_space<vmem>>, %arg5: memref<1x128xf32, #tpu.memory_space<vmem>>, %arg6: memref<1x128xf32, #tpu.memory_space<vmem>>, %arg7: memref<1x128xf32, #tpu.memory_space<vmem>>, %arg8: memref<128x128xf32, #tpu.memory_space<vmem>>) attributes {dimension_semantics = [#tpu.dimension_semantics<parallel>], iteration_bounds = array<i64: 1>, scalar_prefetch = 0 : i64, scratch_operands = 0 : i64, tpu.core_type = #tpu.core_type<tc>, window_params = [{transform_indices = @transform_0, window_bounds = array<i64: 128, 128>}, {pipeline_mode = #tpu.pipeline_mode<synchronous>, transform_indices = @transform_1, window_bounds = array<i64: 128, 256>}, {pipeline_mode = #tpu.pipeline_mode<synchronous>, transform_indices = @transform_2, window_bounds = array<i64: 1, 256>}, {pipeline_mode = #tpu.pipeline_mode<synchronous>, transform_indices = @transform_3, window_bounds = array<i64: 256, 128>}, {pipeline_mode = #tpu.pipeline_mode<synchronous>, transform_indices = @transform_4, window_bounds = array<i64: 1, 128>}, {pipeline_mode = #tpu.pipeline_mode<synchronous>, transform_indices = @transform_5, window_bounds = array<i64: 1, 128>}, {pipeline_mode = #tpu.pipeline_mode<synchronous>, transform_indices = @transform_6, window_bounds = array<i64: 1, 128>}, {transform_indices = @transform_7, window_bounds = array<i64: 128, 128>}]} {
    %c0 = arith.constant 0 : index
    %c0_0 = arith.constant 0 : index
    %0 = vector.load %arg1[%c0, %c0_0] : memref<128x128xf32, #tpu.memory_space<vmem>>, vector<128x128xf32>
    %1 = arith.truncf %0 : vector<128x128xf32> to vector<128x128xbf16>
    %c0_1 = arith.constant 0 : index
    %c0_2 = arith.constant 0 : index
    %2 = vector.load %arg2[%c0_1, %c0_2] : memref<128x256xbf16, #tpu.memory_space<vmem>>, vector<128x256xbf16>
    %cst = arith.constant dense<0.000000e+00> : vector<128x256xf32>
    %3 = tpu.matmul %1, %2, %cst {dimension_numbers = #tpu.dot_dimension_numbers<[1], [0], [0], [1], [0, 0, 1, 1], [], []>} : vector<128x128xbf16>, vector<128x256xbf16>, vector<128x256xf32> -> vector<128x256xf32>
    %c0_3 = arith.constant 0 : index
    %c0_4 = arith.constant 0 : index
    %4 = vector.load %arg3[%c0_3, %c0_4] : memref<1x256xf32, #tpu.memory_space<vmem>>, vector<1x256xf32>
    %5 = vector.broadcast %4 : vector<1x256xf32> to vector<128x256xf32>
    %6 = arith.addf %3, %5 : vector<128x256xf32>
    %cst_5 = arith.constant 0.000000e+00 : f32
    %7 = vector.broadcast %cst_5 : f32 to vector<128x256xf32>
    %8 = arith.maximumf %6, %7 : vector<128x256xf32>
    %9 = arith.truncf %8 : vector<128x256xf32> to vector<128x256xbf16>
    %c0_6 = arith.constant 0 : index
    %c0_7 = arith.constant 0 : index
    %10 = vector.load %arg4[%c0_6, %c0_7] : memref<256x128xbf16, #tpu.memory_space<vmem>>, vector<256x128xbf16>
    %cst_8 = arith.constant dense<0.000000e+00> : vector<128x128xf32>
    %11 = tpu.matmul %9, %10, %cst_8 {dimension_numbers = #tpu.dot_dimension_numbers<[1], [0], [0], [1], [0, 0, 1, 1], [], []>} : vector<128x256xbf16>, vector<256x128xbf16>, vector<128x128xf32> -> vector<128x128xf32>
    %c0_9 = arith.constant 0 : index
    %c0_10 = arith.constant 0 : index
    %12 = vector.load %arg5[%c0_9, %c0_10] : memref<1x128xf32, #tpu.memory_space<vmem>>, vector<1x128xf32>
    %13 = vector.broadcast %12 : vector<1x128xf32> to vector<128x128xf32>
    %14 = arith.addf %11, %13 : vector<128x128xf32>
    %15 = arith.addf %0, %14 : vector<128x128xf32>
    %c0_11 = arith.constant 0 : index
    %c0_12 = arith.constant 0 : index
    %16 = vector.load %arg6[%c0_11, %c0_12] : memref<1x128xf32, #tpu.memory_space<vmem>>, vector<1x128xf32>
    %c0_13 = arith.constant 0 : index
    %c0_14 = arith.constant 0 : index
    %17 = vector.load %arg7[%c0_13, %c0_14] : memref<1x128xf32, #tpu.memory_space<vmem>>, vector<1x128xf32>
    %cst_15 = arith.constant dense<0.000000e+00> : vector<128xf32>
    %18 = vector.multi_reduction <add>, %15, %cst_15 [1] : vector<128x128xf32> to vector<128xf32>
    %19 = vector.shape_cast %18 : vector<128xf32> to vector<128x1xf32>
    %cst_16 = arith.constant 1.280000e+02 : f32
    %20 = vector.broadcast %cst_16 : f32 to vector<128x1xf32>
    %21 = arith.divf %19, %20 : vector<128x1xf32>
    %22 = vector.broadcast %21 : vector<128x1xf32> to vector<128x128xf32>
    %23 = arith.subf %15, %22 : vector<128x128xf32>
    %24 = arith.mulf %23, %23 : vector<128x128xf32>
    %cst_17 = arith.constant dense<0.000000e+00> : vector<128xf32>
    %25 = vector.multi_reduction <add>, %24, %cst_17 [1] : vector<128x128xf32> to vector<128xf32>
    %26 = vector.shape_cast %25 : vector<128xf32> to vector<128x1xf32>
    %cst_18 = arith.constant 1.280000e+02 : f32
    %27 = vector.broadcast %cst_18 : f32 to vector<128x1xf32>
    %28 = arith.divf %26, %27 : vector<128x1xf32>
    %29 = vector.broadcast %21 : vector<128x1xf32> to vector<128x128xf32>
    %30 = arith.subf %15, %29 : vector<128x128xf32>
    %cst_19 = arith.constant 9.99999974E-6 : f32
    %31 = vector.broadcast %cst_19 : f32 to vector<128x1xf32>
    %32 = arith.addf %28, %31 : vector<128x1xf32>
    %33 = math.rsqrt %32 : vector<128x1xf32>
    %34 = vector.broadcast %33 : vector<128x1xf32> to vector<128x128xf32>
    %35 = arith.mulf %30, %34 : vector<128x128xf32>
    %36 = vector.broadcast %16 : vector<1x128xf32> to vector<128x128xf32>
    %37 = arith.mulf %35, %36 : vector<128x128xf32>
    %38 = vector.broadcast %17 : vector<1x128xf32> to vector<128x128xf32>
    %39 = arith.addf %37, %38 : vector<128x128xf32>
    %c0_20 = arith.constant 0 : index
    %c0_21 = arith.constant 0 : index
    %40 = vector.load %arg8[%c0_20, %c0_21] : memref<128x128xf32, #tpu.memory_space<vmem>>, vector<128x128xf32>
    tpu.vector_store %arg8[%c0_20, %c0_21], %39 {strides = array<i32>} : memref<128x128xf32, #tpu.memory_space<vmem>>, vector<128x128xf32>,
    return
  }
  func.func @transform_0(%arg0: i32) -> (i32, i32) {
    %c0_i32 = arith.constant 0 : i32
    %c0_i32_0 = arith.constant 0 : i32
    return %arg0, %c0_i32 : i32, i32
  }
  func.func @transform_1(%arg0: i32) -> (i32, i32) {
    %c0_i32 = arith.constant 0 : i32
    %c0_i32_0 = arith.constant 0 : i32
    %c0_i32_1 = arith.constant 0 : i32
    return %c0_i32, %c0_i32_0 : i32, i32
  }
  func.func @transform_2(%arg0: i32) -> (i32, i32) {
    %c0_i32 = arith.constant 0 : i32
    %c0_i32_0 = arith.constant 0 : i32
    %c0_i32_1 = arith.constant 0 : i32
    return %c0_i32, %c0_i32_0 : i32, i32
  }
  func.func @transform_3(%arg0: i32) -> (i32, i32) {
    %c0_i32 = arith.constant 0 : i32
    %c0_i32_0 = arith.constant 0 : i32
    %c0_i32_1 = arith.constant 0 : i32
    return %c0_i32, %c0_i32_0 : i32, i32
  }
  func.func @transform_4(%arg0: i32) -> (i32, i32) {
    %c0_i32 = arith.constant 0 : i32
    %c0_i32_0 = arith.constant 0 : i32
    %c0_i32_1 = arith.constant 0 : i32
    return %c0_i32, %c0_i32_0 : i32, i32
  }
  func.func @transform_5(%arg0: i32) -> (i32, i32) {
    %c0_i32 = arith.constant 0 : i32
    %c0_i32_0 = arith.constant 0 : i32
    %c0_i32_1 = arith.constant 0 : i32
    return %c0_i32, %c0_i32_0 : i32, i32
  }
  func.func @transform_6(%arg0: i32) -> (i32, i32) {
    %c0_i32 = arith.constant 0 : i32
    %c0_i32_0 = arith.constant 0 : i32
    %c0_i32_1 = arith.constant 0 : i32
    return %c0_i32, %c0_i32_0 : i32, i32
  }
  func.func @transform_7(%arg0: i32) -> (i32, i32) {
    %c0_i32 = arith.constant 0 : i32
    %c0_i32_0 = arith.constant 0 : i32
    return %arg0, %c0_i32 : i32, i32
  }
}

module attributes {stable_mosaic.version = 11 : i64} {
  func.func @_qkv_proj_kernel(%arg0: i32, %arg1: memref<128x128xf32, #tpu.memory_space<vmem>>, %arg2: memref<128x128xf32, #tpu.memory_space<vmem>>, %arg3: memref<128x128xbf16, #tpu.memory_space<vmem>>, %arg4: memref<128x128xbf16, #tpu.memory_space<vmem>>, %arg5: memref<128x128xbf16, #tpu.memory_space<vmem>>, %arg6: memref<3x128xf32, #tpu.memory_space<vmem>>, %arg7: memref<128x128xbf16, #tpu.memory_space<vmem>>, %arg8: memref<128x128xbf16, #tpu.memory_space<vmem>>, %arg9: memref<128x128xbf16, #tpu.memory_space<vmem>>) attributes {dimension_semantics = [#tpu.dimension_semantics<parallel>], iteration_bounds = array<i64: 1>, scalar_prefetch = 0 : i64, scratch_operands = 0 : i64, tpu.core_type = #tpu.core_type<tc>, window_params = [{transform_indices = @transform_0, window_bounds = array<i64: 128, 128>}, {transform_indices = @transform_1, window_bounds = array<i64: 128, 128>}, {pipeline_mode = #tpu.pipeline_mode<synchronous>, transform_indices = @transform_2, window_bounds = array<i64: 128, 128>}, {pipeline_mode = #tpu.pipeline_mode<synchronous>, transform_indices = @transform_3, window_bounds = array<i64: 128, 128>}, {pipeline_mode = #tpu.pipeline_mode<synchronous>, transform_indices = @transform_4, window_bounds = array<i64: 128, 128>}, {pipeline_mode = #tpu.pipeline_mode<synchronous>, transform_indices = @transform_5, window_bounds = array<i64: 3, 128>}, {transform_indices = @transform_6, window_bounds = array<i64: 128, 128>}, {transform_indices = @transform_7, window_bounds = array<i64: 128, 128>}, {transform_indices = @transform_8, window_bounds = array<i64: 128, 128>}]} {
    %c0 = arith.constant 0 : index
    %c0_0 = arith.constant 0 : index
    %0 = vector.load %arg1[%c0, %c0_0] : memref<128x128xf32, #tpu.memory_space<vmem>>, vector<128x128xf32>
    %c0_1 = arith.constant 0 : index
    %c0_2 = arith.constant 0 : index
    %1 = vector.load %arg6[%c0_1, %c0_2] : memref<3x128xf32, #tpu.memory_space<vmem>>, vector<3x128xf32>
    %c0_3 = arith.constant 0 : index
    %c0_4 = arith.constant 0 : index
    %2 = vector.load %arg2[%c0_3, %c0_4] : memref<128x128xf32, #tpu.memory_space<vmem>>, vector<128x128xf32>
    %3 = arith.addf %0, %2 : vector<128x128xf32>
    %4 = arith.truncf %3 : vector<128x128xf32> to vector<128x128xbf16>
    %5 = arith.truncf %0 : vector<128x128xf32> to vector<128x128xbf16>
    %c0_5 = arith.constant 0 : index
    %c0_6 = arith.constant 0 : index
    %6 = vector.load %arg3[%c0_5, %c0_6] : memref<128x128xbf16, #tpu.memory_space<vmem>>, vector<128x128xbf16>
    %cst = arith.constant dense<0.000000e+00> : vector<128x128xf32>
    %7 = tpu.matmul %4, %6, %cst {dimension_numbers = #tpu.dot_dimension_numbers<[1], [0], [0], [1], [0, 0, 1, 1], [], []>} : vector<128x128xbf16>, vector<128x128xbf16>, vector<128x128xf32> -> vector<128x128xf32>
    %8 = vector.extract_strided_slice %1 {offsets = [0, 0], sizes = [1, 128], strides = [1, 1]} : vector<3x128xf32> to vector<1x128xf32>
    %9 = vector.broadcast %8 : vector<1x128xf32> to vector<128x128xf32>
    %10 = arith.addf %7, %9 : vector<128x128xf32>
    %c0_7 = arith.constant 0 : index
    %c0_8 = arith.constant 0 : index
    %11 = vector.load %arg4[%c0_7, %c0_8] : memref<128x128xbf16, #tpu.memory_space<vmem>>, vector<128x128xbf16>
    %cst_9 = arith.constant dense<0.000000e+00> : vector<128x128xf32>
    %12 = tpu.matmul %4, %11, %cst_9 {dimension_numbers = #tpu.dot_dimension_numbers<[1], [0], [0], [1], [0, 0, 1, 1], [], []>} : vector<128x128xbf16>, vector<128x128xbf16>, vector<128x128xf32> -> vector<128x128xf32>
    %13 = vector.extract_strided_slice %1 {offsets = [1, 0], sizes = [1, 128], strides = [1, 1]} : vector<3x128xf32> to vector<1x128xf32>
    %14 = vector.broadcast %13 : vector<1x128xf32> to vector<128x128xf32>
    %15 = arith.addf %12, %14 : vector<128x128xf32>
    %c0_10 = arith.constant 0 : index
    %c0_11 = arith.constant 0 : index
    %16 = vector.load %arg5[%c0_10, %c0_11] : memref<128x128xbf16, #tpu.memory_space<vmem>>, vector<128x128xbf16>
    %cst_12 = arith.constant dense<0.000000e+00> : vector<128x128xf32>
    %17 = tpu.matmul %5, %16, %cst_12 {dimension_numbers = #tpu.dot_dimension_numbers<[1], [0], [0], [1], [0, 0, 1, 1], [], []>} : vector<128x128xbf16>, vector<128x128xbf16>, vector<128x128xf32> -> vector<128x128xf32>
    %18 = vector.extract_strided_slice %1 {offsets = [2, 0], sizes = [1, 128], strides = [1, 1]} : vector<3x128xf32> to vector<1x128xf32>
    %19 = vector.broadcast %18 : vector<1x128xf32> to vector<128x128xf32>
    %20 = arith.addf %17, %19 : vector<128x128xf32>
    %21 = arith.truncf %10 : vector<128x128xf32> to vector<128x128xbf16>
    %c0_13 = arith.constant 0 : index
    %c0_14 = arith.constant 0 : index
    %22 = vector.load %arg7[%c0_13, %c0_14] : memref<128x128xbf16, #tpu.memory_space<vmem>>, vector<128x128xbf16>
    tpu.vector_store %arg7[%c0_13, %c0_14], %21 {strides = array<i32>} : memref<128x128xbf16, #tpu.memory_space<vmem>>, vector<128x128xbf16>,
    %23 = arith.truncf %15 : vector<128x128xf32> to vector<128x128xbf16>
    %c0_15 = arith.constant 0 : index
    %c0_16 = arith.constant 0 : index
    %24 = vector.load %arg8[%c0_15, %c0_16] : memref<128x128xbf16, #tpu.memory_space<vmem>>, vector<128x128xbf16>
    tpu.vector_store %arg8[%c0_15, %c0_16], %23 {strides = array<i32>} : memref<128x128xbf16, #tpu.memory_space<vmem>>, vector<128x128xbf16>,
    %25 = arith.truncf %20 : vector<128x128xf32> to vector<128x128xbf16>
    %c0_17 = arith.constant 0 : index
    %c0_18 = arith.constant 0 : index
    %26 = vector.load %arg9[%c0_17, %c0_18] : memref<128x128xbf16, #tpu.memory_space<vmem>>, vector<128x128xbf16>
    tpu.vector_store %arg9[%c0_17, %c0_18], %25 {strides = array<i32>} : memref<128x128xbf16, #tpu.memory_space<vmem>>, vector<128x128xbf16>,
    return
  }
  func.func @transform_0(%arg0: i32) -> (i32, i32) {
    %c0_i32 = arith.constant 0 : i32
    %c0_i32_0 = arith.constant 0 : i32
    return %arg0, %c0_i32 : i32, i32
  }
  func.func @transform_1(%arg0: i32) -> (i32, i32) {
    %c0_i32 = arith.constant 0 : i32
    %c0_i32_0 = arith.constant 0 : i32
    return %arg0, %c0_i32 : i32, i32
  }
  func.func @transform_2(%arg0: i32) -> (i32, i32) {
    %c0_i32 = arith.constant 0 : i32
    %c0_i32_0 = arith.constant 0 : i32
    %c0_i32_1 = arith.constant 0 : i32
    return %c0_i32, %c0_i32_0 : i32, i32
  }
  func.func @transform_3(%arg0: i32) -> (i32, i32) {
    %c0_i32 = arith.constant 0 : i32
    %c0_i32_0 = arith.constant 0 : i32
    %c0_i32_1 = arith.constant 0 : i32
    return %c0_i32, %c0_i32_0 : i32, i32
  }
  func.func @transform_4(%arg0: i32) -> (i32, i32) {
    %c0_i32 = arith.constant 0 : i32
    %c0_i32_0 = arith.constant 0 : i32
    %c0_i32_1 = arith.constant 0 : i32
    return %c0_i32, %c0_i32_0 : i32, i32
  }
  func.func @transform_5(%arg0: i32) -> (i32, i32) {
    %c0_i32 = arith.constant 0 : i32
    %c0_i32_0 = arith.constant 0 : i32
    %c0_i32_1 = arith.constant 0 : i32
    return %c0_i32, %c0_i32_0 : i32, i32
  }
  func.func @transform_6(%arg0: i32) -> (i32, i32) {
    %c0_i32 = arith.constant 0 : i32
    %c0_i32_0 = arith.constant 0 : i32
    return %arg0, %c0_i32 : i32, i32
  }
  func.func @transform_7(%arg0: i32) -> (i32, i32) {
    %c0_i32 = arith.constant 0 : i32
    %c0_i32_0 = arith.constant 0 : i32
    return %arg0, %c0_i32 : i32, i32
  }
  func.func @transform_8(%arg0: i32) -> (i32, i32) {
    %c0_i32 = arith.constant 0 : i32
    %c0_i32_0 = arith.constant 0 : i32
    return %arg0, %c0_i32 : i32, i32
  }
}

module attributes {stable_mosaic.version = 11 : i64} {
  func.func @_kv_proj_kernel(%arg0: i32, %arg1: memref<128x128xf32, #tpu.memory_space<vmem>>, %arg2: memref<128x128xf32, #tpu.memory_space<vmem>>, %arg3: memref<128x128xbf16, #tpu.memory_space<vmem>>, %arg4: memref<128x128xbf16, #tpu.memory_space<vmem>>, %arg5: memref<2x128xf32, #tpu.memory_space<vmem>>, %arg6: memref<128x128xbf16, #tpu.memory_space<vmem>>, %arg7: memref<128x128xbf16, #tpu.memory_space<vmem>>) attributes {dimension_semantics = [#tpu.dimension_semantics<parallel>], iteration_bounds = array<i64: 1>, scalar_prefetch = 0 : i64, scratch_operands = 0 : i64, tpu.core_type = #tpu.core_type<tc>, window_params = [{transform_indices = @transform_0, window_bounds = array<i64: 128, 128>}, {transform_indices = @transform_1, window_bounds = array<i64: 128, 128>}, {pipeline_mode = #tpu.pipeline_mode<synchronous>, transform_indices = @transform_2, window_bounds = array<i64: 128, 128>}, {pipeline_mode = #tpu.pipeline_mode<synchronous>, transform_indices = @transform_3, window_bounds = array<i64: 128, 128>}, {pipeline_mode = #tpu.pipeline_mode<synchronous>, transform_indices = @transform_4, window_bounds = array<i64: 2, 128>}, {transform_indices = @transform_5, window_bounds = array<i64: 128, 128>}, {transform_indices = @transform_6, window_bounds = array<i64: 128, 128>}]} {
    %c0 = arith.constant 0 : index
    %c0_0 = arith.constant 0 : index
    %0 = vector.load %arg1[%c0, %c0_0] : memref<128x128xf32, #tpu.memory_space<vmem>>, vector<128x128xf32>
    %c0_1 = arith.constant 0 : index
    %c0_2 = arith.constant 0 : index
    %1 = vector.load %arg5[%c0_1, %c0_2] : memref<2x128xf32, #tpu.memory_space<vmem>>, vector<2x128xf32>
    %c0_3 = arith.constant 0 : index
    %c0_4 = arith.constant 0 : index
    %2 = vector.load %arg2[%c0_3, %c0_4] : memref<128x128xf32, #tpu.memory_space<vmem>>, vector<128x128xf32>
    %3 = arith.addf %0, %2 : vector<128x128xf32>
    %4 = arith.truncf %3 : vector<128x128xf32> to vector<128x128xbf16>
    %5 = arith.truncf %0 : vector<128x128xf32> to vector<128x128xbf16>
    %c0_5 = arith.constant 0 : index
    %c0_6 = arith.constant 0 : index
    %6 = vector.load %arg3[%c0_5, %c0_6] : memref<128x128xbf16, #tpu.memory_space<vmem>>, vector<128x128xbf16>
    %cst = arith.constant dense<0.000000e+00> : vector<128x128xf32>
    %7 = tpu.matmul %4, %6, %cst {dimension_numbers = #tpu.dot_dimension_numbers<[1], [0], [0], [1], [0, 0, 1, 1], [], []>} : vector<128x128xbf16>, vector<128x128xbf16>, vector<128x128xf32> -> vector<128x128xf32>
    %8 = vector.extract_strided_slice %1 {offsets = [0, 0], sizes = [1, 128], strides = [1, 1]} : vector<2x128xf32> to vector<1x128xf32>
    %9 = vector.broadcast %8 : vector<1x128xf32> to vector<128x128xf32>
    %10 = arith.addf %7, %9 : vector<128x128xf32>
    %c0_7 = arith.constant 0 : index
    %c0_8 = arith.constant 0 : index
    %11 = vector.load %arg4[%c0_7, %c0_8] : memref<128x128xbf16, #tpu.memory_space<vmem>>, vector<128x128xbf16>
    %cst_9 = arith.constant dense<0.000000e+00> : vector<128x128xf32>
    %12 = tpu.matmul %5, %11, %cst_9 {dimension_numbers = #tpu.dot_dimension_numbers<[1], [0], [0], [1], [0, 0, 1, 1], [], []>} : vector<128x128xbf16>, vector<128x128xbf16>, vector<128x128xf32> -> vector<128x128xf32>
    %13 = vector.extract_strided_slice %1 {offsets = [1, 0], sizes = [1, 128], strides = [1, 1]} : vector<2x128xf32> to vector<1x128xf32>
    %14 = vector.broadcast %13 : vector<1x128xf32> to vector<128x128xf32>
    %15 = arith.addf %12, %14 : vector<128x128xf32>
    %16 = arith.truncf %10 : vector<128x128xf32> to vector<128x128xbf16>
    %c0_10 = arith.constant 0 : index
    %c0_11 = arith.constant 0 : index
    %17 = vector.load %arg6[%c0_10, %c0_11] : memref<128x128xbf16, #tpu.memory_space<vmem>>, vector<128x128xbf16>
    tpu.vector_store %arg6[%c0_10, %c0_11], %16 {strides = array<i32>} : memref<128x128xbf16, #tpu.memory_space<vmem>>, vector<128x128xbf16>,
    %18 = arith.truncf %15 : vector<128x128xf32> to vector<128x128xbf16>
    %c0_12 = arith.constant 0 : index
    %c0_13 = arith.constant 0 : index
    %19 = vector.load %arg7[%c0_12, %c0_13] : memref<128x128xbf16, #tpu.memory_space<vmem>>, vector<128x128xbf16>
    tpu.vector_store %arg7[%c0_12, %c0_13], %18 {strides = array<i32>} : memref<128x128xbf16, #tpu.memory_space<vmem>>, vector<128x128xbf16>,
    return
  }
  func.func @transform_0(%arg0: i32) -> (i32, i32) {
    %c0_i32 = arith.constant 0 : i32
    %c0_i32_0 = arith.constant 0 : i32
    return %arg0, %c0_i32 : i32, i32
  }
  func.func @transform_1(%arg0: i32) -> (i32, i32) {
    %c0_i32 = arith.constant 0 : i32
    %c0_i32_0 = arith.constant 0 : i32
    return %arg0, %c0_i32 : i32, i32
  }
  func.func @transform_2(%arg0: i32) -> (i32, i32) {
    %c0_i32 = arith.constant 0 : i32
    %c0_i32_0 = arith.constant 0 : i32
    %c0_i32_1 = arith.constant 0 : i32
    return %c0_i32, %c0_i32_0 : i32, i32
  }
  func.func @transform_3(%arg0: i32) -> (i32, i32) {
    %c0_i32 = arith.constant 0 : i32
    %c0_i32_0 = arith.constant 0 : i32
    %c0_i32_1 = arith.constant 0 : i32
    return %c0_i32, %c0_i32_0 : i32, i32
  }
  func.func @transform_4(%arg0: i32) -> (i32, i32) {
    %c0_i32 = arith.constant 0 : i32
    %c0_i32_0 = arith.constant 0 : i32
    %c0_i32_1 = arith.constant 0 : i32
    return %c0_i32, %c0_i32_0 : i32, i32
  }
  func.func @transform_5(%arg0: i32) -> (i32, i32) {
    %c0_i32 = arith.constant 0 : i32
    %c0_i32_0 = arith.constant 0 : i32
    return %arg0, %c0_i32 : i32, i32
  }
  func.func @transform_6(%arg0: i32) -> (i32, i32) {
    %c0_i32 = arith.constant 0 : i32
    %c0_i32_0 = arith.constant 0 : i32
    return %arg0, %c0_i32 : i32, i32
  }
}

module attributes {stable_mosaic.version = 11 : i64} {
  func.func @_qkv_proj_kernel(%arg0: i32, %arg1: memref<32x128xf32, #tpu.memory_space<vmem>>, %arg2: memref<32x128xf32, #tpu.memory_space<vmem>>, %arg3: memref<128x128xbf16, #tpu.memory_space<vmem>>, %arg4: memref<128x128xbf16, #tpu.memory_space<vmem>>, %arg5: memref<128x128xbf16, #tpu.memory_space<vmem>>, %arg6: memref<3x128xf32, #tpu.memory_space<vmem>>, %arg7: memref<32x128xbf16, #tpu.memory_space<vmem>>, %arg8: memref<32x128xbf16, #tpu.memory_space<vmem>>, %arg9: memref<32x128xbf16, #tpu.memory_space<vmem>>) attributes {dimension_semantics = [#tpu.dimension_semantics<parallel>], iteration_bounds = array<i64: 1>, scalar_prefetch = 0 : i64, scratch_operands = 0 : i64, tpu.core_type = #tpu.core_type<tc>, window_params = [{transform_indices = @transform_0, window_bounds = array<i64: 32, 128>}, {transform_indices = @transform_1, window_bounds = array<i64: 32, 128>}, {pipeline_mode = #tpu.pipeline_mode<synchronous>, transform_indices = @transform_2, window_bounds = array<i64: 128, 128>}, {pipeline_mode = #tpu.pipeline_mode<synchronous>, transform_indices = @transform_3, window_bounds = array<i64: 128, 128>}, {pipeline_mode = #tpu.pipeline_mode<synchronous>, transform_indices = @transform_4, window_bounds = array<i64: 128, 128>}, {pipeline_mode = #tpu.pipeline_mode<synchronous>, transform_indices = @transform_5, window_bounds = array<i64: 3, 128>}, {transform_indices = @transform_6, window_bounds = array<i64: 32, 128>}, {transform_indices = @transform_7, window_bounds = array<i64: 32, 128>}, {transform_indices = @transform_8, window_bounds = array<i64: 32, 128>}]} {
    %c0 = arith.constant 0 : index
    %c0_0 = arith.constant 0 : index
    %0 = vector.load %arg1[%c0, %c0_0] : memref<32x128xf32, #tpu.memory_space<vmem>>, vector<32x128xf32>
    %c0_1 = arith.constant 0 : index
    %c0_2 = arith.constant 0 : index
    %1 = vector.load %arg6[%c0_1, %c0_2] : memref<3x128xf32, #tpu.memory_space<vmem>>, vector<3x128xf32>
    %c0_3 = arith.constant 0 : index
    %c0_4 = arith.constant 0 : index
    %2 = vector.load %arg2[%c0_3, %c0_4] : memref<32x128xf32, #tpu.memory_space<vmem>>, vector<32x128xf32>
    %3 = arith.addf %0, %2 : vector<32x128xf32>
    %4 = arith.truncf %3 : vector<32x128xf32> to vector<32x128xbf16>
    %5 = arith.truncf %0 : vector<32x128xf32> to vector<32x128xbf16>
    %c0_5 = arith.constant 0 : index
    %c0_6 = arith.constant 0 : index
    %6 = vector.load %arg3[%c0_5, %c0_6] : memref<128x128xbf16, #tpu.memory_space<vmem>>, vector<128x128xbf16>
    %cst = arith.constant dense<0.000000e+00> : vector<32x128xf32>
    %7 = tpu.matmul %4, %6, %cst {dimension_numbers = #tpu.dot_dimension_numbers<[1], [0], [0], [1], [0, 0, 1, 1], [], []>} : vector<32x128xbf16>, vector<128x128xbf16>, vector<32x128xf32> -> vector<32x128xf32>
    %8 = vector.extract_strided_slice %1 {offsets = [0, 0], sizes = [1, 128], strides = [1, 1]} : vector<3x128xf32> to vector<1x128xf32>
    %9 = vector.broadcast %8 : vector<1x128xf32> to vector<32x128xf32>
    %10 = arith.addf %7, %9 : vector<32x128xf32>
    %c0_7 = arith.constant 0 : index
    %c0_8 = arith.constant 0 : index
    %11 = vector.load %arg4[%c0_7, %c0_8] : memref<128x128xbf16, #tpu.memory_space<vmem>>, vector<128x128xbf16>
    %cst_9 = arith.constant dense<0.000000e+00> : vector<32x128xf32>
    %12 = tpu.matmul %4, %11, %cst_9 {dimension_numbers = #tpu.dot_dimension_numbers<[1], [0], [0], [1], [0, 0, 1, 1], [], []>} : vector<32x128xbf16>, vector<128x128xbf16>, vector<32x128xf32> -> vector<32x128xf32>
    %13 = vector.extract_strided_slice %1 {offsets = [1, 0], sizes = [1, 128], strides = [1, 1]} : vector<3x128xf32> to vector<1x128xf32>
    %14 = vector.broadcast %13 : vector<1x128xf32> to vector<32x128xf32>
    %15 = arith.addf %12, %14 : vector<32x128xf32>
    %c0_10 = arith.constant 0 : index
    %c0_11 = arith.constant 0 : index
    %16 = vector.load %arg5[%c0_10, %c0_11] : memref<128x128xbf16, #tpu.memory_space<vmem>>, vector<128x128xbf16>
    %cst_12 = arith.constant dense<0.000000e+00> : vector<32x128xf32>
    %17 = tpu.matmul %5, %16, %cst_12 {dimension_numbers = #tpu.dot_dimension_numbers<[1], [0], [0], [1], [0, 0, 1, 1], [], []>} : vector<32x128xbf16>, vector<128x128xbf16>, vector<32x128xf32> -> vector<32x128xf32>
    %18 = vector.extract_strided_slice %1 {offsets = [2, 0], sizes = [1, 128], strides = [1, 1]} : vector<3x128xf32> to vector<1x128xf32>
    %19 = vector.broadcast %18 : vector<1x128xf32> to vector<32x128xf32>
    %20 = arith.addf %17, %19 : vector<32x128xf32>
    %21 = arith.truncf %10 : vector<32x128xf32> to vector<32x128xbf16>
    %c0_13 = arith.constant 0 : index
    %c0_14 = arith.constant 0 : index
    %22 = vector.load %arg7[%c0_13, %c0_14] : memref<32x128xbf16, #tpu.memory_space<vmem>>, vector<32x128xbf16>
    tpu.vector_store %arg7[%c0_13, %c0_14], %21 {strides = array<i32>} : memref<32x128xbf16, #tpu.memory_space<vmem>>, vector<32x128xbf16>,
    %23 = arith.truncf %15 : vector<32x128xf32> to vector<32x128xbf16>
    %c0_15 = arith.constant 0 : index
    %c0_16 = arith.constant 0 : index
    %24 = vector.load %arg8[%c0_15, %c0_16] : memref<32x128xbf16, #tpu.memory_space<vmem>>, vector<32x128xbf16>
    tpu.vector_store %arg8[%c0_15, %c0_16], %23 {strides = array<i32>} : memref<32x128xbf16, #tpu.memory_space<vmem>>, vector<32x128xbf16>,
    %25 = arith.truncf %20 : vector<32x128xf32> to vector<32x128xbf16>
    %c0_17 = arith.constant 0 : index
    %c0_18 = arith.constant 0 : index
    %26 = vector.load %arg9[%c0_17, %c0_18] : memref<32x128xbf16, #tpu.memory_space<vmem>>, vector<32x128xbf16>
    tpu.vector_store %arg9[%c0_17, %c0_18], %25 {strides = array<i32>} : memref<32x128xbf16, #tpu.memory_space<vmem>>, vector<32x128xbf16>,
    return
  }
  func.func @transform_0(%arg0: i32) -> (i32, i32) {
    %c0_i32 = arith.constant 0 : i32
    %c0_i32_0 = arith.constant 0 : i32
    return %arg0, %c0_i32 : i32, i32
  }
  func.func @transform_1(%arg0: i32) -> (i32, i32) {
    %c0_i32 = arith.constant 0 : i32
    %c0_i32_0 = arith.constant 0 : i32
    return %arg0, %c0_i32 : i32, i32
  }
  func.func @transform_2(%arg0: i32) -> (i32, i32) {
    %c0_i32 = arith.constant 0 : i32
    %c0_i32_0 = arith.constant 0 : i32
    %c0_i32_1 = arith.constant 0 : i32
    return %c0_i32, %c0_i32_0 : i32, i32
  }
  func.func @transform_3(%arg0: i32) -> (i32, i32) {
    %c0_i32 = arith.constant 0 : i32
    %c0_i32_0 = arith.constant 0 : i32
    %c0_i32_1 = arith.constant 0 : i32
    return %c0_i32, %c0_i32_0 : i32, i32
  }
  func.func @transform_4(%arg0: i32) -> (i32, i32) {
    %c0_i32 = arith.constant 0 : i32
    %c0_i32_0 = arith.constant 0 : i32
    %c0_i32_1 = arith.constant 0 : i32
    return %c0_i32, %c0_i32_0 : i32, i32
  }
  func.func @transform_5(%arg0: i32) -> (i32, i32) {
    %c0_i32 = arith.constant 0 : i32
    %c0_i32_0 = arith.constant 0 : i32
    %c0_i32_1 = arith.constant 0 : i32
    return %c0_i32, %c0_i32_0 : i32, i32
  }
  func.func @transform_6(%arg0: i32) -> (i32, i32) {
    %c0_i32 = arith.constant 0 : i32
    %c0_i32_0 = arith.constant 0 : i32
    return %arg0, %c0_i32 : i32, i32
  }
  func.func @transform_7(%arg0: i32) -> (i32, i32) {
    %c0_i32 = arith.constant 0 : i32
    %c0_i32_0 = arith.constant 0 : i32
    return %arg0, %c0_i32 : i32, i32
  }
  func.func @transform_8(%arg0: i32) -> (i32, i32) {
    %c0_i32 = arith.constant 0 : i32
    %c0_i32_0 = arith.constant 0 : i32
    return %arg0, %c0_i32 : i32, i32
  }
}

module attributes {stable_mosaic.version = 11 : i64} {
  func.func @_attn_kernel(%arg0: i32, %arg1: i32, %arg2: memref<1x16x128xbf16, #tpu.memory_space<vmem>>, %arg3: memref<1x16x128xbf16, #tpu.memory_space<vmem>>, %arg4: memref<1x16x128xbf16, #tpu.memory_space<vmem>>, %arg5: memref<1x1x16xf32, #tpu.memory_space<vmem>>, %arg6: memref<1x16x128xf32, #tpu.memory_space<vmem>>) attributes {dimension_semantics = [#tpu.dimension_semantics<parallel>, #tpu.dimension_semantics<parallel>], iteration_bounds = array<i64: 2, 1>, scalar_prefetch = 0 : i64, scratch_operands = 0 : i64, tpu.core_type = #tpu.core_type<tc>, window_params = [{transform_indices = @transform_0, window_bounds = array<i64: 1, 16, 128>}, {transform_indices = @transform_1, window_bounds = array<i64: 1, 16, 128>}, {transform_indices = @transform_2, window_bounds = array<i64: 1, 16, 128>}, {transform_indices = @transform_3, window_bounds = array<i64: 1, 1, 16>}, {transform_indices = @transform_4, window_bounds = array<i64: 1, 16, 128>}]} {
    %c0 = arith.constant 0 : index
    %c0_0 = arith.constant 0 : index
    %c0_1 = arith.constant 0 : index
    %0 = vector.load %arg2[%c0, %c0_0, %c0_1] : memref<1x16x128xbf16, #tpu.memory_space<vmem>>, vector<1x16x128xbf16>
    %1 = vector.shape_cast %0 : vector<1x16x128xbf16> to vector<16x128xbf16>
    %c0_2 = arith.constant 0 : index
    %c0_3 = arith.constant 0 : index
    %c0_4 = arith.constant 0 : index
    %2 = vector.load %arg3[%c0_2, %c0_3, %c0_4] : memref<1x16x128xbf16, #tpu.memory_space<vmem>>, vector<1x16x128xbf16>
    %3 = vector.shape_cast %2 : vector<1x16x128xbf16> to vector<16x128xbf16>
    %c0_5 = arith.constant 0 : index
    %c0_6 = arith.constant 0 : index
    %c0_7 = arith.constant 0 : index
    %4 = vector.load %arg4[%c0_5, %c0_6, %c0_7] : memref<1x16x128xbf16, #tpu.memory_space<vmem>>, vector<1x16x128xbf16>
    %5 = vector.shape_cast %4 : vector<1x16x128xbf16> to vector<16x128xbf16>
    %c0_8 = arith.constant 0 : index
    %c0_9 = arith.constant 0 : index
    %c0_10 = arith.constant 0 : index
    %6 = vector.load %arg5[%c0_8, %c0_9, %c0_10] : memref<1x1x16xf32, #tpu.memory_space<vmem>>, vector<1x1x16xf32>
    %7 = vector.shape_cast %6 : vector<1x1x16xf32> to vector<1x16xf32>
    %8 = vector.extract_strided_slice %1 {offsets = [0, 0], sizes = [16, 32], strides = [1, 1]} : vector<16x128xbf16> to vector<16x32xbf16>
    %9 = vector.extract_strided_slice %3 {offsets = [0, 0], sizes = [16, 32], strides = [1, 1]} : vector<16x128xbf16> to vector<16x32xbf16>
    %cst = arith.constant dense<0.000000e+00> : vector<16x16xf32>
    %10 = tpu.matmul %8, %9, %cst {dimension_numbers = #tpu.dot_dimension_numbers<[1], [1], [0], [0], [0, 0, 1, 0], [], []>} : vector<16x32xbf16>, vector<16x32xbf16>, vector<16x16xf32> -> vector<16x16xf32>
    %cst_11 = arith.constant 0.176776692 : f32
    %11 = vector.broadcast %cst_11 : f32 to vector<16x16xf32>
    %12 = arith.mulf %10, %11 : vector<16x16xf32>
    %13 = vector.broadcast %7 : vector<1x16xf32> to vector<16x16xf32>
    %14 = arith.addf %12, %13 : vector<16x16xf32>
    %cst_12 = arith.constant dense<0xFF800000> : vector<16xf32>
    %15 = vector.multi_reduction <maximumf>, %14, %cst_12 [1] : vector<16x16xf32> to vector<16xf32>
    %16 = vector.shape_cast %15 : vector<16xf32> to vector<16x1xf32>
    %17 = vector.broadcast %16 : vector<16x1xf32> to vector<16x16xf32>
    %18 = arith.subf %14, %17 : vector<16x16xf32>
    %19 = math.exp %18 : vector<16x16xf32>
    %cst_13 = arith.constant dense<0.000000e+00> : vector<16xf32>
    %20 = vector.multi_reduction <add>, %19, %cst_13 [1] : vector<16x16xf32> to vector<16xf32>
    %21 = vector.shape_cast %20 : vector<16xf32> to vector<16x1xf32>
    %22 = tpu.reciprocal %21 {approx = true} : vector<16x1xf32> -> vector<16x1xf32>
    %23 = vector.broadcast %22 : vector<16x1xf32> to vector<16x16xf32>
    %24 = arith.mulf %19, %23 : vector<16x16xf32>
    %25 = arith.truncf %24 : vector<16x16xf32> to vector<16x16xbf16>
    %26 = vector.extract_strided_slice %5 {offsets = [0, 0], sizes = [16, 32], strides = [1, 1]} : vector<16x128xbf16> to vector<16x32xbf16>
    %cst_14 = arith.constant dense<0.000000e+00> : vector<16x32xf32>
    %27 = tpu.matmul %25, %26, %cst_14 {dimension_numbers = #tpu.dot_dimension_numbers<[1], [0], [0], [1], [0, 0, 1, 1], [], []>} : vector<16x16xbf16>, vector<16x32xbf16>, vector<16x32xf32> -> vector<16x32xf32>
    %28 = vector.extract_strided_slice %1 {offsets = [0, 32], sizes = [16, 32], strides = [1, 1]} : vector<16x128xbf16> to vector<16x32xbf16>
    %29 = vector.extract_strided_slice %3 {offsets = [0, 32], sizes = [16, 32], strides = [1, 1]} : vector<16x128xbf16> to vector<16x32xbf16>
    %cst_15 = arith.constant dense<0.000000e+00> : vector<16x16xf32>
    %30 = tpu.matmul %28, %29, %cst_15 {dimension_numbers = #tpu.dot_dimension_numbers<[1], [1], [0], [0], [0, 0, 1, 0], [], []>} : vector<16x32xbf16>, vector<16x32xbf16>, vector<16x16xf32> -> vector<16x16xf32>
    %cst_16 = arith.constant 0.176776692 : f32
    %31 = vector.broadcast %cst_16 : f32 to vector<16x16xf32>
    %32 = arith.mulf %30, %31 : vector<16x16xf32>
    %33 = vector.broadcast %7 : vector<1x16xf32> to vector<16x16xf32>
    %34 = arith.addf %32, %33 : vector<16x16xf32>
    %cst_17 = arith.constant dense<0xFF800000> : vector<16xf32>
    %35 = vector.multi_reduction <maximumf>, %34, %cst_17 [1] : vector<16x16xf32> to vector<16xf32>
    %36 = vector.shape_cast %35 : vector<16xf32> to vector<16x1xf32>
    %37 = vector.broadcast %36 : vector<16x1xf32> to vector<16x16xf32>
    %38 = arith.subf %34, %37 : vector<16x16xf32>
    %39 = math.exp %38 : vector<16x16xf32>
    %cst_18 = arith.constant dense<0.000000e+00> : vector<16xf32>
    %40 = vector.multi_reduction <add>, %39, %cst_18 [1] : vector<16x16xf32> to vector<16xf32>
    %41 = vector.shape_cast %40 : vector<16xf32> to vector<16x1xf32>
    %42 = tpu.reciprocal %41 {approx = true} : vector<16x1xf32> -> vector<16x1xf32>
    %43 = vector.broadcast %42 : vector<16x1xf32> to vector<16x16xf32>
    %44 = arith.mulf %39, %43 : vector<16x16xf32>
    %45 = arith.truncf %44 : vector<16x16xf32> to vector<16x16xbf16>
    %46 = vector.extract_strided_slice %5 {offsets = [0, 32], sizes = [16, 32], strides = [1, 1]} : vector<16x128xbf16> to vector<16x32xbf16>
    %cst_19 = arith.constant dense<0.000000e+00> : vector<16x32xf32>
    %47 = tpu.matmul %45, %46, %cst_19 {dimension_numbers = #tpu.dot_dimension_numbers<[1], [0], [0], [1], [0, 0, 1, 1], [], []>} : vector<16x16xbf16>, vector<16x32xbf16>, vector<16x32xf32> -> vector<16x32xf32>
    %48 = vector.extract_strided_slice %1 {offsets = [0, 64], sizes = [16, 32], strides = [1, 1]} : vector<16x128xbf16> to vector<16x32xbf16>
    %49 = vector.extract_strided_slice %3 {offsets = [0, 64], sizes = [16, 32], strides = [1, 1]} : vector<16x128xbf16> to vector<16x32xbf16>
    %cst_20 = arith.constant dense<0.000000e+00> : vector<16x16xf32>
    %50 = tpu.matmul %48, %49, %cst_20 {dimension_numbers = #tpu.dot_dimension_numbers<[1], [1], [0], [0], [0, 0, 1, 0], [], []>} : vector<16x32xbf16>, vector<16x32xbf16>, vector<16x16xf32> -> vector<16x16xf32>
    %cst_21 = arith.constant 0.176776692 : f32
    %51 = vector.broadcast %cst_21 : f32 to vector<16x16xf32>
    %52 = arith.mulf %50, %51 : vector<16x16xf32>
    %53 = vector.broadcast %7 : vector<1x16xf32> to vector<16x16xf32>
    %54 = arith.addf %52, %53 : vector<16x16xf32>
    %cst_22 = arith.constant dense<0xFF800000> : vector<16xf32>
    %55 = vector.multi_reduction <maximumf>, %54, %cst_22 [1] : vector<16x16xf32> to vector<16xf32>
    %56 = vector.shape_cast %55 : vector<16xf32> to vector<16x1xf32>
    %57 = vector.broadcast %56 : vector<16x1xf32> to vector<16x16xf32>
    %58 = arith.subf %54, %57 : vector<16x16xf32>
    %59 = math.exp %58 : vector<16x16xf32>
    %cst_23 = arith.constant dense<0.000000e+00> : vector<16xf32>
    %60 = vector.multi_reduction <add>, %59, %cst_23 [1] : vector<16x16xf32> to vector<16xf32>
    %61 = vector.shape_cast %60 : vector<16xf32> to vector<16x1xf32>
    %62 = tpu.reciprocal %61 {approx = true} : vector<16x1xf32> -> vector<16x1xf32>
    %63 = vector.broadcast %62 : vector<16x1xf32> to vector<16x16xf32>
    %64 = arith.mulf %59, %63 : vector<16x16xf32>
    %65 = arith.truncf %64 : vector<16x16xf32> to vector<16x16xbf16>
    %66 = vector.extract_strided_slice %5 {offsets = [0, 64], sizes = [16, 32], strides = [1, 1]} : vector<16x128xbf16> to vector<16x32xbf16>
    %cst_24 = arith.constant dense<0.000000e+00> : vector<16x32xf32>
    %67 = tpu.matmul %65, %66, %cst_24 {dimension_numbers = #tpu.dot_dimension_numbers<[1], [0], [0], [1], [0, 0, 1, 1], [], []>} : vector<16x16xbf16>, vector<16x32xbf16>, vector<16x32xf32> -> vector<16x32xf32>
    %68 = vector.extract_strided_slice %1 {offsets = [0, 96], sizes = [16, 32], strides = [1, 1]} : vector<16x128xbf16> to vector<16x32xbf16>
    %69 = vector.extract_strided_slice %3 {offsets = [0, 96], sizes = [16, 32], strides = [1, 1]} : vector<16x128xbf16> to vector<16x32xbf16>
    %cst_25 = arith.constant dense<0.000000e+00> : vector<16x16xf32>
    %70 = tpu.matmul %68, %69, %cst_25 {dimension_numbers = #tpu.dot_dimension_numbers<[1], [1], [0], [0], [0, 0, 1, 0], [], []>} : vector<16x32xbf16>, vector<16x32xbf16>, vector<16x16xf32> -> vector<16x16xf32>
    %cst_26 = arith.constant 0.176776692 : f32
    %71 = vector.broadcast %cst_26 : f32 to vector<16x16xf32>
    %72 = arith.mulf %70, %71 : vector<16x16xf32>
    %73 = vector.broadcast %7 : vector<1x16xf32> to vector<16x16xf32>
    %74 = arith.addf %72, %73 : vector<16x16xf32>
    %cst_27 = arith.constant dense<0xFF800000> : vector<16xf32>
    %75 = vector.multi_reduction <maximumf>, %74, %cst_27 [1] : vector<16x16xf32> to vector<16xf32>
    %76 = vector.shape_cast %75 : vector<16xf32> to vector<16x1xf32>
    %77 = vector.broadcast %76 : vector<16x1xf32> to vector<16x16xf32>
    %78 = arith.subf %74, %77 : vector<16x16xf32>
    %79 = math.exp %78 : vector<16x16xf32>
    %cst_28 = arith.constant dense<0.000000e+00> : vector<16xf32>
    %80 = vector.multi_reduction <add>, %79, %cst_28 [1] : vector<16x16xf32> to vector<16xf32>
    %81 = vector.shape_cast %80 : vector<16xf32> to vector<16x1xf32>
    %82 = tpu.reciprocal %81 {approx = true} : vector<16x1xf32> -> vector<16x1xf32>
    %83 = vector.broadcast %82 : vector<16x1xf32> to vector<16x16xf32>
    %84 = arith.mulf %79, %83 : vector<16x16xf32>
    %85 = arith.truncf %84 : vector<16x16xf32> to vector<16x16xbf16>
    %86 = vector.extract_strided_slice %5 {offsets = [0, 96], sizes = [16, 32], strides = [1, 1]} : vector<16x128xbf16> to vector<16x32xbf16>
    %cst_29 = arith.constant dense<0.000000e+00> : vector<16x32xf32>
    %87 = tpu.matmul %85, %86, %cst_29 {dimension_numbers = #tpu.dot_dimension_numbers<[1], [0], [0], [1], [0, 0, 1, 1], [], []>} : vector<16x16xbf16>, vector<16x32xbf16>, vector<16x32xf32> -> vector<16x32xf32>
    %88 = tpu.concatenate %27, %47, %67, %87 in 1 : vector<16x32xf32>, vector<16x32xf32>, vector<16x32xf32>, vector<16x32xf32> -> vector<16x128xf32>
    %c0_30 = arith.constant 0 : index
    %c0_31 = arith.constant 0 : index
    %c0_32 = arith.constant 0 : index
    %89 = vector.load %arg6[%c0_30, %c0_31, %c0_32] : memref<1x16x128xf32, #tpu.memory_space<vmem>>, vector<1x16x128xf32>
    %90 = vector.shape_cast %89 : vector<1x16x128xf32> to vector<16x128xf32>
    %91 = vector.shape_cast %88 : vector<16x128xf32> to vector<1x16x128xf32>
    tpu.vector_store %arg6[%c0_30, %c0_31, %c0_32], %91 {strides = array<i32>} : memref<1x16x128xf32, #tpu.memory_space<vmem>>, vector<1x16x128xf32>,
    return
  }
  func.func @transform_0(%arg0: i32, %arg1: i32) -> (i32, i32, i32) {
    %c0_i32 = arith.constant 0 : i32
    %c0_i32_0 = arith.constant 0 : i32
    return %arg0, %arg1, %c0_i32 : i32, i32, i32
  }
  func.func @transform_1(%arg0: i32, %arg1: i32) -> (i32, i32, i32) {
    %c0_i32 = arith.constant 0 : i32
    %c0_i32_0 = arith.constant 0 : i32
    %c0_i32_1 = arith.constant 0 : i32
    return %arg0, %c0_i32, %c0_i32_0 : i32, i32, i32
  }
  func.func @transform_2(%arg0: i32, %arg1: i32) -> (i32, i32, i32) {
    %c0_i32 = arith.constant 0 : i32
    %c0_i32_0 = arith.constant 0 : i32
    %c0_i32_1 = arith.constant 0 : i32
    return %arg0, %c0_i32, %c0_i32_0 : i32, i32, i32
  }
  func.func @transform_3(%arg0: i32, %arg1: i32) -> (i32, i32, i32) {
    %c0_i32 = arith.constant 0 : i32
    %c0_i32_0 = arith.constant 0 : i32
    %c0_i32_1 = arith.constant 0 : i32
    return %arg0, %c0_i32, %c0_i32_0 : i32, i32, i32
  }
  func.func @transform_4(%arg0: i32, %arg1: i32) -> (i32, i32, i32) {
    %c0_i32 = arith.constant 0 : i32
    %c0_i32_0 = arith.constant 0 : i32
    return %arg0, %arg1, %c0_i32 : i32, i32, i32
  }
}

module attributes {stable_mosaic.version = 11 : i64} {
  func.func @_proj_add_ln_kernel(%arg0: i32, %arg1: memref<32x128xf32, #tpu.memory_space<vmem>>, %arg2: memref<32x128xf32, #tpu.memory_space<vmem>>, %arg3: memref<128x128xbf16, #tpu.memory_space<vmem>>, %arg4: memref<1x128xf32, #tpu.memory_space<vmem>>, %arg5: memref<1x128xf32, #tpu.memory_space<vmem>>, %arg6: memref<1x128xf32, #tpu.memory_space<vmem>>, %arg7: memref<32x128xf32, #tpu.memory_space<vmem>>) attributes {dimension_semantics = [#tpu.dimension_semantics<parallel>], iteration_bounds = array<i64: 1>, scalar_prefetch = 0 : i64, scratch_operands = 0 : i64, tpu.core_type = #tpu.core_type<tc>, window_params = [{transform_indices = @transform_0, window_bounds = array<i64: 32, 128>}, {transform_indices = @transform_1, window_bounds = array<i64: 32, 128>}, {pipeline_mode = #tpu.pipeline_mode<synchronous>, transform_indices = @transform_2, window_bounds = array<i64: 128, 128>}, {pipeline_mode = #tpu.pipeline_mode<synchronous>, transform_indices = @transform_3, window_bounds = array<i64: 1, 128>}, {pipeline_mode = #tpu.pipeline_mode<synchronous>, transform_indices = @transform_4, window_bounds = array<i64: 1, 128>}, {pipeline_mode = #tpu.pipeline_mode<synchronous>, transform_indices = @transform_5, window_bounds = array<i64: 1, 128>}, {transform_indices = @transform_6, window_bounds = array<i64: 32, 128>}]} {
    %c0 = arith.constant 0 : index
    %c0_0 = arith.constant 0 : index
    %0 = vector.load %arg1[%c0, %c0_0] : memref<32x128xf32, #tpu.memory_space<vmem>>, vector<32x128xf32>
    %1 = arith.truncf %0 : vector<32x128xf32> to vector<32x128xbf16>
    %c0_1 = arith.constant 0 : index
    %c0_2 = arith.constant 0 : index
    %2 = vector.load %arg3[%c0_1, %c0_2] : memref<128x128xbf16, #tpu.memory_space<vmem>>, vector<128x128xbf16>
    %cst = arith.constant dense<0.000000e+00> : vector<32x128xf32>
    %3 = tpu.matmul %1, %2, %cst {dimension_numbers = #tpu.dot_dimension_numbers<[1], [0], [0], [1], [0, 0, 1, 1], [], []>} : vector<32x128xbf16>, vector<128x128xbf16>, vector<32x128xf32> -> vector<32x128xf32>
    %c0_3 = arith.constant 0 : index
    %c0_4 = arith.constant 0 : index
    %4 = vector.load %arg4[%c0_3, %c0_4] : memref<1x128xf32, #tpu.memory_space<vmem>>, vector<1x128xf32>
    %5 = vector.broadcast %4 : vector<1x128xf32> to vector<32x128xf32>
    %6 = arith.addf %3, %5 : vector<32x128xf32>
    %c0_5 = arith.constant 0 : index
    %c0_6 = arith.constant 0 : index
    %7 = vector.load %arg2[%c0_5, %c0_6] : memref<32x128xf32, #tpu.memory_space<vmem>>, vector<32x128xf32>
    %8 = arith.addf %7, %6 : vector<32x128xf32>
    %c0_7 = arith.constant 0 : index
    %c0_8 = arith.constant 0 : index
    %9 = vector.load %arg5[%c0_7, %c0_8] : memref<1x128xf32, #tpu.memory_space<vmem>>, vector<1x128xf32>
    %c0_9 = arith.constant 0 : index
    %c0_10 = arith.constant 0 : index
    %10 = vector.load %arg6[%c0_9, %c0_10] : memref<1x128xf32, #tpu.memory_space<vmem>>, vector<1x128xf32>
    %cst_11 = arith.constant dense<0.000000e+00> : vector<32xf32>
    %11 = vector.multi_reduction <add>, %8, %cst_11 [1] : vector<32x128xf32> to vector<32xf32>
    %12 = vector.shape_cast %11 : vector<32xf32> to vector<32x1xf32>
    %cst_12 = arith.constant 1.280000e+02 : f32
    %13 = vector.broadcast %cst_12 : f32 to vector<32x1xf32>
    %14 = arith.divf %12, %13 : vector<32x1xf32>
    %15 = vector.broadcast %14 : vector<32x1xf32> to vector<32x128xf32>
    %16 = arith.subf %8, %15 : vector<32x128xf32>
    %17 = arith.mulf %16, %16 : vector<32x128xf32>
    %cst_13 = arith.constant dense<0.000000e+00> : vector<32xf32>
    %18 = vector.multi_reduction <add>, %17, %cst_13 [1] : vector<32x128xf32> to vector<32xf32>
    %19 = vector.shape_cast %18 : vector<32xf32> to vector<32x1xf32>
    %cst_14 = arith.constant 1.280000e+02 : f32
    %20 = vector.broadcast %cst_14 : f32 to vector<32x1xf32>
    %21 = arith.divf %19, %20 : vector<32x1xf32>
    %22 = vector.broadcast %14 : vector<32x1xf32> to vector<32x128xf32>
    %23 = arith.subf %8, %22 : vector<32x128xf32>
    %cst_15 = arith.constant 9.99999974E-6 : f32
    %24 = vector.broadcast %cst_15 : f32 to vector<32x1xf32>
    %25 = arith.addf %21, %24 : vector<32x1xf32>
    %26 = math.rsqrt %25 : vector<32x1xf32>
    %27 = vector.broadcast %26 : vector<32x1xf32> to vector<32x128xf32>
    %28 = arith.mulf %23, %27 : vector<32x128xf32>
    %29 = vector.broadcast %9 : vector<1x128xf32> to vector<32x128xf32>
    %30 = arith.mulf %28, %29 : vector<32x128xf32>
    %31 = vector.broadcast %10 : vector<1x128xf32> to vector<32x128xf32>
    %32 = arith.addf %30, %31 : vector<32x128xf32>
    %c0_16 = arith.constant 0 : index
    %c0_17 = arith.constant 0 : index
    %33 = vector.load %arg7[%c0_16, %c0_17] : memref<32x128xf32, #tpu.memory_space<vmem>>, vector<32x128xf32>
    tpu.vector_store %arg7[%c0_16, %c0_17], %32 {strides = array<i32>} : memref<32x128xf32, #tpu.memory_space<vmem>>, vector<32x128xf32>,
    return
  }
  func.func @transform_0(%arg0: i32) -> (i32, i32) {
    %c0_i32 = arith.constant 0 : i32
    %c0_i32_0 = arith.constant 0 : i32
    return %arg0, %c0_i32 : i32, i32
  }
  func.func @transform_1(%arg0: i32) -> (i32, i32) {
    %c0_i32 = arith.constant 0 : i32
    %c0_i32_0 = arith.constant 0 : i32
    return %arg0, %c0_i32 : i32, i32
  }
  func.func @transform_2(%arg0: i32) -> (i32, i32) {
    %c0_i32 = arith.constant 0 : i32
    %c0_i32_0 = arith.constant 0 : i32
    %c0_i32_1 = arith.constant 0 : i32
    return %c0_i32, %c0_i32_0 : i32, i32
  }
  func.func @transform_3(%arg0: i32) -> (i32, i32) {
    %c0_i32 = arith.constant 0 : i32
    %c0_i32_0 = arith.constant 0 : i32
    %c0_i32_1 = arith.constant 0 : i32
    return %c0_i32, %c0_i32_0 : i32, i32
  }
  func.func @transform_4(%arg0: i32) -> (i32, i32) {
    %c0_i32 = arith.constant 0 : i32
    %c0_i32_0 = arith.constant 0 : i32
    %c0_i32_1 = arith.constant 0 : i32
    return %c0_i32, %c0_i32_0 : i32, i32
  }
  func.func @transform_5(%arg0: i32) -> (i32, i32) {
    %c0_i32 = arith.constant 0 : i32
    %c0_i32_0 = arith.constant 0 : i32
    %c0_i32_1 = arith.constant 0 : i32
    return %c0_i32, %c0_i32_0 : i32, i32
  }
  func.func @transform_6(%arg0: i32) -> (i32, i32) {
    %c0_i32 = arith.constant 0 : i32
    %c0_i32_0 = arith.constant 0 : i32
    return %arg0, %c0_i32 : i32, i32
  }
}

module attributes {stable_mosaic.version = 11 : i64} {
  func.func @_q_proj_kernel(%arg0: i32, %arg1: memref<32x128xf32, #tpu.memory_space<vmem>>, %arg2: memref<32x128xf32, #tpu.memory_space<vmem>>, %arg3: memref<128x128xbf16, #tpu.memory_space<vmem>>, %arg4: memref<1x128xf32, #tpu.memory_space<vmem>>, %arg5: memref<32x128xbf16, #tpu.memory_space<vmem>>) attributes {dimension_semantics = [#tpu.dimension_semantics<parallel>], iteration_bounds = array<i64: 1>, scalar_prefetch = 0 : i64, scratch_operands = 0 : i64, tpu.core_type = #tpu.core_type<tc>, window_params = [{transform_indices = @transform_0, window_bounds = array<i64: 32, 128>}, {transform_indices = @transform_1, window_bounds = array<i64: 32, 128>}, {pipeline_mode = #tpu.pipeline_mode<synchronous>, transform_indices = @transform_2, window_bounds = array<i64: 128, 128>}, {pipeline_mode = #tpu.pipeline_mode<synchronous>, transform_indices = @transform_3, window_bounds = array<i64: 1, 128>}, {transform_indices = @transform_4, window_bounds = array<i64: 32, 128>}]} {
    %c0 = arith.constant 0 : index
    %c0_0 = arith.constant 0 : index
    %0 = vector.load %arg1[%c0, %c0_0] : memref<32x128xf32, #tpu.memory_space<vmem>>, vector<32x128xf32>
    %c0_1 = arith.constant 0 : index
    %c0_2 = arith.constant 0 : index
    %1 = vector.load %arg2[%c0_1, %c0_2] : memref<32x128xf32, #tpu.memory_space<vmem>>, vector<32x128xf32>
    %2 = arith.addf %0, %1 : vector<32x128xf32>
    %3 = arith.truncf %2 : vector<32x128xf32> to vector<32x128xbf16>
    %c0_3 = arith.constant 0 : index
    %c0_4 = arith.constant 0 : index
    %4 = vector.load %arg3[%c0_3, %c0_4] : memref<128x128xbf16, #tpu.memory_space<vmem>>, vector<128x128xbf16>
    %cst = arith.constant dense<0.000000e+00> : vector<32x128xf32>
    %5 = tpu.matmul %3, %4, %cst {dimension_numbers = #tpu.dot_dimension_numbers<[1], [0], [0], [1], [0, 0, 1, 1], [], []>} : vector<32x128xbf16>, vector<128x128xbf16>, vector<32x128xf32> -> vector<32x128xf32>
    %c0_5 = arith.constant 0 : index
    %c0_6 = arith.constant 0 : index
    %6 = vector.load %arg4[%c0_5, %c0_6] : memref<1x128xf32, #tpu.memory_space<vmem>>, vector<1x128xf32>
    %7 = vector.broadcast %6 : vector<1x128xf32> to vector<32x128xf32>
    %8 = arith.addf %5, %7 : vector<32x128xf32>
    %9 = arith.truncf %8 : vector<32x128xf32> to vector<32x128xbf16>
    %c0_7 = arith.constant 0 : index
    %c0_8 = arith.constant 0 : index
    %10 = vector.load %arg5[%c0_7, %c0_8] : memref<32x128xbf16, #tpu.memory_space<vmem>>, vector<32x128xbf16>
    tpu.vector_store %arg5[%c0_7, %c0_8], %9 {strides = array<i32>} : memref<32x128xbf16, #tpu.memory_space<vmem>>, vector<32x128xbf16>,
    return
  }
  func.func @transform_0(%arg0: i32) -> (i32, i32) {
    %c0_i32 = arith.constant 0 : i32
    %c0_i32_0 = arith.constant 0 : i32
    return %arg0, %c0_i32 : i32, i32
  }
  func.func @transform_1(%arg0: i32) -> (i32, i32) {
    %c0_i32 = arith.constant 0 : i32
    %c0_i32_0 = arith.constant 0 : i32
    return %arg0, %c0_i32 : i32, i32
  }
  func.func @transform_2(%arg0: i32) -> (i32, i32) {
    %c0_i32 = arith.constant 0 : i32
    %c0_i32_0 = arith.constant 0 : i32
    %c0_i32_1 = arith.constant 0 : i32
    return %c0_i32, %c0_i32_0 : i32, i32
  }
  func.func @transform_3(%arg0: i32) -> (i32, i32) {
    %c0_i32 = arith.constant 0 : i32
    %c0_i32_0 = arith.constant 0 : i32
    %c0_i32_1 = arith.constant 0 : i32
    return %c0_i32, %c0_i32_0 : i32, i32
  }
  func.func @transform_4(%arg0: i32) -> (i32, i32) {
    %c0_i32 = arith.constant 0 : i32
    %c0_i32_0 = arith.constant 0 : i32
    return %arg0, %c0_i32 : i32, i32
  }
}

module attributes {stable_mosaic.version = 11 : i64} {
  func.func @_attn_kernel(%arg0: i32, %arg1: i32, %arg2: memref<1x16x128xbf16, #tpu.memory_space<vmem>>, %arg3: memref<1x64x128xbf16, #tpu.memory_space<vmem>>, %arg4: memref<1x64x128xbf16, #tpu.memory_space<vmem>>, %arg5: memref<1x1x64xf32, #tpu.memory_space<vmem>>, %arg6: memref<1x16x128xf32, #tpu.memory_space<vmem>>) attributes {dimension_semantics = [#tpu.dimension_semantics<parallel>, #tpu.dimension_semantics<parallel>], iteration_bounds = array<i64: 2, 1>, scalar_prefetch = 0 : i64, scratch_operands = 0 : i64, tpu.core_type = #tpu.core_type<tc>, window_params = [{transform_indices = @transform_0, window_bounds = array<i64: 1, 16, 128>}, {transform_indices = @transform_1, window_bounds = array<i64: 1, 64, 128>}, {transform_indices = @transform_2, window_bounds = array<i64: 1, 64, 128>}, {transform_indices = @transform_3, window_bounds = array<i64: 1, 1, 64>}, {transform_indices = @transform_4, window_bounds = array<i64: 1, 16, 128>}]} {
    %c0 = arith.constant 0 : index
    %c0_0 = arith.constant 0 : index
    %c0_1 = arith.constant 0 : index
    %0 = vector.load %arg2[%c0, %c0_0, %c0_1] : memref<1x16x128xbf16, #tpu.memory_space<vmem>>, vector<1x16x128xbf16>
    %1 = vector.shape_cast %0 : vector<1x16x128xbf16> to vector<16x128xbf16>
    %c0_2 = arith.constant 0 : index
    %c0_3 = arith.constant 0 : index
    %c0_4 = arith.constant 0 : index
    %2 = vector.load %arg3[%c0_2, %c0_3, %c0_4] : memref<1x64x128xbf16, #tpu.memory_space<vmem>>, vector<1x64x128xbf16>
    %3 = vector.shape_cast %2 : vector<1x64x128xbf16> to vector<64x128xbf16>
    %c0_5 = arith.constant 0 : index
    %c0_6 = arith.constant 0 : index
    %c0_7 = arith.constant 0 : index
    %4 = vector.load %arg4[%c0_5, %c0_6, %c0_7] : memref<1x64x128xbf16, #tpu.memory_space<vmem>>, vector<1x64x128xbf16>
    %5 = vector.shape_cast %4 : vector<1x64x128xbf16> to vector<64x128xbf16>
    %c0_8 = arith.constant 0 : index
    %c0_9 = arith.constant 0 : index
    %c0_10 = arith.constant 0 : index
    %6 = vector.load %arg5[%c0_8, %c0_9, %c0_10] : memref<1x1x64xf32, #tpu.memory_space<vmem>>, vector<1x1x64xf32>
    %7 = vector.shape_cast %6 : vector<1x1x64xf32> to vector<1x64xf32>
    %8 = vector.extract_strided_slice %1 {offsets = [0, 0], sizes = [16, 32], strides = [1, 1]} : vector<16x128xbf16> to vector<16x32xbf16>
    %9 = vector.extract_strided_slice %3 {offsets = [0, 0], sizes = [64, 32], strides = [1, 1]} : vector<64x128xbf16> to vector<64x32xbf16>
    %cst = arith.constant dense<0.000000e+00> : vector<16x64xf32>
    %10 = tpu.matmul %8, %9, %cst {dimension_numbers = #tpu.dot_dimension_numbers<[1], [1], [0], [0], [0, 0, 1, 0], [], []>} : vector<16x32xbf16>, vector<64x32xbf16>, vector<16x64xf32> -> vector<16x64xf32>
    %cst_11 = arith.constant 0.176776692 : f32
    %11 = vector.broadcast %cst_11 : f32 to vector<16x64xf32>
    %12 = arith.mulf %10, %11 : vector<16x64xf32>
    %13 = vector.broadcast %7 : vector<1x64xf32> to vector<16x64xf32>
    %14 = arith.addf %12, %13 : vector<16x64xf32>
    %cst_12 = arith.constant dense<0xFF800000> : vector<16xf32>
    %15 = vector.multi_reduction <maximumf>, %14, %cst_12 [1] : vector<16x64xf32> to vector<16xf32>
    %16 = vector.shape_cast %15 : vector<16xf32> to vector<16x1xf32>
    %17 = vector.broadcast %16 : vector<16x1xf32> to vector<16x64xf32>
    %18 = arith.subf %14, %17 : vector<16x64xf32>
    %19 = math.exp %18 : vector<16x64xf32>
    %cst_13 = arith.constant dense<0.000000e+00> : vector<16xf32>
    %20 = vector.multi_reduction <add>, %19, %cst_13 [1] : vector<16x64xf32> to vector<16xf32>
    %21 = vector.shape_cast %20 : vector<16xf32> to vector<16x1xf32>
    %22 = tpu.reciprocal %21 {approx = true} : vector<16x1xf32> -> vector<16x1xf32>
    %23 = vector.broadcast %22 : vector<16x1xf32> to vector<16x64xf32>
    %24 = arith.mulf %19, %23 : vector<16x64xf32>
    %25 = arith.truncf %24 : vector<16x64xf32> to vector<16x64xbf16>
    %26 = vector.extract_strided_slice %5 {offsets = [0, 0], sizes = [64, 32], strides = [1, 1]} : vector<64x128xbf16> to vector<64x32xbf16>
    %cst_14 = arith.constant dense<0.000000e+00> : vector<16x32xf32>
    %27 = tpu.matmul %25, %26, %cst_14 {dimension_numbers = #tpu.dot_dimension_numbers<[1], [0], [0], [1], [0, 0, 1, 1], [], []>} : vector<16x64xbf16>, vector<64x32xbf16>, vector<16x32xf32> -> vector<16x32xf32>
    %28 = vector.extract_strided_slice %1 {offsets = [0, 32], sizes = [16, 32], strides = [1, 1]} : vector<16x128xbf16> to vector<16x32xbf16>
    %29 = vector.extract_strided_slice %3 {offsets = [0, 32], sizes = [64, 32], strides = [1, 1]} : vector<64x128xbf16> to vector<64x32xbf16>
    %cst_15 = arith.constant dense<0.000000e+00> : vector<16x64xf32>
    %30 = tpu.matmul %28, %29, %cst_15 {dimension_numbers = #tpu.dot_dimension_numbers<[1], [1], [0], [0], [0, 0, 1, 0], [], []>} : vector<16x32xbf16>, vector<64x32xbf16>, vector<16x64xf32> -> vector<16x64xf32>
    %cst_16 = arith.constant 0.176776692 : f32
    %31 = vector.broadcast %cst_16 : f32 to vector<16x64xf32>
    %32 = arith.mulf %30, %31 : vector<16x64xf32>
    %33 = vector.broadcast %7 : vector<1x64xf32> to vector<16x64xf32>
    %34 = arith.addf %32, %33 : vector<16x64xf32>
    %cst_17 = arith.constant dense<0xFF800000> : vector<16xf32>
    %35 = vector.multi_reduction <maximumf>, %34, %cst_17 [1] : vector<16x64xf32> to vector<16xf32>
    %36 = vector.shape_cast %35 : vector<16xf32> to vector<16x1xf32>
    %37 = vector.broadcast %36 : vector<16x1xf32> to vector<16x64xf32>
    %38 = arith.subf %34, %37 : vector<16x64xf32>
    %39 = math.exp %38 : vector<16x64xf32>
    %cst_18 = arith.constant dense<0.000000e+00> : vector<16xf32>
    %40 = vector.multi_reduction <add>, %39, %cst_18 [1] : vector<16x64xf32> to vector<16xf32>
    %41 = vector.shape_cast %40 : vector<16xf32> to vector<16x1xf32>
    %42 = tpu.reciprocal %41 {approx = true} : vector<16x1xf32> -> vector<16x1xf32>
    %43 = vector.broadcast %42 : vector<16x1xf32> to vector<16x64xf32>
    %44 = arith.mulf %39, %43 : vector<16x64xf32>
    %45 = arith.truncf %44 : vector<16x64xf32> to vector<16x64xbf16>
    %46 = vector.extract_strided_slice %5 {offsets = [0, 32], sizes = [64, 32], strides = [1, 1]} : vector<64x128xbf16> to vector<64x32xbf16>
    %cst_19 = arith.constant dense<0.000000e+00> : vector<16x32xf32>
    %47 = tpu.matmul %45, %46, %cst_19 {dimension_numbers = #tpu.dot_dimension_numbers<[1], [0], [0], [1], [0, 0, 1, 1], [], []>} : vector<16x64xbf16>, vector<64x32xbf16>, vector<16x32xf32> -> vector<16x32xf32>
    %48 = vector.extract_strided_slice %1 {offsets = [0, 64], sizes = [16, 32], strides = [1, 1]} : vector<16x128xbf16> to vector<16x32xbf16>
    %49 = vector.extract_strided_slice %3 {offsets = [0, 64], sizes = [64, 32], strides = [1, 1]} : vector<64x128xbf16> to vector<64x32xbf16>
    %cst_20 = arith.constant dense<0.000000e+00> : vector<16x64xf32>
    %50 = tpu.matmul %48, %49, %cst_20 {dimension_numbers = #tpu.dot_dimension_numbers<[1], [1], [0], [0], [0, 0, 1, 0], [], []>} : vector<16x32xbf16>, vector<64x32xbf16>, vector<16x64xf32> -> vector<16x64xf32>
    %cst_21 = arith.constant 0.176776692 : f32
    %51 = vector.broadcast %cst_21 : f32 to vector<16x64xf32>
    %52 = arith.mulf %50, %51 : vector<16x64xf32>
    %53 = vector.broadcast %7 : vector<1x64xf32> to vector<16x64xf32>
    %54 = arith.addf %52, %53 : vector<16x64xf32>
    %cst_22 = arith.constant dense<0xFF800000> : vector<16xf32>
    %55 = vector.multi_reduction <maximumf>, %54, %cst_22 [1] : vector<16x64xf32> to vector<16xf32>
    %56 = vector.shape_cast %55 : vector<16xf32> to vector<16x1xf32>
    %57 = vector.broadcast %56 : vector<16x1xf32> to vector<16x64xf32>
    %58 = arith.subf %54, %57 : vector<16x64xf32>
    %59 = math.exp %58 : vector<16x64xf32>
    %cst_23 = arith.constant dense<0.000000e+00> : vector<16xf32>
    %60 = vector.multi_reduction <add>, %59, %cst_23 [1] : vector<16x64xf32> to vector<16xf32>
    %61 = vector.shape_cast %60 : vector<16xf32> to vector<16x1xf32>
    %62 = tpu.reciprocal %61 {approx = true} : vector<16x1xf32> -> vector<16x1xf32>
    %63 = vector.broadcast %62 : vector<16x1xf32> to vector<16x64xf32>
    %64 = arith.mulf %59, %63 : vector<16x64xf32>
    %65 = arith.truncf %64 : vector<16x64xf32> to vector<16x64xbf16>
    %66 = vector.extract_strided_slice %5 {offsets = [0, 64], sizes = [64, 32], strides = [1, 1]} : vector<64x128xbf16> to vector<64x32xbf16>
    %cst_24 = arith.constant dense<0.000000e+00> : vector<16x32xf32>
    %67 = tpu.matmul %65, %66, %cst_24 {dimension_numbers = #tpu.dot_dimension_numbers<[1], [0], [0], [1], [0, 0, 1, 1], [], []>} : vector<16x64xbf16>, vector<64x32xbf16>, vector<16x32xf32> -> vector<16x32xf32>
    %68 = vector.extract_strided_slice %1 {offsets = [0, 96], sizes = [16, 32], strides = [1, 1]} : vector<16x128xbf16> to vector<16x32xbf16>
    %69 = vector.extract_strided_slice %3 {offsets = [0, 96], sizes = [64, 32], strides = [1, 1]} : vector<64x128xbf16> to vector<64x32xbf16>
    %cst_25 = arith.constant dense<0.000000e+00> : vector<16x64xf32>
    %70 = tpu.matmul %68, %69, %cst_25 {dimension_numbers = #tpu.dot_dimension_numbers<[1], [1], [0], [0], [0, 0, 1, 0], [], []>} : vector<16x32xbf16>, vector<64x32xbf16>, vector<16x64xf32> -> vector<16x64xf32>
    %cst_26 = arith.constant 0.176776692 : f32
    %71 = vector.broadcast %cst_26 : f32 to vector<16x64xf32>
    %72 = arith.mulf %70, %71 : vector<16x64xf32>
    %73 = vector.broadcast %7 : vector<1x64xf32> to vector<16x64xf32>
    %74 = arith.addf %72, %73 : vector<16x64xf32>
    %cst_27 = arith.constant dense<0xFF800000> : vector<16xf32>
    %75 = vector.multi_reduction <maximumf>, %74, %cst_27 [1] : vector<16x64xf32> to vector<16xf32>
    %76 = vector.shape_cast %75 : vector<16xf32> to vector<16x1xf32>
    %77 = vector.broadcast %76 : vector<16x1xf32> to vector<16x64xf32>
    %78 = arith.subf %74, %77 : vector<16x64xf32>
    %79 = math.exp %78 : vector<16x64xf32>
    %cst_28 = arith.constant dense<0.000000e+00> : vector<16xf32>
    %80 = vector.multi_reduction <add>, %79, %cst_28 [1] : vector<16x64xf32> to vector<16xf32>
    %81 = vector.shape_cast %80 : vector<16xf32> to vector<16x1xf32>
    %82 = tpu.reciprocal %81 {approx = true} : vector<16x1xf32> -> vector<16x1xf32>
    %83 = vector.broadcast %82 : vector<16x1xf32> to vector<16x64xf32>
    %84 = arith.mulf %79, %83 : vector<16x64xf32>
    %85 = arith.truncf %84 : vector<16x64xf32> to vector<16x64xbf16>
    %86 = vector.extract_strided_slice %5 {offsets = [0, 96], sizes = [64, 32], strides = [1, 1]} : vector<64x128xbf16> to vector<64x32xbf16>
    %cst_29 = arith.constant dense<0.000000e+00> : vector<16x32xf32>
    %87 = tpu.matmul %85, %86, %cst_29 {dimension_numbers = #tpu.dot_dimension_numbers<[1], [0], [0], [1], [0, 0, 1, 1], [], []>} : vector<16x64xbf16>, vector<64x32xbf16>, vector<16x32xf32> -> vector<16x32xf32>
    %88 = tpu.concatenate %27, %47, %67, %87 in 1 : vector<16x32xf32>, vector<16x32xf32>, vector<16x32xf32>, vector<16x32xf32> -> vector<16x128xf32>
    %c0_30 = arith.constant 0 : index
    %c0_31 = arith.constant 0 : index
    %c0_32 = arith.constant 0 : index
    %89 = vector.load %arg6[%c0_30, %c0_31, %c0_32] : memref<1x16x128xf32, #tpu.memory_space<vmem>>, vector<1x16x128xf32>
    %90 = vector.shape_cast %89 : vector<1x16x128xf32> to vector<16x128xf32>
    %91 = vector.shape_cast %88 : vector<16x128xf32> to vector<1x16x128xf32>
    tpu.vector_store %arg6[%c0_30, %c0_31, %c0_32], %91 {strides = array<i32>} : memref<1x16x128xf32, #tpu.memory_space<vmem>>, vector<1x16x128xf32>,
    return
  }
  func.func @transform_0(%arg0: i32, %arg1: i32) -> (i32, i32, i32) {
    %c0_i32 = arith.constant 0 : i32
    %c0_i32_0 = arith.constant 0 : i32
    return %arg0, %arg1, %c0_i32 : i32, i32, i32
  }
  func.func @transform_1(%arg0: i32, %arg1: i32) -> (i32, i32, i32) {
    %c0_i32 = arith.constant 0 : i32
    %c0_i32_0 = arith.constant 0 : i32
    %c0_i32_1 = arith.constant 0 : i32
    return %arg0, %c0_i32, %c0_i32_0 : i32, i32, i32
  }
  func.func @transform_2(%arg0: i32, %arg1: i32) -> (i32, i32, i32) {
    %c0_i32 = arith.constant 0 : i32
    %c0_i32_0 = arith.constant 0 : i32
    %c0_i32_1 = arith.constant 0 : i32
    return %arg0, %c0_i32, %c0_i32_0 : i32, i32, i32
  }
  func.func @transform_3(%arg0: i32, %arg1: i32) -> (i32, i32, i32) {
    %c0_i32 = arith.constant 0 : i32
    %c0_i32_0 = arith.constant 0 : i32
    %c0_i32_1 = arith.constant 0 : i32
    return %arg0, %c0_i32, %c0_i32_0 : i32, i32, i32
  }
  func.func @transform_4(%arg0: i32, %arg1: i32) -> (i32, i32, i32) {
    %c0_i32 = arith.constant 0 : i32
    %c0_i32_0 = arith.constant 0 : i32
    return %arg0, %arg1, %c0_i32 : i32, i32, i32
  }
}

module attributes {stable_mosaic.version = 11 : i64} {
  func.func @_ffn_ln_kernel(%arg0: i32, %arg1: memref<32x128xf32, #tpu.memory_space<vmem>>, %arg2: memref<128x256xbf16, #tpu.memory_space<vmem>>, %arg3: memref<1x256xf32, #tpu.memory_space<vmem>>, %arg4: memref<256x128xbf16, #tpu.memory_space<vmem>>, %arg5: memref<1x128xf32, #tpu.memory_space<vmem>>, %arg6: memref<1x128xf32, #tpu.memory_space<vmem>>, %arg7: memref<1x128xf32, #tpu.memory_space<vmem>>, %arg8: memref<32x128xf32, #tpu.memory_space<vmem>>) attributes {dimension_semantics = [#tpu.dimension_semantics<parallel>], iteration_bounds = array<i64: 1>, scalar_prefetch = 0 : i64, scratch_operands = 0 : i64, tpu.core_type = #tpu.core_type<tc>, window_params = [{transform_indices = @transform_0, window_bounds = array<i64: 32, 128>}, {pipeline_mode = #tpu.pipeline_mode<synchronous>, transform_indices = @transform_1, window_bounds = array<i64: 128, 256>}, {pipeline_mode = #tpu.pipeline_mode<synchronous>, transform_indices = @transform_2, window_bounds = array<i64: 1, 256>}, {pipeline_mode = #tpu.pipeline_mode<synchronous>, transform_indices = @transform_3, window_bounds = array<i64: 256, 128>}, {pipeline_mode = #tpu.pipeline_mode<synchronous>, transform_indices = @transform_4, window_bounds = array<i64: 1, 128>}, {pipeline_mode = #tpu.pipeline_mode<synchronous>, transform_indices = @transform_5, window_bounds = array<i64: 1, 128>}, {pipeline_mode = #tpu.pipeline_mode<synchronous>, transform_indices = @transform_6, window_bounds = array<i64: 1, 128>}, {transform_indices = @transform_7, window_bounds = array<i64: 32, 128>}]} {
    %c0 = arith.constant 0 : index
    %c0_0 = arith.constant 0 : index
    %0 = vector.load %arg1[%c0, %c0_0] : memref<32x128xf32, #tpu.memory_space<vmem>>, vector<32x128xf32>
    %1 = arith.truncf %0 : vector<32x128xf32> to vector<32x128xbf16>
    %c0_1 = arith.constant 0 : index
    %c0_2 = arith.constant 0 : index
    %2 = vector.load %arg2[%c0_1, %c0_2] : memref<128x256xbf16, #tpu.memory_space<vmem>>, vector<128x256xbf16>
    %cst = arith.constant dense<0.000000e+00> : vector<32x256xf32>
    %3 = tpu.matmul %1, %2, %cst {dimension_numbers = #tpu.dot_dimension_numbers<[1], [0], [0], [1], [0, 0, 1, 1], [], []>} : vector<32x128xbf16>, vector<128x256xbf16>, vector<32x256xf32> -> vector<32x256xf32>
    %c0_3 = arith.constant 0 : index
    %c0_4 = arith.constant 0 : index
    %4 = vector.load %arg3[%c0_3, %c0_4] : memref<1x256xf32, #tpu.memory_space<vmem>>, vector<1x256xf32>
    %5 = vector.broadcast %4 : vector<1x256xf32> to vector<32x256xf32>
    %6 = arith.addf %3, %5 : vector<32x256xf32>
    %cst_5 = arith.constant 0.000000e+00 : f32
    %7 = vector.broadcast %cst_5 : f32 to vector<32x256xf32>
    %8 = arith.maximumf %6, %7 : vector<32x256xf32>
    %9 = arith.truncf %8 : vector<32x256xf32> to vector<32x256xbf16>
    %c0_6 = arith.constant 0 : index
    %c0_7 = arith.constant 0 : index
    %10 = vector.load %arg4[%c0_6, %c0_7] : memref<256x128xbf16, #tpu.memory_space<vmem>>, vector<256x128xbf16>
    %cst_8 = arith.constant dense<0.000000e+00> : vector<32x128xf32>
    %11 = tpu.matmul %9, %10, %cst_8 {dimension_numbers = #tpu.dot_dimension_numbers<[1], [0], [0], [1], [0, 0, 1, 1], [], []>} : vector<32x256xbf16>, vector<256x128xbf16>, vector<32x128xf32> -> vector<32x128xf32>
    %c0_9 = arith.constant 0 : index
    %c0_10 = arith.constant 0 : index
    %12 = vector.load %arg5[%c0_9, %c0_10] : memref<1x128xf32, #tpu.memory_space<vmem>>, vector<1x128xf32>
    %13 = vector.broadcast %12 : vector<1x128xf32> to vector<32x128xf32>
    %14 = arith.addf %11, %13 : vector<32x128xf32>
    %15 = arith.addf %0, %14 : vector<32x128xf32>
    %c0_11 = arith.constant 0 : index
    %c0_12 = arith.constant 0 : index
    %16 = vector.load %arg6[%c0_11, %c0_12] : memref<1x128xf32, #tpu.memory_space<vmem>>, vector<1x128xf32>
    %c0_13 = arith.constant 0 : index
    %c0_14 = arith.constant 0 : index
    %17 = vector.load %arg7[%c0_13, %c0_14] : memref<1x128xf32, #tpu.memory_space<vmem>>, vector<1x128xf32>
    %cst_15 = arith.constant dense<0.000000e+00> : vector<32xf32>
    %18 = vector.multi_reduction <add>, %15, %cst_15 [1] : vector<32x128xf32> to vector<32xf32>
    %19 = vector.shape_cast %18 : vector<32xf32> to vector<32x1xf32>
    %cst_16 = arith.constant 1.280000e+02 : f32
    %20 = vector.broadcast %cst_16 : f32 to vector<32x1xf32>
    %21 = arith.divf %19, %20 : vector<32x1xf32>
    %22 = vector.broadcast %21 : vector<32x1xf32> to vector<32x128xf32>
    %23 = arith.subf %15, %22 : vector<32x128xf32>
    %24 = arith.mulf %23, %23 : vector<32x128xf32>
    %cst_17 = arith.constant dense<0.000000e+00> : vector<32xf32>
    %25 = vector.multi_reduction <add>, %24, %cst_17 [1] : vector<32x128xf32> to vector<32xf32>
    %26 = vector.shape_cast %25 : vector<32xf32> to vector<32x1xf32>
    %cst_18 = arith.constant 1.280000e+02 : f32
    %27 = vector.broadcast %cst_18 : f32 to vector<32x1xf32>
    %28 = arith.divf %26, %27 : vector<32x1xf32>
    %29 = vector.broadcast %21 : vector<32x1xf32> to vector<32x128xf32>
    %30 = arith.subf %15, %29 : vector<32x128xf32>
    %cst_19 = arith.constant 9.99999974E-6 : f32
    %31 = vector.broadcast %cst_19 : f32 to vector<32x1xf32>
    %32 = arith.addf %28, %31 : vector<32x1xf32>
    %33 = math.rsqrt %32 : vector<32x1xf32>
    %34 = vector.broadcast %33 : vector<32x1xf32> to vector<32x128xf32>
    %35 = arith.mulf %30, %34 : vector<32x128xf32>
    %36 = vector.broadcast %16 : vector<1x128xf32> to vector<32x128xf32>
    %37 = arith.mulf %35, %36 : vector<32x128xf32>
    %38 = vector.broadcast %17 : vector<1x128xf32> to vector<32x128xf32>
    %39 = arith.addf %37, %38 : vector<32x128xf32>
    %c0_20 = arith.constant 0 : index
    %c0_21 = arith.constant 0 : index
    %40 = vector.load %arg8[%c0_20, %c0_21] : memref<32x128xf32, #tpu.memory_space<vmem>>, vector<32x128xf32>
    tpu.vector_store %arg8[%c0_20, %c0_21], %39 {strides = array<i32>} : memref<32x128xf32, #tpu.memory_space<vmem>>, vector<32x128xf32>,
    return
  }
  func.func @transform_0(%arg0: i32) -> (i32, i32) {
    %c0_i32 = arith.constant 0 : i32
    %c0_i32_0 = arith.constant 0 : i32
    return %arg0, %c0_i32 : i32, i32
  }
  func.func @transform_1(%arg0: i32) -> (i32, i32) {
    %c0_i32 = arith.constant 0 : i32
    %c0_i32_0 = arith.constant 0 : i32
    %c0_i32_1 = arith.constant 0 : i32
    return %c0_i32, %c0_i32_0 : i32, i32
  }
  func.func @transform_2(%arg0: i32) -> (i32, i32) {
    %c0_i32 = arith.constant 0 : i32
    %c0_i32_0 = arith.constant 0 : i32
    %c0_i32_1 = arith.constant 0 : i32
    return %c0_i32, %c0_i32_0 : i32, i32
  }
  func.func @transform_3(%arg0: i32) -> (i32, i32) {
    %c0_i32 = arith.constant 0 : i32
    %c0_i32_0 = arith.constant 0 : i32
    %c0_i32_1 = arith.constant 0 : i32
    return %c0_i32, %c0_i32_0 : i32, i32
  }
  func.func @transform_4(%arg0: i32) -> (i32, i32) {
    %c0_i32 = arith.constant 0 : i32
    %c0_i32_0 = arith.constant 0 : i32
    %c0_i32_1 = arith.constant 0 : i32
    return %c0_i32, %c0_i32_0 : i32, i32
  }
  func.func @transform_5(%arg0: i32) -> (i32, i32) {
    %c0_i32 = arith.constant 0 : i32
    %c0_i32_0 = arith.constant 0 : i32
    %c0_i32_1 = arith.constant 0 : i32
    return %c0_i32, %c0_i32_0 : i32, i32
  }
  func.func @transform_6(%arg0: i32) -> (i32, i32) {
    %c0_i32 = arith.constant 0 : i32
    %c0_i32_0 = arith.constant 0 : i32
    %c0_i32_1 = arith.constant 0 : i32
    return %c0_i32, %c0_i32_0 : i32, i32
  }
  func.func @transform_7(%arg0: i32) -> (i32, i32) {
    %c0_i32 = arith.constant 0 : i32
    %c0_i32_0 = arith.constant 0 : i32
    return %arg0, %c0_i32 : i32, i32
  }
}

module attributes {stable_mosaic.version = 11 : i64} {
  func.func @_ln_kernel(%arg0: i32, %arg1: memref<32x128xf32, #tpu.memory_space<vmem>>, %arg2: memref<1x128xf32, #tpu.memory_space<vmem>>, %arg3: memref<1x128xf32, #tpu.memory_space<vmem>>, %arg4: memref<32x128xf32, #tpu.memory_space<vmem>>) attributes {dimension_semantics = [#tpu.dimension_semantics<parallel>], iteration_bounds = array<i64: 1>, scalar_prefetch = 0 : i64, scratch_operands = 0 : i64, tpu.core_type = #tpu.core_type<tc>, window_params = [{transform_indices = @transform_0, window_bounds = array<i64: 32, 128>}, {pipeline_mode = #tpu.pipeline_mode<synchronous>, transform_indices = @transform_1, window_bounds = array<i64: 1, 128>}, {pipeline_mode = #tpu.pipeline_mode<synchronous>, transform_indices = @transform_2, window_bounds = array<i64: 1, 128>}, {transform_indices = @transform_3, window_bounds = array<i64: 32, 128>}]} {
    %c0 = arith.constant 0 : index
    %c0_0 = arith.constant 0 : index
    %0 = vector.load %arg1[%c0, %c0_0] : memref<32x128xf32, #tpu.memory_space<vmem>>, vector<32x128xf32>
    %c0_1 = arith.constant 0 : index
    %c0_2 = arith.constant 0 : index
    %1 = vector.load %arg2[%c0_1, %c0_2] : memref<1x128xf32, #tpu.memory_space<vmem>>, vector<1x128xf32>
    %c0_3 = arith.constant 0 : index
    %c0_4 = arith.constant 0 : index
    %2 = vector.load %arg3[%c0_3, %c0_4] : memref<1x128xf32, #tpu.memory_space<vmem>>, vector<1x128xf32>
    %cst = arith.constant dense<0.000000e+00> : vector<32xf32>
    %3 = vector.multi_reduction <add>, %0, %cst [1] : vector<32x128xf32> to vector<32xf32>
    %4 = vector.shape_cast %3 : vector<32xf32> to vector<32x1xf32>
    %cst_5 = arith.constant 1.280000e+02 : f32
    %5 = vector.broadcast %cst_5 : f32 to vector<32x1xf32>
    %6 = arith.divf %4, %5 : vector<32x1xf32>
    %7 = vector.broadcast %6 : vector<32x1xf32> to vector<32x128xf32>
    %8 = arith.subf %0, %7 : vector<32x128xf32>
    %9 = arith.mulf %8, %8 : vector<32x128xf32>
    %cst_6 = arith.constant dense<0.000000e+00> : vector<32xf32>
    %10 = vector.multi_reduction <add>, %9, %cst_6 [1] : vector<32x128xf32> to vector<32xf32>
    %11 = vector.shape_cast %10 : vector<32xf32> to vector<32x1xf32>
    %cst_7 = arith.constant 1.280000e+02 : f32
    %12 = vector.broadcast %cst_7 : f32 to vector<32x1xf32>
    %13 = arith.divf %11, %12 : vector<32x1xf32>
    %14 = vector.broadcast %6 : vector<32x1xf32> to vector<32x128xf32>
    %15 = arith.subf %0, %14 : vector<32x128xf32>
    %cst_8 = arith.constant 9.99999974E-6 : f32
    %16 = vector.broadcast %cst_8 : f32 to vector<32x1xf32>
    %17 = arith.addf %13, %16 : vector<32x1xf32>
    %18 = math.rsqrt %17 : vector<32x1xf32>
    %19 = vector.broadcast %18 : vector<32x1xf32> to vector<32x128xf32>
    %20 = arith.mulf %15, %19 : vector<32x128xf32>
    %21 = vector.broadcast %1 : vector<1x128xf32> to vector<32x128xf32>
    %22 = arith.mulf %20, %21 : vector<32x128xf32>
    %23 = vector.broadcast %2 : vector<1x128xf32> to vector<32x128xf32>
    %24 = arith.addf %22, %23 : vector<32x128xf32>
    %c0_9 = arith.constant 0 : index
    %c0_10 = arith.constant 0 : index
    %25 = vector.load %arg4[%c0_9, %c0_10] : memref<32x128xf32, #tpu.memory_space<vmem>>, vector<32x128xf32>
    tpu.vector_store %arg4[%c0_9, %c0_10], %24 {strides = array<i32>} : memref<32x128xf32, #tpu.memory_space<vmem>>, vector<32x128xf32>,
    return
  }
  func.func @transform_0(%arg0: i32) -> (i32, i32) {
    %c0_i32 = arith.constant 0 : i32
    %c0_i32_0 = arith.constant 0 : i32
    return %arg0, %c0_i32 : i32, i32
  }
  func.func @transform_1(%arg0: i32) -> (i32, i32) {
    %c0_i32 = arith.constant 0 : i32
    %c0_i32_0 = arith.constant 0 : i32
    %c0_i32_1 = arith.constant 0 : i32
    return %c0_i32, %c0_i32_0 : i32, i32
  }
  func.func @transform_2(%arg0: i32) -> (i32, i32) {
    %c0_i32 = arith.constant 0 : i32
    %c0_i32_0 = arith.constant 0 : i32
    %c0_i32_1 = arith.constant 0 : i32
    return %c0_i32, %c0_i32_0 : i32, i32
  }
  func.func @transform_3(%arg0: i32) -> (i32, i32) {
    %c0_i32 = arith.constant 0 : i32
    %c0_i32_0 = arith.constant 0 : i32
    return %arg0, %c0_i32 : i32, i32
  }
}

</mosaic_0001>

<llo_original>
// kernel: transformer_forward.27
$region0: #{transformer_forward.27}
  #allocation0 [shape = 'u32[]', space=smem, size = 0x4, offset = 0x4, fixed_abs, tag = 'smem constant byte address 0x4 - core index']
  #allocation1 [shape = 'u32[144,128]{1,0:T(1,128)}', space=vmem, size = 0x12000, scoped, tag = 'internal scratch']
  %s0 = inlined_call_operand.vmem [shape: f32[128,128], index: 0, kind: input, shape index: {}]
  %s1 = inlined_call_operand.vmem [shape: f32[128,128], index: 1, kind: input, shape index: {}]
  %s2 = inlined_call_operand.vmem [shape: bf16[128,128], index: 2, kind: input, shape index: {}]
  %s3 = inlined_call_operand.vmem [shape: f32[1,128], index: 3, kind: input, shape index: {}]
  %s4 = inlined_call_operand.vmem [shape: f32[1,128], index: 4, kind: input, shape index: {}]
  %s5 = inlined_call_operand.vmem [shape: f32[1,128], index: 5, kind: input, shape index: {}]
  %s6 = inlined_call_operand.vmem [shape: f32[128,128], index: 6, kind: output, shape index: {}]
  %s7 = sld [smem:[#allocation0]]
  $region34: #{transformer_forward.27} parent=0
    _
  %s9 = ssub.s32 1, %s7
  %s10 = scalar_select 0, %s9, %s7
  // Predicated region
  $region2: #{transformer_forward.27} parent=0 // pred_check
    _
  $region3: #{transformer_forward.27} parent=0 // pred_check_branch
    %12 = sbr.rel (0) target = $region5
  $region4: #{transformer_forward.27} parent=0 // pred_region
    _
  $region5: #{transformer_forward.27} parent=0 // pred_fallthru
    _
  // Predicated region
  $region6: #{transformer_forward.27} parent=0 // pred_check
    _
  $region7: #{transformer_forward.27} parent=0 // pred_check_branch
    %14 = sbr.rel (0) target = $region9
  $region8: #{transformer_forward.27} parent=0 // pred_region
    _
  $region9: #{transformer_forward.27} parent=0 // pred_fallthru
    _
  // Predicated region
  $region10: #{transformer_forward.27} parent=0 // pred_check
    _
  $region11: #{transformer_forward.27} parent=0 // pred_check_branch
    %16 = sbr.rel (0) target = $region13
  $region12: #{transformer_forward.27} parent=0 // pred_region
    _
  $region13: #{transformer_forward.27} parent=0 // pred_fallthru
    _
  // Predicated region
  $region14: #{transformer_forward.27} parent=0 // pred_check
    _
  $region15: #{transformer_forward.27} parent=0 // pred_check_branch
    %18 = sbr.rel (0) target = $region17
  $region16: #{transformer_forward.27} parent=0 // pred_region
    _
  $region17: #{transformer_forward.27} parent=0 // pred_fallthru
    _
  // Predicated region
  $region18: #{transformer_forward.27} parent=0 // pred_check
    _
  $region19: #{transformer_forward.27} parent=0 // pred_check_branch
    %20 = sbr.rel (0) target = $region21
  $region20: #{transformer_forward.27} parent=0 // pred_region
    _
  $region21: #{transformer_forward.27} parent=0 // pred_fallthru
    _
  // Predicated region
  $region22: #{transformer_forward.27} parent=0 // pred_check
    _
  $region23: #{transformer_forward.27} parent=0 // pred_check_branch
    %22 = sbr.rel (0) target = $region25
  $region24: #{transformer_forward.27} parent=0 // pred_region
    _
  $region25: #{transformer_forward.27} parent=0 // pred_fallthru
    _
  %v24 = vld [vmem:[%s0] sm:$0xff]
  %v25 = vld [vmem:[%s0 + $0x8] sm:$0xff]
  %v26 = vld [vmem:[%s0 + $0x10] sm:$0xff]
  %v27 = vld [vmem:[%s0 + $0x18] sm:$0xff]
  %v28 = vld [vmem:[%s0 + $0x20] sm:$0xff]
  %v29 = vld [vmem:[%s0 + $0x28] sm:$0xff]
  %v30 = vld [vmem:[%s0 + $0x30] sm:$0xff]
  %v31 = vld [vmem:[%s0 + $0x38] sm:$0xff]
  %v32 = vld [vmem:[%s0 + $0x40] sm:$0xff]
  %v33 = vld [vmem:[%s0 + $0x48] sm:$0xff]
  %v34 = vld [vmem:[%s0 + $0x50] sm:$0xff]
  %v35 = vld [vmem:[%s0 + $0x58] sm:$0xff]
  %v36 = vld [vmem:[%s0 + $0x60] sm:$0xff]
  %v37 = vld [vmem:[%s0 + $0x68] sm:$0xff]
  %v38 = vld [vmem:[%s0 + $0x70] sm:$0xff]
  %v39 = vld [vmem:[%s0 + $0x78] sm:$0xff]
  %v40 = vpack.c.bf16 %v25, %v24
  %v41 = vpack.c.bf16 %v27, %v26
  %v42 = vpack.c.bf16 %v29, %v28
  %v43 = vpack.c.bf16 %v31, %v30
  %v44 = vpack.c.bf16 %v33, %v32
  %v45 = vpack.c.bf16 %v35, %v34
  %v46 = vpack.c.bf16 %v37, %v36
  %v47 = vpack.c.bf16 %v39, %v38
  %v48 = vld [vmem:[%s2] sm:$0xf]
  %v49 = vld [vmem:[%s2 + $0x4] sm:$0xf]
  %v50 = vld [vmem:[%s2 + $0x8] sm:$0xf]
  %v51 = vld [vmem:[%s2 + $0xc] sm:$0xf]
  %v52 = vld [vmem:[%s2 + $0x10] sm:$0xf]
  %v53 = vld [vmem:[%s2 + $0x14] sm:$0xf]
  %v54 = vld [vmem:[%s2 + $0x18] sm:$0xf]
  %v55 = vld [vmem:[%s2 + $0x1c] sm:$0xf]
  %v56 = vld [vmem:[%s2 + $0x20] sm:$0xf]
  %v57 = vld [vmem:[%s2 + $0x24] sm:$0xf]
  %v58 = vld [vmem:[%s2 + $0x28] sm:$0xf]
  %v59 = vld [vmem:[%s2 + $0x2c] sm:$0xf]
  %v60 = vld [vmem:[%s2 + $0x30] sm:$0xf]
  %v61 = vld [vmem:[%s2 + $0x34] sm:$0xf]
  %v62 = vld [vmem:[%s2 + $0x38] sm:$0xf]
  %v63 = vld [vmem:[%s2 + $0x3c] sm:$0xf]
  %v64 = vld [vmem:[%s3] sm:$0x1]
  %v66 = vlaneseq
  %v67 = vshrl.u32 %v66, 7
  %v68 = vsub.s32 0, %v67
  %v69 = vrot.slane %v64, %v68
  %v87 = vunpack.c.l.b16 %v48
  %v88 = vunpack.c.l.b16 %v49
  %v89 = vunpack.c.l.b16 %v50
  %v90 = vunpack.c.l.b16 %v51
  %v91 = vunpack.c.l.b16 %v52
  %v92 = vunpack.c.l.b16 %v53
  %v93 = vunpack.c.l.b16 %v54
  %v94 = vunpack.c.l.b16 %v55
  %v95 = vunpack.c.l.b16 %v56
  %v96 = vunpack.c.l.b16 %v57
  %v97 = vunpack.c.l.b16 %v58
  %v98 = vunpack.c.l.b16 %v59
  %v99 = vunpack.c.l.b16 %v60
  %v100 = vunpack.c.l.b16 %v61
  %v101 = vunpack.c.l.b16 %v62
  %v102 = vunpack.c.l.b16 %v63
  %v103 = vpack.c.b16 %v88, %v87
  %v104 = vpack.c.b16 %v90, %v89
  %v105 = vpack.c.b16 %v92, %v91
  %v106 = vpack.c.b16 %v94, %v93
  %v107 = vpack.c.b16 %v96, %v95
  %v108 = vpack.c.b16 %v98, %v97
  %v109 = vpack.c.b16 %v100, %v99
  %v110 = vpack.c.b16 %v102, %v101
  %119 = vmatprep.subr.bf16.mxu0 0
  %120 = vmatpush1.bf16.msra.mxu0 %v103
  %121 = vmatprep.subr.bf16.mxu0 0
  %122 = vmatpush1.bf16.msra.mxu0 %v104
  %123 = vmatprep.subr.bf16.mxu0 0
  %124 = vmatpush1.bf16.msra.mxu0 %v105
  %125 = vmatprep.subr.bf16.mxu0 0
  %126 = vmatpush1.bf16.msra.mxu0 %v106
  %127 = vmatprep.subr.bf16.mxu0 0
  %128 = vmatpush1.bf16.msra.mxu0 %v107
  %129 = vmatprep.subr.bf16.mxu0 0
  %130 = vmatpush1.bf16.msra.mxu0 %v108
  %131 = vmatprep.subr.bf16.mxu0 0
  %132 = vmatpush1.bf16.msra.mxu0 %v109
  %133 = vmatprep.subr.bf16.mxu0 0
  %134 = vmatpush1.bf16.msra.mxu0 %v110
  %135 = vmatprep.subr.bf16.mxu0 0
  %136 = vmatpush1.bf16.msra.mxu0 0
  %137 = vmatprep.subr.bf16.mxu0 0
  %138 = vmatpush1.bf16.msra.mxu0 0
  %139 = vmatprep.subr.bf16.mxu0 0
  %140 = vmatpush1.bf16.msra.mxu0 0
  %141 = vmatprep.subr.bf16.mxu0 0
  %142 = vmatpush1.bf16.msra.mxu0 0
  %143 = vmatprep.subr.bf16.mxu0 0
  %144 = vmatpush1.bf16.msra.mxu0 0
  %145 = vmatprep.subr.bf16.mxu0 0
  %146 = vmatpush1.bf16.msra.mxu0 0
  %147 = vmatprep.subr.bf16.mxu0 0
  %148 = vmatpush1.bf16.msra.mxu0 0
  %149 = vmatprep.subr.bf16.mxu0 0
  %150 = vmatpush1.bf16.msra.mxu0 0
  %151 = vmatprep.mubr.bf16.mxu0 0
  %152 = vmatmul.mubr.bf16.gmra.mrb[0].mxu0 %v40
  %v153 = vpop.f32.mrb[0].mxu0
  %v154 = vadd.f32 %v69, %v153
  %v155 = vpop.f32.mrb[0].mxu0
  %v156 = vpop.f32.mrb[0].mxu0
  %v157 = vadd.f32 %v69, %v156
  %v158 = vpop.f32.mrb[0].mxu0
  %159 = vmatprep.mubr.bf16.mxu0 0
  %160 = vmatmul.mubr.bf16.gmra.mrb[0].mxu0 %v41
  %v161 = vpop.f32.mrb[0].mxu0
  %v162 = vadd.f32 %v69, %v161
  %v163 = vpop.f32.mrb[0].mxu0
  %v164 = vpop.f32.mrb[0].mxu0
  %v165 = vadd.f32 %v69, %v164
  %v166 = vpop.f32.mrb[0].mxu0
  %167 = vmatprep.mubr.bf16.mxu0 0
  %168 = vmatmul.mubr.bf16.gmra.mrb[0].mxu0 %v42
  %v169 = vpop.f32.mrb[0].mxu0
  %v170 = vadd.f32 %v69, %v169
  %v171 = vpop.f32.mrb[0].mxu0
  %v172 = vpop.f32.mrb[0].mxu0
  %v173 = vadd.f32 %v69, %v172
  %v174 = vpop.f32.mrb[0].mxu0
  %175 = vmatprep.mubr.bf16.mxu0 0
  %176 = vmatmul.mubr.bf16.gmra.mrb[0].mxu0 %v43
  %v177 = vpop.f32.mrb[0].mxu0
  %v178 = vadd.f32 %v69, %v177
  %v179 = vpop.f32.mrb[0].mxu0
  %v180 = vpop.f32.mrb[0].mxu0
  %v181 = vadd.f32 %v69, %v180
  %v182 = vpop.f32.mrb[0].mxu0
  %183 = vmatprep.mubr.bf16.mxu0 0
  %184 = vmatmul.mubr.bf16.gmra.mrb[0].mxu0 %v44
  %v185 = vpop.f32.mrb[0].mxu0
  %v186 = vadd.f32 %v69, %v185
  %v187 = vpop.f32.mrb[0].mxu0
  %v188 = vpop.f32.mrb[0].mxu0
  %v189 = vadd.f32 %v69, %v188
  %v190 = vpop.f32.mrb[0].mxu0
  %191 = vmatprep.mubr.bf16.mxu0 0
  %192 = vmatmul.mubr.bf16.gmra.mrb[0].mxu0 %v45
  %v193 = vpop.f32.mrb[0].mxu0
  %v194 = vadd.f32 %v69, %v193
  %v195 = vpop.f32.mrb[0].mxu0
  %v196 = vpop.f32.mrb[0].mxu0
  %v197 = vadd.f32 %v69, %v196
  %v198 = vpop.f32.mrb[0].mxu0
  %199 = vmatprep.mubr.bf16.mxu0 0
  %200 = vmatmul.mubr.bf16.gmra.mrb[0].mxu0 %v46
  %v201 = vpop.f32.mrb[0].mxu0
  %v202 = vadd.f32 %v69, %v201
  %v203 = vpop.f32.mrb[0].mxu0
  %v204 = vpop.f32.mrb[0].mxu0
  %v205 = vadd.f32 %v69, %v204
  %v206 = vpop.f32.mrb[0].mxu0
  %207 = vmatprep.mubr.bf16.mxu0 0
  %208 = vmatmul.mubr.bf16.gmra.mrb[0].mxu0 %v47
  %v209 = vpop.f32.mrb[0].mxu0
  %v210 = vadd.f32 %v69, %v209
  %v211 = vpop.f32.mrb[0].mxu0
  %v212 = vpop.f32.mrb[0].mxu0
  %v213 = vadd.f32 %v69, %v212
  %v214 = vpop.f32.mrb[0].mxu0
  %215 = vdwg.mxu0
  %v216 = vld [vmem:[%s1] sm:$0xff]
  %v217 = vld [vmem:[%s1 + $0x8] sm:$0xff]
  %v218 = vld [vmem:[%s1 + $0x10] sm:$0xff]
  %v219 = vld [vmem:[%s1 + $0x18] sm:$0xff]
  %v220 = vld [vmem:[%s1 + $0x20] sm:$0xff]
  %v221 = vld [vmem:[%s1 + $0x28] sm:$0xff]
  %v222 = vld [vmem:[%s1 + $0x30] sm:$0xff]
  %v223 = vld [vmem:[%s1 + $0x38] sm:$0xff]
  %v224 = vld [vmem:[%s1 + $0x40] sm:$0xff]
  %v225 = vld [vmem:[%s1 + $0x48] sm:$0xff]
  %v226 = vld [vmem:[%s1 + $0x50] sm:$0xff]
  %v227 = vld [vmem:[%s1 + $0x58] sm:$0xff]
  %v228 = vld [vmem:[%s1 + $0x60] sm:$0xff]
  %v229 = vld [vmem:[%s1 + $0x68] sm:$0xff]
  %v230 = vld [vmem:[%s1 + $0x70] sm:$0xff]
  %v231 = vld [vmem:[%s1 + $0x78] sm:$0xff]
  %v232 = vadd.f32 %v216, %v154
  %v233 = vadd.f32 %v217, %v157
  %v234 = vadd.f32 %v218, %v162
  %v235 = vadd.f32 %v219, %v165
  %v236 = vadd.f32 %v220, %v170
  %v237 = vadd.f32 %v221, %v173
  %v238 = vadd.f32 %v222, %v178
  %v239 = vadd.f32 %v223, %v181
  %v240 = vadd.f32 %v224, %v186
  %v241 = vadd.f32 %v225, %v189
  %v242 = vadd.f32 %v226, %v194
  %v243 = vadd.f32 %v227, %v197
  %v244 = vadd.f32 %v228, %v202
  %v245 = vadd.f32 %v229, %v205
  %v246 = vadd.f32 %v230, %v210
  %v247 = vadd.f32 %v231, %v213
  %v248 = vld [vmem:[%s4] sm:$0x1]
  %v249 = vld [vmem:[%s5] sm:$0x1]
  %250 = vadd.xlane.f32.xlu0 %v232
  %v251 = vpop.xlane.xlu0 %250
  %252 = vadd.xlane.f32.xlu0 %v233
  %v253 = vpop.xlane.xlu0 %252
  %254 = vadd.xlane.f32.xlu0 %v234
  %v255 = vpop.xlane.xlu0 %254
  %256 = vadd.xlane.f32.xlu0 %v235
  %v257 = vpop.xlane.xlu0 %256
  %258 = vadd.xlane.f32.xlu0 %v236
  %v259 = vpop.xlane.xlu0 %258
  %260 = vadd.xlane.f32.xlu0 %v237
  %v261 = vpop.xlane.xlu0 %260
  %262 = vadd.xlane.f32.xlu0 %v238
  %v263 = vpop.xlane.xlu0 %262
  %264 = vadd.xlane.f32.xlu0 %v239
  %v265 = vpop.xlane.xlu0 %264
  %266 = vadd.xlane.f32.xlu0 %v240
  %v267 = vpop.xlane.xlu0 %266
  %268 = vadd.xlane.f32.xlu0 %v241
  %v269 = vpop.xlane.xlu0 %268
  %270 = vadd.xlane.f32.xlu0 %v242
  %v271 = vpop.xlane.xlu0 %270
  %272 = vadd.xlane.f32.xlu0 %v243
  %v273 = vpop.xlane.xlu0 %272
  %274 = vadd.xlane.f32.xlu0 %v244
  %v275 = vpop.xlane.xlu0 %274
  %276 = vadd.xlane.f32.xlu0 %v245
  %v277 = vpop.xlane.xlu0 %276
  %278 = vadd.xlane.f32.xlu0 %v246
  %v279 = vpop.xlane.xlu0 %278
  %280 = vadd.xlane.f32.xlu0 %v247
  %v281 = vpop.xlane.xlu0 %280
  %v282 = vrcp.pop 128.0
  %v283 = vmul.f32 %v251, %v282
  %v284 = vmul.f32 %v253, %v282
  %v285 = vmul.f32 %v255, %v282
  %v286 = vmul.f32 %v257, %v282
  %v287 = vmul.f32 %v259, %v282
  %v288 = vmul.f32 %v261, %v282
  %v289 = vmul.f32 %v263, %v282
  %v290 = vmul.f32 %v265, %v282
  %v291 = vmul.f32 %v267, %v282
  %v292 = vmul.f32 %v269, %v282
  %v293 = vmul.f32 %v271, %v282
  %v294 = vmul.f32 %v273, %v282
  %v295 = vmul.f32 %v275, %v282
  %v296 = vmul.f32 %v277, %v282
  %v297 = vmul.f32 %v279, %v282
  %v298 = vmul.f32 %v281, %v282
  %v299 = vsub.f32 %v232, %v283
  %v300 = vsub.f32 %v233, %v284
  %v301 = vsub.f32 %v234, %v285
  %v302 = vsub.f32 %v235, %v286
  %v303 = vsub.f32 %v236, %v287
  %v304 = vsub.f32 %v237, %v288
  %v305 = vsub.f32 %v238, %v289
  %v306 = vsub.f32 %v239, %v290
  %v307 = vsub.f32 %v240, %v291
  %v308 = vsub.f32 %v241, %v292
  %v309 = vsub.f32 %v242, %v293
  %v310 = vsub.f32 %v243, %v294
  %v311 = vsub.f32 %v244, %v295
  %v312 = vsub.f32 %v245, %v296
  %v313 = vsub.f32 %v246, %v297
  %v314 = vsub.f32 %v247, %v298
  %v315 = vmul.f32 %v299, %v299
  %v316 = vmul.f32 %v300, %v300
  %v317 = vmul.f32 %v301, %v301
  %v318 = vmul.f32 %v302, %v302
  %v319 = vmul.f32 %v303, %v303
  %v320 = vmul.f32 %v304, %v304
  %v321 = vmul.f32 %v305, %v305
  %v322 = vmul.f32 %v306, %v306
  %v323 = vmul.f32 %v307, %v307
  %v324 = vmul.f32 %v308, %v308
  %v325 = vmul.f32 %v309, %v309
  %v326 = vmul.f32 %v310, %v310
  %v327 = vmul.f32 %v311, %v311
  %v328 = vmul.f32 %v312, %v312
  %v329 = vmul.f32 %v313, %v313
  %v330 = vmul.f32 %v314, %v314
  %331 = vadd.xlane.f32.xlu0 %v315
  %v332 = vpop.xlane.xlu0 %331
  %333 = vadd.xlane.f32.xlu0 %v316
  %v334 = vpop.xlane.xlu0 %333
  %335 = vadd.xlane.f32.xlu0 %v317
  %v336 = vpop.xlane.xlu0 %335
  %337 = vadd.xlane.f32.xlu0 %v318
  %v338 = vpop.xlane.xlu0 %337
  %339 = vadd.xlane.f32.xlu0 %v319
  %v340 = vpop.xlane.xlu0 %339
  %341 = vadd.xlane.f32.xlu0 %v320
  %v342 = vpop.xlane.xlu0 %341
  %343 = vadd.xlane.f32.xlu0 %v321
  %v344 = vpop.xlane.xlu0 %343
  %345 = vadd.xlane.f32.xlu0 %v322
  %v346 = vpop.xlane.xlu0 %345
  %347 = vadd.xlane.f32.xlu0 %v323
  %v348 = vpop.xlane.xlu0 %347
  %349 = vadd.xlane.f32.xlu0 %v324
  %v350 = vpop.xlane.xlu0 %349
  %351 = vadd.xlane.f32.xlu0 %v325
  %v352 = vpop.xlane.xlu0 %351
  %353 = vadd.xlane.f32.xlu0 %v326
  %v354 = vpop.xlane.xlu0 %353
  %355 = vadd.xlane.f32.xlu0 %v327
  %v356 = vpop.xlane.xlu0 %355
  %357 = vadd.xlane.f32.xlu0 %v328
  %v358 = vpop.xlane.xlu0 %357
  %359 = vadd.xlane.f32.xlu0 %v329
  %v360 = vpop.xlane.xlu0 %359
  %361 = vadd.xlane.f32.xlu0 %v330
  %v362 = vpop.xlane.xlu0 %361
  %v363 = vmul.f32 %v332, %v282
  %v364 = vmul.f32 %v334, %v282
  %v365 = vmul.f32 %v336, %v282
  %v366 = vmul.f32 %v338, %v282
  %v367 = vmul.f32 %v340, %v282
  %v368 = vmul.f32 %v342, %v282
  %v369 = vmul.f32 %v344, %v282
  %v370 = vmul.f32 %v346, %v282
  %v371 = vmul.f32 %v348, %v282
  %v372 = vmul.f32 %v350, %v282
  %v373 = vmul.f32 %v352, %v282
  %v374 = vmul.f32 %v354, %v282
  %v375 = vmul.f32 %v356, %v282
  %v376 = vmul.f32 %v358, %v282
  %v377 = vmul.f32 %v360, %v282
  %v378 = vmul.f32 %v362, %v282
  %v379 = vadd.f32 %v363, 1e-05
  %v380 = vadd.f32 %v364, 1e-05
  %v381 = vadd.f32 %v365, 1e-05
  %v382 = vadd.f32 %v366, 1e-05
  %v383 = vadd.f32 %v367, 1e-05
  %v384 = vadd.f32 %v368, 1e-05
  %v385 = vadd.f32 %v369, 1e-05
  %v386 = vadd.f32 %v370, 1e-05
  %v387 = vadd.f32 %v371, 1e-05
  %v388 = vadd.f32 %v372, 1e-05
  %v389 = vadd.f32 %v373, 1e-05
  %v390 = vadd.f32 %v374, 1e-05
  %v391 = vadd.f32 %v375, 1e-05
  %v392 = vadd.f32 %v376, 1e-05
  %v393 = vadd.f32 %v377, 1e-05
  %v394 = vadd.f32 %v378, 1e-05
  %v395 = vrsqrt.pop %v379
  %v396 = vrsqrt.pop %v380
  %v397 = vrsqrt.pop %v381
  %v398 = vrsqrt.pop %v382
  %v399 = vrsqrt.pop %v383
  %v400 = vrsqrt.pop %v384
  %v401 = vrsqrt.pop %v385
  %v402 = vrsqrt.pop %v386
  %v403 = vrsqrt.pop %v387
  %v404 = vrsqrt.pop %v388
  %v405 = vrsqrt.pop %v389
  %v406 = vrsqrt.pop %v390
  %v407 = vrsqrt.pop %v391
  %v408 = vrsqrt.pop %v392
  %v409 = vrsqrt.pop %v393
  %v410 = vrsqrt.pop %v394
  %v411 = vmul.f32 %v299, %v395
  %v412 = vmul.f32 %v300, %v396
  %v413 = vmul.f32 %v301, %v397
  %v414 = vmul.f32 %v302, %v398
  %v415 = vmul.f32 %v303, %v399
  %v416 = vmul.f32 %v304, %v400
  %v417 = vmul.f32 %v305, %v401
  %v418 = vmul.f32 %v306, %v402
  %v419 = vmul.f32 %v307, %v403
  %v420 = vmul.f32 %v308, %v404
  %v421 = vmul.f32 %v309, %v405
  %v422 = vmul.f32 %v310, %v406
  %v423 = vmul.f32 %v311, %v407
  %v424 = vmul.f32 %v312, %v408
  %v425 = vmul.f32 %v313, %v409
  %v426 = vmul.f32 %v314, %v410
  %v428 = vlaneseq
  %v429 = vshrl.u32 %v428, 7
  %v430 = vsub.s32 0, %v429
  %v431 = vrot.slane %v248, %v430
  %v433 = vmul.f32 %v411, %v431
  %v434 = vmul.f32 %v412, %v431
  %v435 = vmul.f32 %v413, %v431
  %v436 = vmul.f32 %v414, %v431
  %v437 = vmul.f32 %v415, %v431
  %v438 = vmul.f32 %v416, %v431
  %v439 = vmul.f32 %v417, %v431
  %v440 = vmul.f32 %v418, %v431
  %v441 = vmul.f32 %v419, %v431
  %v442 = vmul.f32 %v420, %v431
  %v443 = vmul.f32 %v421, %v431
  %v444 = vmul.f32 %v422, %v431
  %v445 = vmul.f32 %v423, %v431
  %v446 = vmul.f32 %v424, %v431
  %v447 = vmul.f32 %v425, %v431
  %v448 = vmul.f32 %v426, %v431
  %v450 = vlaneseq
  %v451 = vshrl.u32 %v450, 7
  %v452 = vsub.s32 0, %v451
  %v453 = vrot.slane %v249, %v452
  %v455 = vadd.f32 %v433, %v453
  %v456 = vadd.f32 %v434, %v453
  %v457 = vadd.f32 %v435, %v453
  %v458 = vadd.f32 %v436, %v453
  %v459 = vadd.f32 %v437, %v453
  %v460 = vadd.f32 %v438, %v453
  %v461 = vadd.f32 %v439, %v453
  %v462 = vadd.f32 %v440, %v453
  %v463 = vadd.f32 %v441, %v453
  %v464 = vadd.f32 %v442, %v453
  %v465 = vadd.f32 %v443, %v453
  %v466 = vadd.f32 %v444, %v453
  %v467 = vadd.f32 %v445, %v453
  %v468 = vadd.f32 %v446, %v453
  %v469 = vadd.f32 %v447, %v453
  %v470 = vadd.f32 %v448, %v453
  %471 = vst [vmem:[%s6] sm:$0xff] %v455
  %472 = vst [vmem:[%s6 + $0x8] sm:$0xff] %v456
  %473 = vst [vmem:[%s6 + $0x10] sm:$0xff] %v457
  %474 = vst [vmem:[%s6 + $0x18] sm:$0xff] %v458
  %475 = vst [vmem:[%s6 + $0x20] sm:$0xff] %v459
  %476 = vst [vmem:[%s6 + $0x28] sm:$0xff] %v460
  %477 = vst [vmem:[%s6 + $0x30] sm:$0xff] %v461
  %478 = vst [vmem:[%s6 + $0x38] sm:$0xff] %v462
  %479 = vst [vmem:[%s6 + $0x40] sm:$0xff] %v463
  %480 = vst [vmem:[%s6 + $0x48] sm:$0xff] %v464
  %481 = vst [vmem:[%s6 + $0x50] sm:$0xff] %v465
  %482 = vst [vmem:[%s6 + $0x58] sm:$0xff] %v466
  %483 = vst [vmem:[%s6 + $0x60] sm:$0xff] %v467
  %484 = vst [vmem:[%s6 + $0x68] sm:$0xff] %v468
  %485 = vst [vmem:[%s6 + $0x70] sm:$0xff] %v469
  %486 = vst [vmem:[%s6 + $0x78] sm:$0xff] %v470
  // Predicated region
  $region26: #{transformer_forward.27} parent=0 // pred_check
    _
  $region27: #{transformer_forward.27} parent=0 // pred_check_branch
    %488 = sbr.rel (0) target = $region29
  $region28: #{transformer_forward.27} parent=0 // pred_region
    _
  $region29: #{transformer_forward.27} parent=0 // pred_fallthru
    _
  // Predicated region
  $region30: #{transformer_forward.27} parent=0 // pred_check
    _
  $region31: #{transformer_forward.27} parent=0 // pred_check_branch
    %490 = sbr.rel (0) target = $region33
  $region32: #{transformer_forward.27} parent=0 // pred_region
    _
  $region33: #{transformer_forward.27} parent=0 // pred_fallthru
    _

// kernel: transformer_forward.25
$region0: #{transformer_forward.25}
  #allocation0 [shape = 'u32[]', space=smem, size = 0x4, offset = 0x4, fixed_abs, tag = 'smem constant byte address 0x4 - core index']
  #allocation1 [shape = 'u32[144,128]{1,0:T(1,128)}', space=vmem, size = 0x12000, scoped, tag = 'internal scratch']
  %s0 = inlined_call_operand.vmem [shape: f32[128,128], index: 0, kind: input, shape index: {}]
  %s1 = inlined_call_operand.vmem [shape: f32[128,128], index: 1, kind: input, shape index: {}]
  %s2 = inlined_call_operand.hbm [shape: bf16[128,128], index: 2, kind: input, shape index: {}]
  %s3 = inlined_call_operand.hbm [shape: bf16[128,128], index: 3, kind: input, shape index: {}]
  %s4 = inlined_call_operand.hbm [shape: bf16[128,128], index: 4, kind: input, shape index: {}]
  %s5 = inlined_call_operand.vmem [shape: f32[3,128], index: 5, kind: input, shape index: {}]
  %s6 = inlined_call_operand.vmem [shape: bf16[128,128], index: 6, kind: output, shape index: {0}]
  %s7 = inlined_call_operand.vmem [shape: bf16[128,128], index: 7, kind: output, shape index: {1}]
  %s8 = inlined_call_operand.vmem [shape: bf16[128,128], index: 8, kind: output, shape index: {2}]
  %9 = xla_tuple %s6, %s7, %s8
  %s10 = sld [smem:[#allocation0]]
  $region62: #{transformer_forward.25} parent=0
    _
  %s12 = ssub.s32 1, %s10
  %s13 = scalar_select 0, %s12, %s10
  $region1: #{transformer_forward.25} parent=0
    #allocation2 [shape = 'u8[32768]{0}', space=vmem, size = 0x8000, scoped, tag = 'input window, operand 2, single buffered']
    #allocation3 [shape = 's32[1]{0}', space=sflag, size = 0x4, scoped, tag = 'scoped memory for transformer_forward.25']
    #allocation4 [shape = 'u8[32768]{0}', space=vmem, size = 0x8000, scoped, tag = 'input window, operand 3, single buffered']
    #allocation5 [shape = 's32[1]{0}', space=sflag, size = 0x4, scoped, tag = 'scoped memory for transformer_forward.25']
    #allocation6 [shape = 'u8[32768]{0}', space=vmem, size = 0x8000, scoped, tag = 'input window, operand 4, single buffered']
    %14 = vsyncpa [#allocation3], 0
    %15 = vsyncpa [#allocation5], 0
    // Predicated region
    $region2: #{transformer_forward.25} parent=1 // pred_check
      _
    $region3: #{transformer_forward.25} parent=1 // pred_check_branch
      %17 = sbr.rel (0) target = $region5
    $region4: #{transformer_forward.25} parent=1 // pred_region
      _
    $region5: #{transformer_forward.25} parent=1 // pred_fallthru
      _
    // Predicated region
    $region6: #{transformer_forward.25} parent=1 // pred_check
      _
    $region7: #{transformer_forward.25} parent=1 // pred_check_branch
      %19 = sbr.rel (0) target = $region9
    $region8: #{transformer_forward.25} parent=1 // pred_region
      _
    $region9: #{transformer_forward.25} parent=1 // pred_fallthru
      _
    // Predicated region
    $region10: #{transformer_forward.25} parent=1 // pred_check
      _
    $region11: #{transformer_forward.25} parent=1 // pred_check_branch
      %21 = sbr.rel (0) target = $region13
    $region12: #{transformer_forward.25} parent=1 // pred_region
      %s23 = ssub.s32 1024, 1024
      %24 = vsyncadd [#allocation3], %s23
      %s25 = sshll.u32 [#allocation2], 4
      %s26 = int_to_ptr.vmem [resolvable:$true] %s25
      %31 = dma.hbm_to_vmem [thread:$0]  %s2, 1024, %s26, [#allocation3], 64, 64, 4
    $region13: #{transformer_forward.25} parent=1 // pred_fallthru
      _
    // Predicated region
    $region14: #{transformer_forward.25} parent=1 // pred_check
      _
    $region15: #{transformer_forward.25} parent=1 // pred_check_branch
      %33 = sbr.rel (0) target = $region17
    $region16: #{transformer_forward.25} parent=1 // pred_region
      %s35 = ssub.s32 1024, 1024
      %36 = vsyncadd [#allocation5], %s35
      %s37 = sshll.u32 [#allocation4], 4
      %s38 = int_to_ptr.vmem [resolvable:$true] %s37
      %43 = dma.hbm_to_vmem [thread:$0]  %s3, 1024, %s38, [#allocation5], 64, 64, 4
    $region17: #{transformer_forward.25} parent=1 // pred_fallthru
      _
    // Predicated region
    $region18: #{transformer_forward.25} parent=1 // pred_check
      _
    $region19: #{transformer_forward.25} parent=1 // pred_check_branch
      %45 = sbr.rel (0) target = $region21
    $region20: #{transformer_forward.25} parent=1 // pred_region
      %s47 = ssub.s32 1024, 1024
      %48 = vsyncadd [#allocation5], %s47
      %s49 = sshll.u32 [#allocation6], 4
      %s50 = int_to_ptr.vmem [resolvable:$true] %s49
      %55 = dma.hbm_to_vmem [thread:$0]  %s4, 1024, %s50, [#allocation5], 64, 64, 4
    $region21: #{transformer_forward.25} parent=1 // pred_fallthru
      _
    // Predicated region
    $region22: #{transformer_forward.25} parent=1 // pred_check
      _
    $region23: #{transformer_forward.25} parent=1 // pred_check_branch
      %57 = sbr.rel (0) target = $region25
    $region24: #{transformer_forward.25} parent=1 // pred_region
      _
    $region25: #{transformer_forward.25} parent=1 // pred_fallthru
      _
    // Predicated region
    $region26: #{transformer_forward.25} parent=1 // pred_check
      _
    $region27: #{transformer_forward.25} parent=1 // pred_check_branch
      %59 = sbr.rel (0) target = $region29
    $region28: #{transformer_forward.25} parent=1 // pred_region
      %60 = dma.done [#allocation3], 1024
    $region29: #{transformer_forward.25} parent=1 // pred_fallthru
      _
    // Predicated region
    $region30: #{transformer_forward.25} parent=1 // pred_check
      _
    $region31: #{transformer_forward.25} parent=1 // pred_check_branch
      %62 = sbr.rel (0) target = $region33
    $region32: #{transformer_forward.25} parent=1 // pred_region
      %63 = dma.done [#allocation5], 1024
    $region33: #{transformer_forward.25} parent=1 // pred_fallthru
      _
    // Predicated region
    $region34: #{transformer_forward.25} parent=1 // pred_check
      _
    $region35: #{transformer_forward.25} parent=1 // pred_check_branch
      %65 = sbr.rel (0) target = $region37
    $region36: #{transformer_forward.25} parent=1 // pred_region
      %66 = dma.done [#allocation5], 1024
    $region37: #{transformer_forward.25} parent=1 // pred_fallthru
      _
    %v68 = vld [vmem:[%s0] sm:$0xff]
    %v69 = vld [vmem:[%s0 + $0x8] sm:$0xff]
    %v70 = vld [vmem:[%s0 + $0x10] sm:$0xff]
    %v71 = vld [vmem:[%s0 + $0x18] sm:$0xff]
    %v72 = vld [vmem:[%s0 + $0x20] sm:$0xff]
    %v73 = vld [vmem:[%s0 + $0x28] sm:$0xff]
    %v74 = vld [vmem:[%s0 + $0x30] sm:$0xff]
    %v75 = vld [vmem:[%s0 + $0x38] sm:$0xff]
    %v76 = vld [vmem:[%s0 + $0x40] sm:$0xff]
    %v77 = vld [vmem:[%s0 + $0x48] sm:$0xff]
    %v78 = vld [vmem:[%s0 + $0x50] sm:$0xff]
    %v79 = vld [vmem:[%s0 + $0x58] sm:$0xff]
    %v80 = vld [vmem:[%s0 + $0x60] sm:$0xff]
    %v81 = vld [vmem:[%s0 + $0x68] sm:$0xff]
    %v82 = vld [vmem:[%s0 + $0x70] sm:$0xff]
    %v83 = vld [vmem:[%s0 + $0x78] sm:$0xff]
    %v84 = vld [vmem:[%s5] sm:$0x7]
    %v85 = vld [vmem:[%s1] sm:$0xff]
    %v86 = vld [vmem:[%s1 + $0x8] sm:$0xff]
    %v87 = vld [vmem:[%s1 + $0x10] sm:$0xff]
    %v88 = vld [vmem:[%s1 + $0x18] sm:$0xff]
    %v89 = vld [vmem:[%s1 + $0x20] sm:$0xff]
    %v90 = vld [vmem:[%s1 + $0x28] sm:$0xff]
    %v91 = vld [vmem:[%s1 + $0x30] sm:$0xff]
    %v92 = vld [vmem:[%s1 + $0x38] sm:$0xff]
    %v93 = vld [vmem:[%s1 + $0x40] sm:$0xff]
    %v94 = vld [vmem:[%s1 + $0x48] sm:$0xff]
    %v95 = vld [vmem:[%s1 + $0x50] sm:$0xff]
    %v96 = vld [vmem:[%s1 + $0x58] sm:$0xff]
    %v97 = vld [vmem:[%s1 + $0x60] sm:$0xff]
    %v98 = vld [vmem:[%s1 + $0x68] sm:$0xff]
    %v99 = vld [vmem:[%s1 + $0x70] sm:$0xff]
    %v100 = vld [vmem:[%s1 + $0x78] sm:$0xff]
    %v101 = vadd.f32 %v68, %v85
    %v102 = vadd.f32 %v69, %v86
    %v103 = vadd.f32 %v70, %v87
    %v104 = vadd.f32 %v71, %v88
    %v105 = vadd.f32 %v72, %v89
    %v106 = vadd.f32 %v73, %v90
    %v107 = vadd.f32 %v74, %v91
    %v108 = vadd.f32 %v75, %v92
    %v109 = vadd.f32 %v76, %v93
    %v110 = vadd.f32 %v77, %v94
    %v111 = vadd.f32 %v78, %v95
    %v112 = vadd.f32 %v79, %v96
    %v113 = vadd.f32 %v80, %v97
    %v114 = vadd.f32 %v81, %v98
    %v115 = vadd.f32 %v82, %v99
    %v116 = vadd.f32 %v83, %v100
    %v117 = vpack.c.bf16 %v102, %v101
    %v118 = vpack.c.bf16 %v104, %v103
    %v119 = vpack.c.bf16 %v106, %v105
    %v120 = vpack.c.bf16 %v108, %v107
    %v121 = vpack.c.bf16 %v110, %v109
    %v122 = vpack.c.bf16 %v112, %v111
    %v123 = vpack.c.bf16 %v114, %v113
    %v124 = vpack.c.bf16 %v116, %v115
    %v125 = vpack.c.bf16 %v69, %v68
    %v126 = vpack.c.bf16 %v71, %v70
    %v127 = vpack.c.bf16 %v73, %v72
    %v128 = vpack.c.bf16 %v75, %v74
    %v129 = vpack.c.bf16 %v77, %v76
    %v130 = vpack.c.bf16 %v79, %v78
    %v131 = vpack.c.bf16 %v81, %v80
    %v132 = vpack.c.bf16 %v83, %v82
    %v133 = vld [vmem:[#allocation2] sm:$0xf]
    %v134 = vld [vmem:[#allocation2 + $0x4] sm:$0xf]
    %v135 = vld [vmem:[#allocation2 + $0x8] sm:$0xf]
    %v136 = vld [vmem:[#allocation2 + $0xc] sm:$0xf]
    %v137 = vld [vmem:[#allocation2 + $0x10] sm:$0xf]
    %v138 = vld [vmem:[#allocation2 + $0x14] sm:$0xf]
    %v139 = vld [vmem:[#allocation2 + $0x18] sm:$0xf]
    %v140 = vld [vmem:[#allocation2 + $0x1c] sm:$0xf]
    %v141 = vld [vmem:[#allocation2 + $0x20] sm:$0xf]
    %v142 = vld [vmem:[#allocation2 + $0x24] sm:$0xf]
    %v143 = vld [vmem:[#allocation2 + $0x28] sm:$0xf]
    %v144 = vld [vmem:[#allocation2 + $0x2c] sm:$0xf]
    %v145 = vld [vmem:[#allocation2 + $0x30] sm:$0xf]
    %v146 = vld [vmem:[#allocation2 + $0x34] sm:$0xf]
    %v147 = vld [vmem:[#allocation2 + $0x38] sm:$0xf]
    %v148 = vld [vmem:[#allocation2 + $0x3c] sm:$0xf]
    %v149 = vlaneseq
    %v150 = vshrl.u32 %v149, 7
    %v151 = vsub.s32 0, %v150
    %v152 = vrot.slane %v84, %v151
    %v169 = vunpack.c.l.b16 %v133
    %v170 = vunpack.c.l.b16 %v134
    %v171 = vunpack.c.l.b16 %v135
    %v172 = vunpack.c.l.b16 %v136
    %v173 = vunpack.c.l.b16 %v137
    %v174 = vunpack.c.l.b16 %v138
    %v175 = vunpack.c.l.b16 %v139
    %v176 = vunpack.c.l.b16 %v140
    %v177 = vunpack.c.l.b16 %v141
    %v178 = vunpack.c.l.b16 %v142
    %v179 = vunpack.c.l.b16 %v143
    %v180 = vunpack.c.l.b16 %v144
    %v181 = vunpack.c.l.b16 %v145
    %v182 = vunpack.c.l.b16 %v146
    %v183 = vunpack.c.l.b16 %v147
    %v184 = vunpack.c.l.b16 %v148
    %v185 = vpack.c.b16 %v170, %v169
    %v186 = vpack.c.b16 %v172, %v171
    %v187 = vpack.c.b16 %v174, %v173
    %v188 = vpack.c.b16 %v176, %v175
    %v189 = vpack.c.b16 %v178, %v177
    %v190 = vpack.c.b16 %v180, %v179
    %v191 = vpack.c.b16 %v182, %v181
    %v192 = vpack.c.b16 %v184, %v183
    %201 = vmatprep.subr.bf16.mxu0 0
    %202 = vmatpush1.bf16.msra.mxu0 %v185
    %203 = vmatprep.subr.bf16.mxu0 0
    %204 = vmatpush1.bf16.msra.mxu0 %v186
    %205 = vmatprep.subr.bf16.mxu0 0
    %206 = vmatpush1.bf16.msra.mxu0 %v187
    %207 = vmatprep.subr.bf16.mxu0 0
    %208 = vmatpush1.bf16.msra.mxu0 %v188
    %209 = vmatprep.subr.bf16.mxu0 0
    %210 = vmatpush1.bf16.msra.mxu0 %v189
    %211 = vmatprep.subr.bf16.mxu0 0
    %212 = vmatpush1.bf16.msra.mxu0 %v190
    %213 = vmatprep.subr.bf16.mxu0 0
    %214 = vmatpush1.bf16.msra.mxu0 %v191
    %215 = vmatprep.subr.bf16.mxu0 0
    %216 = vmatpush1.bf16.msra.mxu0 %v192
    %217 = vmatprep.subr.bf16.mxu0 0
    %218 = vmatpush1.bf16.msra.mxu0 0
    %219 = vmatprep.subr.bf16.mxu0 0
    %220 = vmatpush1.bf16.msra.mxu0 0
    %221 = vmatprep.subr.bf16.mxu0 0
    %222 = vmatpush1.bf16.msra.mxu0 0
    %223 = vmatprep.subr.bf16.mxu0 0
    %224 = vmatpush1.bf16.msra.mxu0 0
    %225 = vmatprep.subr.bf16.mxu0 0
    %226 = vmatpush1.bf16.msra.mxu0 0
    %227 = vmatprep.subr.bf16.mxu0 0
    %228 = vmatpush1.bf16.msra.mxu0 0
    %229 = vmatprep.subr.bf16.mxu0 0
    %230 = vmatpush1.bf16.msra.mxu0 0
    %231 = vmatprep.subr.bf16.mxu0 0
    %232 = vmatpush1.bf16.msra.mxu0 0
    %233 = vmatprep.mubr.bf16.mxu0 0
    %234 = vmatmul.mubr.bf16.gmra.mrb[0].mxu0 %v117
    %v235 = vpop.f32.mrb[0].mxu0
    %v236 = vadd.f32 %v152, %v235
    %v237 = vpop.f32.mrb[0].mxu0
    %v238 = vpop.f32.mrb[0].mxu0
    %v239 = vadd.f32 %v152, %v238
    %v240 = vpop.f32.mrb[0].mxu0
    %241 = vmatprep.mubr.bf16.mxu0 0
    %242 = vmatmul.mubr.bf16.gmra.mrb[0].mxu0 %v118
    %v243 = vpop.f32.mrb[0].mxu0
    %v244 = vadd.f32 %v152, %v243
    %v245 = vpop.f32.mrb[0].mxu0
    %v246 = vpop.f32.mrb[0].mxu0
    %v247 = vadd.f32 %v152, %v246
    %v248 = vpop.f32.mrb[0].mxu0
    %249 = vmatprep.mubr.bf16.mxu0 0
    %250 = vmatmul.mubr.bf16.gmra.mrb[0].mxu0 %v119
    %v251 = vpop.f32.mrb[0].mxu0
    %v252 = vadd.f32 %v152, %v251
    %v253 = vpop.f32.mrb[0].mxu0
    %v254 = vpop.f32.mrb[0].mxu0
    %v255 = vadd.f32 %v152, %v254
    %v256 = vpop.f32.mrb[0].mxu0
    %257 = vmatprep.mubr.bf16.mxu0 0
    %258 = vmatmul.mubr.bf16.gmra.mrb[0].mxu0 %v120
    %v259 = vpop.f32.mrb[0].mxu0
    %v260 = vadd.f32 %v152, %v259
    %v261 = vpop.f32.mrb[0].mxu0
    %v262 = vpop.f32.mrb[0].mxu0
    %v263 = vadd.f32 %v152, %v262
    %v264 = vpop.f32.mrb[0].mxu0
    %265 = vmatprep.mubr.bf16.mxu0 0
    %266 = vmatmul.mubr.bf16.gmra.mrb[0].mxu0 %v121
    %v267 = vpop.f32.mrb[0].mxu0
    %v268 = vadd.f32 %v152, %v267
    %v269 = vpop.f32.mrb[0].mxu0
    %v270 = vpop.f32.mrb[0].mxu0
    %v271 = vadd.f32 %v152, %v270
    %v272 = vpop.f32.mrb[0].mxu0
    %273 = vmatprep.mubr.bf16.mxu0 0
    %274 = vmatmul.mubr.bf16.gmra.mrb[0].mxu0 %v122
    %v275 = vpop.f32.mrb[0].mxu0
    %v276 = vadd.f32 %v152, %v275
    %v277 = vpop.f32.mrb[0].mxu0
    %v278 = vpop.f32.mrb[0].mxu0
    %v279 = vadd.f32 %v152, %v278
    %v280 = vpop.f32.mrb[0].mxu0
    %281 = vmatprep.mubr.bf16.mxu0 0
    %282 = vmatmul.mubr.bf16.gmra.mrb[0].mxu0 %v123
    %v283 = vpop.f32.mrb[0].mxu0
    %v284 = vadd.f32 %v152, %v283
    %v285 = vpop.f32.mrb[0].mxu0
    %v286 = vpop.f32.mrb[0].mxu0
    %v287 = vadd.f32 %v152, %v286
    %v288 = vpop.f32.mrb[0].mxu0
    %289 = vmatprep.mubr.bf16.mxu0 0
    %290 = vmatmul.mubr.bf16.gmra.mrb[0].mxu0 %v124
    %v291 = vpop.f32.mrb[0].mxu0
    %v292 = vadd.f32 %v152, %v291
    %v293 = vpop.f32.mrb[0].mxu0
    %v294 = vpop.f32.mrb[0].mxu0
    %v295 = vadd.f32 %v152, %v294
    %v296 = vpop.f32.mrb[0].mxu0
    %297 = vdwg.mxu0
    %v298 = vld [vmem:[#allocation4] sm:$0xf]
    %v299 = vld [vmem:[#allocation4 + $0x4] sm:$0xf]
    %v300 = vld [vmem:[#allocation4 + $0x8] sm:$0xf]
    %v301 = vld [vmem:[#allocation4 + $0xc] sm:$0xf]
    %v302 = vld [vmem:[#allocation4 + $0x10] sm:$0xf]
    %v303 = vld [vmem:[#allocation4 + $0x14] sm:$0xf]
    %v304 = vld [vmem:[#allocation4 + $0x18] sm:$0xf]
    %v305 = vld [vmem:[#allocation4 + $0x1c] sm:$0xf]
    %v306 = vld [vmem:[#allocation4 + $0x20] sm:$0xf]
    %v307 = vld [vmem:[#allocation4 + $0x24] sm:$0xf]
    %v308 = vld [vmem:[#allocation4 + $0x28] sm:$0xf]
    %v309 = vld [vmem:[#allocation4 + $0x2c] sm:$0xf]
    %v310 = vld [vmem:[#allocation4 + $0x30] sm:$0xf]
    %v311 = vld [vmem:[#allocation4 + $0x34] sm:$0xf]
    %v312 = vld [vmem:[#allocation4 + $0x38] sm:$0xf]
    %v313 = vld [vmem:[#allocation4 + $0x3c] sm:$0xf]
    %v314 = vlaneseq
    %v315 = vshrl.u32 %v314, 7
    %v316 = vsub.s32 1, %v315
    %v317 = vrot.slane %v84, %v316
    %v334 = vunpack.c.l.b16 %v298
    %v335 = vunpack.c.l.b16 %v299
    %v336 = vunpack.c.l.b16 %v300
    %v337 = vunpack.c.l.b16 %v301
    %v338 = vunpack.c.l.b16 %v302
    %v339 = vunpack.c.l.b16 %v303
    %v340 = vunpack.c.l.b16 %v304
    %v341 = vunpack.c.l.b16 %v305
    %v342 = vunpack.c.l.b16 %v306
    %v343 = vunpack.c.l.b16 %v307
    %v344 = vunpack.c.l.b16 %v308
    %v345 = vunpack.c.l.b16 %v309
    %v346 = vunpack.c.l.b16 %v310
    %v347 = vunpack.c.l.b16 %v311
    %v348 = vunpack.c.l.b16 %v312
    %v349 = vunpack.c.l.b16 %v313
    %v350 = vpack.c.b16 %v335, %v334
    %v351 = vpack.c.b16 %v337, %v336
    %v352 = vpack.c.b16 %v339, %v338
    %v353 = vpack.c.b16 %v341, %v340
    %v354 = vpack.c.b16 %v343, %v342
    %v355 = vpack.c.b16 %v345, %v344
    %v356 = vpack.c.b16 %v347, %v346
    %v357 = vpack.c.b16 %v349, %v348
    %366 = vmatprep.subr.bf16.mxu0 0
    %367 = vmatpush1.bf16.msra.mxu0 %v350
    %368 = vmatprep.subr.bf16.mxu0 0
    %369 = vmatpush1.bf16.msra.mxu0 %v351
    %370 = vmatprep.subr.bf16.mxu0 0
    %371 = vmatpush1.bf16.msra.mxu0 %v352
    %372 = vmatprep.subr.bf16.mxu0 0
    %373 = vmatpush1.bf16.msra.mxu0 %v353
    %374 = vmatprep.subr.bf16.mxu0 0
    %375 = vmatpush1.bf16.msra.mxu0 %v354
    %376 = vmatprep.subr.bf16.mxu0 0
    %377 = vmatpush1.bf16.msra.mxu0 %v355
    %378 = vmatprep.subr.bf16.mxu0 0
    %379 = vmatpush1.bf16.msra.mxu0 %v356
    %380 = vmatprep.subr.bf16.mxu0 0
    %381 = vmatpush1.bf16.msra.mxu0 %v357
    %382 = vmatprep.subr.bf16.mxu0 0
    %383 = vmatpush1.bf16.msra.mxu0 0
    %384 = vmatprep.subr.bf16.mxu0 0
    %385 = vmatpush1.bf16.msra.mxu0 0
    %386 = vmatprep.subr.bf16.mxu0 0
    %387 = vmatpush1.bf16.msra.mxu0 0
    %388 = vmatprep.subr.bf16.mxu0 0
    %389 = vmatpush1.bf16.msra.mxu0 0
    %390 = vmatprep.subr.bf16.mxu0 0
    %391 = vmatpush1.bf16.msra.mxu0 0
    %392 = vmatprep.subr.bf16.mxu0 0
    %393 = vmatpush1.bf16.msra.mxu0 0
    %394 = vmatprep.subr.bf16.mxu0 0
    %395 = vmatpush1.bf16.msra.mxu0 0
    %396 = vmatprep.subr.bf16.mxu0 0
    %397 = vmatpush1.bf16.msra.mxu0 0
    %398 = vmatprep.mubr.bf16.mxu0 0
    %399 = vmatmul.mubr.bf16.gmra.mrb[0].mxu0 %v117
    %v400 = vpop.f32.mrb[0].mxu0
    %v401 = vadd.f32 %v317, %v400
    %v402 = vpop.f32.mrb[0].mxu0
    %v403 = vpop.f32.mrb[0].mxu0
    %v404 = vadd.f32 %v317, %v403
    %v405 = vpop.f32.mrb[0].mxu0
    %406 = vmatprep.mubr.bf16.mxu0 0
    %407 = vmatmul.mubr.bf16.gmra.mrb[0].mxu0 %v118
    %v408 = vpop.f32.mrb[0].mxu0
    %v409 = vadd.f32 %v317, %v408
    %v410 = vpop.f32.mrb[0].mxu0
    %v411 = vpop.f32.mrb[0].mxu0
    %v412 = vadd.f32 %v317, %v411
    %v413 = vpop.f32.mrb[0].mxu0
    %414 = vmatprep.mubr.bf16.mxu0 0
    %415 = vmatmul.mubr.bf16.gmra.mrb[0].mxu0 %v119
    %v416 = vpop.f32.mrb[0].mxu0
    %v417 = vadd.f32 %v317, %v416
    %v418 = vpop.f32.mrb[0].mxu0
    %v419 = vpop.f32.mrb[0].mxu0
    %v420 = vadd.f32 %v317, %v419
    %v421 = vpop.f32.mrb[0].mxu0
    %422 = vmatprep.mubr.bf16.mxu0 0
    %423 = vmatmul.mubr.bf16.gmra.mrb[0].mxu0 %v120
    %v424 = vpop.f32.mrb[0].mxu0
    %v425 = vadd.f32 %v317, %v424
    %v426 = vpop.f32.mrb[0].mxu0
    %v427 = vpop.f32.mrb[0].mxu0
    %v428 = vadd.f32 %v317, %v427
    %v429 = vpop.f32.mrb[0].mxu0
    %430 = vmatprep.mubr.bf16.mxu0 0
    %431 = vmatmul.mubr.bf16.gmra.mrb[0].mxu0 %v121
    %v432 = vpop.f32.mrb[0].mxu0
    %v433 = vadd.f32 %v317, %v432
    %v434 = vpop.f32.mrb[0].mxu0
    %v435 = vpop.f32.mrb[0].mxu0
    %v436 = vadd.f32 %v317, %v435
    %v437 = vpop.f32.mrb[0].mxu0
    %438 = vmatprep.mubr.bf16.mxu0 0
    %439 = vmatmul.mubr.bf16.gmra.mrb[0].mxu0 %v122
    %v440 = vpop.f32.mrb[0].mxu0
    %v441 = vadd.f32 %v317, %v440
    %v442 = vpop.f32.mrb[0].mxu0
    %v443 = vpop.f32.mrb[0].mxu0
    %v444 = vadd.f32 %v317, %v443
    %v445 = vpop.f32.mrb[0].mxu0
    %446 = vmatprep.mubr.bf16.mxu0 0
    %447 = vmatmul.mubr.bf16.gmra.mrb[0].mxu0 %v123
    %v448 = vpop.f32.mrb[0].mxu0
    %v449 = vadd.f32 %v317, %v448
    %v450 = vpop.f32.mrb[0].mxu0
    %v451 = vpop.f32.mrb[0].mxu0
    %v452 = vadd.f32 %v317, %v451
    %v453 = vpop.f32.mrb[0].mxu0
    %454 = vmatprep.mubr.bf16.mxu0 0
    %455 = vmatmul.mubr.bf16.gmra.mrb[0].mxu0 %v124
    %v456 = vpop.f32.mrb[0].mxu0
    %v457 = vadd.f32 %v317, %v456
    %v458 = vpop.f32.mrb[0].mxu0
    %v459 = vpop.f32.mrb[0].mxu0
    %v460 = vadd.f32 %v317, %v459
    %v461 = vpop.f32.mrb[0].mxu0
    %462 = vdwg.mxu0
    %v463 = vld [vmem:[#allocation6] sm:$0xf]
    %v464 = vld [vmem:[#allocation6 + $0x4] sm:$0xf]
    %v465 = vld [vmem:[#allocation6 + $0x8] sm:$0xf]
    %v466 = vld [vmem:[#allocation6 + $0xc] sm:$0xf]
    %v467 = vld [vmem:[#allocation6 + $0x10] sm:$0xf]
    %v468 = vld [vmem:[#allocation6 + $0x14] sm:$0xf]
    %v469 = vld [vmem:[#allocation6 + $0x18] sm:$0xf]
    %v470 = vld [vmem:[#allocation6 + $0x1c] sm:$0xf]
    %v471 = vld [vmem:[#allocation6 + $0x20] sm:$0xf]
    %v472 = vld [vmem:[#allocation6 + $0x24] sm:$0xf]
    %v473 = vld [vmem:[#allocation6 + $0x28] sm:$0xf]
    %v474 = vld [vmem:[#allocation6 + $0x2c] sm:$0xf]
    %v475 = vld [vmem:[#allocation6 + $0x30] sm:$0xf]
    %v476 = vld [vmem:[#allocation6 + $0x34] sm:$0xf]
    %v477 = vld [vmem:[#allocation6 + $0x38] sm:$0xf]
    %v478 = vld [vmem:[#allocation6 + $0x3c] sm:$0xf]
    %v479 = vlaneseq
    %v480 = vshrl.u32 %v479, 7
    %v481 = vsub.s32 2, %v480
    %v482 = vrot.slane %v84, %v481
    %v499 = vunpack.c.l.b16 %v463
    %v500 = vunpack.c.l.b16 %v464
    %v501 = vunpack.c.l.b16 %v465
    %v502 = vunpack.c.l.b16 %v466
    %v503 = vunpack.c.l.b16 %v467
    %v504 = vunpack.c.l.b16 %v468
    %v505 = vunpack.c.l.b16 %v469
    %v506 = vunpack.c.l.b16 %v470
    %v507 = vunpack.c.l.b16 %v471
    %v508 = vunpack.c.l.b16 %v472
    %v509 = vunpack.c.l.b16 %v473
    %v510 = vunpack.c.l.b16 %v474
    %v511 = vunpack.c.l.b16 %v475
    %v512 = vunpack.c.l.b16 %v476
    %v513 = vunpack.c.l.b16 %v477
    %v514 = vunpack.c.l.b16 %v478
    %v515 = vpack.c.b16 %v500, %v499
    %v516 = vpack.c.b16 %v502, %v501
    %v517 = vpack.c.b16 %v504, %v503
    %v518 = vpack.c.b16 %v506, %v505
    %v519 = vpack.c.b16 %v508, %v507
    %v520 = vpack.c.b16 %v510, %v509
    %v521 = vpack.c.b16 %v512, %v511
    %v522 = vpack.c.b16 %v514, %v513
    %531 = vmatprep.subr.bf16.mxu0 0
    %532 = vmatpush1.bf16.msra.mxu0 %v515
    %533 = vmatprep.subr.bf16.mxu0 0
    %534 = vmatpush1.bf16.msra.mxu0 %v516
    %535 = vmatprep.subr.bf16.mxu0 0
    %536 = vmatpush1.bf16.msra.mxu0 %v517
    %537 = vmatprep.subr.bf16.mxu0 0
    %538 = vmatpush1.bf16.msra.mxu0 %v518
    %539 = vmatprep.subr.bf16.mxu0 0
    %540 = vmatpush1.bf16.msra.mxu0 %v519
    %541 = vmatprep.subr.bf16.mxu0 0
    %542 = vmatpush1.bf16.msra.mxu0 %v520
    %543 = vmatprep.subr.bf16.mxu0 0
    %544 = vmatpush1.bf16.msra.mxu0 %v521
    %545 = vmatprep.subr.bf16.mxu0 0
    %546 = vmatpush1.bf16.msra.mxu0 %v522
    %547 = vmatprep.subr.bf16.mxu0 0
    %548 = vmatpush1.bf16.msra.mxu0 0
    %549 = vmatprep.subr.bf16.mxu0 0
    %550 = vmatpush1.bf16.msra.mxu0 0
    %551 = vmatprep.subr.bf16.mxu0 0
    %552 = vmatpush1.bf16.msra.mxu0 0
    %553 = vmatprep.subr.bf16.mxu0 0
    %554 = vmatpush1.bf16.msra.mxu0 0
    %555 = vmatprep.subr.bf16.mxu0 0
    %556 = vmatpush1.bf16.msra.mxu0 0
    %557 = vmatprep.subr.bf16.mxu0 0
    %558 = vmatpush1.bf16.msra.mxu0 0
    %559 = vmatprep.subr.bf16.mxu0 0
    %560 = vmatpush1.bf16.msra.mxu0 0
    %561 = vmatprep.subr.bf16.mxu0 0
    %562 = vmatpush1.bf16.msra.mxu0 0
    %563 = vmatprep.mubr.bf16.mxu0 0
    %564 = vmatmul.mubr.bf16.gmra.mrb[0].mxu0 %v125
    %v565 = vpop.f32.mrb[0].mxu0
    %v566 = vadd.f32 %v482, %v565
    %v567 = vpop.f32.mrb[0].mxu0
    %v568 = vpop.f32.mrb[0].mxu0
    %v569 = vadd.f32 %v482, %v568
    %v570 = vpop.f32.mrb[0].mxu0
    %571 = vmatprep.mubr.bf16.mxu0 0
    %572 = vmatmul.mubr.bf16.gmra.mrb[0].mxu0 %v126
    %v573 = vpop.f32.mrb[0].mxu0
    %v574 = vadd.f32 %v482, %v573
    %v575 = vpop.f32.mrb[0].mxu0
    %v576 = vpop.f32.mrb[0].mxu0
    %v577 = vadd.f32 %v482, %v576
    %v578 = vpop.f32.mrb[0].mxu0
    %579 = vmatprep.mubr.bf16.mxu0 0
    %580 = vmatmul.mubr.bf16.gmra.mrb[0].mxu0 %v127
    %v581 = vpop.f32.mrb[0].mxu0
    %v582 = vadd.f32 %v482, %v581
    %v583 = vpop.f32.mrb[0].mxu0
    %v584 = vpop.f32.mrb[0].mxu0
    %v585 = vadd.f32 %v482, %v584
    %v586 = vpop.f32.mrb[0].mxu0
    %587 = vmatprep.mubr.bf16.mxu0 0
    %588 = vmatmul.mubr.bf16.gmra.mrb[0].mxu0 %v128
    %v589 = vpop.f32.mrb[0].mxu0
    %v590 = vadd.f32 %v482, %v589
    %v591 = vpop.f32.mrb[0].mxu0
    %v592 = vpop.f32.mrb[0].mxu0
    %v593 = vadd.f32 %v482, %v592
    %v594 = vpop.f32.mrb[0].mxu0
    %595 = vmatprep.mubr.bf16.mxu0 0
    %596 = vmatmul.mubr.bf16.gmra.mrb[0].mxu0 %v129
    %v597 = vpop.f32.mrb[0].mxu0
    %v598 = vadd.f32 %v482, %v597
    %v599 = vpop.f32.mrb[0].mxu0
    %v600 = vpop.f32.mrb[0].mxu0
    %v601 = vadd.f32 %v482, %v600
    %v602 = vpop.f32.mrb[0].mxu0
    %603 = vmatprep.mubr.bf16.mxu0 0
    %604 = vmatmul.mubr.bf16.gmra.mrb[0].mxu0 %v130
    %v605 = vpop.f32.mrb[0].mxu0
    %v606 = vadd.f32 %v482, %v605
    %v607 = vpop.f32.mrb[0].mxu0
    %v608 = vpop.f32.mrb[0].mxu0
    %v609 = vadd.f32 %v482, %v608
    %v610 = vpop.f32.mrb[0].mxu0
    %611 = vmatprep.mubr.bf16.mxu0 0
    %612 = vmatmul.mubr.bf16.gmra.mrb[0].mxu0 %v131
    %v613 = vpop.f32.mrb[0].mxu0
    %v614 = vadd.f32 %v482, %v613
    %v615 = vpop.f32.mrb[0].mxu0
    %v616 = vpop.f32.mrb[0].mxu0
    %v617 = vadd.f32 %v482, %v616
    %v618 = vpop.f32.mrb[0].mxu0
    %619 = vmatprep.mubr.bf16.mxu0 0
    %620 = vmatmul.mubr.bf16.gmra.mrb[0].mxu0 %v132
    %v621 = vpop.f32.mrb[0].mxu0
    %v622 = vadd.f32 %v482, %v621
    %v623 = vpop.f32.mrb[0].mxu0
    %v624 = vpop.f32.mrb[0].mxu0
    %v625 = vadd.f32 %v482, %v624
    %v626 = vpop.f32.mrb[0].mxu0
    %627 = vdwg.mxu0
    %v628 = vpack.c.bf16 %v239, %v236
    %v629 = vpack.c.bf16 %v247, %v244
    %v630 = vpack.c.bf16 %v255, %v252
    %v631 = vpack.c.bf16 %v263, %v260
    %v632 = vpack.c.bf16 %v271, %v268
    %v633 = vpack.c.bf16 %v279, %v276
    %v634 = vpack.c.bf16 %v287, %v284
    %v635 = vpack.c.bf16 %v295, %v292
    %v644 = vunpack.c.l.b16 %v628
    %v645 = vunpack.c.h.b16 %v628
    %v646 = vunpack.c.l.b16 %v629
    %v647 = vunpack.c.h.b16 %v629
    %v648 = vunpack.c.l.b16 %v630
    %v649 = vunpack.c.h.b16 %v630
    %v650 = vunpack.c.l.b16 %v631
    %v651 = vunpack.c.h.b16 %v631
    %v652 = vunpack.c.l.b16 %v632
    %v653 = vunpack.c.h.b16 %v632
    %v654 = vunpack.c.l.b16 %v633
    %v655 = vunpack.c.h.b16 %v633
    %v656 = vunpack.c.l.b16 %v634
    %v657 = vunpack.c.h.b16 %v634
    %v658 = vunpack.c.l.b16 %v635
    %v659 = vunpack.c.h.b16 %v635
    %v660 = vpack.c.b16 %v644, %v644
    %v661 = vpack.c.b16 %v645, %v645
    %v662 = vpack.c.b16 %v646, %v646
    %v663 = vpack.c.b16 %v647, %v647
    %v664 = vpack.c.b16 %v648, %v648
    %v665 = vpack.c.b16 %v649, %v649
    %v666 = vpack.c.b16 %v650, %v650
    %v667 = vpack.c.b16 %v651, %v651
    %v668 = vpack.c.b16 %v652, %v652
    %v669 = vpack.c.b16 %v653, %v653
    %v670 = vpack.c.b16 %v654, %v654
    %v671 = vpack.c.b16 %v655, %v655
    %v672 = vpack.c.b16 %v656, %v656
    %v673 = vpack.c.b16 %v657, %v657
    %v674 = vpack.c.b16 %v658, %v658
    %v675 = vpack.c.b16 %v659, %v659
    %692 = vst [vmem:[%s6] sm:$0xf] %v660
    %693 = vst [vmem:[%s6 + $0x4] sm:$0xf] %v661
    %694 = vst [vmem:[%s6 + $0x8] sm:$0xf] %v662
    %695 = vst [vmem:[%s6 + $0xc] sm:$0xf] %v663
    %696 = vst [vmem:[%s6 + $0x10] sm:$0xf] %v664
    %697 = vst [vmem:[%s6 + $0x14] sm:$0xf] %v665
    %698 = vst [vmem:[%s6 + $0x18] sm:$0xf] %v666
    %699 = vst [vmem:[%s6 + $0x1c] sm:$0xf] %v667
    %700 = vst [vmem:[%s6 + $0x20] sm:$0xf] %v668
    %701 = vst [vmem:[%s6 + $0x24] sm:$0xf] %v669
    %702 = vst [vmem:[%s6 + $0x28] sm:$0xf] %v670
    %703 = vst [vmem:[%s6 + $0x2c] sm:$0xf] %v671
    %704 = vst [vmem:[%s6 + $0x30] sm:$0xf] %v672
    %705 = vst [vmem:[%s6 + $0x34] sm:$0xf] %v673
    %706 = vst [vmem:[%s6 + $0x38] sm:$0xf] %v674
    %707 = vst [vmem:[%s6 + $0x3c] sm:$0xf] %v675
    %v708 = vpack.c.bf16 %v404, %v401
    %v709 = vpack.c.bf16 %v412, %v409
    %v710 = vpack.c.bf16 %v420, %v417
    %v711 = vpack.c.bf16 %v428, %v425
    %v712 = vpack.c.bf16 %v436, %v433
    %v713 = vpack.c.bf16 %v444, %v441
    %v714 = vpack.c.bf16 %v452, %v449
    %v715 = vpack.c.bf16 %v460, %v457
    %v724 = vunpack.c.l.b16 %v708
    %v725 = vunpack.c.h.b16 %v708
    %v726 = vunpack.c.l.b16 %v709
    %v727 = vunpack.c.h.b16 %v709
    %v728 = vunpack.c.l.b16 %v710
    %v729 = vunpack.c.h.b16 %v710
    %v730 = vunpack.c.l.b16 %v711
    %v731 = vunpack.c.h.b16 %v711
    %v732 = vunpack.c.l.b16 %v712
    %v733 = vunpack.c.h.b16 %v712
    %v734 = vunpack.c.l.b16 %v713
    %v735 = vunpack.c.h.b16 %v713
    %v736 = vunpack.c.l.b16 %v714
    %v737 = vunpack.c.h.b16 %v714
    %v738 = vunpack.c.l.b16 %v715
    %v739 = vunpack.c.h.b16 %v715
    %v740 = vpack.c.b16 %v724, %v724
    %v741 = vpack.c.b16 %v725, %v725
    %v742 = vpack.c.b16 %v726, %v726
    %v743 = vpack.c.b16 %v727, %v727
    %v744 = vpack.c.b16 %v728, %v728
    %v745 = vpack.c.b16 %v729, %v729
    %v746 = vpack.c.b16 %v730, %v730
    %v747 = vpack.c.b16 %v731, %v731
    %v748 = vpack.c.b16 %v732, %v732
    %v749 = vpack.c.b16 %v733, %v733
    %v750 = vpack.c.b16 %v734, %v734
    %v751 = vpack.c.b16 %v735, %v735
    %v752 = vpack.c.b16 %v736, %v736
    %v753 = vpack.c.b16 %v737, %v737
    %v754 = vpack.c.b16 %v738, %v738
    %v755 = vpack.c.b16 %v739, %v739
    %772 = vst [vmem:[%s7] sm:$0xf] %v740
    %773 = vst [vmem:[%s7 + $0x4] sm:$0xf] %v741
    %774 = vst [vmem:[%s7 + $0x8] sm:$0xf] %v742
    %775 = vst [vmem:[%s7 + $0xc] sm:$0xf] %v743
    %776 = vst [vmem:[%s7 + $0x10] sm:$0xf] %v744
    %777 = vst [vmem:[%s7 + $0x14] sm:$0xf] %v745
    %778 = vst [vmem:[%s7 + $0x18] sm:$0xf] %v746
    %779 = vst [vmem:[%s7 + $0x1c] sm:$0xf] %v747
    %780 = vst [vmem:[%s7 + $0x20] sm:$0xf] %v748
    %781 = vst [vmem:[%s7 + $0x24] sm:$0xf] %v749
    %782 = vst [vmem:[%s7 + $0x28] sm:$0xf] %v750
    %783 = vst [vmem:[%s7 + $0x2c] sm:$0xf] %v751
    %784 = vst [vmem:[%s7 + $0x30] sm:$0xf] %v752
    %785 = vst [vmem:[%s7 + $0x34] sm:$0xf] %v753
    %786 = vst [vmem:[%s7 + $0x38] sm:$0xf] %v754
    %787 = vst [vmem:[%s7 + $0x3c] sm:$0xf] %v755
    %v788 = vpack.c.bf16 %v569, %v566
    %v789 = vpack.c.bf16 %v577, %v574
    %v790 = vpack.c.bf16 %v585, %v582
    %v791 = vpack.c.bf16 %v593, %v590
    %v792 = vpack.c.bf16 %v601, %v598
    %v793 = vpack.c.bf16 %v609, %v606
    %v794 = vpack.c.bf16 %v617, %v614
    %v795 = vpack.c.bf16 %v625, %v622
    %v804 = vunpack.c.l.b16 %v788
    %v805 = vunpack.c.h.b16 %v788
    %v806 = vunpack.c.l.b16 %v789
    %v807 = vunpack.c.h.b16 %v789
    %v808 = vunpack.c.l.b16 %v790
    %v809 = vunpack.c.h.b16 %v790
    %v810 = vunpack.c.l.b16 %v791
    %v811 = vunpack.c.h.b16 %v791
    %v812 = vunpack.c.l.b16 %v792
    %v813 = vunpack.c.h.b16 %v792
    %v814 = vunpack.c.l.b16 %v793
    %v815 = vunpack.c.h.b16 %v793
    %v816 = vunpack.c.l.b16 %v794
    %v817 = vunpack.c.h.b16 %v794
    %v818 = vunpack.c.l.b16 %v795
    %v819 = vunpack.c.h.b16 %v795
    %v820 = vpack.c.b16 %v804, %v804
    %v821 = vpack.c.b16 %v805, %v805
    %v822 = vpack.c.b16 %v806, %v806
    %v823 = vpack.c.b16 %v807, %v807
    %v824 = vpack.c.b16 %v808, %v808
    %v825 = vpack.c.b16 %v809, %v809
    %v826 = vpack.c.b16 %v810, %v810
    %v827 = vpack.c.b16 %v811, %v811
    %v828 = vpack.c.b16 %v812, %v812
    %v829 = vpack.c.b16 %v813, %v813
    %v830 = vpack.c.b16 %v814, %v814
    %v831 = vpack.c.b16 %v815, %v815
    %v832 = vpack.c.b16 %v816, %v816
    %v833 = vpack.c.b16 %v817, %v817
    %v834 = vpack.c.b16 %v818, %v818
    %v835 = vpack.c.b16 %v819, %v819
    %852 = vst [vmem:[%s8] sm:$0xf] %v820
    %853 = vst [vmem:[%s8 + $0x4] sm:$0xf] %v821
    %854 = vst [vmem:[%s8 + $0x8] sm:$0xf] %v822
    %855 = vst [vmem:[%s8 + $0xc] sm:$0xf] %v823
    %856 = vst [vmem:[%s8 + $0x10] sm:$0xf] %v824
    %857 = vst [vmem:[%s8 + $0x14] sm:$0xf] %v825
    %858 = vst [vmem:[%s8 + $0x18] sm:$0xf] %v826
    %859 = vst [vmem:[%s8 + $0x1c] sm:$0xf] %v827
    %860 = vst [vmem:[%s8 + $0x20] sm:$0xf] %v828
    %861 = vst [vmem:[%s8 + $0x24] sm:$0xf] %v829
    %862 = vst [vmem:[%s8 + $0x28] sm:$0xf] %v830
    %863 = vst [vmem:[%s8 + $0x2c] sm:$0xf] %v831
    %864 = vst [vmem:[%s8 + $0x30] sm:$0xf] %v832
    %865 = vst [vmem:[%s8 + $0x34] sm:$0xf] %v833
    %866 = vst [vmem:[%s8 + $0x38] sm:$0xf] %v834
    %867 = vst [vmem:[%s8 + $0x3c] sm:$0xf] %v835
    // Predicated region
    $region38: #{transformer_forward.25} parent=1 // pred_check
      _
    $region39: #{transformer_forward.25} parent=1 // pred_check_branch
      %869 = sbr.rel (0) target = $region41
    $region40: #{transformer_forward.25} parent=1 // pred_region
      _
    $region41: #{transformer_forward.25} parent=1 // pred_fallthru
      _
    // Predicated region
    $region42: #{transformer_forward.25} parent=1 // pred_check
      _
    $region43: #{transformer_forward.25} parent=1 // pred_check_branch
      %871 = sbr.rel (0) target = $region45
    $region44: #{transformer_forward.25} parent=1 // pred_region
      _
    $region45: #{transformer_forward.25} parent=1 // pred_fallthru
      _
    // Predicated region
    $region46: #{transformer_forward.25} parent=1 // pred_check
      _
    $region47: #{transformer_forward.25} parent=1 // pred_check_branch
      %873 = sbr.rel (0) target = $region49
    $region48: #{transformer_forward.25} parent=1 // pred_region
      _
    $region49: #{transformer_forward.25} parent=1 // pred_fallthru
      _
    // Predicated region
    $region50: #{transformer_forward.25} parent=1 // pred_check
      _
    $region51: #{transformer_forward.25} parent=1 // pred_check_branch
      %875 = sbr.rel (0) target = $region53
    $region52: #{transformer_forward.25} parent=1 // pred_region
      _
    $region53: #{transformer_forward.25} parent=1 // pred_fallthru
      _
    // Predicated region
    $region54: #{transformer_forward.25} parent=1 // pred_check
      _
    $region55: #{transformer_forward.25} parent=1 // pred_check_branch
      %877 = sbr.rel (0) target = $region57
    $region56: #{transformer_forward.25} parent=1 // pred_region
      _
    $region57: #{transformer_forward.25} parent=1 // pred_fallthru
      _
    // Predicated region
    $region58: #{transformer_forward.25} parent=1 // pred_check
      _
    $region59: #{transformer_forward.25} parent=1 // pred_check_branch
      %879 = sbr.rel (0) target = $region61
    $region60: #{transformer_forward.25} parent=1 // pred_region
      _
    $region61: #{transformer_forward.25} parent=1 // pred_fallthru
      _
    %880 = vsyncpa [#allocation3], 1
    %881 = vsyncpa [#allocation5], 1

// kernel: transformer_forward.26
$region0: #{transformer_forward.26}
  #allocation0 [shape = 'u32[]', space=smem, size = 0x4, offset = 0x4, fixed_abs, tag = 'smem constant byte address 0x4 - core index']
  #allocation1 [shape = 'u32[144,128]{1,0:T(1,128)}', space=vmem, size = 0x12000, scoped, tag = 'internal scratch']
  %s0 = inlined_call_operand.vmem [shape: bf16[2,64,128], index: 0, kind: input, shape index: {}]
  %s1 = inlined_call_operand.vmem [shape: bf16[2,64,128], index: 1, kind: input, shape index: {}]
  %s2 = inlined_call_operand.vmem [shape: bf16[2,64,128], index: 2, kind: input, shape index: {}]
  %s3 = inlined_call_operand.vmem [shape: f32[2,1,64], index: 3, kind: input, shape index: {}]
  %s4 = inlined_call_operand.vmem [shape: f32[2,64,128], index: 4, kind: output, shape index: {}]
  %s5 = sld [smem:[#allocation0]]
  $region49: #{transformer_forward.26} parent=0
    _
  %s7 = ssub.s32 1, %s5
  %s8 = scalar_select 0, %s7, %s5
  loop: start=0, step=1, limit=4
  $region2: #{transformer_forward.26} parent=0 // loop_pre_header
    _
  $region3: #{transformer_forward.26} parent=0 // loop_header
    %s10 = sphi 0, %s14
    %p11 = scmp.ge.s32.totalorder %s10, 4
    %s17 = sphi 0, %s29
    %s18 = sphi 0, %s25
    %s19 = sphi 0, %s17
    %s20 = sphi 0, %s18
    %s21 = sphi 0, %s19
    %s22 = sphi 0, %s20
    %s34 = sphi 0, %s36
    %s37 = sphi 0, %s34
    %s38 = sphi 0, %s37
    %s54 = sphi 0, %s38
    %s60 = sphi 0, %s62
    %s63 = sphi 0, %s60
    %s64 = sphi 0, %s63
    %s80 = sphi 0, %s64
    %s86 = sphi 0, %s88
    %s89 = sphi 0, %s86
    %s90 = sphi 0, %s89
    %s106 = sphi 0, %s90
    %s112 = sphi 0, %s114
    %s115 = sphi 0, %s112
    %s116 = sphi 0, %s115
    %s132 = sphi 0, %s116
    %s140 = sphi 0, %s142
    %s143 = sphi 0, %s140
    %s144 = sphi 0, %s143
    %s160 = sphi 0, %s144
  $region4: #{transformer_forward.26} parent=0 // loop_header_branch
    %13 = sbr.rel (%p11) target = $region8
  $region5: #{transformer_forward.26} parent=0 // loop_body
    %s15 = ssub.s32 %s10, 1
    %s16 = ssub.s32 %s10, 2
    %s23 = sadd.s32 1, %s18
    %p24 = scmp.ge.s32.totalorder %s23, 1
    %s25 = scalar_select %p24, 0, %s23
    %s26 = sadd.s32 1, %s17
    %s27 = scalar_select %p24, %s26, %s17
    %p28 = scmp.ge.s32.totalorder %s27, 2
    %s29 = scalar_select %p28, 0, %s27
    %s30 = ssub.s32 %s17, %s29
    %s31 = ssub.s32 %s18, %s25
    %s32 = sor.u32 %s30, %s31
    %p33 = scmp.eq.s32.totalorder %s32, 0
    %s35 = sadd.s32 %s34, 1
    %s36 = scalar_select %p33, %s34, %s35
    %p39 = pneg %p33
    %p40 = scmp.eq.s32.totalorder %s10, 1
    %p41 = por %p39, %p40
    %p42 = scmp.ne.s32.totalorder %s34, %s37
    %p43 = scmp.eq.s32.totalorder %s10, 0
    %p44 = por %p42, %p43
    %p45 = scmp.ne.s32.totalorder %s34, %s37
    %p46 = scmp.eq.s32.totalorder %s15, 1
    %p47 = por %p45, %p46
    %p48 = scmp.ne.s32.totalorder %s37, %s38
    %p49 = scmp.eq.s32.totalorder %s15, 0
    %p50 = por %p48, %p49
    %p51 = scmp.ne.s32.totalorder %s37, %s38
    %p52 = scmp.eq.s32.totalorder %s16, 1
    %p53 = por %p51, %p52
    %p55 = scmp.ne.s32.totalorder %s38, %s54
    %p56 = scmp.eq.s32.totalorder %s16, 0
    %p57 = por %p55, %p56
    %s58 = ssub.s32 %s17, %s29
    %p59 = scmp.eq.s32.totalorder %s58, 0
    %s61 = sadd.s32 %s60, 1
    %s62 = scalar_select %p59, %s60, %s61
    %p65 = pneg %p59
    %p66 = scmp.eq.s32.totalorder %s10, 1
    %p67 = por %p65, %p66
    %p68 = scmp.ne.s32.totalorder %s60, %s63
    %p69 = scmp.eq.s32.totalorder %s10, 0
    %p70 = por %p68, %p69
    %p71 = scmp.ne.s32.totalorder %s60, %s63
    %p72 = scmp.eq.s32.totalorder %s15, 1
    %p73 = por %p71, %p72
    %p74 = scmp.ne.s32.totalorder %s63, %s64
    %p75 = scmp.eq.s32.totalorder %s15, 0
    %p76 = por %p74, %p75
    %p77 = scmp.ne.s32.totalorder %s63, %s64
    %p78 = scmp.eq.s32.totalorder %s16, 1
    %p79 = por %p77, %p78
    %p81 = scmp.ne.s32.totalorder %s64, %s80
    %p82 = scmp.eq.s32.totalorder %s16, 0
    %p83 = por %p81, %p82
    %s84 = ssub.s32 %s17, %s29
    %p85 = scmp.eq.s32.totalorder %s84, 0
    %s87 = sadd.s32 %s86, 1
    %s88 = scalar_select %p85, %s86, %s87
    %p91 = pneg %p85
    %p92 = scmp.eq.s32.totalorder %s10, 1
    %p93 = por %p91, %p92
    %p94 = scmp.ne.s32.totalorder %s86, %s89
    %p95 = scmp.eq.s32.totalorder %s10, 0
    %p96 = por %p94, %p95
    %p97 = scmp.ne.s32.totalorder %s86, %s89
    %p98 = scmp.eq.s32.totalorder %s15, 1
    %p99 = por %p97, %p98
    %p100 = scmp.ne.s32.totalorder %s89, %s90
    %p101 = scmp.eq.s32.totalorder %s15, 0
    %p102 = por %p100, %p101
    %p103 = scmp.ne.s32.totalorder %s89, %s90
    %p104 = scmp.eq.s32.totalorder %s16, 1
    %p105 = por %p103, %p104
    %p107 = scmp.ne.s32.totalorder %s90, %s106
    %p108 = scmp.eq.s32.totalorder %s16, 0
    %p109 = por %p107, %p108
    %s110 = ssub.s32 %s17, %s29
    %p111 = scmp.eq.s32.totalorder %s110, 0
    %s113 = sadd.s32 %s112, 1
    %s114 = scalar_select %p111, %s112, %s113
    %p117 = pneg %p111
    %p118 = scmp.eq.s32.totalorder %s10, 1
    %p119 = por %p117, %p118
    %p120 = scmp.ne.s32.totalorder %s112, %s115
    %p121 = scmp.eq.s32.totalorder %s10, 0
    %p122 = por %p120, %p121
    %p123 = scmp.ne.s32.totalorder %s112, %s115
    %p124 = scmp.eq.s32.totalorder %s15, 1
    %p125 = por %p123, %p124
    %p126 = scmp.ne.s32.totalorder %s115, %s116
    %p127 = scmp.eq.s32.totalorder %s15, 0
    %p128 = por %p126, %p127
    %p129 = scmp.ne.s32.totalorder %s115, %s116
    %p130 = scmp.eq.s32.totalorder %s16, 1
    %p131 = por %p129, %p130
    %p133 = scmp.ne.s32.totalorder %s116, %s132
    %p134 = scmp.eq.s32.totalorder %s16, 0
    %p135 = por %p133, %p134
    %s136 = ssub.s32 %s17, %s29
    %s137 = ssub.s32 %s18, %s25
    %s138 = sor.u32 %s136, %s137
    %p139 = scmp.eq.s32.totalorder %s138, 0
    %s141 = sadd.s32 %s140, 1
    %s142 = scalar_select %p139, %s140, %s141
    %p145 = pneg %p139
    %p146 = scmp.eq.s32.totalorder %s10, 1
    %p147 = por %p145, %p146
    %p148 = scmp.ne.s32.totalorder %s140, %s143
    %p149 = scmp.eq.s32.totalorder %s10, 0
    %p150 = por %p148, %p149
    %p151 = scmp.ne.s32.totalorder %s140, %s143
    %p152 = scmp.eq.s32.totalorder %s15, 1
    %p153 = por %p151, %p152
    %p154 = scmp.ne.s32.totalorder %s143, %s144
    %p155 = scmp.eq.s32.totalorder %s15, 0
    %p156 = por %p154, %p155
    %p157 = scmp.ne.s32.totalorder %s143, %s144
    %p158 = scmp.eq.s32.totalorder %s16, 1
    %p159 = por %p157, %p158
    %p161 = scmp.ne.s32.totalorder %s144, %s160
    %p162 = scmp.eq.s32.totalorder %s16, 0
    %p163 = por %p161, %p162
    %p164 = scmp.le.s32.totalorder 1, %s10
    %p165 = scmp.lt.s32.totalorder %s10, 3
    %p166 = pnand %p164, %p165
    %p167 = pneg %p166
    // Predicated region
    $region9: #{transformer_forward.26} parent=5 // pred_check
      _
    $region10: #{transformer_forward.26} parent=5 // pred_check_branch
      %169 = sbr.rel (%p166) target = $region12
    $region11: #{transformer_forward.26} parent=5 // pred_region
      %s170 = ssub.s32 %s10, 1
    $region12: #{transformer_forward.26} parent=5 // pred_fallthru
      _
    %p171 = scmp.lt.s32.totalorder %s10, 2
    // Predicated region
    $region13: #{transformer_forward.26} parent=5 // pred_check
      %p172 = pneg %p171
    $region14: #{transformer_forward.26} parent=5 // pred_check_branch
      %174 = sbr.rel (%p172) target = $region16
    $region15: #{transformer_forward.26} parent=5 // pred_region
      // Predicated region
      $region17: #{transformer_forward.26} parent=15 // pred_check
        %p175 = pneg %p44
      $region18: #{transformer_forward.26} parent=15 // pred_check_branch
        %177 = sbr.rel (%p175) target = $region20
      $region19: #{transformer_forward.26} parent=15 // pred_region
        %s178 = smul.u32 8, %s18
        %p179 = scmp.lt.s32.totalorder %s17, 1
        %s180 = scalar_select %p179, %s17, 1
        %p181 = scmp.lt.s32.totalorder %s178, 7
        %s182 = scalar_select %p181, %s178, 7
        %s183 = smul.addr %s180, 8
        %s184 = sadd.s32 %s182, %s183
        %s185 = smul.addr %s184, 4
        %s186 = scalar_lea.vmem %s0, %s185
        %s187 = smul.u32 8, %s18
      $region20: #{transformer_forward.26} parent=15 // pred_fallthru
        _
      // Predicated region
      $region21: #{transformer_forward.26} parent=15 // pred_check
        %p188 = pneg %p70
      $region22: #{transformer_forward.26} parent=15 // pred_check_branch
        %190 = sbr.rel (%p188) target = $region24
      $region23: #{transformer_forward.26} parent=15 // pred_region
        %p191 = scmp.lt.s32.totalorder %s17, 1
        %s192 = scalar_select %p191, %s17, 1
        %s193 = smul.addr %s192, 8
        %s194 = smul.addr %s193, 4
        %s195 = scalar_lea.vmem %s1, %s194
      $region24: #{transformer_forward.26} parent=15 // pred_fallthru
        _
      // Predicated region
      $region25: #{transformer_forward.26} parent=15 // pred_check
        %p196 = pneg %p96
      $region26: #{transformer_forward.26} parent=15 // pred_check_branch
        %198 = sbr.rel (%p196) target = $region28
      $region27: #{transformer_forward.26} parent=15 // pred_region
        %p199 = scmp.lt.s32.totalorder %s17, 1
        %s200 = scalar_select %p199, %s17, 1
        %s201 = smul.addr %s200, 8
        %s202 = smul.addr %s201, 4
        %s203 = scalar_lea.vmem %s2, %s202
      $region28: #{transformer_forward.26} parent=15 // pred_fallthru
        _
      // Predicated region
      $region29: #{transformer_forward.26} parent=15 // pred_check
        %p204 = pneg %p122
      $region30: #{transformer_forward.26} parent=15 // pred_check_branch
        %206 = sbr.rel (%p204) target = $region32
      $region31: #{transformer_forward.26} parent=15 // pred_region
        %p207 = scmp.lt.s32.totalorder %s17, 1
        %s208 = scalar_select %p207, %s17, 1
        %s209 = scalar_lea.vmem %s3, %s208
      $region32: #{transformer_forward.26} parent=15 // pred_fallthru
        _
    $region16: #{transformer_forward.26} parent=5 // pred_fallthru
      _
    %p210 = scmp.le.s32.totalorder 1, %s10
    %p211 = scmp.lt.s32.totalorder %s10, 3
    %p212 = pnand %p210, %p211
    %p213 = pneg %p212
    // Predicated region
    $region33: #{transformer_forward.26} parent=5 // pred_check
      _
    $region34: #{transformer_forward.26} parent=5 // pred_check_branch
      %215 = sbr.rel (%p212) target = $region36
    $region35: #{transformer_forward.26} parent=5 // pred_region
      %s216 = ssub.s32 %s10, 1
      %s217 = smul.u32 8, %s20
      %p218 = scmp.lt.s32.totalorder %s19, 1
      %s219 = scalar_select %p218, %s19, 1
      %p220 = scmp.lt.s32.totalorder %s217, 7
      %s221 = scalar_select %p220, %s217, 7
      %s222 = smul.addr %s219, 8
      %s223 = sadd.s32 %s221, %s222
      %s224 = smul.addr %s223, 4
      %s225 = scalar_lea.vmem %s0, %s224
      %p226 = pneg %p50
      %p227 = pneg %p47
      %p228 = scmp.lt.s32.totalorder %s19, 1
      %s229 = scalar_select %p228, %s19, 1
      %s230 = smul.addr %s229, 8
      %s231 = smul.addr %s230, 4
      %s232 = scalar_lea.vmem %s1, %s231
      %p233 = pneg %p76
      %p234 = pneg %p73
      %p235 = scmp.lt.s32.totalorder %s19, 1
      %s236 = scalar_select %p235, %s19, 1
      %s237 = smul.addr %s236, 8
      %s238 = smul.addr %s237, 4
      %s239 = scalar_lea.vmem %s2, %s238
      %p240 = pneg %p102
      %p241 = pneg %p99
      %p242 = scmp.lt.s32.totalorder %s19, 1
      %s243 = scalar_select %p242, %s19, 1
      %s244 = scalar_lea.vmem %s3, %s243
      %p245 = pneg %p128
      %p246 = pneg %p125
      %p247 = pneg %p156
      %p248 = pneg %p153
      %s249 = smul.u32 8, %s20
      %p250 = scmp.lt.s32.totalorder %s19, 1
      %s251 = scalar_select %p250, %s19, 1
      %p252 = scmp.lt.s32.totalorder %s249, 7
      %s253 = scalar_select %p252, %s249, 7
      %s254 = smul.addr %s251, 8
      %s255 = sadd.s32 %s253, %s254
      %s256 = smul.addr %s255, 8
      %s257 = scalar_lea.vmem %s4, %s256
      %s258 = smul.u32 8, %s20
      %p259 = scmp.lt.s32.totalorder %s19, 1
      %s260 = scalar_select %p259, %s19, 1
      %p261 = scmp.lt.s32.totalorder %s258, 7
      %s262 = scalar_select %p261, %s258, 7
      %s263 = smul.addr %s260, 8
      %s264 = sadd.s32 %s262, %s263
      %s265 = smul.addr %s264, 4
      %s266 = scalar_lea.vmem %s0, %s265
      %s267 = smul.u32 8, %s20
      %p268 = scmp.lt.s32.totalorder %s19, 1
      %s269 = scalar_select %p268, %s19, 1
      %s270 = smul.addr %s269, 8
      %s271 = smul.addr %s270, 4
      %s272 = scalar_lea.vmem %s1, %s271
      %p273 = scmp.lt.s32.totalorder %s19, 1
      %s274 = scalar_select %p273, %s19, 1
      %s275 = smul.addr %s274, 8
      %s276 = smul.addr %s275, 4
      %s277 = scalar_lea.vmem %s2, %s276
      %p278 = scmp.lt.s32.totalorder %s19, 1
      %s279 = scalar_select %p278, %s19, 1
      %s280 = scalar_lea.vmem %s3, %s279
      %s281 = smul.u32 8, %s20
      %p282 = scmp.lt.s32.totalorder %s19, 1
      %s283 = scalar_select %p282, %s19, 1
      %p284 = scmp.lt.s32.totalorder %s281, 7
      %s285 = scalar_select %p284, %s281, 7
      %s286 = smul.addr %s283, 8
      %s287 = sadd.s32 %s285, %s286
      %s288 = smul.addr %s287, 8
      %s289 = scalar_lea.vmem %s4, %s288
      %s290 = smul.u32 8, %s20
      %v292 = vld [vmem:[%s266] sm:$0xf]
      %v293 = vld [vmem:[%s266 + $0x4] sm:$0xf]
      %v294 = vld [vmem:[%s266 + $0x8] sm:$0xf]
      %v295 = vld [vmem:[%s266 + $0xc] sm:$0xf]
      %v296 = vld [vmem:[%s266 + $0x10] sm:$0xf]
      %v297 = vld [vmem:[%s266 + $0x14] sm:$0xf]
      %v298 = vld [vmem:[%s266 + $0x18] sm:$0xf]
      %v299 = vld [vmem:[%s266 + $0x1c] sm:$0xf]
      %v300 = vld [vmem:[%s272] sm:$0xf]
      %v301 = vld [vmem:[%s272 + $0x4] sm:$0xf]
      %v302 = vld [vmem:[%s272 + $0x8] sm:$0xf]
      %v303 = vld [vmem:[%s272 + $0xc] sm:$0xf]
      %v304 = vld [vmem:[%s272 + $0x10] sm:$0xf]
      %v305 = vld [vmem:[%s272 + $0x14] sm:$0xf]
      %v306 = vld [vmem:[%s272 + $0x18] sm:$0xf]
      %v307 = vld [vmem:[%s272 + $0x1c] sm:$0xf]
      %v308 = vld [vmem:[%s277] sm:$0xf]
      %v309 = vld [vmem:[%s277 + $0x4] sm:$0xf]
      %v310 = vld [vmem:[%s277 + $0x8] sm:$0xf]
      %v311 = vld [vmem:[%s277 + $0xc] sm:$0xf]
      %v312 = vld [vmem:[%s277 + $0x10] sm:$0xf]
      %v313 = vld [vmem:[%s277 + $0x14] sm:$0xf]
      %v314 = vld [vmem:[%s277 + $0x18] sm:$0xf]
      %v315 = vld [vmem:[%s277 + $0x1c] sm:$0xf]
      %v316 = vld [vmem:[%s280] sm:$0x1]
      %v325 = vunpack.c.l.b16 %v292
      %v326 = vunpack.c.l.b16 %v293
      %v327 = vunpack.c.l.b16 %v294
      %v328 = vunpack.c.l.b16 %v295
      %v329 = vunpack.c.l.b16 %v296
      %v330 = vunpack.c.l.b16 %v297
      %v331 = vunpack.c.l.b16 %v298
      %v332 = vunpack.c.l.b16 %v299
      %v333 = vpack.c.b16 %v326, %v325
      %v334 = vpack.c.b16 %v328, %v327
      %v335 = vpack.c.b16 %v330, %v329
      %v336 = vpack.c.b16 %v332, %v331
      %v345 = vunpack.c.l.b16 %v300
      %v346 = vunpack.c.l.b16 %v301
      %v347 = vunpack.c.l.b16 %v302
      %v348 = vunpack.c.l.b16 %v303
      %v349 = vunpack.c.l.b16 %v304
      %v350 = vunpack.c.l.b16 %v305
      %v351 = vunpack.c.l.b16 %v306
      %v352 = vunpack.c.l.b16 %v307
      %v353 = vpack.c.b16 %v346, %v345
      %v354 = vpack.c.b16 %v348, %v347
      %v355 = vpack.c.b16 %v350, %v349
      %v356 = vpack.c.b16 %v352, %v351
      %vm357 = vcmask 261120
      %v359 = vsel %vm357, %v333, 0
      %v362 = vsel %vm357, %v334, 0
      %v365 = vsel %vm357, %v335, 0
      %v368 = vsel %vm357, %v336, 0
      %v371 = vsel %vm357, %v353, 0
      %v374 = vsel %vm357, %v354, 0
      %v377 = vsel %vm357, %v355, 0
      %v380 = vsel %vm357, %v356, 0
      %382 = vmatprep.subr.bf16.mxu0 0
      %383 = vmatpush1.bf16.xpose.msra.mxu0 %v371
      %384 = vmatprep.subr.bf16.mxu0 0
      %385 = vmatpush1.bf16.xpose.msra.mxu0 %v374
      %386 = vmatprep.subr.bf16.mxu0 0
      %387 = vmatpush1.bf16.xpose.msra.mxu0 %v377
      %388 = vmatprep.subr.bf16.mxu0 0
      %389 = vmatpush1.bf16.xpose.msra.mxu0 %v380
      %390 = vmatprep.subr.bf16.mxu0 0
      %391 = vmatpush1.bf16.xpose.msra.mxu0 0
      %392 = vmatprep.subr.bf16.mxu0 0
      %393 = vmatpush1.bf16.xpose.msra.mxu0 0
      %394 = vmatprep.subr.bf16.mxu0 0
      %395 = vmatpush1.bf16.xpose.msra.mxu0 0
      %396 = vmatprep.subr.bf16.mxu0 0
      %397 = vmatpush1.bf16.xpose.msra.mxu0 0
      %398 = vmatprep.subr.bf16.mxu0 0
      %399 = vmatpush1.bf16.xpose.msra.mxu0 0
      %400 = vmatprep.subr.bf16.mxu0 0
      %401 = vmatpush1.bf16.xpose.msra.mxu0 0
      %402 = vmatprep.subr.bf16.mxu0 0
      %403 = vmatpush1.bf16.xpose.msra.mxu0 0
      %404 = vmatprep.subr.bf16.mxu0 0
      %405 = vmatpush1.bf16.xpose.msra.mxu0 0
      %406 = vmatprep.subr.bf16.mxu0 0
      %407 = vmatpush1.bf16.xpose.msra.mxu0 0
      %408 = vmatprep.subr.bf16.mxu0 0
      %409 = vmatpush1.bf16.xpose.msra.mxu0 0
      %410 = vmatprep.subr.bf16.mxu0 0
      %411 = vmatpush1.bf16.xpose.msra.mxu0 0
      %412 = vmatprep.subr.bf16.mxu0 0
      %413 = vmatpush1.bf16.xpose.msra.mxu0 0
      %414 = vmatprep.mubr.bf16.mxu0 0
      %415 = vmatmul.mubr.bf16.gmra.mrb[0].mxu0 %v359
      %v416 = vpop.f32.mrb[0].mxu0
      %v417 = vadd.f32 0.0, %v416
      %v418 = vpop.f32.mrb[0].mxu0
      %v419 = vpop.f32.mrb[0].mxu0
      %v420 = vadd.f32 0.0, %v419
      %v421 = vpop.f32.mrb[0].mxu0
      %422 = vmatprep.mubr.bf16.mxu0 0
      %423 = vmatmul.mubr.bf16.gmra.mrb[0].mxu0 %v362
      %v424 = vpop.f32.mrb[0].mxu0
      %v425 = vadd.f32 0.0, %v424
      %v426 = vpop.f32.mrb[0].mxu0
      %v427 = vpop.f32.mrb[0].mxu0
      %v428 = vadd.f32 0.0, %v427
      %v429 = vpop.f32.mrb[0].mxu0
      %430 = vmatprep.mubr.bf16.mxu0 0
      %431 = vmatmul.mubr.bf16.gmra.mrb[0].mxu0 %v365
      %v432 = vpop.f32.mrb[0].mxu0
      %v433 = vadd.f32 0.0, %v432
      %v434 = vpop.f32.mrb[0].mxu0
      %v435 = vpop.f32.mrb[0].mxu0
      %v436 = vadd.f32 0.0, %v435
      %v437 = vpop.f32.mrb[0].mxu0
      %438 = vmatprep.mubr.bf16.mxu0 0
      %439 = vmatmul.mubr.bf16.gmra.mrb[0].mxu0 %v368
      %v440 = vpop.f32.mrb[0].mxu0
      %v441 = vadd.f32 0.0, %v440
      %v442 = vpop.f32.mrb[0].mxu0
      %v443 = vpop.f32.mrb[0].mxu0
      %v444 = vadd.f32 0.0, %v443
      %v445 = vpop.f32.mrb[0].mxu0
      %446 = vdwg.mxu0
      %v447 = vmul.f32 %v417, 0.17677669
      %v448 = vmul.f32 %v420, 0.17677669
      %v449 = vmul.f32 %v425, 0.17677669
      %v450 = vmul.f32 %v428, 0.17677669
      %v451 = vmul.f32 %v433, 0.17677669
      %v452 = vmul.f32 %v436, 0.17677669
      %v453 = vmul.f32 %v441, 0.17677669
      %v454 = vmul.f32 %v444, 0.17677669
      %v456 = vlaneseq
      %v457 = vshrl.u32 %v456, 7
      %v458 = vsub.s32 0, %v457
      %v459 = vrot.slane %v316, %v458
      %v461 = vadd.f32 %v447, %v459
      %v462 = vadd.f32 %v448, %v459
      %v463 = vadd.f32 %v449, %v459
      %v464 = vadd.f32 %v450, %v459
      %v465 = vadd.f32 %v451, %v459
      %v466 = vadd.f32 %v452, %v459
      %v467 = vadd.f32 %v453, %v459
      %v468 = vadd.f32 %v454, %v459
      %vm469 = vcmask 523264
      %v470 = vsel %vm469, %v461, -inf
      %471 = vmax.xlane.f32.xlu0 %v470
      %v472 = vpop.xlane.xlu0 %471
      %v473 = vsel %vm469, %v462, -inf
      %474 = vmax.xlane.f32.xlu0 %v473
      %v475 = vpop.xlane.xlu0 %474
      %v476 = vsel %vm469, %v463, -inf
      %477 = vmax.xlane.f32.xlu0 %v476
      %v478 = vpop.xlane.xlu0 %477
      %v479 = vsel %vm469, %v464, -inf
      %480 = vmax.xlane.f32.xlu0 %v479
      %v481 = vpop.xlane.xlu0 %480
      %v482 = vsel %vm469, %v465, -inf
      %483 = vmax.xlane.f32.xlu0 %v482
      %v484 = vpop.xlane.xlu0 %483
      %v485 = vsel %vm469, %v466, -inf
      %486 = vmax.xlane.f32.xlu0 %v485
      %v487 = vpop.xlane.xlu0 %486
      %v488 = vsel %vm469, %v467, -inf
      %489 = vmax.xlane.f32.xlu0 %v488
      %v490 = vpop.xlane.xlu0 %489
      %v491 = vsel %vm469, %v468, -inf
      %492 = vmax.xlane.f32.xlu0 %v491
      %v493 = vpop.xlane.xlu0 %492
      %v494 = vsub.f32 %v461, %v472
      %v495 = vsub.f32 %v462, %v475
      %v496 = vsub.f32 %v463, %v478
      %v497 = vsub.f32 %v464, %v481
      %v498 = vsub.f32 %v465, %v484
      %v499 = vsub.f32 %v466, %v487
      %v500 = vsub.f32 %v467, %v490
      %v501 = vsub.f32 %v468, %v493
      %v502 = vmul.f32 %v494, 1.442695
      %v503 = vpow.pop %v502
      %v504 = vmul.f32 %v495, 1.442695
      %v505 = vpow.pop %v504
      %v506 = vmul.f32 %v496, 1.442695
      %v507 = vpow.pop %v506
      %v508 = vmul.f32 %v497, 1.442695
      %v509 = vpow.pop %v508
      %v510 = vmul.f32 %v498, 1.442695
      %v511 = vpow.pop %v510
      %v512 = vmul.f32 %v499, 1.442695
      %v513 = vpow.pop %v512
      %v514 = vmul.f32 %v500, 1.442695
      %v515 = vpow.pop %v514
      %v516 = vmul.f32 %v501, 1.442695
      %v517 = vpow.pop %v516
      %v518 = vsel %vm469, %v503, 0.0
      %519 = vadd.xlane.f32.xlu0 %v518
      %v520 = vpop.xlane.xlu0 %519
      %v521 = vsel %vm469, %v505, 0.0
      %522 = vadd.xlane.f32.xlu0 %v521
      %v523 = vpop.xlane.xlu0 %522
      %v524 = vsel %vm469, %v507, 0.0
      %525 = vadd.xlane.f32.xlu0 %v524
      %v526 = vpop.xlane.xlu0 %525
      %v527 = vsel %vm469, %v509, 0.0
      %528 = vadd.xlane.f32.xlu0 %v527
      %v529 = vpop.xlane.xlu0 %528
      %v530 = vsel %vm469, %v511, 0.0
      %531 = vadd.xlane.f32.xlu0 %v530
      %v532 = vpop.xlane.xlu0 %531
      %v533 = vsel %vm469, %v513, 0.0
      %534 = vadd.xlane.f32.xlu0 %v533
      %v535 = vpop.xlane.xlu0 %534
      %v536 = vsel %vm469, %v515, 0.0
      %537 = vadd.xlane.f32.xlu0 %v536
      %v538 = vpop.xlane.xlu0 %537
      %v539 = vsel %vm469, %v517, 0.0
      %540 = vadd.xlane.f32.xlu0 %v539
      %v541 = vpop.xlane.xlu0 %540
      %v542 = vrcp.pop %v520
      %v543 = vrcp.pop %v523
      %v544 = vrcp.pop %v526
      %v545 = vrcp.pop %v529
      %v546 = vrcp.pop %v532
      %v547 = vrcp.pop %v535
      %v548 = vrcp.pop %v538
      %v549 = vrcp.pop %v541
      %v550 = vmul.f32 %v503, %v542
      %v551 = vmul.f32 %v505, %v543
      %v552 = vmul.f32 %v507, %v544
      %v553 = vmul.f32 %v509, %v545
      %v554 = vmul.f32 %v511, %v546
      %v555 = vmul.f32 %v513, %v547
      %v556 = vmul.f32 %v515, %v548
      %v557 = vmul.f32 %v517, %v549
      %v558 = vpack.c.bf16 %v551, %v550
      %v559 = vpack.c.bf16 %v553, %v552
      %v560 = vpack.c.bf16 %v555, %v554
      %v561 = vpack.c.bf16 %v557, %v556
      %v570 = vunpack.c.l.b16 %v308
      %v571 = vunpack.c.l.b16 %v309
      %v572 = vunpack.c.l.b16 %v310
      %v573 = vunpack.c.l.b16 %v311
      %v574 = vunpack.c.l.b16 %v312
      %v575 = vunpack.c.l.b16 %v313
      %v576 = vunpack.c.l.b16 %v314
      %v577 = vunpack.c.l.b16 %v315
      %v578 = vpack.c.b16 %v571, %v570
      %v579 = vpack.c.b16 %v573, %v572
      %v580 = vpack.c.b16 %v575, %v574
      %v581 = vpack.c.b16 %v577, %v576
      %v587 = vsel %vm469, %v558, 0
      %v590 = vsel %vm469, %v559, 0
      %v593 = vsel %vm469, %v560, 0
      %v596 = vsel %vm469, %v561, 0
      %598 = vmatprep.subr.bf16.mxu0 0
      %599 = vmatpush1.bf16.msra.mxu0 %v578
      %600 = vmatprep.subr.bf16.mxu0 0
      %601 = vmatpush1.bf16.msra.mxu0 %v579
      %602 = vmatprep.subr.bf16.mxu0 0
      %603 = vmatpush1.bf16.msra.mxu0 %v580
      %604 = vmatprep.subr.bf16.mxu0 0
      %605 = vmatpush1.bf16.msra.mxu0 %v581
      %606 = vmatprep.subr.bf16.mxu0 0
      %607 = vmatpush1.bf16.msra.mxu0 0
      %608 = vmatprep.subr.bf16.mxu0 0
      %609 = vmatpush1.bf16.msra.mxu0 0
      %610 = vmatprep.subr.bf16.mxu0 0
      %611 = vmatpush1.bf16.msra.mxu0 0
      %612 = vmatprep.subr.bf16.mxu0 0
      %613 = vmatpush1.bf16.msra.mxu0 0
      %614 = vmatprep.subr.bf16.mxu0 0
      %615 = vmatpush1.bf16.msra.mxu0 0
      %616 = vmatprep.subr.bf16.mxu0 0
      %617 = vmatpush1.bf16.msra.mxu0 0
      %618 = vmatprep.subr.bf16.mxu0 0
      %619 = vmatpush1.bf16.msra.mxu0 0
      %620 = vmatprep.subr.bf16.mxu0 0
      %621 = vmatpush1.bf16.msra.mxu0 0
      %622 = vmatprep.subr.bf16.mxu0 0
      %623 = vmatpush1.bf16.msra.mxu0 0
      %624 = vmatprep.subr.bf16.mxu0 0
      %625 = vmatpush1.bf16.msra.mxu0 0
      %626 = vmatprep.subr.bf16.mxu0 0
      %627 = vmatpush1.bf16.msra.mxu0 0
      %628 = vmatprep.subr.bf16.mxu0 0
      %629 = vmatpush1.bf16.msra.mxu0 0
      %630 = vmatprep.mubr.bf16.mxu0 0
      %631 = vmatmul.mubr.bf16.gmra.mrb[0].mxu0 %v587
      %v632 = vpop.f32.mrb[0].mxu0
      %v633 = vadd.f32 0.0, %v632
      %v634 = vpop.f32.mrb[0].mxu0
      %v635 = vpop.f32.mrb[0].mxu0
      %v636 = vadd.f32 0.0, %v635
      %v637 = vpop.f32.mrb[0].mxu0
      %638 = vmatprep.mubr.bf16.mxu0 0
      %639 = vmatmul.mubr.bf16.gmra.mrb[0].mxu0 %v590
      %v640 = vpop.f32.mrb[0].mxu0
      %v641 = vadd.f32 0.0, %v640
      %v642 = vpop.f32.mrb[0].mxu0
      %v643 = vpop.f32.mrb[0].mxu0
      %v644 = vadd.f32 0.0, %v643
      %v645 = vpop.f32.mrb[0].mxu0
      %646 = vmatprep.mubr.bf16.mxu0 0
      %647 = vmatmul.mubr.bf16.gmra.mrb[0].mxu0 %v593
      %v648 = vpop.f32.mrb[0].mxu0
      %v649 = vadd.f32 0.0, %v648
      %v650 = vpop.f32.mrb[0].mxu0
      %v651 = vpop.f32.mrb[0].mxu0
      %v652 = vadd.f32 0.0, %v651
      %v653 = vpop.f32.mrb[0].mxu0
      %654 = vmatprep.mubr.bf16.mxu0 0
      %655 = vmatmul.mubr.bf16.gmra.mrb[0].mxu0 %v596
      %v656 = vpop.f32.mrb[0].mxu0
      %v657 = vadd.f32 0.0, %v656
      %v658 = vpop.f32.mrb[0].mxu0
      %v659 = vpop.f32.mrb[0].mxu0
      %v660 = vadd.f32 0.0, %v659
      %v661 = vpop.f32.mrb[0].mxu0
      %662 = vdwg.mxu0
      %663 = vrot.lane.b32.xlu0 %v333, 96
      %v664 = vpop.permute.xlu0 %663
      %665 = vrot.lane.b32.xlu0 %v334, 96
      %v666 = vpop.permute.xlu0 %665
      %667 = vrot.lane.b32.xlu0 %v335, 96
      %v668 = vpop.permute.xlu0 %667
      %669 = vrot.lane.b32.xlu0 %v336, 96
      %v670 = vpop.permute.xlu0 %669
      %671 = vrot.lane.b32.xlu0 %v353, 96
      %v672 = vpop.permute.xlu0 %671
      %673 = vrot.lane.b32.xlu0 %v354, 96
      %v674 = vpop.permute.xlu0 %673
      %675 = vrot.lane.b32.xlu0 %v355, 96
      %v676 = vpop.permute.xlu0 %675
      %677 = vrot.lane.b32.xlu0 %v356, 96
      %v678 = vpop.permute.xlu0 %677
      %v680 = vsel %vm357, %v664, 0
      %v683 = vsel %vm357, %v666, 0
      %v686 = vsel %vm357, %v668, 0
      %v689 = vsel %vm357, %v670, 0
      %v692 = vsel %vm357, %v672, 0
      %v695 = vsel %vm357, %v674, 0
      %v698 = vsel %vm357, %v676, 0
      %v701 = vsel %vm357, %v678, 0
      %703 = vmatprep.subr.bf16.mxu0 0
      %704 = vmatpush1.bf16.xpose.msra.mxu0 %v692
      %705 = vmatprep.subr.bf16.mxu0 0
      %706 = vmatpush1.bf16.xpose.msra.mxu0 %v695
      %707 = vmatprep.subr.bf16.mxu0 0
      %708 = vmatpush1.bf16.xpose.msra.mxu0 %v698
      %709 = vmatprep.subr.bf16.mxu0 0
      %710 = vmatpush1.bf16.xpose.msra.mxu0 %v701
      %711 = vmatprep.subr.bf16.mxu0 0
      %712 = vmatpush1.bf16.xpose.msra.mxu0 0
      %713 = vmatprep.subr.bf16.mxu0 0
      %714 = vmatpush1.bf16.xpose.msra.mxu0 0
      %715 = vmatprep.subr.bf16.mxu0 0
      %716 = vmatpush1.bf16.xpose.msra.mxu0 0
      %717 = vmatprep.subr.bf16.mxu0 0
      %718 = vmatpush1.bf16.xpose.msra.mxu0 0
      %719 = vmatprep.subr.bf16.mxu0 0
      %720 = vmatpush1.bf16.xpose.msra.mxu0 0
      %721 = vmatprep.subr.bf16.mxu0 0
      %722 = vmatpush1.bf16.xpose.msra.mxu0 0
      %723 = vmatprep.subr.bf16.mxu0 0
      %724 = vmatpush1.bf16.xpose.msra.mxu0 0
      %725 = vmatprep.subr.bf16.mxu0 0
      %726 = vmatpush1.bf16.xpose.msra.mxu0 0
      %727 = vmatprep.subr.bf16.mxu0 0
      %728 = vmatpush1.bf16.xpose.msra.mxu0 0
      %729 = vmatprep.subr.bf16.mxu0 0
      %730 = vmatpush1.bf16.xpose.msra.mxu0 0
      %731 = vmatprep.subr.bf16.mxu0 0
      %732 = vmatpush1.bf16.xpose.msra.mxu0 0
      %733 = vmatprep.subr.bf16.mxu0 0
      %734 = vmatpush1.bf16.xpose.msra.mxu0 0
      %735 = vmatprep.mubr.bf16.mxu0 0
      %736 = vmatmul.mubr.bf16.gmra.mrb[0].mxu0 %v680
      %v737 = vpop.f32.mrb[0].mxu0
      %v738 = vadd.f32 0.0, %v737
      %v739 = vpop.f32.mrb[0].mxu0
      %v740 = vpop.f32.mrb[0].mxu0
      %v741 = vadd.f32 0.0, %v740
      %v742 = vpop.f32.mrb[0].mxu0
      %743 = vmatprep.mubr.bf16.mxu0 0
      %744 = vmatmul.mubr.bf16.gmra.mrb[0].mxu0 %v683
      %v745 = vpop.f32.mrb[0].mxu0
      %v746 = vadd.f32 0.0, %v745
      %v747 = vpop.f32.mrb[0].mxu0
      %v748 = vpop.f32.mrb[0].mxu0
      %v749 = vadd.f32 0.0, %v748
      %v750 = vpop.f32.mrb[0].mxu0
      %751 = vmatprep.mubr.bf16.mxu0 0
      %752 = vmatmul.mubr.bf16.gmra.mrb[0].mxu0 %v686
      %v753 = vpop.f32.mrb[0].mxu0
      %v754 = vadd.f32 0.0, %v753
      %v755 = vpop.f32.mrb[0].mxu0
      %v756 = vpop.f32.mrb[0].mxu0
      %v757 = vadd.f32 0.0, %v756
      %v758 = vpop.f32.mrb[0].mxu0
      %759 = vmatprep.mubr.bf16.mxu0 0
      %760 = vmatmul.mubr.bf16.gmra.mrb[0].mxu0 %v689
      %v761 = vpop.f32.mrb[0].mxu0
      %v762 = vadd.f32 0.0, %v761
      %v763 = vpop.f32.mrb[0].mxu0
      %v764 = vpop.f32.mrb[0].mxu0
      %v765 = vadd.f32 0.0, %v764
      %v766 = vpop.f32.mrb[0].mxu0
      %767 = vdwg.mxu0
      %v768 = vmul.f32 %v738, 0.17677669
      %v769 = vmul.f32 %v741, 0.17677669
      %v770 = vmul.f32 %v746, 0.17677669
      %v771 = vmul.f32 %v749, 0.17677669
      %v772 = vmul.f32 %v754, 0.17677669
      %v773 = vmul.f32 %v757, 0.17677669
      %v774 = vmul.f32 %v762, 0.17677669
      %v775 = vmul.f32 %v765, 0.17677669
      %v776 = vadd.f32 %v768, %v459
      %v777 = vadd.f32 %v769, %v459
      %v778 = vadd.f32 %v770, %v459
      %v779 = vadd.f32 %v771, %v459
      %v780 = vadd.f32 %v772, %v459
      %v781 = vadd.f32 %v773, %v459
      %v782 = vadd.f32 %v774, %v459
      %v783 = vadd.f32 %v775, %v459
      %v784 = vsel %vm469, %v776, -inf
      %785 = vmax.xlane.f32.xlu0 %v784
      %v786 = vpop.xlane.xlu0 %785
      %v787 = vsel %vm469, %v777, -inf
      %788 = vmax.xlane.f32.xlu0 %v787
      %v789 = vpop.xlane.xlu0 %788
      %v790 = vsel %vm469, %v778, -inf
      %791 = vmax.xlane.f32.xlu0 %v790
      %v792 = vpop.xlane.xlu0 %791
      %v793 = vsel %vm469, %v779, -inf
      %794 = vmax.xlane.f32.xlu0 %v793
      %v795 = vpop.xlane.xlu0 %794
      %v796 = vsel %vm469, %v780, -inf
      %797 = vmax.xlane.f32.xlu0 %v796
      %v798 = vpop.xlane.xlu0 %797
      %v799 = vsel %vm469, %v781, -inf
      %800 = vmax.xlane.f32.xlu0 %v799
      %v801 = vpop.xlane.xlu0 %800
      %v802 = vsel %vm469, %v782, -inf
      %803 = vmax.xlane.f32.xlu0 %v802
      %v804 = vpop.xlane.xlu0 %803
      %v805 = vsel %vm469, %v783, -inf
      %806 = vmax.xlane.f32.xlu0 %v805
      %v807 = vpop.xlane.xlu0 %806
      %v808 = vsub.f32 %v776, %v786
      %v809 = vsub.f32 %v777, %v789
      %v810 = vsub.f32 %v778, %v792
      %v811 = vsub.f32 %v779, %v795
      %v812 = vsub.f32 %v780, %v798
      %v813 = vsub.f32 %v781, %v801
      %v814 = vsub.f32 %v782, %v804
      %v815 = vsub.f32 %v783, %v807
      %v816 = vmul.f32 %v808, 1.442695
      %v817 = vpow.pop %v816
      %v818 = vmul.f32 %v809, 1.442695
      %v819 = vpow.pop %v818
      %v820 = vmul.f32 %v810, 1.442695
      %v821 = vpow.pop %v820
      %v822 = vmul.f32 %v811, 1.442695
      %v823 = vpow.pop %v822
      %v824 = vmul.f32 %v812, 1.442695
      %v825 = vpow.pop %v824
      %v826 = vmul.f32 %v813, 1.442695
      %v827 = vpow.pop %v826
      %v828 = vmul.f32 %v814, 1.442695
      %v829 = vpow.pop %v828
      %v830 = vmul.f32 %v815, 1.442695
      %v831 = vpow.pop %v830
      %v832 = vsel %vm469, %v817, 0.0
      %833 = vadd.xlane.f32.xlu0 %v832
      %v834 = vpop.xlane.xlu0 %833
      %v835 = vsel %vm469, %v819, 0.0
      %836 = vadd.xlane.f32.xlu0 %v835
      %v837 = vpop.xlane.xlu0 %836
      %v838 = vsel %vm469, %v821, 0.0
      %839 = vadd.xlane.f32.xlu0 %v838
      %v840 = vpop.xlane.xlu0 %839
      %v841 = vsel %vm469, %v823, 0.0
      %842 = vadd.xlane.f32.xlu0 %v841
      %v843 = vpop.xlane.xlu0 %842
      %v844 = vsel %vm469, %v825, 0.0
      %845 = vadd.xlane.f32.xlu0 %v844
      %v846 = vpop.xlane.xlu0 %845
      %v847 = vsel %vm469, %v827, 0.0
      %848 = vadd.xlane.f32.xlu0 %v847
      %v849 = vpop.xlane.xlu0 %848
      %v850 = vsel %vm469, %v829, 0.0
      %851 = vadd.xlane.f32.xlu0 %v850
      %v852 = vpop.xlane.xlu0 %851
      %v853 = vsel %vm469, %v831, 0.0
      %854 = vadd.xlane.f32.xlu0 %v853
      %v855 = vpop.xlane.xlu0 %854
      %v856 = vrcp.pop %v834
      %v857 = vrcp.pop %v837
      %v858 = vrcp.pop %v840
      %v859 = vrcp.pop %v843
      %v860 = vrcp.pop %v846
      %v861 = vrcp.pop %v849
      %v862 = vrcp.pop %v852
      %v863 = vrcp.pop %v855
      %v864 = vmul.f32 %v817, %v856
      %v865 = vmul.f32 %v819, %v857
      %v866 = vmul.f32 %v821, %v858
      %v867 = vmul.f32 %v823, %v859
      %v868 = vmul.f32 %v825, %v860
      %v869 = vmul.f32 %v827, %v861
      %v870 = vmul.f32 %v829, %v862
      %v871 = vmul.f32 %v831, %v863
      %v872 = vpack.c.bf16 %v865, %v864
      %v873 = vpack.c.bf16 %v867, %v866
      %v874 = vpack.c.bf16 %v869, %v868
      %v875 = vpack.c.bf16 %v871, %v870
      %876 = vrot.lane.b32.xlu0 %v578, 96
      %v877 = vpop.permute.xlu0 %876
      %878 = vrot.lane.b32.xlu0 %v579, 96
      %v879 = vpop.permute.xlu0 %878
      %880 = vrot.lane.b32.xlu0 %v580, 96
      %v881 = vpop.permute.xlu0 %880
      %882 = vrot.lane.b32.xlu0 %v581, 96
      %v883 = vpop.permute.xlu0 %882
      %v889 = vsel %vm469, %v872, 0
      %v892 = vsel %vm469, %v873, 0
      %v895 = vsel %vm469, %v874, 0
      %v898 = vsel %vm469, %v875, 0
      %900 = vmatprep.subr.bf16.mxu0 0
      %901 = vmatpush1.bf16.msra.mxu0 %v877
      %902 = vmatprep.subr.bf16.mxu0 0
      %903 = vmatpush1.bf16.msra.mxu0 %v879
      %904 = vmatprep.subr.bf16.mxu0 0
      %905 = vmatpush1.bf16.msra.mxu0 %v881
      %906 = vmatprep.subr.bf16.mxu0 0
      %907 = vmatpush1.bf16.msra.mxu0 %v883
      %908 = vmatprep.subr.bf16.mxu0 0
      %909 = vmatpush1.bf16.msra.mxu0 0
      %910 = vmatprep.subr.bf16.mxu0 0
      %911 = vmatpush1.bf16.msra.mxu0 0
      %912 = vmatprep.subr.bf16.mxu0 0
      %913 = vmatpush1.bf16.msra.mxu0 0
      %914 = vmatprep.subr.bf16.mxu0 0
      %915 = vmatpush1.bf16.msra.mxu0 0
      %916 = vmatprep.subr.bf16.mxu0 0
      %917 = vmatpush1.bf16.msra.mxu0 0
      %918 = vmatprep.subr.bf16.mxu0 0
      %919 = vmatpush1.bf16.msra.mxu0 0
      %920 = vmatprep.subr.bf16.mxu0 0
      %921 = vmatpush1.bf16.msra.mxu0 0
      %922 = vmatprep.subr.bf16.mxu0 0
      %923 = vmatpush1.bf16.msra.mxu0 0
      %924 = vmatprep.subr.bf16.mxu0 0
      %925 = vmatpush1.bf16.msra.mxu0 0
      %926 = vmatprep.subr.bf16.mxu0 0
      %927 = vmatpush1.bf16.msra.mxu0 0
      %928 = vmatprep.subr.bf16.mxu0 0
      %929 = vmatpush1.bf16.msra.mxu0 0
      %930 = vmatprep.subr.bf16.mxu0 0
      %931 = vmatpush1.bf16.msra.mxu0 0
      %932 = vmatprep.mubr.bf16.mxu0 0
      %933 = vmatmul.mubr.bf16.gmra.mrb[0].mxu0 %v889
      %v934 = vpop.f32.mrb[0].mxu0
      %v935 = vadd.f32 0.0, %v934
      %v936 = vpop.f32.mrb[0].mxu0
      %v937 = vpop.f32.mrb[0].mxu0
      %v938 = vadd.f32 0.0, %v937
      %v939 = vpop.f32.mrb[0].mxu0
      %940 = vmatprep.mubr.bf16.mxu0 0
      %941 = vmatmul.mubr.bf16.gmra.mrb[0].mxu0 %v892
      %v942 = vpop.f32.mrb[0].mxu0
      %v943 = vadd.f32 0.0, %v942
      %v944 = vpop.f32.mrb[0].mxu0
      %v945 = vpop.f32.mrb[0].mxu0
      %v946 = vadd.f32 0.0, %v945
      %v947 = vpop.f32.mrb[0].mxu0
      %948 = vmatprep.mubr.bf16.mxu0 0
      %949 = vmatmul.mubr.bf16.gmra.mrb[0].mxu0 %v895
      %v950 = vpop.f32.mrb[0].mxu0
      %v951 = vadd.f32 0.0, %v950
      %v952 = vpop.f32.mrb[0].mxu0
      %v953 = vpop.f32.mrb[0].mxu0
      %v954 = vadd.f32 0.0, %v953
      %v955 = vpop.f32.mrb[0].mxu0
      %956 = vmatprep.mubr.bf16.mxu0 0
      %957 = vmatmul.mubr.bf16.gmra.mrb[0].mxu0 %v898
      %v958 = vpop.f32.mrb[0].mxu0
      %v959 = vadd.f32 0.0, %v958
      %v960 = vpop.f32.mrb[0].mxu0
      %v961 = vpop.f32.mrb[0].mxu0
      %v962 = vadd.f32 0.0, %v961
      %v963 = vpop.f32.mrb[0].mxu0
      %964 = vdwg.mxu0
      %965 = vrot.lane.b32.xlu0 %v333, 64
      %v966 = vpop.permute.xlu0 %965
      %967 = vrot.lane.b32.xlu0 %v334, 64
      %v968 = vpop.permute.xlu0 %967
      %969 = vrot.lane.b32.xlu0 %v335, 64
      %v970 = vpop.permute.xlu0 %969
      %971 = vrot.lane.b32.xlu0 %v336, 64
      %v972 = vpop.permute.xlu0 %971
      %973 = vrot.lane.b32.xlu0 %v353, 64
      %v974 = vpop.permute.xlu0 %973
      %975 = vrot.lane.b32.xlu0 %v354, 64
      %v976 = vpop.permute.xlu0 %975
      %977 = vrot.lane.b32.xlu0 %v355, 64
      %v978 = vpop.permute.xlu0 %977
      %979 = vrot.lane.b32.xlu0 %v356, 64
      %v980 = vpop.permute.xlu0 %979
      %v982 = vsel %vm357, %v966, 0
      %v985 = vsel %vm357, %v968, 0
      %v988 = vsel %vm357, %v970, 0
      %v991 = vsel %vm357, %v972, 0
      %v994 = vsel %vm357, %v974, 0
      %v997 = vsel %vm357, %v976, 0
      %v1000 = vsel %vm357, %v978, 0
      %v1003 = vsel %vm357, %v980, 0
      %1005 = vmatprep.subr.bf16.mxu0 0
      %1006 = vmatpush1.bf16.xpose.msra.mxu0 %v994
      %1007 = vmatprep.subr.bf16.mxu0 0
      %1008 = vmatpush1.bf16.xpose.msra.mxu0 %v997
      %1009 = vmatprep.subr.bf16.mxu0 0
      %1010 = vmatpush1.bf16.xpose.msra.mxu0 %v1000
      %1011 = vmatprep.subr.bf16.mxu0 0
      %1012 = vmatpush1.bf16.xpose.msra.mxu0 %v1003
      %1013 = vmatprep.subr.bf16.mxu0 0
      %1014 = vmatpush1.bf16.xpose.msra.mxu0 0
      %1015 = vmatprep.subr.bf16.mxu0 0
      %1016 = vmatpush1.bf16.xpose.msra.mxu0 0
      %1017 = vmatprep.subr.bf16.mxu0 0
      %1018 = vmatpush1.bf16.xpose.msra.mxu0 0
      %1019 = vmatprep.subr.bf16.mxu0 0
      %1020 = vmatpush1.bf16.xpose.msra.mxu0 0
      %1021 = vmatprep.subr.bf16.mxu0 0
      %1022 = vmatpush1.bf16.xpose.msra.mxu0 0
      %1023 = vmatprep.subr.bf16.mxu0 0
      %1024 = vmatpush1.bf16.xpose.msra.mxu0 0
      %1025 = vmatprep.subr.bf16.mxu0 0
      %1026 = vmatpush1.bf16.xpose.msra.mxu0 0
      %1027 = vmatprep.subr.bf16.mxu0 0
      %1028 = vmatpush1.bf16.xpose.msra.mxu0 0
      %1029 = vmatprep.subr.bf16.mxu0 0
      %1030 = vmatpush1.bf16.xpose.msra.mxu0 0
      %1031 = vmatprep.subr.bf16.mxu0 0
      %1032 = vmatpush1.bf16.xpose.msra.mxu0 0
      %1033 = vmatprep.subr.bf16.mxu0 0
      %1034 = vmatpush1.bf16.xpose.msra.mxu0 0
      %1035 = vmatprep.subr.bf16.mxu0 0
      %1036 = vmatpush1.bf16.xpose.msra.mxu0 0
      %1037 = vmatprep.mubr.bf16.mxu0 0
      %1038 = vmatmul.mubr.bf16.gmra.mrb[0].mxu0 %v982
      %v1039 = vpop.f32.mrb[0].mxu0
      %v1040 = vadd.f32 0.0, %v1039
      %v1041 = vpop.f32.mrb[0].mxu0
      %v1042 = vpop.f32.mrb[0].mxu0
      %v1043 = vadd.f32 0.0, %v1042
      %v1044 = vpop.f32.mrb[0].mxu0
      %1045 = vmatprep.mubr.bf16.mxu0 0
      %1046 = vmatmul.mubr.bf16.gmra.mrb[0].mxu0 %v985
      %v1047 = vpop.f32.mrb[0].mxu0
      %v1048 = vadd.f32 0.0, %v1047
      %v1049 = vpop.f32.mrb[0].mxu0
      %v1050 = vpop.f32.mrb[0].mxu0
      %v1051 = vadd.f32 0.0, %v1050
      %v1052 = vpop.f32.mrb[0].mxu0
      %1053 = vmatprep.mubr.bf16.mxu0 0
      %1054 = vmatmul.mubr.bf16.gmra.mrb[0].mxu0 %v988
      %v1055 = vpop.f32.mrb[0].mxu0
      %v1056 = vadd.f32 0.0, %v1055
      %v1057 = vpop.f32.mrb[0].mxu0
      %v1058 = vpop.f32.mrb[0].mxu0
      %v1059 = vadd.f32 0.0, %v1058
      %v1060 = vpop.f32.mrb[0].mxu0
      %1061 = vmatprep.mubr.bf16.mxu0 0
      %1062 = vmatmul.mubr.bf16.gmra.mrb[0].mxu0 %v991
      %v1063 = vpop.f32.mrb[0].mxu0
      %v1064 = vadd.f32 0.0, %v1063
      %v1065 = vpop.f32.mrb[0].mxu0
      %v1066 = vpop.f32.mrb[0].mxu0
      %v1067 = vadd.f32 0.0, %v1066
      %v1068 = vpop.f32.mrb[0].mxu0
      %1069 = vdwg.mxu0
      %v1070 = vmul.f32 %v1040, 0.17677669
      %v1071 = vmul.f32 %v1043, 0.17677669
      %v1072 = vmul.f32 %v1048, 0.17677669
      %v1073 = vmul.f32 %v1051, 0.17677669
      %v1074 = vmul.f32 %v1056, 0.17677669
      %v1075 = vmul.f32 %v1059, 0.17677669
      %v1076 = vmul.f32 %v1064, 0.17677669
      %v1077 = vmul.f32 %v1067, 0.17677669
      %v1078 = vadd.f32 %v1070, %v459
      %v1079 = vadd.f32 %v1071, %v459
      %v1080 = vadd.f32 %v1072, %v459
      %v1081 = vadd.f32 %v1073, %v459
      %v1082 = vadd.f32 %v1074, %v459
      %v1083 = vadd.f32 %v1075, %v459
      %v1084 = vadd.f32 %v1076, %v459
      %v1085 = vadd.f32 %v1077, %v459
      %v1086 = vsel %vm469, %v1078, -inf
      %1087 = vmax.xlane.f32.xlu0 %v1086
      %v1088 = vpop.xlane.xlu0 %1087
      %v1089 = vsel %vm469, %v1079, -inf
      %1090 = vmax.xlane.f32.xlu0 %v1089
      %v1091 = vpop.xlane.xlu0 %1090
      %v1092 = vsel %vm469, %v1080, -inf
      %1093 = vmax.xlane.f32.xlu0 %v1092
      %v1094 = vpop.xlane.xlu0 %1093
      %v1095 = vsel %vm469, %v1081, -inf
      %1096 = vmax.xlane.f32.xlu0 %v1095
      %v1097 = vpop.xlane.xlu0 %1096
      %v1098 = vsel %vm469, %v1082, -inf
      %1099 = vmax.xlane.f32.xlu0 %v1098
      %v1100 = vpop.xlane.xlu0 %1099
      %v1101 = vsel %vm469, %v1083, -inf
      %1102 = vmax.xlane.f32.xlu0 %v1101
      %v1103 = vpop.xlane.xlu0 %1102
      %v1104 = vsel %vm469, %v1084, -inf
      %1105 = vmax.xlane.f32.xlu0 %v1104
      %v1106 = vpop.xlane.xlu0 %1105
      %v1107 = vsel %vm469, %v1085, -inf
      %1108 = vmax.xlane.f32.xlu0 %v1107
      %v1109 = vpop.xlane.xlu0 %1108
      %v1110 = vsub.f32 %v1078, %v1088
      %v1111 = vsub.f32 %v1079, %v1091
      %v1112 = vsub.f32 %v1080, %v1094
      %v1113 = vsub.f32 %v1081, %v1097
      %v1114 = vsub.f32 %v1082, %v1100
      %v1115 = vsub.f32 %v1083, %v1103
      %v1116 = vsub.f32 %v1084, %v1106
      %v1117 = vsub.f32 %v1085, %v1109
      %v1118 = vmul.f32 %v1110, 1.442695
      %v1119 = vpow.pop %v1118
      %v1120 = vmul.f32 %v1111, 1.442695
      %v1121 = vpow.pop %v1120
      %v1122 = vmul.f32 %v1112, 1.442695
      %v1123 = vpow.pop %v1122
      %v1124 = vmul.f32 %v1113, 1.442695
      %v1125 = vpow.pop %v1124
      %v1126 = vmul.f32 %v1114, 1.442695
      %v1127 = vpow.pop %v1126
      %v1128 = vmul.f32 %v1115, 1.442695
      %v1129 = vpow.pop %v1128
      %v1130 = vmul.f32 %v1116, 1.442695
      %v1131 = vpow.pop %v1130
      %v1132 = vmul.f32 %v1117, 1.442695
      %v1133 = vpow.pop %v1132
      %v1134 = vsel %vm469, %v1119, 0.0
      %1135 = vadd.xlane.f32.xlu0 %v1134
      %v1136 = vpop.xlane.xlu0 %1135
      %v1137 = vsel %vm469, %v1121, 0.0
      %1138 = vadd.xlane.f32.xlu0 %v1137
      %v1139 = vpop.xlane.xlu0 %1138
      %v1140 = vsel %vm469, %v1123, 0.0
      %1141 = vadd.xlane.f32.xlu0 %v1140
      %v1142 = vpop.xlane.xlu0 %1141
      %v1143 = vsel %vm469, %v1125, 0.0
      %1144 = vadd.xlane.f32.xlu0 %v1143
      %v1145 = vpop.xlane.xlu0 %1144
      %v1146 = vsel %vm469, %v1127, 0.0
      %1147 = vadd.xlane.f32.xlu0 %v1146
      %v1148 = vpop.xlane.xlu0 %1147
      %v1149 = vsel %vm469, %v1129, 0.0
      %1150 = vadd.xlane.f32.xlu0 %v1149
      %v1151 = vpop.xlane.xlu0 %1150
      %v1152 = vsel %vm469, %v1131, 0.0
      %1153 = vadd.xlane.f32.xlu0 %v1152
      %v1154 = vpop.xlane.xlu0 %1153
      %v1155 = vsel %vm469, %v1133, 0.0
      %1156 = vadd.xlane.f32.xlu0 %v1155
      %v1157 = vpop.xlane.xlu0 %1156
      %v1158 = vrcp.pop %v1136
      %v1159 = vrcp.pop %v1139
      %v1160 = vrcp.pop %v1142
      %v1161 = vrcp.pop %v1145
      %v1162 = vrcp.pop %v1148
      %v1163 = vrcp.pop %v1151
      %v1164 = vrcp.pop %v1154
      %v1165 = vrcp.pop %v1157
      %v1166 = vmul.f32 %v1119, %v1158
      %v1167 = vmul.f32 %v1121, %v1159
      %v1168 = vmul.f32 %v1123, %v1160
      %v1169 = vmul.f32 %v1125, %v1161
      %v1170 = vmul.f32 %v1127, %v1162
      %v1171 = vmul.f32 %v1129, %v1163
      %v1172 = vmul.f32 %v1131, %v1164
      %v1173 = vmul.f32 %v1133, %v1165
      %v1174 = vpack.c.bf16 %v1167, %v1166
      %v1175 = vpack.c.bf16 %v1169, %v1168
      %v1176 = vpack.c.bf16 %v1171, %v1170
      %v1177 = vpack.c.bf16 %v1173, %v1172
      %1178 = vrot.lane.b32.xlu0 %v578, 64
      %v1179 = vpop.permute.xlu0 %1178
      %1180 = vrot.lane.b32.xlu0 %v579, 64
      %v1181 = vpop.permute.xlu0 %1180
      %1182 = vrot.lane.b32.xlu0 %v580, 64
      %v1183 = vpop.permute.xlu0 %1182
      %1184 = vrot.lane.b32.xlu0 %v581, 64
      %v1185 = vpop.permute.xlu0 %1184
      %v1191 = vsel %vm469, %v1174, 0
      %v1194 = vsel %vm469, %v1175, 0
      %v1197 = vsel %vm469, %v1176, 0
      %v1200 = vsel %vm469, %v1177, 0
      %1202 = vmatprep.subr.bf16.mxu0 0
      %1203 = vmatpush1.bf16.msra.mxu0 %v1179
      %1204 = vmatprep.subr.bf16.mxu0 0
      %1205 = vmatpush1.bf16.msra.mxu0 %v1181
      %1206 = vmatprep.subr.bf16.mxu0 0
      %1207 = vmatpush1.bf16.msra.mxu0 %v1183
      %1208 = vmatprep.subr.bf16.mxu0 0
      %1209 = vmatpush1.bf16.msra.mxu0 %v1185
      %1210 = vmatprep.subr.bf16.mxu0 0
      %1211 = vmatpush1.bf16.msra.mxu0 0
      %1212 = vmatprep.subr.bf16.mxu0 0
      %1213 = vmatpush1.bf16.msra.mxu0 0
      %1214 = vmatprep.subr.bf16.mxu0 0
      %1215 = vmatpush1.bf16.msra.mxu0 0
      %1216 = vmatprep.subr.bf16.mxu0 0
      %1217 = vmatpush1.bf16.msra.mxu0 0
      %1218 = vmatprep.subr.bf16.mxu0 0
      %1219 = vmatpush1.bf16.msra.mxu0 0
      %1220 = vmatprep.subr.bf16.mxu0 0
      %1221 = vmatpush1.bf16.msra.mxu0 0
      %1222 = vmatprep.subr.bf16.mxu0 0
      %1223 = vmatpush1.bf16.msra.mxu0 0
      %1224 = vmatprep.subr.bf16.mxu0 0
      %1225 = vmatpush1.bf16.msra.mxu0 0
      %1226 = vmatprep.subr.bf16.mxu0 0
      %1227 = vmatpush1.bf16.msra.mxu0 0
      %1228 = vmatprep.subr.bf16.mxu0 0
      %1229 = vmatpush1.bf16.msra.mxu0 0
      %1230 = vmatprep.subr.bf16.mxu0 0
      %1231 = vmatpush1.bf16.msra.mxu0 0
      %1232 = vmatprep.subr.bf16.mxu0 0
      %1233 = vmatpush1.bf16.msra.mxu0 0
      %1234 = vmatprep.mubr.bf16.mxu0 0
      %1235 = vmatmul.mubr.bf16.gmra.mrb[0].mxu0 %v1191
      %v1236 = vpop.f32.mrb[0].mxu0
      %v1237 = vadd.f32 0.0, %v1236
      %v1238 = vpop.f32.mrb[0].mxu0
      %v1239 = vpop.f32.mrb[0].mxu0
      %v1240 = vadd.f32 0.0, %v1239
      %v1241 = vpop.f32.mrb[0].mxu0
      %1242 = vmatprep.mubr.bf16.mxu0 0
      %1243 = vmatmul.mubr.bf16.gmra.mrb[0].mxu0 %v1194
      %v1244 = vpop.f32.mrb[0].mxu0
      %v1245 = vadd.f32 0.0, %v1244
      %v1246 = vpop.f32.mrb[0].mxu0
      %v1247 = vpop.f32.mrb[0].mxu0
      %v1248 = vadd.f32 0.0, %v1247
      %v1249 = vpop.f32.mrb[0].mxu0
      %1250 = vmatprep.mubr.bf16.mxu0 0
      %1251 = vmatmul.mubr.bf16.gmra.mrb[0].mxu0 %v1197
      %v1252 = vpop.f32.mrb[0].mxu0
      %v1253 = vadd.f32 0.0, %v1252
      %v1254 = vpop.f32.mrb[0].mxu0
      %v1255 = vpop.f32.mrb[0].mxu0
      %v1256 = vadd.f32 0.0, %v1255
      %v1257 = vpop.f32.mrb[0].mxu0
      %1258 = vmatprep.mubr.bf16.mxu0 0
      %1259 = vmatmul.mubr.bf16.gmra.mrb[0].mxu0 %v1200
      %v1260 = vpop.f32.mrb[0].mxu0
      %v1261 = vadd.f32 0.0, %v1260
      %v1262 = vpop.f32.mrb[0].mxu0
      %v1263 = vpop.f32.mrb[0].mxu0
      %v1264 = vadd.f32 0.0, %v1263
      %v1265 = vpop.f32.mrb[0].mxu0
      %1266 = vdwg.mxu0
      %1267 = vrot.lane.b32.xlu0 %v333, 32
      %v1268 = vpop.permute.xlu0 %1267
      %1269 = vrot.lane.b32.xlu0 %v334, 32
      %v1270 = vpop.permute.xlu0 %1269
      %1271 = vrot.lane.b32.xlu0 %v335, 32
      %v1272 = vpop.permute.xlu0 %1271
      %1273 = vrot.lane.b32.xlu0 %v336, 32
      %v1274 = vpop.permute.xlu0 %1273
      %1275 = vrot.lane.b32.xlu0 %v353, 32
      %v1276 = vpop.permute.xlu0 %1275
      %1277 = vrot.lane.b32.xlu0 %v354, 32
      %v1278 = vpop.permute.xlu0 %1277
      %1279 = vrot.lane.b32.xlu0 %v355, 32
      %v1280 = vpop.permute.xlu0 %1279
      %1281 = vrot.lane.b32.xlu0 %v356, 32
      %v1282 = vpop.permute.xlu0 %1281
      %v1284 = vsel %vm357, %v1268, 0
      %v1287 = vsel %vm357, %v1270, 0
      %v1290 = vsel %vm357, %v1272, 0
      %v1293 = vsel %vm357, %v1274, 0
      %v1296 = vsel %vm357, %v1276, 0
      %v1299 = vsel %vm357, %v1278, 0
      %v1302 = vsel %vm357, %v1280, 0
      %v1305 = vsel %vm357, %v1282, 0
      %1307 = vmatprep.subr.bf16.mxu0 0
      %1308 = vmatpush1.bf16.xpose.msra.mxu0 %v1296
      %1309 = vmatprep.subr.bf16.mxu0 0
      %1310 = vmatpush1.bf16.xpose.msra.mxu0 %v1299
      %1311 = vmatprep.subr.bf16.mxu0 0
      %1312 = vmatpush1.bf16.xpose.msra.mxu0 %v1302
      %1313 = vmatprep.subr.bf16.mxu0 0
      %1314 = vmatpush1.bf16.xpose.msra.mxu0 %v1305
      %1315 = vmatprep.subr.bf16.mxu0 0
      %1316 = vmatpush1.bf16.xpose.msra.mxu0 0
      %1317 = vmatprep.subr.bf16.mxu0 0
      %1318 = vmatpush1.bf16.xpose.msra.mxu0 0
      %1319 = vmatprep.subr.bf16.mxu0 0
      %1320 = vmatpush1.bf16.xpose.msra.mxu0 0
      %1321 = vmatprep.subr.bf16.mxu0 0
      %1322 = vmatpush1.bf16.xpose.msra.mxu0 0
      %1323 = vmatprep.subr.bf16.mxu0 0
      %1324 = vmatpush1.bf16.xpose.msra.mxu0 0
      %1325 = vmatprep.subr.bf16.mxu0 0
      %1326 = vmatpush1.bf16.xpose.msra.mxu0 0
      %1327 = vmatprep.subr.bf16.mxu0 0
      %1328 = vmatpush1.bf16.xpose.msra.mxu0 0
      %1329 = vmatprep.subr.bf16.mxu0 0
      %1330 = vmatpush1.bf16.xpose.msra.mxu0 0
      %1331 = vmatprep.subr.bf16.mxu0 0
      %1332 = vmatpush1.bf16.xpose.msra.mxu0 0
      %1333 = vmatprep.subr.bf16.mxu0 0
      %1334 = vmatpush1.bf16.xpose.msra.mxu0 0
      %1335 = vmatprep.subr.bf16.mxu0 0
      %1336 = vmatpush1.bf16.xpose.msra.mxu0 0
      %1337 = vmatprep.subr.bf16.mxu0 0
      %1338 = vmatpush1.bf16.xpose.msra.mxu0 0
      %1339 = vmatprep.mubr.bf16.mxu0 0
      %1340 = vmatmul.mubr.bf16.gmra.mrb[0].mxu0 %v1284
      %v1341 = vpop.f32.mrb[0].mxu0
      %v1342 = vadd.f32 0.0, %v1341
      %v1343 = vpop.f32.mrb[0].mxu0
      %v1344 = vpop.f32.mrb[0].mxu0
      %v1345 = vadd.f32 0.0, %v1344
      %v1346 = vpop.f32.mrb[0].mxu0
      %1347 = vmatprep.mubr.bf16.mxu0 0
      %1348 = vmatmul.mubr.bf16.gmra.mrb[0].mxu0 %v1287
      %v1349 = vpop.f32.mrb[0].mxu0
      %v1350 = vadd.f32 0.0, %v1349
      %v1351 = vpop.f32.mrb[0].mxu0
      %v1352 = vpop.f32.mrb[0].mxu0
      %v1353 = vadd.f32 0.0, %v1352
      %v1354 = vpop.f32.mrb[0].mxu0
      %1355 = vmatprep.mubr.bf16.mxu0 0
      %1356 = vmatmul.mubr.bf16.gmra.mrb[0].mxu0 %v1290
      %v1357 = vpop.f32.mrb[0].mxu0
      %v1358 = vadd.f32 0.0, %v1357
      %v1359 = vpop.f32.mrb[0].mxu0
      %v1360 = vpop.f32.mrb[0].mxu0
      %v1361 = vadd.f32 0.0, %v1360
      %v1362 = vpop.f32.mrb[0].mxu0
      %1363 = vmatprep.mubr.bf16.mxu0 0
      %1364 = vmatmul.mubr.bf16.gmra.mrb[0].mxu0 %v1293
      %v1365 = vpop.f32.mrb[0].mxu0
      %v1366 = vadd.f32 0.0, %v1365
      %v1367 = vpop.f32.mrb[0].mxu0
      %v1368 = vpop.f32.mrb[0].mxu0
      %v1369 = vadd.f32 0.0, %v1368
      %v1370 = vpop.f32.mrb[0].mxu0
      %1371 = vdwg.mxu0
      %v1372 = vmul.f32 %v1342, 0.17677669
      %v1373 = vmul.f32 %v1345, 0.17677669
      %v1374 = vmul.f32 %v1350, 0.17677669
      %v1375 = vmul.f32 %v1353, 0.17677669
      %v1376 = vmul.f32 %v1358, 0.17677669
      %v1377 = vmul.f32 %v1361, 0.17677669
      %v1378 = vmul.f32 %v1366, 0.17677669
      %v1379 = vmul.f32 %v1369, 0.17677669
      %v1380 = vadd.f32 %v1372, %v459
      %v1381 = vadd.f32 %v1373, %v459
      %v1382 = vadd.f32 %v1374, %v459
      %v1383 = vadd.f32 %v1375, %v459
      %v1384 = vadd.f32 %v1376, %v459
      %v1385 = vadd.f32 %v1377, %v459
      %v1386 = vadd.f32 %v1378, %v459
      %v1387 = vadd.f32 %v1379, %v459
      %v1388 = vsel %vm469, %v1380, -inf
      %1389 = vmax.xlane.f32.xlu0 %v1388
      %v1390 = vpop.xlane.xlu0 %1389
      %v1391 = vsel %vm469, %v1381, -inf
      %1392 = vmax.xlane.f32.xlu0 %v1391
      %v1393 = vpop.xlane.xlu0 %1392
      %v1394 = vsel %vm469, %v1382, -inf
      %1395 = vmax.xlane.f32.xlu0 %v1394
      %v1396 = vpop.xlane.xlu0 %1395
      %v1397 = vsel %vm469, %v1383, -inf
      %1398 = vmax.xlane.f32.xlu0 %v1397
      %v1399 = vpop.xlane.xlu0 %1398
      %v1400 = vsel %vm469, %v1384, -inf
      %1401 = vmax.xlane.f32.xlu0 %v1400
      %v1402 = vpop.xlane.xlu0 %1401
      %v1403 = vsel %vm469, %v1385, -inf
      %1404 = vmax.xlane.f32.xlu0 %v1403
      %v1405 = vpop.xlane.xlu0 %1404
      %v1406 = vsel %vm469, %v1386, -inf
      %1407 = vmax.xlane.f32.xlu0 %v1406
      %v1408 = vpop.xlane.xlu0 %1407
      %v1409 = vsel %vm469, %v1387, -inf
      %1410 = vmax.xlane.f32.xlu0 %v1409
      %v1411 = vpop.xlane.xlu0 %1410
      %v1412 = vsub.f32 %v1380, %v1390
      %v1413 = vsub.f32 %v1381, %v1393
      %v1414 = vsub.f32 %v1382, %v1396
      %v1415 = vsub.f32 %v1383, %v1399
      %v1416 = vsub.f32 %v1384, %v1402
      %v1417 = vsub.f32 %v1385, %v1405
      %v1418 = vsub.f32 %v1386, %v1408
      %v1419 = vsub.f32 %v1387, %v1411
      %v1420 = vmul.f32 %v1412, 1.442695
      %v1421 = vpow.pop %v1420
      %v1422 = vmul.f32 %v1413, 1.442695
      %v1423 = vpow.pop %v1422
      %v1424 = vmul.f32 %v1414, 1.442695
      %v1425 = vpow.pop %v1424
      %v1426 = vmul.f32 %v1415, 1.442695
      %v1427 = vpow.pop %v1426
      %v1428 = vmul.f32 %v1416, 1.442695
      %v1429 = vpow.pop %v1428
      %v1430 = vmul.f32 %v1417, 1.442695
      %v1431 = vpow.pop %v1430
      %v1432 = vmul.f32 %v1418, 1.442695
      %v1433 = vpow.pop %v1432
      %v1434 = vmul.f32 %v1419, 1.442695
      %v1435 = vpow.pop %v1434
      %v1436 = vsel %vm469, %v1421, 0.0
      %1437 = vadd.xlane.f32.xlu0 %v1436
      %v1438 = vpop.xlane.xlu0 %1437
      %v1439 = vsel %vm469, %v1423, 0.0
      %1440 = vadd.xlane.f32.xlu0 %v1439
      %v1441 = vpop.xlane.xlu0 %1440
      %v1442 = vsel %vm469, %v1425, 0.0
      %1443 = vadd.xlane.f32.xlu0 %v1442
      %v1444 = vpop.xlane.xlu0 %1443
      %v1445 = vsel %vm469, %v1427, 0.0
      %1446 = vadd.xlane.f32.xlu0 %v1445
      %v1447 = vpop.xlane.xlu0 %1446
      %v1448 = vsel %vm469, %v1429, 0.0
      %1449 = vadd.xlane.f32.xlu0 %v1448
      %v1450 = vpop.xlane.xlu0 %1449
      %v1451 = vsel %vm469, %v1431, 0.0
      %1452 = vadd.xlane.f32.xlu0 %v1451
      %v1453 = vpop.xlane.xlu0 %1452
      %v1454 = vsel %vm469, %v1433, 0.0
      %1455 = vadd.xlane.f32.xlu0 %v1454
      %v1456 = vpop.xlane.xlu0 %1455
      %v1457 = vsel %vm469, %v1435, 0.0
      %1458 = vadd.xlane.f32.xlu0 %v1457
      %v1459 = vpop.xlane.xlu0 %1458
      %v1460 = vrcp.pop %v1438
      %v1461 = vrcp.pop %v1441
      %v1462 = vrcp.pop %v1444
      %v1463 = vrcp.pop %v1447
      %v1464 = vrcp.pop %v1450
      %v1465 = vrcp.pop %v1453
      %v1466 = vrcp.pop %v1456
      %v1467 = vrcp.pop %v1459
      %v1468 = vmul.f32 %v1421, %v1460
      %v1469 = vmul.f32 %v1423, %v1461
      %v1470 = vmul.f32 %v1425, %v1462
      %v1471 = vmul.f32 %v1427, %v1463
      %v1472 = vmul.f32 %v1429, %v1464
      %v1473 = vmul.f32 %v1431, %v1465
      %v1474 = vmul.f32 %v1433, %v1466
      %v1475 = vmul.f32 %v1435, %v1467
      %v1476 = vpack.c.bf16 %v1469, %v1468
      %v1477 = vpack.c.bf16 %v1471, %v1470
      %v1478 = vpack.c.bf16 %v1473, %v1472
      %v1479 = vpack.c.bf16 %v1475, %v1474
      %1480 = vrot.lane.b32.xlu0 %v578, 32
      %v1481 = vpop.permute.xlu0 %1480
      %1482 = vrot.lane.b32.xlu0 %v579, 32
      %v1483 = vpop.permute.xlu0 %1482
      %1484 = vrot.lane.b32.xlu0 %v580, 32
      %v1485 = vpop.permute.xlu0 %1484
      %1486 = vrot.lane.b32.xlu0 %v581, 32
      %v1487 = vpop.permute.xlu0 %1486
      %v1493 = vsel %vm469, %v1476, 0
      %v1496 = vsel %vm469, %v1477, 0
      %v1499 = vsel %vm469, %v1478, 0
      %v1502 = vsel %vm469, %v1479, 0
      %1504 = vmatprep.subr.bf16.mxu0 0
      %1505 = vmatpush1.bf16.msra.mxu0 %v1481
      %1506 = vmatprep.subr.bf16.mxu0 0
      %1507 = vmatpush1.bf16.msra.mxu0 %v1483
      %1508 = vmatprep.subr.bf16.mxu0 0
      %1509 = vmatpush1.bf16.msra.mxu0 %v1485
      %1510 = vmatprep.subr.bf16.mxu0 0
      %1511 = vmatpush1.bf16.msra.mxu0 %v1487
      %1512 = vmatprep.subr.bf16.mxu0 0
      %1513 = vmatpush1.bf16.msra.mxu0 0
      %1514 = vmatprep.subr.bf16.mxu0 0
      %1515 = vmatpush1.bf16.msra.mxu0 0
      %1516 = vmatprep.subr.bf16.mxu0 0
      %1517 = vmatpush1.bf16.msra.mxu0 0
      %1518 = vmatprep.subr.bf16.mxu0 0
      %1519 = vmatpush1.bf16.msra.mxu0 0
      %1520 = vmatprep.subr.bf16.mxu0 0
      %1521 = vmatpush1.bf16.msra.mxu0 0
      %1522 = vmatprep.subr.bf16.mxu0 0
      %1523 = vmatpush1.bf16.msra.mxu0 0
      %1524 = vmatprep.subr.bf16.mxu0 0
      %1525 = vmatpush1.bf16.msra.mxu0 0
      %1526 = vmatprep.subr.bf16.mxu0 0
      %1527 = vmatpush1.bf16.msra.mxu0 0
      %1528 = vmatprep.subr.bf16.mxu0 0
      %1529 = vmatpush1.bf16.msra.mxu0 0
      %1530 = vmatprep.subr.bf16.mxu0 0
      %1531 = vmatpush1.bf16.msra.mxu0 0
      %1532 = vmatprep.subr.bf16.mxu0 0
      %1533 = vmatpush1.bf16.msra.mxu0 0
      %1534 = vmatprep.subr.bf16.mxu0 0
      %1535 = vmatpush1.bf16.msra.mxu0 0
      %1536 = vmatprep.mubr.bf16.mxu0 0
      %1537 = vmatmul.mubr.bf16.gmra.mrb[0].mxu0 %v1493
      %v1538 = vpop.f32.mrb[0].mxu0
      %v1539 = vadd.f32 0.0, %v1538
      %v1540 = vpop.f32.mrb[0].mxu0
      %v1541 = vpop.f32.mrb[0].mxu0
      %v1542 = vadd.f32 0.0, %v1541
      %v1543 = vpop.f32.mrb[0].mxu0
      %1544 = vmatprep.mubr.bf16.mxu0 0
      %1545 = vmatmul.mubr.bf16.gmra.mrb[0].mxu0 %v1496
      %v1546 = vpop.f32.mrb[0].mxu0
      %v1547 = vadd.f32 0.0, %v1546
      %v1548 = vpop.f32.mrb[0].mxu0
      %v1549 = vpop.f32.mrb[0].mxu0
      %v1550 = vadd.f32 0.0, %v1549
      %v1551 = vpop.f32.mrb[0].mxu0
      %1552 = vmatprep.mubr.bf16.mxu0 0
      %1553 = vmatmul.mubr.bf16.gmra.mrb[0].mxu0 %v1499
      %v1554 = vpop.f32.mrb[0].mxu0
      %v1555 = vadd.f32 0.0, %v1554
      %v1556 = vpop.f32.mrb[0].mxu0
      %v1557 = vpop.f32.mrb[0].mxu0
      %v1558 = vadd.f32 0.0, %v1557
      %v1559 = vpop.f32.mrb[0].mxu0
      %1560 = vmatprep.mubr.bf16.mxu0 0
      %1561 = vmatmul.mubr.bf16.gmra.mrb[0].mxu0 %v1502
      %v1562 = vpop.f32.mrb[0].mxu0
      %v1563 = vadd.f32 0.0, %v1562
      %v1564 = vpop.f32.mrb[0].mxu0
      %v1565 = vpop.f32.mrb[0].mxu0
      %v1566 = vadd.f32 0.0, %v1565
      %v1567 = vpop.f32.mrb[0].mxu0
      %1568 = vdwg.mxu0
      %1577 = vrot.lane.b32.xlu0 %v935, 32
      %v1578 = vpop.permute.xlu0 %1577
      %1579 = vrot.lane.b32.xlu0 %v938, 32
      %v1580 = vpop.permute.xlu0 %1579
      %1581 = vrot.lane.b32.xlu0 %v943, 32
      %v1582 = vpop.permute.xlu0 %1581
      %1583 = vrot.lane.b32.xlu0 %v946, 32
      %v1584 = vpop.permute.xlu0 %1583
      %1585 = vrot.lane.b32.xlu0 %v951, 32
      %v1586 = vpop.permute.xlu0 %1585
      %1587 = vrot.lane.b32.xlu0 %v954, 32
      %v1588 = vpop.permute.xlu0 %1587
      %1589 = vrot.lane.b32.xlu0 %v959, 32
      %v1590 = vpop.permute.xlu0 %1589
      %1591 = vrot.lane.b32.xlu0 %v962, 32
      %v1592 = vpop.permute.xlu0 %1591
      %1609 = vrot.lane.b32.xlu0 %v1237, 64
      %v1610 = vpop.permute.xlu0 %1609
      %1611 = vrot.lane.b32.xlu0 %v1240, 64
      %v1612 = vpop.permute.xlu0 %1611
      %1613 = vrot.lane.b32.xlu0 %v1245, 64
      %v1614 = vpop.permute.xlu0 %1613
      %1615 = vrot.lane.b32.xlu0 %v1248, 64
      %v1616 = vpop.permute.xlu0 %1615
      %1617 = vrot.lane.b32.xlu0 %v1253, 64
      %v1618 = vpop.permute.xlu0 %1617
      %1619 = vrot.lane.b32.xlu0 %v1256, 64
      %v1620 = vpop.permute.xlu0 %1619
      %1621 = vrot.lane.b32.xlu0 %v1261, 64
      %v1622 = vpop.permute.xlu0 %1621
      %1623 = vrot.lane.b32.xlu0 %v1264, 64
      %v1624 = vpop.permute.xlu0 %1623
      %1641 = vrot.lane.b32.xlu0 %v1539, 96
      %v1642 = vpop.permute.xlu0 %1641
      %1643 = vrot.lane.b32.xlu0 %v1542, 96
      %v1644 = vpop.permute.xlu0 %1643
      %1645 = vrot.lane.b32.xlu0 %v1547, 96
      %v1646 = vpop.permute.xlu0 %1645
      %1647 = vrot.lane.b32.xlu0 %v1550, 96
      %v1648 = vpop.permute.xlu0 %1647
      %1649 = vrot.lane.b32.xlu0 %v1555, 96
      %v1650 = vpop.permute.xlu0 %1649
      %1651 = vrot.lane.b32.xlu0 %v1558, 96
      %v1652 = vpop.permute.xlu0 %1651
      %1653 = vrot.lane.b32.xlu0 %v1563, 96
      %v1654 = vpop.permute.xlu0 %1653
      %1655 = vrot.lane.b32.xlu0 %v1566, 96
      %v1656 = vpop.permute.xlu0 %1655
      %v1665 = vsel %vm357, %v633, %v1578
      %v1666 = vsel %vm357, %v636, %v1580
      %v1667 = vsel %vm357, %v641, %v1582
      %v1668 = vsel %vm357, %v644, %v1584
      %v1669 = vsel %vm357, %v649, %v1586
      %v1670 = vsel %vm357, %v652, %v1588
      %v1671 = vsel %vm357, %v657, %v1590
      %v1672 = vsel %vm357, %v660, %v1592
      %v1673 = vsel %vm469, %v1665, %v1610
      %v1674 = vsel %vm469, %v1666, %v1612
      %v1675 = vsel %vm469, %v1667, %v1614
      %v1676 = vsel %vm469, %v1668, %v1616
      %v1677 = vsel %vm469, %v1669, %v1618
      %v1678 = vsel %vm469, %v1670, %v1620
      %v1679 = vsel %vm469, %v1671, %v1622
      %v1680 = vsel %vm469, %v1672, %v1624
      %vm1681 = vcmask 785408
      %v1682 = vsel %vm1681, %v1673, %v1642
      %v1683 = vsel %vm1681, %v1674, %v1644
      %v1684 = vsel %vm1681, %v1675, %v1646
      %v1685 = vsel %vm1681, %v1676, %v1648
      %v1686 = vsel %vm1681, %v1677, %v1650
      %v1687 = vsel %vm1681, %v1678, %v1652
      %v1688 = vsel %vm1681, %v1679, %v1654
      %v1689 = vsel %vm1681, %v1680, %v1656
      %1690 = vst [vmem:[%s289] sm:$0xff] %v1682
      %1691 = vst [vmem:[%s289 + $0x8] sm:$0xff] %v1683
      %1692 = vst [vmem:[%s289 + $0x10] sm:$0xff] %v1684
      %1693 = vst [vmem:[%s289 + $0x18] sm:$0xff] %v1685
      %1694 = vst [vmem:[%s289 + $0x20] sm:$0xff] %v1686
      %1695 = vst [vmem:[%s289 + $0x28] sm:$0xff] %v1687
      %1696 = vst [vmem:[%s289 + $0x30] sm:$0xff] %v1688
      %1697 = vst [vmem:[%s289 + $0x38] sm:$0xff] %v1689
      %s1698 = smul.u32 8, %s20
      %p1699 = scmp.lt.s32.totalorder %s19, 1
      %s1700 = scalar_select %p1699, %s19, 1
      %p1701 = scmp.lt.s32.totalorder %s1698, 7
      %s1702 = scalar_select %p1701, %s1698, 7
      %s1703 = smul.addr %s1700, 8
      %s1704 = sadd.s32 %s1702, %s1703
      %s1705 = smul.addr %s1704, 8
      %s1706 = scalar_lea.vmem %s4, %s1705
      // Predicated region
      $region37: #{transformer_forward.26} parent=35 // pred_check
        %p1707 = pneg %p153
      $region38: #{transformer_forward.26} parent=35 // pred_check_branch
        %1709 = sbr.rel (%p1707) target = $region40
      $region39: #{transformer_forward.26} parent=35 // pred_region
        %s1710 = smul.u32 8, %s20
      $region40: #{transformer_forward.26} parent=35 // pred_fallthru
        _
    $region36: #{transformer_forward.26} parent=5 // pred_fallthru
      _
    %p1711 = scmp.le.s32.totalorder 2, %s10
    // Predicated region
    $region41: #{transformer_forward.26} parent=5 // pred_check
      %p1712 = pneg %p1711
    $region42: #{transformer_forward.26} parent=5 // pred_check_branch
      %1714 = sbr.rel (%p1712) target = $region44
    $region43: #{transformer_forward.26} parent=5 // pred_region
      %s1715 = ssub.s32 %s10, 2
      // Predicated region
      $region45: #{transformer_forward.26} parent=43 // pred_check
        %p1716 = pneg %p159
      $region46: #{transformer_forward.26} parent=43 // pred_check_branch
        %1718 = sbr.rel (%p1716) target = $region48
      $region47: #{transformer_forward.26} parent=43 // pred_region
        %s1719 = smul.u32 8, %s22
        %p1720 = scmp.lt.s32.totalorder %s21, 1
        %s1721 = scalar_select %p1720, %s21, 1
        %p1722 = scmp.lt.s32.totalorder %s1719, 7
        %s1723 = scalar_select %p1722, %s1719, 7
        %s1724 = smul.addr %s1721, 8
        %s1725 = sadd.s32 %s1723, %s1724
        %s1726 = smul.addr %s1725, 8
        %s1727 = scalar_lea.vmem %s4, %s1726
      $region48: #{transformer_forward.26} parent=43 // pred_fallthru
        _
    $region44: #{transformer_forward.26} parent=5 // pred_fallthru
      _
  $region6: #{transformer_forward.26} parent=0 // loop_footer
    %s14 = sadd.s32 1, %s10
  $region7: #{transformer_forward.26} parent=0 // loop_footer_branch
    %9 = sbr.rel target = $region3
  $region8: #{transformer_forward.26} parent=0 // loop_exit
    _

// kernel: transformer_forward.28
$region0: #{transformer_forward.28}
  #allocation0 [shape = 'u32[]', space=smem, size = 0x4, offset = 0x4, fixed_abs, tag = 'smem constant byte address 0x4 - core index']
  #allocation1 [shape = 'u32[144,128]{1,0:T(1,128)}', space=vmem, size = 0x12000, scoped, tag = 'internal scratch']
  %s0 = inlined_call_operand.vmem [shape: f32[128,128], index: 0, kind: input, shape index: {}]
  %s1 = inlined_call_operand.vmem [shape: bf16[128,256], index: 1, kind: input, shape index: {}]
  %s2 = inlined_call_operand.vmem [shape: f32[1,256], index: 2, kind: input, shape index: {}]
  %s3 = inlined_call_operand.vmem [shape: bf16[256,128], index: 3, kind: input, shape index: {}]
  %s4 = inlined_call_operand.vmem [shape: f32[1,128], index: 4, kind: input, shape index: {}]
  %s5 = inlined_call_operand.vmem [shape: f32[1,128], index: 5, kind: input, shape index: {}]
  %s6 = inlined_call_operand.vmem [shape: f32[1,128], index: 6, kind: input, shape index: {}]
  %s7 = inlined_call_operand.vmem [shape: f32[128,128], index: 7, kind: output, shape index: {}]
  %s8 = sld [smem:[#allocation0]]
  $region38: #{transformer_forward.28} parent=0
    _
  %s10 = ssub.s32 1, %s8
  %s11 = scalar_select 0, %s10, %s8
  // Predicated region
  $region2: #{transformer_forward.28} parent=0 // pred_check
    _
  $region3: #{transformer_forward.28} parent=0 // pred_check_branch
    %13 = sbr.rel (0) target = $region5
  $region4: #{transformer_forward.28} parent=0 // pred_region
    _
  $region5: #{transformer_forward.28} parent=0 // pred_fallthru
    _
  // Predicated region
  $region6: #{transformer_forward.28} parent=0 // pred_check
    _
  $region7: #{transformer_forward.28} parent=0 // pred_check_branch
    %15 = sbr.rel (0) target = $region9
  $region8: #{transformer_forward.28} parent=0 // pred_region
    _
  $region9: #{transformer_forward.28} parent=0 // pred_fallthru
    _
  // Predicated region
  $region10: #{transformer_forward.28} parent=0 // pred_check
    _
  $region11: #{transformer_forward.28} parent=0 // pred_check_branch
    %17 = sbr.rel (0) target = $region13
  $region12: #{transformer_forward.28} parent=0 // pred_region
    _
  $region13: #{transformer_forward.28} parent=0 // pred_fallthru
    _
  // Predicated region
  $region14: #{transformer_forward.28} parent=0 // pred_check
    _
  $region15: #{transformer_forward.28} parent=0 // pred_check_branch
    %19 = sbr.rel (0) target = $region17
  $region16: #{transformer_forward.28} parent=0 // pred_region
    _
  $region17: #{transformer_forward.28} parent=0 // pred_fallthru
    _
  // Predicated region
  $region18: #{transformer_forward.28} parent=0 // pred_check
    _
  $region19: #{transformer_forward.28} parent=0 // pred_check_branch
    %21 = sbr.rel (0) target = $region21
  $region20: #{transformer_forward.28} parent=0 // pred_region
    _
  $region21: #{transformer_forward.28} parent=0 // pred_fallthru
    _
  // Predicated region
  $region22: #{transformer_forward.28} parent=0 // pred_check
    _
  $region23: #{transformer_forward.28} parent=0 // pred_check_branch
    %23 = sbr.rel (0) target = $region25
  $region24: #{transformer_forward.28} parent=0 // pred_region
    _
  $region25: #{transformer_forward.28} parent=0 // pred_fallthru
    _
  // Predicated region
  $region26: #{transformer_forward.28} parent=0 // pred_check
    _
  $region27: #{transformer_forward.28} parent=0 // pred_check_branch
    %25 = sbr.rel (0) target = $region29
  $region28: #{transformer_forward.28} parent=0 // pred_region
    _
  $region29: #{transformer_forward.28} parent=0 // pred_fallthru
    _
  %v27 = vld [vmem:[%s0] sm:$0xff]
  %v28 = vld [vmem:[%s0 + $0x8] sm:$0xff]
  %v29 = vld [vmem:[%s0 + $0x10] sm:$0xff]
  %v30 = vld [vmem:[%s0 + $0x18] sm:$0xff]
  %v31 = vld [vmem:[%s0 + $0x20] sm:$0xff]
  %v32 = vld [vmem:[%s0 + $0x28] sm:$0xff]
  %v33 = vld [vmem:[%s0 + $0x30] sm:$0xff]
  %v34 = vld [vmem:[%s0 + $0x38] sm:$0xff]
  %v35 = vld [vmem:[%s0 + $0x40] sm:$0xff]
  %v36 = vld [vmem:[%s0 + $0x48] sm:$0xff]
  %v37 = vld [vmem:[%s0 + $0x50] sm:$0xff]
  %v38 = vld [vmem:[%s0 + $0x58] sm:$0xff]
  %v39 = vld [vmem:[%s0 + $0x60] sm:$0xff]
  %v40 = vld [vmem:[%s0 + $0x68] sm:$0xff]
  %v41 = vld [vmem:[%s0 + $0x70] sm:$0xff]
  %v42 = vld [vmem:[%s0 + $0x78] sm:$0xff]
  %v43 = vpack.c.bf16 %v28, %v27
  %v44 = vpack.c.bf16 %v30, %v29
  %v45 = vpack.c.bf16 %v32, %v31
  %v46 = vpack.c.bf16 %v34, %v33
  %v47 = vpack.c.bf16 %v36, %v35
  %v48 = vpack.c.bf16 %v38, %v37
  %v49 = vpack.c.bf16 %v40, %v39
  %v50 = vpack.c.bf16 %v42, %v41
  %v51 = vld [vmem:[%s1] sm:$0xff]
  %v52 = vld [vmem:[%s1 + $0x8] sm:$0xff]
  %v53 = vld [vmem:[%s1 + $0x10] sm:$0xff]
  %v54 = vld [vmem:[%s1 + $0x18] sm:$0xff]
  %v55 = vld [vmem:[%s1 + $0x20] sm:$0xff]
  %v56 = vld [vmem:[%s1 + $0x28] sm:$0xff]
  %v57 = vld [vmem:[%s1 + $0x30] sm:$0xff]
  %v58 = vld [vmem:[%s1 + $0x38] sm:$0xff]
  %v59 = vld [vmem:[%s1 + $0x40] sm:$0xff]
  %v60 = vld [vmem:[%s1 + $0x48] sm:$0xff]
  %v61 = vld [vmem:[%s1 + $0x50] sm:$0xff]
  %v62 = vld [vmem:[%s1 + $0x58] sm:$0xff]
  %v63 = vld [vmem:[%s1 + $0x60] sm:$0xff]
  %v64 = vld [vmem:[%s1 + $0x68] sm:$0xff]
  %v65 = vld [vmem:[%s1 + $0x70] sm:$0xff]
  %v66 = vld [vmem:[%s1 + $0x78] sm:$0xff]
  %v67 = vld [vmem:[%s2] sm:$0x3]
  %v69 = vlaneseq
  %v70 = vshrl.u32 %v69, 7
  %v71 = vsub.s32 0, %v70
  %v72 = vrot.slane %v67, %v71
  %v73 = vlaneseq
  %v74 = vshrl.u32 %v73, 7
  %v75 = vsub.s32 1, %v74
  %v76 = vrot.slane %v67, %v75
  %v95 = vunpack.c.l.b16 %v51
  %v96 = vunpack.c.h.b16 %v51
  %v97 = vunpack.c.l.b16 %v52
  %v98 = vunpack.c.h.b16 %v52
  %v99 = vunpack.c.l.b16 %v53
  %v100 = vunpack.c.h.b16 %v53
  %v101 = vunpack.c.l.b16 %v54
  %v102 = vunpack.c.h.b16 %v54
  %v103 = vunpack.c.l.b16 %v55
  %v104 = vunpack.c.h.b16 %v55
  %v105 = vunpack.c.l.b16 %v56
  %v106 = vunpack.c.h.b16 %v56
  %v107 = vunpack.c.l.b16 %v57
  %v108 = vunpack.c.h.b16 %v57
  %v109 = vunpack.c.l.b16 %v58
  %v110 = vunpack.c.h.b16 %v58
  %v111 = vunpack.c.l.b16 %v59
  %v112 = vunpack.c.h.b16 %v59
  %v113 = vunpack.c.l.b16 %v60
  %v114 = vunpack.c.h.b16 %v60
  %v115 = vunpack.c.l.b16 %v61
  %v116 = vunpack.c.h.b16 %v61
  %v117 = vunpack.c.l.b16 %v62
  %v118 = vunpack.c.h.b16 %v62
  %v119 = vunpack.c.l.b16 %v63
  %v120 = vunpack.c.h.b16 %v63
  %v121 = vunpack.c.l.b16 %v64
  %v122 = vunpack.c.h.b16 %v64
  %v123 = vunpack.c.l.b16 %v65
  %v124 = vunpack.c.h.b16 %v65
  %v125 = vunpack.c.l.b16 %v66
  %v126 = vunpack.c.h.b16 %v66
  %v127 = vpack.c.b16 %v97, %v95
  %v128 = vpack.c.b16 %v98, %v96
  %v129 = vpack.c.b16 %v101, %v99
  %v130 = vpack.c.b16 %v102, %v100
  %v131 = vpack.c.b16 %v105, %v103
  %v132 = vpack.c.b16 %v106, %v104
  %v133 = vpack.c.b16 %v109, %v107
  %v134 = vpack.c.b16 %v110, %v108
  %v135 = vpack.c.b16 %v113, %v111
  %v136 = vpack.c.b16 %v114, %v112
  %v137 = vpack.c.b16 %v117, %v115
  %v138 = vpack.c.b16 %v118, %v116
  %v139 = vpack.c.b16 %v121, %v119
  %v140 = vpack.c.b16 %v122, %v120
  %v141 = vpack.c.b16 %v125, %v123
  %v142 = vpack.c.b16 %v126, %v124
  %159 = vmatprep.subr.bf16.mxu0 %v128
  %160 = vmatpush1.bf16.msra.mxu0 %v127
  %161 = vmatprep.subr.bf16.mxu0 %v130
  %162 = vmatpush1.bf16.msra.mxu0 %v129
  %163 = vmatprep.subr.bf16.mxu0 %v132
  %164 = vmatpush1.bf16.msra.mxu0 %v131
  %165 = vmatprep.subr.bf16.mxu0 %v134
  %166 = vmatpush1.bf16.msra.mxu0 %v133
  %167 = vmatprep.subr.bf16.mxu0 %v136
  %168 = vmatpush1.bf16.msra.mxu0 %v135
  %169 = vmatprep.subr.bf16.mxu0 %v138
  %170 = vmatpush1.bf16.msra.mxu0 %v137
  %171 = vmatprep.subr.bf16.mxu0 %v140
  %172 = vmatpush1.bf16.msra.mxu0 %v139
  %173 = vmatprep.subr.bf16.mxu0 %v142
  %174 = vmatpush1.bf16.msra.mxu0 %v141
  %175 = vmatprep.subr.bf16.mxu0 0
  %176 = vmatpush1.bf16.msra.mxu0 0
  %177 = vmatprep.subr.bf16.mxu0 0
  %178 = vmatpush1.bf16.msra.mxu0 0
  %179 = vmatprep.subr.bf16.mxu0 0
  %180 = vmatpush1.bf16.msra.mxu0 0
  %181 = vmatprep.subr.bf16.mxu0 0
  %182 = vmatpush1.bf16.msra.mxu0 0
  %183 = vmatprep.subr.bf16.mxu0 0
  %184 = vmatpush1.bf16.msra.mxu0 0
  %185 = vmatprep.subr.bf16.mxu0 0
  %186 = vmatpush1.bf16.msra.mxu0 0
  %187 = vmatprep.subr.bf16.mxu0 0
  %188 = vmatpush1.bf16.msra.mxu0 0
  %189 = vmatprep.subr.bf16.mxu0 0
  %190 = vmatpush1.bf16.msra.mxu0 0
  %191 = vmatprep.mubr.bf16.mxu0 0
  %192 = vmatmul.mubr.bf16.gmra.mrb[0].mxu0 %v43
  %v193 = vpop.f32.mrb[0].mxu0
  %v194 = vadd.f32 %v72, %v193
  %v195 = vpop.f32.mrb[0].mxu0
  %v196 = vadd.f32 %v76, %v195
  %v197 = vpop.f32.mrb[0].mxu0
  %v198 = vadd.f32 %v72, %v197
  %v199 = vpop.f32.mrb[0].mxu0
  %v200 = vadd.f32 %v76, %v199
  %201 = vmatprep.mubr.bf16.mxu0 0
  %202 = vmatmul.mubr.bf16.gmra.mrb[0].mxu0 %v44
  %v203 = vpop.f32.mrb[0].mxu0
  %v204 = vadd.f32 %v72, %v203
  %v205 = vpop.f32.mrb[0].mxu0
  %v206 = vadd.f32 %v76, %v205
  %v207 = vpop.f32.mrb[0].mxu0
  %v208 = vadd.f32 %v72, %v207
  %v209 = vpop.f32.mrb[0].mxu0
  %v210 = vadd.f32 %v76, %v209
  %211 = vmatprep.mubr.bf16.mxu0 0
  %212 = vmatmul.mubr.bf16.gmra.mrb[0].mxu0 %v45
  %v213 = vpop.f32.mrb[0].mxu0
  %v214 = vadd.f32 %v72, %v213
  %v215 = vpop.f32.mrb[0].mxu0
  %v216 = vadd.f32 %v76, %v215
  %v217 = vpop.f32.mrb[0].mxu0
  %v218 = vadd.f32 %v72, %v217
  %v219 = vpop.f32.mrb[0].mxu0
  %v220 = vadd.f32 %v76, %v219
  %221 = vmatprep.mubr.bf16.mxu0 0
  %222 = vmatmul.mubr.bf16.gmra.mrb[0].mxu0 %v46
  %v223 = vpop.f32.mrb[0].mxu0
  %v224 = vadd.f32 %v72, %v223
  %v225 = vpop.f32.mrb[0].mxu0
  %v226 = vadd.f32 %v76, %v225
  %v227 = vpop.f32.mrb[0].mxu0
  %v228 = vadd.f32 %v72, %v227
  %v229 = vpop.f32.mrb[0].mxu0
  %v230 = vadd.f32 %v76, %v229
  %231 = vmatprep.mubr.bf16.mxu0 0
  %232 = vmatmul.mubr.bf16.gmra.mrb[0].mxu0 %v47
  %v233 = vpop.f32.mrb[0].mxu0
  %v234 = vadd.f32 %v72, %v233
  %v235 = vpop.f32.mrb[0].mxu0
  %v236 = vadd.f32 %v76, %v235
  %v237 = vpop.f32.mrb[0].mxu0
  %v238 = vadd.f32 %v72, %v237
  %v239 = vpop.f32.mrb[0].mxu0
  %v240 = vadd.f32 %v76, %v239
  %241 = vmatprep.mubr.bf16.mxu0 0
  %242 = vmatmul.mubr.bf16.gmra.mrb[0].mxu0 %v48
  %v243 = vpop.f32.mrb[0].mxu0
  %v244 = vadd.f32 %v72, %v243
  %v245 = vpop.f32.mrb[0].mxu0
  %v246 = vadd.f32 %v76, %v245
  %v247 = vpop.f32.mrb[0].mxu0
  %v248 = vadd.f32 %v72, %v247
  %v249 = vpop.f32.mrb[0].mxu0
  %v250 = vadd.f32 %v76, %v249
  %251 = vmatprep.mubr.bf16.mxu0 0
  %252 = vmatmul.mubr.bf16.gmra.mrb[0].mxu0 %v49
  %v253 = vpop.f32.mrb[0].mxu0
  %v254 = vadd.f32 %v72, %v253
  %v255 = vpop.f32.mrb[0].mxu0
  %v256 = vadd.f32 %v76, %v255
  %v257 = vpop.f32.mrb[0].mxu0
  %v258 = vadd.f32 %v72, %v257
  %v259 = vpop.f32.mrb[0].mxu0
  %v260 = vadd.f32 %v76, %v259
  %261 = vmatprep.mubr.bf16.mxu0 0
  %262 = vmatmul.mubr.bf16.gmra.mrb[0].mxu0 %v50
  %v263 = vpop.f32.mrb[0].mxu0
  %v264 = vadd.f32 %v72, %v263
  %v265 = vpop.f32.mrb[0].mxu0
  %v266 = vadd.f32 %v76, %v265
  %v267 = vpop.f32.mrb[0].mxu0
  %v268 = vadd.f32 %v72, %v267
  %v269 = vpop.f32.mrb[0].mxu0
  %v270 = vadd.f32 %v76, %v269
  %271 = vdwg.mxu0
  %v272 = vmax.f32 %v194, 0.0
  %v273 = vmax.f32 %v196, 0.0
  %v274 = vmax.f32 %v198, 0.0
  %v275 = vmax.f32 %v200, 0.0
  %v276 = vmax.f32 %v204, 0.0
  %v277 = vmax.f32 %v206, 0.0
  %v278 = vmax.f32 %v208, 0.0
  %v279 = vmax.f32 %v210, 0.0
  %v280 = vmax.f32 %v214, 0.0
  %v281 = vmax.f32 %v216, 0.0
  %v282 = vmax.f32 %v218, 0.0
  %v283 = vmax.f32 %v220, 0.0
  %v284 = vmax.f32 %v224, 0.0
  %v285 = vmax.f32 %v226, 0.0
  %v286 = vmax.f32 %v228, 0.0
  %v287 = vmax.f32 %v230, 0.0
  %v288 = vmax.f32 %v234, 0.0
  %v289 = vmax.f32 %v236, 0.0
  %v290 = vmax.f32 %v238, 0.0
  %v291 = vmax.f32 %v240, 0.0
  %v292 = vmax.f32 %v244, 0.0
  %v293 = vmax.f32 %v246, 0.0
  %v294 = vmax.f32 %v248, 0.0
  %v295 = vmax.f32 %v250, 0.0
  %v296 = vmax.f32 %v254, 0.0
  %v297 = vmax.f32 %v256, 0.0
  %v298 = vmax.f32 %v258, 0.0
  %v299 = vmax.f32 %v260, 0.0
  %v300 = vmax.f32 %v264, 0.0
  %v301 = vmax.f32 %v266, 0.0
  %v302 = vmax.f32 %v268, 0.0
  %v303 = vmax.f32 %v270, 0.0
  %v304 = vpack.c.bf16 %v274, %v272
  %v305 = vpack.c.bf16 %v275, %v273
  %v306 = vpack.c.bf16 %v278, %v276
  %v307 = vpack.c.bf16 %v279, %v277
  %v308 = vpack.c.bf16 %v282, %v280
  %v309 = vpack.c.bf16 %v283, %v281
  %v310 = vpack.c.bf16 %v286, %v284
  %v311 = vpack.c.bf16 %v287, %v285
  %v312 = vpack.c.bf16 %v290, %v288
  %v313 = vpack.c.bf16 %v291, %v289
  %v314 = vpack.c.bf16 %v294, %v292
  %v315 = vpack.c.bf16 %v295, %v293
  %v316 = vpack.c.bf16 %v298, %v296
  %v317 = vpack.c.bf16 %v299, %v297
  %v318 = vpack.c.bf16 %v302, %v300
  %v319 = vpack.c.bf16 %v303, %v301
  %v320 = vld [vmem:[%s3] sm:$0xf]
  %v321 = vld [vmem:[%s3 + $0x4] sm:$0xf]
  %v322 = vld [vmem:[%s3 + $0x8] sm:$0xf]
  %v323 = vld [vmem:[%s3 + $0xc] sm:$0xf]
  %v324 = vld [vmem:[%s3 + $0x10] sm:$0xf]
  %v325 = vld [vmem:[%s3 + $0x14] sm:$0xf]
  %v326 = vld [vmem:[%s3 + $0x18] sm:$0xf]
  %v327 = vld [vmem:[%s3 + $0x1c] sm:$0xf]
  %v328 = vld [vmem:[%s3 + $0x20] sm:$0xf]
  %v329 = vld [vmem:[%s3 + $0x24] sm:$0xf]
  %v330 = vld [vmem:[%s3 + $0x28] sm:$0xf]
  %v331 = vld [vmem:[%s3 + $0x2c] sm:$0xf]
  %v332 = vld [vmem:[%s3 + $0x30] sm:$0xf]
  %v333 = vld [vmem:[%s3 + $0x34] sm:$0xf]
  %v334 = vld [vmem:[%s3 + $0x38] sm:$0xf]
  %v335 = vld [vmem:[%s3 + $0x3c] sm:$0xf]
  %v336 = vld [vmem:[%s3 + $0x40] sm:$0xf]
  %v337 = vld [vmem:[%s3 + $0x44] sm:$0xf]
  %v338 = vld [vmem:[%s3 + $0x48] sm:$0xf]
  %v339 = vld [vmem:[%s3 + $0x4c] sm:$0xf]
  %v340 = vld [vmem:[%s3 + $0x50] sm:$0xf]
  %v341 = vld [vmem:[%s3 + $0x54] sm:$0xf]
  %v342 = vld [vmem:[%s3 + $0x58] sm:$0xf]
  %v343 = vld [vmem:[%s3 + $0x5c] sm:$0xf]
  %v344 = vld [vmem:[%s3 + $0x60] sm:$0xf]
  %v345 = vld [vmem:[%s3 + $0x64] sm:$0xf]
  %v346 = vld [vmem:[%s3 + $0x68] sm:$0xf]
  %v347 = vld [vmem:[%s3 + $0x6c] sm:$0xf]
  %v348 = vld [vmem:[%s3 + $0x70] sm:$0xf]
  %v349 = vld [vmem:[%s3 + $0x74] sm:$0xf]
  %v350 = vld [vmem:[%s3 + $0x78] sm:$0xf]
  %v351 = vld [vmem:[%s3 + $0x7c] sm:$0xf]
  %v352 = vld [vmem:[%s4] sm:$0x1]
  %v354 = vlaneseq
  %v355 = vshrl.u32 %v354, 7
  %v356 = vsub.s32 0, %v355
  %v357 = vrot.slane %v352, %v356
  %v391 = vunpack.c.l.b16 %v320
  %v392 = vunpack.c.l.b16 %v321
  %v393 = vunpack.c.l.b16 %v322
  %v394 = vunpack.c.l.b16 %v323
  %v395 = vunpack.c.l.b16 %v324
  %v396 = vunpack.c.l.b16 %v325
  %v397 = vunpack.c.l.b16 %v326
  %v398 = vunpack.c.l.b16 %v327
  %v399 = vunpack.c.l.b16 %v328
  %v400 = vunpack.c.l.b16 %v329
  %v401 = vunpack.c.l.b16 %v330
  %v402 = vunpack.c.l.b16 %v331
  %v403 = vunpack.c.l.b16 %v332
  %v404 = vunpack.c.l.b16 %v333
  %v405 = vunpack.c.l.b16 %v334
  %v406 = vunpack.c.l.b16 %v335
  %v407 = vunpack.c.l.b16 %v336
  %v408 = vunpack.c.l.b16 %v337
  %v409 = vunpack.c.l.b16 %v338
  %v410 = vunpack.c.l.b16 %v339
  %v411 = vunpack.c.l.b16 %v340
  %v412 = vunpack.c.l.b16 %v341
  %v413 = vunpack.c.l.b16 %v342
  %v414 = vunpack.c.l.b16 %v343
  %v415 = vunpack.c.l.b16 %v344
  %v416 = vunpack.c.l.b16 %v345
  %v417 = vunpack.c.l.b16 %v346
  %v418 = vunpack.c.l.b16 %v347
  %v419 = vunpack.c.l.b16 %v348
  %v420 = vunpack.c.l.b16 %v349
  %v421 = vunpack.c.l.b16 %v350
  %v422 = vunpack.c.l.b16 %v351
  %v423 = vpack.c.b16 %v392, %v391
  %v424 = vpack.c.b16 %v394, %v393
  %v425 = vpack.c.b16 %v396, %v395
  %v426 = vpack.c.b16 %v398, %v397
  %v427 = vpack.c.b16 %v400, %v399
  %v428 = vpack.c.b16 %v402, %v401
  %v429 = vpack.c.b16 %v404, %v403
  %v430 = vpack.c.b16 %v406, %v405
  %v431 = vpack.c.b16 %v408, %v407
  %v432 = vpack.c.b16 %v410, %v409
  %v433 = vpack.c.b16 %v412, %v411
  %v434 = vpack.c.b16 %v414, %v413
  %v435 = vpack.c.b16 %v416, %v415
  %v436 = vpack.c.b16 %v418, %v417
  %v437 = vpack.c.b16 %v420, %v419
  %v438 = vpack.c.b16 %v422, %v421
  %455 = vmatprep.subr.bf16.mxu0 0
  %456 = vmatpush1.bf16.msra.mxu0 %v423
  %457 = vmatprep.subr.bf16.mxu0 0
  %458 = vmatpush1.bf16.msra.mxu0 %v424
  %459 = vmatprep.subr.bf16.mxu0 0
  %460 = vmatpush1.bf16.msra.mxu0 %v425
  %461 = vmatprep.subr.bf16.mxu0 0
  %462 = vmatpush1.bf16.msra.mxu0 %v426
  %463 = vmatprep.subr.bf16.mxu0 0
  %464 = vmatpush1.bf16.msra.mxu0 %v427
  %465 = vmatprep.subr.bf16.mxu0 0
  %466 = vmatpush1.bf16.msra.mxu0 %v428
  %467 = vmatprep.subr.bf16.mxu0 0
  %468 = vmatpush1.bf16.msra.mxu0 %v429
  %469 = vmatprep.subr.bf16.mxu0 0
  %470 = vmatpush1.bf16.msra.mxu0 %v430
  %471 = vmatprep.subr.bf16.mxu0 0
  %472 = vmatpush1.bf16.msra.mxu0 %v431
  %473 = vmatprep.subr.bf16.mxu0 0
  %474 = vmatpush1.bf16.msra.mxu0 %v432
  %475 = vmatprep.subr.bf16.mxu0 0
  %476 = vmatpush1.bf16.msra.mxu0 %v433
  %477 = vmatprep.subr.bf16.mxu0 0
  %478 = vmatpush1.bf16.msra.mxu0 %v434
  %479 = vmatprep.subr.bf16.mxu0 0
  %480 = vmatpush1.bf16.msra.mxu0 %v435
  %481 = vmatprep.subr.bf16.mxu0 0
  %482 = vmatpush1.bf16.msra.mxu0 %v436
  %483 = vmatprep.subr.bf16.mxu0 0
  %484 = vmatpush1.bf16.msra.mxu0 %v437
  %485 = vmatprep.subr.bf16.mxu0 0
  %486 = vmatpush1.bf16.msra.mxu0 %v438
  %487 = vmatprep.mubr.bf16.mxu0 %v305
  %488 = vmatmul.mubr.bf16.gmra.mrb[0].mxu0 %v304
  %v489 = vpop.f32.mrb[0].mxu0
  %v490 = vadd.f32 %v357, %v489
  %v491 = vpop.f32.mrb[0].mxu0
  %v492 = vpop.f32.mrb[0].mxu0
  %v493 = vadd.f32 %v357, %v492
  %v494 = vpop.f32.mrb[0].mxu0
  %495 = vmatprep.mubr.bf16.mxu0 %v307
  %496 = vmatmul.mubr.bf16.gmra.mrb[0].mxu0 %v306
  %v497 = vpop.f32.mrb[0].mxu0
  %v498 = vadd.f32 %v357, %v497
  %v499 = vpop.f32.mrb[0].mxu0
  %v500 = vpop.f32.mrb[0].mxu0
  %v501 = vadd.f32 %v357, %v500
  %v502 = vpop.f32.mrb[0].mxu0
  %503 = vmatprep.mubr.bf16.mxu0 %v309
  %504 = vmatmul.mubr.bf16.gmra.mrb[0].mxu0 %v308
  %v505 = vpop.f32.mrb[0].mxu0
  %v506 = vadd.f32 %v357, %v505
  %v507 = vpop.f32.mrb[0].mxu0
  %v508 = vpop.f32.mrb[0].mxu0
  %v509 = vadd.f32 %v357, %v508
  %v510 = vpop.f32.mrb[0].mxu0
  %511 = vmatprep.mubr.bf16.mxu0 %v311
  %512 = vmatmul.mubr.bf16.gmra.mrb[0].mxu0 %v310
  %v513 = vpop.f32.mrb[0].mxu0
  %v514 = vadd.f32 %v357, %v513
  %v515 = vpop.f32.mrb[0].mxu0
  %v516 = vpop.f32.mrb[0].mxu0
  %v517 = vadd.f32 %v357, %v516
  %v518 = vpop.f32.mrb[0].mxu0
  %519 = vmatprep.mubr.bf16.mxu0 %v313
  %520 = vmatmul.mubr.bf16.gmra.mrb[0].mxu0 %v312
  %v521 = vpop.f32.mrb[0].mxu0
  %v522 = vadd.f32 %v357, %v521
  %v523 = vpop.f32.mrb[0].mxu0
  %v524 = vpop.f32.mrb[0].mxu0
  %v525 = vadd.f32 %v357, %v524
  %v526 = vpop.f32.mrb[0].mxu0
  %527 = vmatprep.mubr.bf16.mxu0 %v315
  %528 = vmatmul.mubr.bf16.gmra.mrb[0].mxu0 %v314
  %v529 = vpop.f32.mrb[0].mxu0
  %v530 = vadd.f32 %v357, %v529
  %v531 = vpop.f32.mrb[0].mxu0
  %v532 = vpop.f32.mrb[0].mxu0
  %v533 = vadd.f32 %v357, %v532
  %v534 = vpop.f32.mrb[0].mxu0
  %535 = vmatprep.mubr.bf16.mxu0 %v317
  %536 = vmatmul.mubr.bf16.gmra.mrb[0].mxu0 %v316
  %v537 = vpop.f32.mrb[0].mxu0
  %v538 = vadd.f32 %v357, %v537
  %v539 = vpop.f32.mrb[0].mxu0
  %v540 = vpop.f32.mrb[0].mxu0
  %v541 = vadd.f32 %v357, %v540
  %v542 = vpop.f32.mrb[0].mxu0
  %543 = vmatprep.mubr.bf16.mxu0 %v319
  %544 = vmatmul.mubr.bf16.gmra.mrb[0].mxu0 %v318
  %v545 = vpop.f32.mrb[0].mxu0
  %v546 = vadd.f32 %v357, %v545
  %v547 = vpop.f32.mrb[0].mxu0
  %v548 = vpop.f32.mrb[0].mxu0
  %v549 = vadd.f32 %v357, %v548
  %v550 = vpop.f32.mrb[0].mxu0
  %551 = vdwg.mxu0
  %v552 = vadd.f32 %v27, %v490
  %v553 = vadd.f32 %v28, %v493
  %v554 = vadd.f32 %v29, %v498
  %v555 = vadd.f32 %v30, %v501
  %v556 = vadd.f32 %v31, %v506
  %v557 = vadd.f32 %v32, %v509
  %v558 = vadd.f32 %v33, %v514
  %v559 = vadd.f32 %v34, %v517
  %v560 = vadd.f32 %v35, %v522
  %v561 = vadd.f32 %v36, %v525
  %v562 = vadd.f32 %v37, %v530
  %v563 = vadd.f32 %v38, %v533
  %v564 = vadd.f32 %v39, %v538
  %v565 = vadd.f32 %v40, %v541
  %v566 = vadd.f32 %v41, %v546
  %v567 = vadd.f32 %v42, %v549
  %v568 = vld [vmem:[%s5] sm:$0x1]
  %v569 = vld [vmem:[%s6] sm:$0x1]
  %570 = vadd.xlane.f32.xlu0 %v552
  %v571 = vpop.xlane.xlu0 %570
  %572 = vadd.xlane.f32.xlu0 %v553
  %v573 = vpop.xlane.xlu0 %572
  %574 = vadd.xlane.f32.xlu0 %v554
  %v575 = vpop.xlane.xlu0 %574
  %576 = vadd.xlane.f32.xlu0 %v555
  %v577 = vpop.xlane.xlu0 %576
  %578 = vadd.xlane.f32.xlu0 %v556
  %v579 = vpop.xlane.xlu0 %578
  %580 = vadd.xlane.f32.xlu0 %v557
  %v581 = vpop.xlane.xlu0 %580
  %582 = vadd.xlane.f32.xlu0 %v558
  %v583 = vpop.xlane.xlu0 %582
  %584 = vadd.xlane.f32.xlu0 %v559
  %v585 = vpop.xlane.xlu0 %584
  %586 = vadd.xlane.f32.xlu0 %v560
  %v587 = vpop.xlane.xlu0 %586
  %588 = vadd.xlane.f32.xlu0 %v561
  %v589 = vpop.xlane.xlu0 %588
  %590 = vadd.xlane.f32.xlu0 %v562
  %v591 = vpop.xlane.xlu0 %590
  %592 = vadd.xlane.f32.xlu0 %v563
  %v593 = vpop.xlane.xlu0 %592
  %594 = vadd.xlane.f32.xlu0 %v564
  %v595 = vpop.xlane.xlu0 %594
  %596 = vadd.xlane.f32.xlu0 %v565
  %v597 = vpop.xlane.xlu0 %596
  %598 = vadd.xlane.f32.xlu0 %v566
  %v599 = vpop.xlane.xlu0 %598
  %600 = vadd.xlane.f32.xlu0 %v567
  %v601 = vpop.xlane.xlu0 %600
  %v602 = vrcp.pop 128.0
  %v603 = vmul.f32 %v571, %v602
  %v604 = vmul.f32 %v573, %v602
  %v605 = vmul.f32 %v575, %v602
  %v606 = vmul.f32 %v577, %v602
  %v607 = vmul.f32 %v579, %v602
  %v608 = vmul.f32 %v581, %v602
  %v609 = vmul.f32 %v583, %v602
  %v610 = vmul.f32 %v585, %v602
  %v611 = vmul.f32 %v587, %v602
  %v612 = vmul.f32 %v589, %v602
  %v613 = vmul.f32 %v591, %v602
  %v614 = vmul.f32 %v593, %v602
  %v615 = vmul.f32 %v595, %v602
  %v616 = vmul.f32 %v597, %v602
  %v617 = vmul.f32 %v599, %v602
  %v618 = vmul.f32 %v601, %v602
  %v619 = vsub.f32 %v552, %v603
  %v620 = vsub.f32 %v553, %v604
  %v621 = vsub.f32 %v554, %v605
  %v622 = vsub.f32 %v555, %v606
  %v623 = vsub.f32 %v556, %v607
  %v624 = vsub.f32 %v557, %v608
  %v625 = vsub.f32 %v558, %v609
  %v626 = vsub.f32 %v559, %v610
  %v627 = vsub.f32 %v560, %v611
  %v628 = vsub.f32 %v561, %v612
  %v629 = vsub.f32 %v562, %v613
  %v630 = vsub.f32 %v563, %v614
  %v631 = vsub.f32 %v564, %v615
  %v632 = vsub.f32 %v565, %v616
  %v633 = vsub.f32 %v566, %v617
  %v634 = vsub.f32 %v567, %v618
  %v635 = vmul.f32 %v619, %v619
  %v636 = vmul.f32 %v620, %v620
  %v637 = vmul.f32 %v621, %v621
  %v638 = vmul.f32 %v622, %v622
  %v639 = vmul.f32 %v623, %v623
  %v640 = vmul.f32 %v624, %v624
  %v641 = vmul.f32 %v625, %v625
  %v642 = vmul.f32 %v626, %v626
  %v643 = vmul.f32 %v627, %v627
  %v644 = vmul.f32 %v628, %v628
  %v645 = vmul.f32 %v629, %v629
  %v646 = vmul.f32 %v630, %v630
  %v647 = vmul.f32 %v631, %v631
  %v648 = vmul.f32 %v632, %v632
  %v649 = vmul.f32 %v633, %v633
  %v650 = vmul.f32 %v634, %v634
  %651 = vadd.xlane.f32.xlu0 %v635
  %v652 = vpop.xlane.xlu0 %651
  %653 = vadd.xlane.f32.xlu0 %v636
  %v654 = vpop.xlane.xlu0 %653
  %655 = vadd.xlane.f32.xlu0 %v637
  %v656 = vpop.xlane.xlu0 %655
  %657 = vadd.xlane.f32.xlu0 %v638
  %v658 = vpop.xlane.xlu0 %657
  %659 = vadd.xlane.f32.xlu0 %v639
  %v660 = vpop.xlane.xlu0 %659
  %661 = vadd.xlane.f32.xlu0 %v640
  %v662 = vpop.xlane.xlu0 %661
  %663 = vadd.xlane.f32.xlu0 %v641
  %v664 = vpop.xlane.xlu0 %663
  %665 = vadd.xlane.f32.xlu0 %v642
  %v666 = vpop.xlane.xlu0 %665
  %667 = vadd.xlane.f32.xlu0 %v643
  %v668 = vpop.xlane.xlu0 %667
  %669 = vadd.xlane.f32.xlu0 %v644
  %v670 = vpop.xlane.xlu0 %669
  %671 = vadd.xlane.f32.xlu0 %v645
  %v672 = vpop.xlane.xlu0 %671
  %673 = vadd.xlane.f32.xlu0 %v646
  %v674 = vpop.xlane.xlu0 %673
  %675 = vadd.xlane.f32.xlu0 %v647
  %v676 = vpop.xlane.xlu0 %675
  %677 = vadd.xlane.f32.xlu0 %v648
  %v678 = vpop.xlane.xlu0 %677
  %679 = vadd.xlane.f32.xlu0 %v649
  %v680 = vpop.xlane.xlu0 %679
  %681 = vadd.xlane.f32.xlu0 %v650
  %v682 = vpop.xlane.xlu0 %681
  %v683 = vmul.f32 %v652, %v602
  %v684 = vmul.f32 %v654, %v602
  %v685 = vmul.f32 %v656, %v602
  %v686 = vmul.f32 %v658, %v602
  %v687 = vmul.f32 %v660, %v602
  %v688 = vmul.f32 %v662, %v602
  %v689 = vmul.f32 %v664, %v602
  %v690 = vmul.f32 %v666, %v602
  %v691 = vmul.f32 %v668, %v602
  %v692 = vmul.f32 %v670, %v602
  %v693 = vmul.f32 %v672, %v602
  %v694 = vmul.f32 %v674, %v602
  %v695 = vmul.f32 %v676, %v602
  %v696 = vmul.f32 %v678, %v602
  %v697 = vmul.f32 %v680, %v602
  %v698 = vmul.f32 %v682, %v602
  %v699 = vadd.f32 %v683, 1e-05
  %v700 = vadd.f32 %v684, 1e-05
  %v701 = vadd.f32 %v685, 1e-05
  %v702 = vadd.f32 %v686, 1e-05
  %v703 = vadd.f32 %v687, 1e-05
  %v704 = vadd.f32 %v688, 1e-05
  %v705 = vadd.f32 %v689, 1e-05
  %v706 = vadd.f32 %v690, 1e-05
  %v707 = vadd.f32 %v691, 1e-05
  %v708 = vadd.f32 %v692, 1e-05
  %v709 = vadd.f32 %v693, 1e-05
  %v710 = vadd.f32 %v694, 1e-05
  %v711 = vadd.f32 %v695, 1e-05
  %v712 = vadd.f32 %v696, 1e-05
  %v713 = vadd.f32 %v697, 1e-05
  %v714 = vadd.f32 %v698, 1e-05
  %v715 = vrsqrt.pop %v699
  %v716 = vrsqrt.pop %v700
  %v717 = vrsqrt.pop %v701
  %v718 = vrsqrt.pop %v702
  %v719 = vrsqrt.pop %v703
  %v720 = vrsqrt.pop %v704
  %v721 = vrsqrt.pop %v705
  %v722 = vrsqrt.pop %v706
  %v723 = vrsqrt.pop %v707
  %v724 = vrsqrt.pop %v708
  %v725 = vrsqrt.pop %v709
  %v726 = vrsqrt.pop %v710
  %v727 = vrsqrt.pop %v711
  %v728 = vrsqrt.pop %v712
  %v729 = vrsqrt.pop %v713
  %v730 = vrsqrt.pop %v714
  %v731 = vmul.f32 %v619, %v715
  %v732 = vmul.f32 %v620, %v716
  %v733 = vmul.f32 %v621, %v717
  %v734 = vmul.f32 %v622, %v718
  %v735 = vmul.f32 %v623, %v719
  %v736 = vmul.f32 %v624, %v720
  %v737 = vmul.f32 %v625, %v721
  %v738 = vmul.f32 %v626, %v722
  %v739 = vmul.f32 %v627, %v723
  %v740 = vmul.f32 %v628, %v724
  %v741 = vmul.f32 %v629, %v725
  %v742 = vmul.f32 %v630, %v726
  %v743 = vmul.f32 %v631, %v727
  %v744 = vmul.f32 %v632, %v728
  %v745 = vmul.f32 %v633, %v729
  %v746 = vmul.f32 %v634, %v730
  %v748 = vlaneseq
  %v749 = vshrl.u32 %v748, 7
  %v750 = vsub.s32 0, %v749
  %v751 = vrot.slane %v568, %v750
  %v753 = vmul.f32 %v731, %v751
  %v754 = vmul.f32 %v732, %v751
  %v755 = vmul.f32 %v733, %v751
  %v756 = vmul.f32 %v734, %v751
  %v757 = vmul.f32 %v735, %v751
  %v758 = vmul.f32 %v736, %v751
  %v759 = vmul.f32 %v737, %v751
  %v760 = vmul.f32 %v738, %v751
  %v761 = vmul.f32 %v739, %v751
  %v762 = vmul.f32 %v740, %v751
  %v763 = vmul.f32 %v741, %v751
  %v764 = vmul.f32 %v742, %v751
  %v765 = vmul.f32 %v743, %v751
  %v766 = vmul.f32 %v744, %v751
  %v767 = vmul.f32 %v745, %v751
  %v768 = vmul.f32 %v746, %v751
  %v770 = vlaneseq
  %v771 = vshrl.u32 %v770, 7
  %v772 = vsub.s32 0, %v771
  %v773 = vrot.slane %v569, %v772
  %v775 = vadd.f32 %v753, %v773
  %v776 = vadd.f32 %v754, %v773
  %v777 = vadd.f32 %v755, %v773
  %v778 = vadd.f32 %v756, %v773
  %v779 = vadd.f32 %v757, %v773
  %v780 = vadd.f32 %v758, %v773
  %v781 = vadd.f32 %v759, %v773
  %v782 = vadd.f32 %v760, %v773
  %v783 = vadd.f32 %v761, %v773
  %v784 = vadd.f32 %v762, %v773
  %v785 = vadd.f32 %v763, %v773
  %v786 = vadd.f32 %v764, %v773
  %v787 = vadd.f32 %v765, %v773
  %v788 = vadd.f32 %v766, %v773
  %v789 = vadd.f32 %v767, %v773
  %v790 = vadd.f32 %v768, %v773
  %791 = vst [vmem:[%s7] sm:$0xff] %v775
  %792 = vst [vmem:[%s7 + $0x8] sm:$0xff] %v776
  %793 = vst [vmem:[%s7 + $0x10] sm:$0xff] %v777
  %794 = vst [vmem:[%s7 + $0x18] sm:$0xff] %v778
  %795 = vst [vmem:[%s7 + $0x20] sm:$0xff] %v779
  %796 = vst [vmem:[%s7 + $0x28] sm:$0xff] %v780
  %797 = vst [vmem:[%s7 + $0x30] sm:$0xff] %v781
  %798 = vst [vmem:[%s7 + $0x38] sm:$0xff] %v782
  %799 = vst [vmem:[%s7 + $0x40] sm:$0xff] %v783
  %800 = vst [vmem:[%s7 + $0x48] sm:$0xff] %v784
  %801 = vst [vmem:[%s7 + $0x50] sm:$0xff] %v785
  %802 = vst [vmem:[%s7 + $0x58] sm:$0xff] %v786
  %803 = vst [vmem:[%s7 + $0x60] sm:$0xff] %v787
  %804 = vst [vmem:[%s7 + $0x68] sm:$0xff] %v788
  %805 = vst [vmem:[%s7 + $0x70] sm:$0xff] %v789
  %806 = vst [vmem:[%s7 + $0x78] sm:$0xff] %v790
  // Predicated region
  $region30: #{transformer_forward.28} parent=0 // pred_check
    _
  $region31: #{transformer_forward.28} parent=0 // pred_check_branch
    %808 = sbr.rel (0) target = $region33
  $region32: #{transformer_forward.28} parent=0 // pred_region
    _
  $region33: #{transformer_forward.28} parent=0 // pred_fallthru
    _
  // Predicated region
  $region34: #{transformer_forward.28} parent=0 // pred_check
    _
  $region35: #{transformer_forward.28} parent=0 // pred_check_branch
    %810 = sbr.rel (0) target = $region37
  $region36: #{transformer_forward.28} parent=0 // pred_region
    _
  $region37: #{transformer_forward.28} parent=0 // pred_fallthru
    _

// kernel: transformer_forward.29
$region0: #{transformer_forward.29}
  #allocation0 [shape = 'u32[]', space=smem, size = 0x4, offset = 0x4, fixed_abs, tag = 'smem constant byte address 0x4 - core index']
  #allocation1 [shape = 'u32[144,128]{1,0:T(1,128)}', space=vmem, size = 0x12000, scoped, tag = 'internal scratch']
  %s0 = inlined_call_operand.vmem [shape: f32[128,128], index: 0, kind: input, shape index: {}]
  %s1 = inlined_call_operand.vmem [shape: f32[128,128], index: 1, kind: input, shape index: {}]
  %s2 = inlined_call_operand.vmem [shape: bf16[128,128], index: 2, kind: input, shape index: {}]
  %s3 = inlined_call_operand.vmem [shape: bf16[128,128], index: 3, kind: input, shape index: {}]
  %s4 = inlined_call_operand.vmem [shape: bf16[128,128], index: 4, kind: input, shape index: {}]
  %s5 = inlined_call_operand.vmem [shape: f32[3,128], index: 5, kind: input, shape index: {}]
  %s6 = inlined_call_operand.vmem [shape: bf16[128,128], index: 6, kind: output, shape index: {0}]
  %s7 = inlined_call_operand.vmem [shape: bf16[128,128], index: 7, kind: output, shape index: {1}]
  %s8 = inlined_call_operand.vmem [shape: bf16[128,128], index: 8, kind: output, shape index: {2}]
  %9 = xla_tuple %s6, %s7, %s8
  %s10 = sld [smem:[#allocation0]]
  $region50: #{transformer_forward.29} parent=0
    _
  %s12 = ssub.s32 1, %s10
  %s13 = scalar_select 0, %s12, %s10
  // Predicated region
  $region2: #{transformer_forward.29} parent=0 // pred_check
    _
  $region3: #{transformer_forward.29} parent=0 // pred_check_branch
    %15 = sbr.rel (0) target = $region5
  $region4: #{transformer_forward.29} parent=0 // pred_region
    _
  $region5: #{transformer_forward.29} parent=0 // pred_fallthru
    _
  // Predicated region
  $region6: #{transformer_forward.29} parent=0 // pred_check
    _
  $region7: #{transformer_forward.29} parent=0 // pred_check_branch
    %17 = sbr.rel (0) target = $region9
  $region8: #{transformer_forward.29} parent=0 // pred_region
    _
  $region9: #{transformer_forward.29} parent=0 // pred_fallthru
    _
  // Predicated region
  $region10: #{transformer_forward.29} parent=0 // pred_check
    _
  $region11: #{transformer_forward.29} parent=0 // pred_check_branch
    %19 = sbr.rel (0) target = $region13
  $region12: #{transformer_forward.29} parent=0 // pred_region
    _
  $region13: #{transformer_forward.29} parent=0 // pred_fallthru
    _
  // Predicated region
  $region14: #{transformer_forward.29} parent=0 // pred_check
    _
  $region15: #{transformer_forward.29} parent=0 // pred_check_branch
    %21 = sbr.rel (0) target = $region17
  $region16: #{transformer_forward.29} parent=0 // pred_region
    _
  $region17: #{transformer_forward.29} parent=0 // pred_fallthru
    _
  // Predicated region
  $region18: #{transformer_forward.29} parent=0 // pred_check
    _
  $region19: #{transformer_forward.29} parent=0 // pred_check_branch
    %23 = sbr.rel (0) target = $region21
  $region20: #{transformer_forward.29} parent=0 // pred_region
    _
  $region21: #{transformer_forward.29} parent=0 // pred_fallthru
    _
  // Predicated region
  $region22: #{transformer_forward.29} parent=0 // pred_check
    _
  $region23: #{transformer_forward.29} parent=0 // pred_check_branch
    %25 = sbr.rel (0) target = $region25
  $region24: #{transformer_forward.29} parent=0 // pred_region
    _
  $region25: #{transformer_forward.29} parent=0 // pred_fallthru
    _
  %v27 = vld [vmem:[%s0] sm:$0xff]
  %v28 = vld [vmem:[%s0 + $0x8] sm:$0xff]
  %v29 = vld [vmem:[%s0 + $0x10] sm:$0xff]
  %v30 = vld [vmem:[%s0 + $0x18] sm:$0xff]
  %v31 = vld [vmem:[%s0 + $0x20] sm:$0xff]
  %v32 = vld [vmem:[%s0 + $0x28] sm:$0xff]
  %v33 = vld [vmem:[%s0 + $0x30] sm:$0xff]
  %v34 = vld [vmem:[%s0 + $0x38] sm:$0xff]
  %v35 = vld [vmem:[%s0 + $0x40] sm:$0xff]
  %v36 = vld [vmem:[%s0 + $0x48] sm:$0xff]
  %v37 = vld [vmem:[%s0 + $0x50] sm:$0xff]
  %v38 = vld [vmem:[%s0 + $0x58] sm:$0xff]
  %v39 = vld [vmem:[%s0 + $0x60] sm:$0xff]
  %v40 = vld [vmem:[%s0 + $0x68] sm:$0xff]
  %v41 = vld [vmem:[%s0 + $0x70] sm:$0xff]
  %v42 = vld [vmem:[%s0 + $0x78] sm:$0xff]
  %v43 = vld [vmem:[%s5] sm:$0x7]
  %v44 = vld [vmem:[%s1] sm:$0xff]
  %v45 = vld [vmem:[%s1 + $0x8] sm:$0xff]
  %v46 = vld [vmem:[%s1 + $0x10] sm:$0xff]
  %v47 = vld [vmem:[%s1 + $0x18] sm:$0xff]
  %v48 = vld [vmem:[%s1 + $0x20] sm:$0xff]
  %v49 = vld [vmem:[%s1 + $0x28] sm:$0xff]
  %v50 = vld [vmem:[%s1 + $0x30] sm:$0xff]
  %v51 = vld [vmem:[%s1 + $0x38] sm:$0xff]
  %v52 = vld [vmem:[%s1 + $0x40] sm:$0xff]
  %v53 = vld [vmem:[%s1 + $0x48] sm:$0xff]
  %v54 = vld [vmem:[%s1 + $0x50] sm:$0xff]
  %v55 = vld [vmem:[%s1 + $0x58] sm:$0xff]
  %v56 = vld [vmem:[%s1 + $0x60] sm:$0xff]
  %v57 = vld [vmem:[%s1 + $0x68] sm:$0xff]
  %v58 = vld [vmem:[%s1 + $0x70] sm:$0xff]
  %v59 = vld [vmem:[%s1 + $0x78] sm:$0xff]
  %v60 = vadd.f32 %v27, %v44
  %v61 = vadd.f32 %v28, %v45
  %v62 = vadd.f32 %v29, %v46
  %v63 = vadd.f32 %v30, %v47
  %v64 = vadd.f32 %v31, %v48
  %v65 = vadd.f32 %v32, %v49
  %v66 = vadd.f32 %v33, %v50
  %v67 = vadd.f32 %v34, %v51
  %v68 = vadd.f32 %v35, %v52
  %v69 = vadd.f32 %v36, %v53
  %v70 = vadd.f32 %v37, %v54
  %v71 = vadd.f32 %v38, %v55
  %v72 = vadd.f32 %v39, %v56
  %v73 = vadd.f32 %v40, %v57
  %v74 = vadd.f32 %v41, %v58
  %v75 = vadd.f32 %v42, %v59
  %v76 = vpack.c.bf16 %v61, %v60
  %v77 = vpack.c.bf16 %v63, %v62
  %v78 = vpack.c.bf16 %v65, %v64
  %v79 = vpack.c.bf16 %v67, %v66
  %v80 = vpack.c.bf16 %v69, %v68
  %v81 = vpack.c.bf16 %v71, %v70
  %v82 = vpack.c.bf16 %v73, %v72
  %v83 = vpack.c.bf16 %v75, %v74
  %v84 = vpack.c.bf16 %v28, %v27
  %v85 = vpack.c.bf16 %v30, %v29
  %v86 = vpack.c.bf16 %v32, %v31
  %v87 = vpack.c.bf16 %v34, %v33
  %v88 = vpack.c.bf16 %v36, %v35
  %v89 = vpack.c.bf16 %v38, %v37
  %v90 = vpack.c.bf16 %v40, %v39
  %v91 = vpack.c.bf16 %v42, %v41
  %v92 = vld [vmem:[%s2] sm:$0xf]
  %v93 = vld [vmem:[%s2 + $0x4] sm:$0xf]
  %v94 = vld [vmem:[%s2 + $0x8] sm:$0xf]
  %v95 = vld [vmem:[%s2 + $0xc] sm:$0xf]
  %v96 = vld [vmem:[%s2 + $0x10] sm:$0xf]
  %v97 = vld [vmem:[%s2 + $0x14] sm:$0xf]
  %v98 = vld [vmem:[%s2 + $0x18] sm:$0xf]
  %v99 = vld [vmem:[%s2 + $0x1c] sm:$0xf]
  %v100 = vld [vmem:[%s2 + $0x20] sm:$0xf]
  %v101 = vld [vmem:[%s2 + $0x24] sm:$0xf]
  %v102 = vld [vmem:[%s2 + $0x28] sm:$0xf]
  %v103 = vld [vmem:[%s2 + $0x2c] sm:$0xf]
  %v104 = vld [vmem:[%s2 + $0x30] sm:$0xf]
  %v105 = vld [vmem:[%s2 + $0x34] sm:$0xf]
  %v106 = vld [vmem:[%s2 + $0x38] sm:$0xf]
  %v107 = vld [vmem:[%s2 + $0x3c] sm:$0xf]
  %v108 = vlaneseq
  %v109 = vshrl.u32 %v108, 7
  %v110 = vsub.s32 0, %v109
  %v111 = vrot.slane %v43, %v110
  %v128 = vunpack.c.l.b16 %v92
  %v129 = vunpack.c.l.b16 %v93
  %v130 = vunpack.c.l.b16 %v94
  %v131 = vunpack.c.l.b16 %v95
  %v132 = vunpack.c.l.b16 %v96
  %v133 = vunpack.c.l.b16 %v97
  %v134 = vunpack.c.l.b16 %v98
  %v135 = vunpack.c.l.b16 %v99
  %v136 = vunpack.c.l.b16 %v100
  %v137 = vunpack.c.l.b16 %v101
  %v138 = vunpack.c.l.b16 %v102
  %v139 = vunpack.c.l.b16 %v103
  %v140 = vunpack.c.l.b16 %v104
  %v141 = vunpack.c.l.b16 %v105
  %v142 = vunpack.c.l.b16 %v106
  %v143 = vunpack.c.l.b16 %v107
  %v144 = vpack.c.b16 %v129, %v128
  %v145 = vpack.c.b16 %v131, %v130
  %v146 = vpack.c.b16 %v133, %v132
  %v147 = vpack.c.b16 %v135, %v134
  %v148 = vpack.c.b16 %v137, %v136
  %v149 = vpack.c.b16 %v139, %v138
  %v150 = vpack.c.b16 %v141, %v140
  %v151 = vpack.c.b16 %v143, %v142
  %160 = vmatprep.subr.bf16.mxu0 0
  %161 = vmatpush1.bf16.msra.mxu0 %v144
  %162 = vmatprep.subr.bf16.mxu0 0
  %163 = vmatpush1.bf16.msra.mxu0 %v145
  %164 = vmatprep.subr.bf16.mxu0 0
  %165 = vmatpush1.bf16.msra.mxu0 %v146
  %166 = vmatprep.subr.bf16.mxu0 0
  %167 = vmatpush1.bf16.msra.mxu0 %v147
  %168 = vmatprep.subr.bf16.mxu0 0
  %169 = vmatpush1.bf16.msra.mxu0 %v148
  %170 = vmatprep.subr.bf16.mxu0 0
  %171 = vmatpush1.bf16.msra.mxu0 %v149
  %172 = vmatprep.subr.bf16.mxu0 0
  %173 = vmatpush1.bf16.msra.mxu0 %v150
  %174 = vmatprep.subr.bf16.mxu0 0
  %175 = vmatpush1.bf16.msra.mxu0 %v151
  %176 = vmatprep.subr.bf16.mxu0 0
  %177 = vmatpush1.bf16.msra.mxu0 0
  %178 = vmatprep.subr.bf16.mxu0 0
  %179 = vmatpush1.bf16.msra.mxu0 0
  %180 = vmatprep.subr.bf16.mxu0 0
  %181 = vmatpush1.bf16.msra.mxu0 0
  %182 = vmatprep.subr.bf16.mxu0 0
  %183 = vmatpush1.bf16.msra.mxu0 0
  %184 = vmatprep.subr.bf16.mxu0 0
  %185 = vmatpush1.bf16.msra.mxu0 0
  %186 = vmatprep.subr.bf16.mxu0 0
  %187 = vmatpush1.bf16.msra.mxu0 0
  %188 = vmatprep.subr.bf16.mxu0 0
  %189 = vmatpush1.bf16.msra.mxu0 0
  %190 = vmatprep.subr.bf16.mxu0 0
  %191 = vmatpush1.bf16.msra.mxu0 0
  %192 = vmatprep.mubr.bf16.mxu0 0
  %193 = vmatmul.mubr.bf16.gmra.mrb[0].mxu0 %v76
  %v194 = vpop.f32.mrb[0].mxu0
  %v195 = vadd.f32 %v111, %v194
  %v196 = vpop.f32.mrb[0].mxu0
  %v197 = vpop.f32.mrb[0].mxu0
  %v198 = vadd.f32 %v111, %v197
  %v199 = vpop.f32.mrb[0].mxu0
  %200 = vmatprep.mubr.bf16.mxu0 0
  %201 = vmatmul.mubr.bf16.gmra.mrb[0].mxu0 %v77
  %v202 = vpop.f32.mrb[0].mxu0
  %v203 = vadd.f32 %v111, %v202
  %v204 = vpop.f32.mrb[0].mxu0
  %v205 = vpop.f32.mrb[0].mxu0
  %v206 = vadd.f32 %v111, %v205
  %v207 = vpop.f32.mrb[0].mxu0
  %208 = vmatprep.mubr.bf16.mxu0 0
  %209 = vmatmul.mubr.bf16.gmra.mrb[0].mxu0 %v78
  %v210 = vpop.f32.mrb[0].mxu0
  %v211 = vadd.f32 %v111, %v210
  %v212 = vpop.f32.mrb[0].mxu0
  %v213 = vpop.f32.mrb[0].mxu0
  %v214 = vadd.f32 %v111, %v213
  %v215 = vpop.f32.mrb[0].mxu0
  %216 = vmatprep.mubr.bf16.mxu0 0
  %217 = vmatmul.mubr.bf16.gmra.mrb[0].mxu0 %v79
  %v218 = vpop.f32.mrb[0].mxu0
  %v219 = vadd.f32 %v111, %v218
  %v220 = vpop.f32.mrb[0].mxu0
  %v221 = vpop.f32.mrb[0].mxu0
  %v222 = vadd.f32 %v111, %v221
  %v223 = vpop.f32.mrb[0].mxu0
  %224 = vmatprep.mubr.bf16.mxu0 0
  %225 = vmatmul.mubr.bf16.gmra.mrb[0].mxu0 %v80
  %v226 = vpop.f32.mrb[0].mxu0
  %v227 = vadd.f32 %v111, %v226
  %v228 = vpop.f32.mrb[0].mxu0
  %v229 = vpop.f32.mrb[0].mxu0
  %v230 = vadd.f32 %v111, %v229
  %v231 = vpop.f32.mrb[0].mxu0
  %232 = vmatprep.mubr.bf16.mxu0 0
  %233 = vmatmul.mubr.bf16.gmra.mrb[0].mxu0 %v81
  %v234 = vpop.f32.mrb[0].mxu0
  %v235 = vadd.f32 %v111, %v234
  %v236 = vpop.f32.mrb[0].mxu0
  %v237 = vpop.f32.mrb[0].mxu0
  %v238 = vadd.f32 %v111, %v237
  %v239 = vpop.f32.mrb[0].mxu0
  %240 = vmatprep.mubr.bf16.mxu0 0
  %241 = vmatmul.mubr.bf16.gmra.mrb[0].mxu0 %v82
  %v242 = vpop.f32.mrb[0].mxu0
  %v243 = vadd.f32 %v111, %v242
  %v244 = vpop.f32.mrb[0].mxu0
  %v245 = vpop.f32.mrb[0].mxu0
  %v246 = vadd.f32 %v111, %v245
  %v247 = vpop.f32.mrb[0].mxu0
  %248 = vmatprep.mubr.bf16.mxu0 0
  %249 = vmatmul.mubr.bf16.gmra.mrb[0].mxu0 %v83
  %v250 = vpop.f32.mrb[0].mxu0
  %v251 = vadd.f32 %v111, %v250
  %v252 = vpop.f32.mrb[0].mxu0
  %v253 = vpop.f32.mrb[0].mxu0
  %v254 = vadd.f32 %v111, %v253
  %v255 = vpop.f32.mrb[0].mxu0
  %256 = vdwg.mxu0
  %v257 = vld [vmem:[%s3] sm:$0xf]
  %v258 = vld [vmem:[%s3 + $0x4] sm:$0xf]
  %v259 = vld [vmem:[%s3 + $0x8] sm:$0xf]
  %v260 = vld [vmem:[%s3 + $0xc] sm:$0xf]
  %v261 = vld [vmem:[%s3 + $0x10] sm:$0xf]
  %v262 = vld [vmem:[%s3 + $0x14] sm:$0xf]
  %v263 = vld [vmem:[%s3 + $0x18] sm:$0xf]
  %v264 = vld [vmem:[%s3 + $0x1c] sm:$0xf]
  %v265 = vld [vmem:[%s3 + $0x20] sm:$0xf]
  %v266 = vld [vmem:[%s3 + $0x24] sm:$0xf]
  %v267 = vld [vmem:[%s3 + $0x28] sm:$0xf]
  %v268 = vld [vmem:[%s3 + $0x2c] sm:$0xf]
  %v269 = vld [vmem:[%s3 + $0x30] sm:$0xf]
  %v270 = vld [vmem:[%s3 + $0x34] sm:$0xf]
  %v271 = vld [vmem:[%s3 + $0x38] sm:$0xf]
  %v272 = vld [vmem:[%s3 + $0x3c] sm:$0xf]
  %v273 = vlaneseq
  %v274 = vshrl.u32 %v273, 7
  %v275 = vsub.s32 1, %v274
  %v276 = vrot.slane %v43, %v275
  %v293 = vunpack.c.l.b16 %v257
  %v294 = vunpack.c.l.b16 %v258
  %v295 = vunpack.c.l.b16 %v259
  %v296 = vunpack.c.l.b16 %v260
  %v297 = vunpack.c.l.b16 %v261
  %v298 = vunpack.c.l.b16 %v262
  %v299 = vunpack.c.l.b16 %v263
  %v300 = vunpack.c.l.b16 %v264
  %v301 = vunpack.c.l.b16 %v265
  %v302 = vunpack.c.l.b16 %v266
  %v303 = vunpack.c.l.b16 %v267
  %v304 = vunpack.c.l.b16 %v268
  %v305 = vunpack.c.l.b16 %v269
  %v306 = vunpack.c.l.b16 %v270
  %v307 = vunpack.c.l.b16 %v271
  %v308 = vunpack.c.l.b16 %v272
  %v309 = vpack.c.b16 %v294, %v293
  %v310 = vpack.c.b16 %v296, %v295
  %v311 = vpack.c.b16 %v298, %v297
  %v312 = vpack.c.b16 %v300, %v299
  %v313 = vpack.c.b16 %v302, %v301
  %v314 = vpack.c.b16 %v304, %v303
  %v315 = vpack.c.b16 %v306, %v305
  %v316 = vpack.c.b16 %v308, %v307
  %325 = vmatprep.subr.bf16.mxu0 0
  %326 = vmatpush1.bf16.msra.mxu0 %v309
  %327 = vmatprep.subr.bf16.mxu0 0
  %328 = vmatpush1.bf16.msra.mxu0 %v310
  %329 = vmatprep.subr.bf16.mxu0 0
  %330 = vmatpush1.bf16.msra.mxu0 %v311
  %331 = vmatprep.subr.bf16.mxu0 0
  %332 = vmatpush1.bf16.msra.mxu0 %v312
  %333 = vmatprep.subr.bf16.mxu0 0
  %334 = vmatpush1.bf16.msra.mxu0 %v313
  %335 = vmatprep.subr.bf16.mxu0 0
  %336 = vmatpush1.bf16.msra.mxu0 %v314
  %337 = vmatprep.subr.bf16.mxu0 0
  %338 = vmatpush1.bf16.msra.mxu0 %v315
  %339 = vmatprep.subr.bf16.mxu0 0
  %340 = vmatpush1.bf16.msra.mxu0 %v316
  %341 = vmatprep.subr.bf16.mxu0 0
  %342 = vmatpush1.bf16.msra.mxu0 0
  %343 = vmatprep.subr.bf16.mxu0 0
  %344 = vmatpush1.bf16.msra.mxu0 0
  %345 = vmatprep.subr.bf16.mxu0 0
  %346 = vmatpush1.bf16.msra.mxu0 0
  %347 = vmatprep.subr.bf16.mxu0 0
  %348 = vmatpush1.bf16.msra.mxu0 0
  %349 = vmatprep.subr.bf16.mxu0 0
  %350 = vmatpush1.bf16.msra.mxu0 0
  %351 = vmatprep.subr.bf16.mxu0 0
  %352 = vmatpush1.bf16.msra.mxu0 0
  %353 = vmatprep.subr.bf16.mxu0 0
  %354 = vmatpush1.bf16.msra.mxu0 0
  %355 = vmatprep.subr.bf16.mxu0 0
  %356 = vmatpush1.bf16.msra.mxu0 0
  %357 = vmatprep.mubr.bf16.mxu0 0
  %358 = vmatmul.mubr.bf16.gmra.mrb[0].mxu0 %v76
  %v359 = vpop.f32.mrb[0].mxu0
  %v360 = vadd.f32 %v276, %v359
  %v361 = vpop.f32.mrb[0].mxu0
  %v362 = vpop.f32.mrb[0].mxu0
  %v363 = vadd.f32 %v276, %v362
  %v364 = vpop.f32.mrb[0].mxu0
  %365 = vmatprep.mubr.bf16.mxu0 0
  %366 = vmatmul.mubr.bf16.gmra.mrb[0].mxu0 %v77
  %v367 = vpop.f32.mrb[0].mxu0
  %v368 = vadd.f32 %v276, %v367
  %v369 = vpop.f32.mrb[0].mxu0
  %v370 = vpop.f32.mrb[0].mxu0
  %v371 = vadd.f32 %v276, %v370
  %v372 = vpop.f32.mrb[0].mxu0
  %373 = vmatprep.mubr.bf16.mxu0 0
  %374 = vmatmul.mubr.bf16.gmra.mrb[0].mxu0 %v78
  %v375 = vpop.f32.mrb[0].mxu0
  %v376 = vadd.f32 %v276, %v375
  %v377 = vpop.f32.mrb[0].mxu0
  %v378 = vpop.f32.mrb[0].mxu0
  %v379 = vadd.f32 %v276, %v378
  %v380 = vpop.f32.mrb[0].mxu0
  %381 = vmatprep.mubr.bf16.mxu0 0
  %382 = vmatmul.mubr.bf16.gmra.mrb[0].mxu0 %v79
  %v383 = vpop.f32.mrb[0].mxu0
  %v384 = vadd.f32 %v276, %v383
  %v385 = vpop.f32.mrb[0].mxu0
  %v386 = vpop.f32.mrb[0].mxu0
  %v387 = vadd.f32 %v276, %v386
  %v388 = vpop.f32.mrb[0].mxu0
  %389 = vmatprep.mubr.bf16.mxu0 0
  %390 = vmatmul.mubr.bf16.gmra.mrb[0].mxu0 %v80
  %v391 = vpop.f32.mrb[0].mxu0
  %v392 = vadd.f32 %v276, %v391
  %v393 = vpop.f32.mrb[0].mxu0
  %v394 = vpop.f32.mrb[0].mxu0
  %v395 = vadd.f32 %v276, %v394
  %v396 = vpop.f32.mrb[0].mxu0
  %397 = vmatprep.mubr.bf16.mxu0 0
  %398 = vmatmul.mubr.bf16.gmra.mrb[0].mxu0 %v81
  %v399 = vpop.f32.mrb[0].mxu0
  %v400 = vadd.f32 %v276, %v399
  %v401 = vpop.f32.mrb[0].mxu0
  %v402 = vpop.f32.mrb[0].mxu0
  %v403 = vadd.f32 %v276, %v402
  %v404 = vpop.f32.mrb[0].mxu0
  %405 = vmatprep.mubr.bf16.mxu0 0
  %406 = vmatmul.mubr.bf16.gmra.mrb[0].mxu0 %v82
  %v407 = vpop.f32.mrb[0].mxu0
  %v408 = vadd.f32 %v276, %v407
  %v409 = vpop.f32.mrb[0].mxu0
  %v410 = vpop.f32.mrb[0].mxu0
  %v411 = vadd.f32 %v276, %v410
  %v412 = vpop.f32.mrb[0].mxu0
  %413 = vmatprep.mubr.bf16.mxu0 0
  %414 = vmatmul.mubr.bf16.gmra.mrb[0].mxu0 %v83
  %v415 = vpop.f32.mrb[0].mxu0
  %v416 = vadd.f32 %v276, %v415
  %v417 = vpop.f32.mrb[0].mxu0
  %v418 = vpop.f32.mrb[0].mxu0
  %v419 = vadd.f32 %v276, %v418
  %v420 = vpop.f32.mrb[0].mxu0
  %421 = vdwg.mxu0
  %v422 = vld [vmem:[%s4] sm:$0xf]
  %v423 = vld [vmem:[%s4 + $0x4] sm:$0xf]
  %v424 = vld [vmem:[%s4 + $0x8] sm:$0xf]
  %v425 = vld [vmem:[%s4 + $0xc] sm:$0xf]
  %v426 = vld [vmem:[%s4 + $0x10] sm:$0xf]
  %v427 = vld [vmem:[%s4 + $0x14] sm:$0xf]
  %v428 = vld [vmem:[%s4 + $0x18] sm:$0xf]
  %v429 = vld [vmem:[%s4 + $0x1c] sm:$0xf]
  %v430 = vld [vmem:[%s4 + $0x20] sm:$0xf]
  %v431 = vld [vmem:[%s4 + $0x24] sm:$0xf]
  %v432 = vld [vmem:[%s4 + $0x28] sm:$0xf]
  %v433 = vld [vmem:[%s4 + $0x2c] sm:$0xf]
  %v434 = vld [vmem:[%s4 + $0x30] sm:$0xf]
  %v435 = vld [vmem:[%s4 + $0x34] sm:$0xf]
  %v436 = vld [vmem:[%s4 + $0x38] sm:$0xf]
  %v437 = vld [vmem:[%s4 + $0x3c] sm:$0xf]
  %v438 = vlaneseq
  %v439 = vshrl.u32 %v438, 7
  %v440 = vsub.s32 2, %v439
  %v441 = vrot.slane %v43, %v440
  %v458 = vunpack.c.l.b16 %v422
  %v459 = vunpack.c.l.b16 %v423
  %v460 = vunpack.c.l.b16 %v424
  %v461 = vunpack.c.l.b16 %v425
  %v462 = vunpack.c.l.b16 %v426
  %v463 = vunpack.c.l.b16 %v427
  %v464 = vunpack.c.l.b16 %v428
  %v465 = vunpack.c.l.b16 %v429
  %v466 = vunpack.c.l.b16 %v430
  %v467 = vunpack.c.l.b16 %v431
  %v468 = vunpack.c.l.b16 %v432
  %v469 = vunpack.c.l.b16 %v433
  %v470 = vunpack.c.l.b16 %v434
  %v471 = vunpack.c.l.b16 %v435
  %v472 = vunpack.c.l.b16 %v436
  %v473 = vunpack.c.l.b16 %v437
  %v474 = vpack.c.b16 %v459, %v458
  %v475 = vpack.c.b16 %v461, %v460
  %v476 = vpack.c.b16 %v463, %v462
  %v477 = vpack.c.b16 %v465, %v464
  %v478 = vpack.c.b16 %v467, %v466
  %v479 = vpack.c.b16 %v469, %v468
  %v480 = vpack.c.b16 %v471, %v470
  %v481 = vpack.c.b16 %v473, %v472
  %490 = vmatprep.subr.bf16.mxu0 0
  %491 = vmatpush1.bf16.msra.mxu0 %v474
  %492 = vmatprep.subr.bf16.mxu0 0
  %493 = vmatpush1.bf16.msra.mxu0 %v475
  %494 = vmatprep.subr.bf16.mxu0 0
  %495 = vmatpush1.bf16.msra.mxu0 %v476
  %496 = vmatprep.subr.bf16.mxu0 0
  %497 = vmatpush1.bf16.msra.mxu0 %v477
  %498 = vmatprep.subr.bf16.mxu0 0
  %499 = vmatpush1.bf16.msra.mxu0 %v478
  %500 = vmatprep.subr.bf16.mxu0 0
  %501 = vmatpush1.bf16.msra.mxu0 %v479
  %502 = vmatprep.subr.bf16.mxu0 0
  %503 = vmatpush1.bf16.msra.mxu0 %v480
  %504 = vmatprep.subr.bf16.mxu0 0
  %505 = vmatpush1.bf16.msra.mxu0 %v481
  %506 = vmatprep.subr.bf16.mxu0 0
  %507 = vmatpush1.bf16.msra.mxu0 0
  %508 = vmatprep.subr.bf16.mxu0 0
  %509 = vmatpush1.bf16.msra.mxu0 0
  %510 = vmatprep.subr.bf16.mxu0 0
  %511 = vmatpush1.bf16.msra.mxu0 0
  %512 = vmatprep.subr.bf16.mxu0 0
  %513 = vmatpush1.bf16.msra.mxu0 0
  %514 = vmatprep.subr.bf16.mxu0 0
  %515 = vmatpush1.bf16.msra.mxu0 0
  %516 = vmatprep.subr.bf16.mxu0 0
  %517 = vmatpush1.bf16.msra.mxu0 0
  %518 = vmatprep.subr.bf16.mxu0 0
  %519 = vmatpush1.bf16.msra.mxu0 0
  %520 = vmatprep.subr.bf16.mxu0 0
  %521 = vmatpush1.bf16.msra.mxu0 0
  %522 = vmatprep.mubr.bf16.mxu0 0
  %523 = vmatmul.mubr.bf16.gmra.mrb[0].mxu0 %v84
  %v524 = vpop.f32.mrb[0].mxu0
  %v525 = vadd.f32 %v441, %v524
  %v526 = vpop.f32.mrb[0].mxu0
  %v527 = vpop.f32.mrb[0].mxu0
  %v528 = vadd.f32 %v441, %v527
  %v529 = vpop.f32.mrb[0].mxu0
  %530 = vmatprep.mubr.bf16.mxu0 0
  %531 = vmatmul.mubr.bf16.gmra.mrb[0].mxu0 %v85
  %v532 = vpop.f32.mrb[0].mxu0
  %v533 = vadd.f32 %v441, %v532
  %v534 = vpop.f32.mrb[0].mxu0
  %v535 = vpop.f32.mrb[0].mxu0
  %v536 = vadd.f32 %v441, %v535
  %v537 = vpop.f32.mrb[0].mxu0
  %538 = vmatprep.mubr.bf16.mxu0 0
  %539 = vmatmul.mubr.bf16.gmra.mrb[0].mxu0 %v86
  %v540 = vpop.f32.mrb[0].mxu0
  %v541 = vadd.f32 %v441, %v540
  %v542 = vpop.f32.mrb[0].mxu0
  %v543 = vpop.f32.mrb[0].mxu0
  %v544 = vadd.f32 %v441, %v543
  %v545 = vpop.f32.mrb[0].mxu0
  %546 = vmatprep.mubr.bf16.mxu0 0
  %547 = vmatmul.mubr.bf16.gmra.mrb[0].mxu0 %v87
  %v548 = vpop.f32.mrb[0].mxu0
  %v549 = vadd.f32 %v441, %v548
  %v550 = vpop.f32.mrb[0].mxu0
  %v551 = vpop.f32.mrb[0].mxu0
  %v552 = vadd.f32 %v441, %v551
  %v553 = vpop.f32.mrb[0].mxu0
  %554 = vmatprep.mubr.bf16.mxu0 0
  %555 = vmatmul.mubr.bf16.gmra.mrb[0].mxu0 %v88
  %v556 = vpop.f32.mrb[0].mxu0
  %v557 = vadd.f32 %v441, %v556
  %v558 = vpop.f32.mrb[0].mxu0
  %v559 = vpop.f32.mrb[0].mxu0
  %v560 = vadd.f32 %v441, %v559
  %v561 = vpop.f32.mrb[0].mxu0
  %562 = vmatprep.mubr.bf16.mxu0 0
  %563 = vmatmul.mubr.bf16.gmra.mrb[0].mxu0 %v89
  %v564 = vpop.f32.mrb[0].mxu0
  %v565 = vadd.f32 %v441, %v564
  %v566 = vpop.f32.mrb[0].mxu0
  %v567 = vpop.f32.mrb[0].mxu0
  %v568 = vadd.f32 %v441, %v567
  %v569 = vpop.f32.mrb[0].mxu0
  %570 = vmatprep.mubr.bf16.mxu0 0
  %571 = vmatmul.mubr.bf16.gmra.mrb[0].mxu0 %v90
  %v572 = vpop.f32.mrb[0].mxu0
  %v573 = vadd.f32 %v441, %v572
  %v574 = vpop.f32.mrb[0].mxu0
  %v575 = vpop.f32.mrb[0].mxu0
  %v576 = vadd.f32 %v441, %v575
  %v577 = vpop.f32.mrb[0].mxu0
  %578 = vmatprep.mubr.bf16.mxu0 0
  %579 = vmatmul.mubr.bf16.gmra.mrb[0].mxu0 %v91
  %v580 = vpop.f32.mrb[0].mxu0
  %v581 = vadd.f32 %v441, %v580
  %v582 = vpop.f32.mrb[0].mxu0
  %v583 = vpop.f32.mrb[0].mxu0
  %v584 = vadd.f32 %v441, %v583
  %v585 = vpop.f32.mrb[0].mxu0
  %586 = vdwg.mxu0
  %v587 = vpack.c.bf16 %v198, %v195
  %v588 = vpack.c.bf16 %v206, %v203
  %v589 = vpack.c.bf16 %v214, %v211
  %v590 = vpack.c.bf16 %v222, %v219
  %v591 = vpack.c.bf16 %v230, %v227
  %v592 = vpack.c.bf16 %v238, %v235
  %v593 = vpack.c.bf16 %v246, %v243
  %v594 = vpack.c.bf16 %v254, %v251
  %v603 = vunpack.c.l.b16 %v587
  %v604 = vunpack.c.h.b16 %v587
  %v605 = vunpack.c.l.b16 %v588
  %v606 = vunpack.c.h.b16 %v588
  %v607 = vunpack.c.l.b16 %v589
  %v608 = vunpack.c.h.b16 %v589
  %v609 = vunpack.c.l.b16 %v590
  %v610 = vunpack.c.h.b16 %v590
  %v611 = vunpack.c.l.b16 %v591
  %v612 = vunpack.c.h.b16 %v591
  %v613 = vunpack.c.l.b16 %v592
  %v614 = vunpack.c.h.b16 %v592
  %v615 = vunpack.c.l.b16 %v593
  %v616 = vunpack.c.h.b16 %v593
  %v617 = vunpack.c.l.b16 %v594
  %v618 = vunpack.c.h.b16 %v594
  %v619 = vpack.c.b16 %v603, %v603
  %v620 = vpack.c.b16 %v604, %v604
  %v621 = vpack.c.b16 %v605, %v605
  %v622 = vpack.c.b16 %v606, %v606
  %v623 = vpack.c.b16 %v607, %v607
  %v624 = vpack.c.b16 %v608, %v608
  %v625 = vpack.c.b16 %v609, %v609
  %v626 = vpack.c.b16 %v610, %v610
  %v627 = vpack.c.b16 %v611, %v611
  %v628 = vpack.c.b16 %v612, %v612
  %v629 = vpack.c.b16 %v613, %v613
  %v630 = vpack.c.b16 %v614, %v614
  %v631 = vpack.c.b16 %v615, %v615
  %v632 = vpack.c.b16 %v616, %v616
  %v633 = vpack.c.b16 %v617, %v617
  %v634 = vpack.c.b16 %v618, %v618
  %651 = vst [vmem:[%s6] sm:$0xf] %v619
  %652 = vst [vmem:[%s6 + $0x4] sm:$0xf] %v620
  %653 = vst [vmem:[%s6 + $0x8] sm:$0xf] %v621
  %654 = vst [vmem:[%s6 + $0xc] sm:$0xf] %v622
  %655 = vst [vmem:[%s6 + $0x10] sm:$0xf] %v623
  %656 = vst [vmem:[%s6 + $0x14] sm:$0xf] %v624
  %657 = vst [vmem:[%s6 + $0x18] sm:$0xf] %v625
  %658 = vst [vmem:[%s6 + $0x1c] sm:$0xf] %v626
  %659 = vst [vmem:[%s6 + $0x20] sm:$0xf] %v627
  %660 = vst [vmem:[%s6 + $0x24] sm:$0xf] %v628
  %661 = vst [vmem:[%s6 + $0x28] sm:$0xf] %v629
  %662 = vst [vmem:[%s6 + $0x2c] sm:$0xf] %v630
  %663 = vst [vmem:[%s6 + $0x30] sm:$0xf] %v631
  %664 = vst [vmem:[%s6 + $0x34] sm:$0xf] %v632
  %665 = vst [vmem:[%s6 + $0x38] sm:$0xf] %v633
  %666 = vst [vmem:[%s6 + $0x3c] sm:$0xf] %v634
  %v667 = vpack.c.bf16 %v363, %v360
  %v668 = vpack.c.bf16 %v371, %v368
  %v669 = vpack.c.bf16 %v379, %v376
  %v670 = vpack.c.bf16 %v387, %v384
  %v671 = vpack.c.bf16 %v395, %v392
  %v672 = vpack.c.bf16 %v403, %v400
  %v673 = vpack.c.bf16 %v411, %v408
  %v674 = vpack.c.bf16 %v419, %v416
  %v683 = vunpack.c.l.b16 %v667
  %v684 = vunpack.c.h.b16 %v667
  %v685 = vunpack.c.l.b16 %v668
  %v686 = vunpack.c.h.b16 %v668
  %v687 = vunpack.c.l.b16 %v669
  %v688 = vunpack.c.h.b16 %v669
  %v689 = vunpack.c.l.b16 %v670
  %v690 = vunpack.c.h.b16 %v670
  %v691 = vunpack.c.l.b16 %v671
  %v692 = vunpack.c.h.b16 %v671
  %v693 = vunpack.c.l.b16 %v672
  %v694 = vunpack.c.h.b16 %v672
  %v695 = vunpack.c.l.b16 %v673
  %v696 = vunpack.c.h.b16 %v673
  %v697 = vunpack.c.l.b16 %v674
  %v698 = vunpack.c.h.b16 %v674
  %v699 = vpack.c.b16 %v683, %v683
  %v700 = vpack.c.b16 %v684, %v684
  %v701 = vpack.c.b16 %v685, %v685
  %v702 = vpack.c.b16 %v686, %v686
  %v703 = vpack.c.b16 %v687, %v687
  %v704 = vpack.c.b16 %v688, %v688
  %v705 = vpack.c.b16 %v689, %v689
  %v706 = vpack.c.b16 %v690, %v690
  %v707 = vpack.c.b16 %v691, %v691
  %v708 = vpack.c.b16 %v692, %v692
  %v709 = vpack.c.b16 %v693, %v693
  %v710 = vpack.c.b16 %v694, %v694
  %v711 = vpack.c.b16 %v695, %v695
  %v712 = vpack.c.b16 %v696, %v696
  %v713 = vpack.c.b16 %v697, %v697
  %v714 = vpack.c.b16 %v698, %v698
  %731 = vst [vmem:[%s7] sm:$0xf] %v699
  %732 = vst [vmem:[%s7 + $0x4] sm:$0xf] %v700
  %733 = vst [vmem:[%s7 + $0x8] sm:$0xf] %v701
  %734 = vst [vmem:[%s7 + $0xc] sm:$0xf] %v702
  %735 = vst [vmem:[%s7 + $0x10] sm:$0xf] %v703
  %736 = vst [vmem:[%s7 + $0x14] sm:$0xf] %v704
  %737 = vst [vmem:[%s7 + $0x18] sm:$0xf] %v705
  %738 = vst [vmem:[%s7 + $0x1c] sm:$0xf] %v706
  %739 = vst [vmem:[%s7 + $0x20] sm:$0xf] %v707
  %740 = vst [vmem:[%s7 + $0x24] sm:$0xf] %v708
  %741 = vst [vmem:[%s7 + $0x28] sm:$0xf] %v709
  %742 = vst [vmem:[%s7 + $0x2c] sm:$0xf] %v710
  %743 = vst [vmem:[%s7 + $0x30] sm:$0xf] %v711
  %744 = vst [vmem:[%s7 + $0x34] sm:$0xf] %v712
  %745 = vst [vmem:[%s7 + $0x38] sm:$0xf] %v713
  %746 = vst [vmem:[%s7 + $0x3c] sm:$0xf] %v714
  %v747 = vpack.c.bf16 %v528, %v525
  %v748 = vpack.c.bf16 %v536, %v533
  %v749 = vpack.c.bf16 %v544, %v541
  %v750 = vpack.c.bf16 %v552, %v549
  %v751 = vpack.c.bf16 %v560, %v557
  %v752 = vpack.c.bf16 %v568, %v565
  %v753 = vpack.c.bf16 %v576, %v573
  %v754 = vpack.c.bf16 %v584, %v581
  %v763 = vunpack.c.l.b16 %v747
  %v764 = vunpack.c.h.b16 %v747
  %v765 = vunpack.c.l.b16 %v748
  %v766 = vunpack.c.h.b16 %v748
  %v767 = vunpack.c.l.b16 %v749
  %v768 = vunpack.c.h.b16 %v749
  %v769 = vunpack.c.l.b16 %v750
  %v770 = vunpack.c.h.b16 %v750
  %v771 = vunpack.c.l.b16 %v751
  %v772 = vunpack.c.h.b16 %v751
  %v773 = vunpack.c.l.b16 %v752
  %v774 = vunpack.c.h.b16 %v752
  %v775 = vunpack.c.l.b16 %v753
  %v776 = vunpack.c.h.b16 %v753
  %v777 = vunpack.c.l.b16 %v754
  %v778 = vunpack.c.h.b16 %v754
  %v779 = vpack.c.b16 %v763, %v763
  %v780 = vpack.c.b16 %v764, %v764
  %v781 = vpack.c.b16 %v765, %v765
  %v782 = vpack.c.b16 %v766, %v766
  %v783 = vpack.c.b16 %v767, %v767
  %v784 = vpack.c.b16 %v768, %v768
  %v785 = vpack.c.b16 %v769, %v769
  %v786 = vpack.c.b16 %v770, %v770
  %v787 = vpack.c.b16 %v771, %v771
  %v788 = vpack.c.b16 %v772, %v772
  %v789 = vpack.c.b16 %v773, %v773
  %v790 = vpack.c.b16 %v774, %v774
  %v791 = vpack.c.b16 %v775, %v775
  %v792 = vpack.c.b16 %v776, %v776
  %v793 = vpack.c.b16 %v777, %v777
  %v794 = vpack.c.b16 %v778, %v778
  %811 = vst [vmem:[%s8] sm:$0xf] %v779
  %812 = vst [vmem:[%s8 + $0x4] sm:$0xf] %v780
  %813 = vst [vmem:[%s8 + $0x8] sm:$0xf] %v781
  %814 = vst [vmem:[%s8 + $0xc] sm:$0xf] %v782
  %815 = vst [vmem:[%s8 + $0x10] sm:$0xf] %v783
  %816 = vst [vmem:[%s8 + $0x14] sm:$0xf] %v784
  %817 = vst [vmem:[%s8 + $0x18] sm:$0xf] %v785
  %818 = vst [vmem:[%s8 + $0x1c] sm:$0xf] %v786
  %819 = vst [vmem:[%s8 + $0x20] sm:$0xf] %v787
  %820 = vst [vmem:[%s8 + $0x24] sm:$0xf] %v788
  %821 = vst [vmem:[%s8 + $0x28] sm:$0xf] %v789
  %822 = vst [vmem:[%s8 + $0x2c] sm:$0xf] %v790
  %823 = vst [vmem:[%s8 + $0x30] sm:$0xf] %v791
  %824 = vst [vmem:[%s8 + $0x34] sm:$0xf] %v792
  %825 = vst [vmem:[%s8 + $0x38] sm:$0xf] %v793
  %826 = vst [vmem:[%s8 + $0x3c] sm:$0xf] %v794
  // Predicated region
  $region26: #{transformer_forward.29} parent=0 // pred_check
    _
  $region27: #{transformer_forward.29} parent=0 // pred_check_branch
    %828 = sbr.rel (0) target = $region29
  $region28: #{transformer_forward.29} parent=0 // pred_region
    _
  $region29: #{transformer_forward.29} parent=0 // pred_fallthru
    _
  // Predicated region
  $region30: #{transformer_forward.29} parent=0 // pred_check
    _
  $region31: #{transformer_forward.29} parent=0 // pred_check_branch
    %830 = sbr.rel (0) target = $region33
  $region32: #{transformer_forward.29} parent=0 // pred_region
    _
  $region33: #{transformer_forward.29} parent=0 // pred_fallthru
    _
  // Predicated region
  $region34: #{transformer_forward.29} parent=0 // pred_check
    _
  $region35: #{transformer_forward.29} parent=0 // pred_check_branch
    %832 = sbr.rel (0) target = $region37
  $region36: #{transformer_forward.29} parent=0 // pred_region
    _
  $region37: #{transformer_forward.29} parent=0 // pred_fallthru
    _
  // Predicated region
  $region38: #{transformer_forward.29} parent=0 // pred_check
    _
  $region39: #{transformer_forward.29} parent=0 // pred_check_branch
    %834 = sbr.rel (0) target = $region41
  $region40: #{transformer_forward.29} parent=0 // pred_region
    _
  $region41: #{transformer_forward.29} parent=0 // pred_fallthru
    _
  // Predicated region
  $region42: #{transformer_forward.29} parent=0 // pred_check
    _
  $region43: #{transformer_forward.29} parent=0 // pred_check_branch
    %836 = sbr.rel (0) target = $region45
  $region44: #{transformer_forward.29} parent=0 // pred_region
    _
  $region45: #{transformer_forward.29} parent=0 // pred_fallthru
    _
  // Predicated region
  $region46: #{transformer_forward.29} parent=0 // pred_check
    _
  $region47: #{transformer_forward.29} parent=0 // pred_check_branch
    %838 = sbr.rel (0) target = $region49
  $region48: #{transformer_forward.29} parent=0 // pred_region
    _
  $region49: #{transformer_forward.29} parent=0 // pred_fallthru
    _

// kernel: transformer_forward.37
$region0: #{transformer_forward.37}
  #allocation0 [shape = 'u32[]', space=smem, size = 0x4, offset = 0x4, fixed_abs, tag = 'smem constant byte address 0x4 - core index']
  #allocation1 [shape = 'u32[144,128]{1,0:T(1,128)}', space=vmem, size = 0x12000, scoped, tag = 'internal scratch']
  %s0 = inlined_call_operand.vmem [shape: f32[128,128], index: 0, kind: input, shape index: {}]
  %s1 = inlined_call_operand.vmem [shape: f32[128,128], index: 1, kind: input, shape index: {}]
  %s2 = inlined_call_operand.vmem [shape: bf16[128,128], index: 2, kind: input, shape index: {}]
  %s3 = inlined_call_operand.vmem [shape: bf16[128,128], index: 3, kind: input, shape index: {}]
  %s4 = inlined_call_operand.vmem [shape: f32[2,128], index: 4, kind: input, shape index: {}]
  %s5 = inlined_call_operand.vmem [shape: bf16[128,128], index: 5, kind: output, shape index: {0}]
  %s6 = inlined_call_operand.vmem [shape: bf16[128,128], index: 6, kind: output, shape index: {1}]
  %7 = xla_tuple %s5, %s6
  %s8 = sld [smem:[#allocation0]]
  $region38: #{transformer_forward.37} parent=0
    _
  %s10 = ssub.s32 1, %s8
  %s11 = scalar_select 0, %s10, %s8
  // Predicated region
  $region2: #{transformer_forward.37} parent=0 // pred_check
    _
  $region3: #{transformer_forward.37} parent=0 // pred_check_branch
    %13 = sbr.rel (0) target = $region5
  $region4: #{transformer_forward.37} parent=0 // pred_region
    _
  $region5: #{transformer_forward.37} parent=0 // pred_fallthru
    _
  // Predicated region
  $region6: #{transformer_forward.37} parent=0 // pred_check
    _
  $region7: #{transformer_forward.37} parent=0 // pred_check_branch
    %15 = sbr.rel (0) target = $region9
  $region8: #{transformer_forward.37} parent=0 // pred_region
    _
  $region9: #{transformer_forward.37} parent=0 // pred_fallthru
    _
  // Predicated region
  $region10: #{transformer_forward.37} parent=0 // pred_check
    _
  $region11: #{transformer_forward.37} parent=0 // pred_check_branch
    %17 = sbr.rel (0) target = $region13
  $region12: #{transformer_forward.37} parent=0 // pred_region
    _
  $region13: #{transformer_forward.37} parent=0 // pred_fallthru
    _
  // Predicated region
  $region14: #{transformer_forward.37} parent=0 // pred_check
    _
  $region15: #{transformer_forward.37} parent=0 // pred_check_branch
    %19 = sbr.rel (0) target = $region17
  $region16: #{transformer_forward.37} parent=0 // pred_region
    _
  $region17: #{transformer_forward.37} parent=0 // pred_fallthru
    _
  // Predicated region
  $region18: #{transformer_forward.37} parent=0 // pred_check
    _
  $region19: #{transformer_forward.37} parent=0 // pred_check_branch
    %21 = sbr.rel (0) target = $region21
  $region20: #{transformer_forward.37} parent=0 // pred_region
    _
  $region21: #{transformer_forward.37} parent=0 // pred_fallthru
    _
  %v23 = vld [vmem:[%s0] sm:$0xff]
  %v24 = vld [vmem:[%s0 + $0x8] sm:$0xff]
  %v25 = vld [vmem:[%s0 + $0x10] sm:$0xff]
  %v26 = vld [vmem:[%s0 + $0x18] sm:$0xff]
  %v27 = vld [vmem:[%s0 + $0x20] sm:$0xff]
  %v28 = vld [vmem:[%s0 + $0x28] sm:$0xff]
  %v29 = vld [vmem:[%s0 + $0x30] sm:$0xff]
  %v30 = vld [vmem:[%s0 + $0x38] sm:$0xff]
  %v31 = vld [vmem:[%s0 + $0x40] sm:$0xff]
  %v32 = vld [vmem:[%s0 + $0x48] sm:$0xff]
  %v33 = vld [vmem:[%s0 + $0x50] sm:$0xff]
  %v34 = vld [vmem:[%s0 + $0x58] sm:$0xff]
  %v35 = vld [vmem:[%s0 + $0x60] sm:$0xff]
  %v36 = vld [vmem:[%s0 + $0x68] sm:$0xff]
  %v37 = vld [vmem:[%s0 + $0x70] sm:$0xff]
  %v38 = vld [vmem:[%s0 + $0x78] sm:$0xff]
  %v39 = vld [vmem:[%s4] sm:$0x3]
  %v40 = vld [vmem:[%s1] sm:$0xff]
  %v41 = vld [vmem:[%s1 + $0x8] sm:$0xff]
  %v42 = vld [vmem:[%s1 + $0x10] sm:$0xff]
  %v43 = vld [vmem:[%s1 + $0x18] sm:$0xff]
  %v44 = vld [vmem:[%s1 + $0x20] sm:$0xff]
  %v45 = vld [vmem:[%s1 + $0x28] sm:$0xff]
  %v46 = vld [vmem:[%s1 + $0x30] sm:$0xff]
  %v47 = vld [vmem:[%s1 + $0x38] sm:$0xff]
  %v48 = vld [vmem:[%s1 + $0x40] sm:$0xff]
  %v49 = vld [vmem:[%s1 + $0x48] sm:$0xff]
  %v50 = vld [vmem:[%s1 + $0x50] sm:$0xff]
  %v51 = vld [vmem:[%s1 + $0x58] sm:$0xff]
  %v52 = vld [vmem:[%s1 + $0x60] sm:$0xff]
  %v53 = vld [vmem:[%s1 + $0x68] sm:$0xff]
  %v54 = vld [vmem:[%s1 + $0x70] sm:$0xff]
  %v55 = vld [vmem:[%s1 + $0x78] sm:$0xff]
  %v56 = vadd.f32 %v23, %v40
  %v57 = vadd.f32 %v24, %v41
  %v58 = vadd.f32 %v25, %v42
  %v59 = vadd.f32 %v26, %v43
  %v60 = vadd.f32 %v27, %v44
  %v61 = vadd.f32 %v28, %v45
  %v62 = vadd.f32 %v29, %v46
  %v63 = vadd.f32 %v30, %v47
  %v64 = vadd.f32 %v31, %v48
  %v65 = vadd.f32 %v32, %v49
  %v66 = vadd.f32 %v33, %v50
  %v67 = vadd.f32 %v34, %v51
  %v68 = vadd.f32 %v35, %v52
  %v69 = vadd.f32 %v36, %v53
  %v70 = vadd.f32 %v37, %v54
  %v71 = vadd.f32 %v38, %v55
  %v72 = vpack.c.bf16 %v57, %v56
  %v73 = vpack.c.bf16 %v59, %v58
  %v74 = vpack.c.bf16 %v61, %v60
  %v75 = vpack.c.bf16 %v63, %v62
  %v76 = vpack.c.bf16 %v65, %v64
  %v77 = vpack.c.bf16 %v67, %v66
  %v78 = vpack.c.bf16 %v69, %v68
  %v79 = vpack.c.bf16 %v71, %v70
  %v80 = vpack.c.bf16 %v24, %v23
  %v81 = vpack.c.bf16 %v26, %v25
  %v82 = vpack.c.bf16 %v28, %v27
  %v83 = vpack.c.bf16 %v30, %v29
  %v84 = vpack.c.bf16 %v32, %v31
  %v85 = vpack.c.bf16 %v34, %v33
  %v86 = vpack.c.bf16 %v36, %v35
  %v87 = vpack.c.bf16 %v38, %v37
  %v88 = vld [vmem:[%s2] sm:$0xf]
  %v89 = vld [vmem:[%s2 + $0x4] sm:$0xf]
  %v90 = vld [vmem:[%s2 + $0x8] sm:$0xf]
  %v91 = vld [vmem:[%s2 + $0xc] sm:$0xf]
  %v92 = vld [vmem:[%s2 + $0x10] sm:$0xf]
  %v93 = vld [vmem:[%s2 + $0x14] sm:$0xf]
  %v94 = vld [vmem:[%s2 + $0x18] sm:$0xf]
  %v95 = vld [vmem:[%s2 + $0x1c] sm:$0xf]
  %v96 = vld [vmem:[%s2 + $0x20] sm:$0xf]
  %v97 = vld [vmem:[%s2 + $0x24] sm:$0xf]
  %v98 = vld [vmem:[%s2 + $0x28] sm:$0xf]
  %v99 = vld [vmem:[%s2 + $0x2c] sm:$0xf]
  %v100 = vld [vmem:[%s2 + $0x30] sm:$0xf]
  %v101 = vld [vmem:[%s2 + $0x34] sm:$0xf]
  %v102 = vld [vmem:[%s2 + $0x38] sm:$0xf]
  %v103 = vld [vmem:[%s2 + $0x3c] sm:$0xf]
  %v104 = vlaneseq
  %v105 = vshrl.u32 %v104, 7
  %v106 = vsub.s32 0, %v105
  %v107 = vrot.slane %v39, %v106
  %v124 = vunpack.c.l.b16 %v88
  %v125 = vunpack.c.l.b16 %v89
  %v126 = vunpack.c.l.b16 %v90
  %v127 = vunpack.c.l.b16 %v91
  %v128 = vunpack.c.l.b16 %v92
  %v129 = vunpack.c.l.b16 %v93
  %v130 = vunpack.c.l.b16 %v94
  %v131 = vunpack.c.l.b16 %v95
  %v132 = vunpack.c.l.b16 %v96
  %v133 = vunpack.c.l.b16 %v97
  %v134 = vunpack.c.l.b16 %v98
  %v135 = vunpack.c.l.b16 %v99
  %v136 = vunpack.c.l.b16 %v100
  %v137 = vunpack.c.l.b16 %v101
  %v138 = vunpack.c.l.b16 %v102
  %v139 = vunpack.c.l.b16 %v103
  %v140 = vpack.c.b16 %v125, %v124
  %v141 = vpack.c.b16 %v127, %v126
  %v142 = vpack.c.b16 %v129, %v128
  %v143 = vpack.c.b16 %v131, %v130
  %v144 = vpack.c.b16 %v133, %v132
  %v145 = vpack.c.b16 %v135, %v134
  %v146 = vpack.c.b16 %v137, %v136
  %v147 = vpack.c.b16 %v139, %v138
  %156 = vmatprep.subr.bf16.mxu0 0
  %157 = vmatpush1.bf16.msra.mxu0 %v140
  %158 = vmatprep.subr.bf16.mxu0 0
  %159 = vmatpush1.bf16.msra.mxu0 %v141
  %160 = vmatprep.subr.bf16.mxu0 0
  %161 = vmatpush1.bf16.msra.mxu0 %v142
  %162 = vmatprep.subr.bf16.mxu0 0
  %163 = vmatpush1.bf16.msra.mxu0 %v143
  %164 = vmatprep.subr.bf16.mxu0 0
  %165 = vmatpush1.bf16.msra.mxu0 %v144
  %166 = vmatprep.subr.bf16.mxu0 0
  %167 = vmatpush1.bf16.msra.mxu0 %v145
  %168 = vmatprep.subr.bf16.mxu0 0
  %169 = vmatpush1.bf16.msra.mxu0 %v146
  %170 = vmatprep.subr.bf16.mxu0 0
  %171 = vmatpush1.bf16.msra.mxu0 %v147
  %172 = vmatprep.subr.bf16.mxu0 0
  %173 = vmatpush1.bf16.msra.mxu0 0
  %174 = vmatprep.subr.bf16.mxu0 0
  %175 = vmatpush1.bf16.msra.mxu0 0
  %176 = vmatprep.subr.bf16.mxu0 0
  %177 = vmatpush1.bf16.msra.mxu0 0
  %178 = vmatprep.subr.bf16.mxu0 0
  %179 = vmatpush1.bf16.msra.mxu0 0
  %180 = vmatprep.subr.bf16.mxu0 0
  %181 = vmatpush1.bf16.msra.mxu0 0
  %182 = vmatprep.subr.bf16.mxu0 0
  %183 = vmatpush1.bf16.msra.mxu0 0
  %184 = vmatprep.subr.bf16.mxu0 0
  %185 = vmatpush1.bf16.msra.mxu0 0
  %186 = vmatprep.subr.bf16.mxu0 0
  %187 = vmatpush1.bf16.msra.mxu0 0
  %188 = vmatprep.mubr.bf16.mxu0 0
  %189 = vmatmul.mubr.bf16.gmra.mrb[0].mxu0 %v72
  %v190 = vpop.f32.mrb[0].mxu0
  %v191 = vadd.f32 %v107, %v190
  %v192 = vpop.f32.mrb[0].mxu0
  %v193 = vpop.f32.mrb[0].mxu0
  %v194 = vadd.f32 %v107, %v193
  %v195 = vpop.f32.mrb[0].mxu0
  %196 = vmatprep.mubr.bf16.mxu0 0
  %197 = vmatmul.mubr.bf16.gmra.mrb[0].mxu0 %v73
  %v198 = vpop.f32.mrb[0].mxu0
  %v199 = vadd.f32 %v107, %v198
  %v200 = vpop.f32.mrb[0].mxu0
  %v201 = vpop.f32.mrb[0].mxu0
  %v202 = vadd.f32 %v107, %v201
  %v203 = vpop.f32.mrb[0].mxu0
  %204 = vmatprep.mubr.bf16.mxu0 0
  %205 = vmatmul.mubr.bf16.gmra.mrb[0].mxu0 %v74
  %v206 = vpop.f32.mrb[0].mxu0
  %v207 = vadd.f32 %v107, %v206
  %v208 = vpop.f32.mrb[0].mxu0
  %v209 = vpop.f32.mrb[0].mxu0
  %v210 = vadd.f32 %v107, %v209
  %v211 = vpop.f32.mrb[0].mxu0
  %212 = vmatprep.mubr.bf16.mxu0 0
  %213 = vmatmul.mubr.bf16.gmra.mrb[0].mxu0 %v75
  %v214 = vpop.f32.mrb[0].mxu0
  %v215 = vadd.f32 %v107, %v214
  %v216 = vpop.f32.mrb[0].mxu0
  %v217 = vpop.f32.mrb[0].mxu0
  %v218 = vadd.f32 %v107, %v217
  %v219 = vpop.f32.mrb[0].mxu0
  %220 = vmatprep.mubr.bf16.mxu0 0
  %221 = vmatmul.mubr.bf16.gmra.mrb[0].mxu0 %v76
  %v222 = vpop.f32.mrb[0].mxu0
  %v223 = vadd.f32 %v107, %v222
  %v224 = vpop.f32.mrb[0].mxu0
  %v225 = vpop.f32.mrb[0].mxu0
  %v226 = vadd.f32 %v107, %v225
  %v227 = vpop.f32.mrb[0].mxu0
  %228 = vmatprep.mubr.bf16.mxu0 0
  %229 = vmatmul.mubr.bf16.gmra.mrb[0].mxu0 %v77
  %v230 = vpop.f32.mrb[0].mxu0
  %v231 = vadd.f32 %v107, %v230
  %v232 = vpop.f32.mrb[0].mxu0
  %v233 = vpop.f32.mrb[0].mxu0
  %v234 = vadd.f32 %v107, %v233
  %v235 = vpop.f32.mrb[0].mxu0
  %236 = vmatprep.mubr.bf16.mxu0 0
  %237 = vmatmul.mubr.bf16.gmra.mrb[0].mxu0 %v78
  %v238 = vpop.f32.mrb[0].mxu0
  %v239 = vadd.f32 %v107, %v238
  %v240 = vpop.f32.mrb[0].mxu0
  %v241 = vpop.f32.mrb[0].mxu0
  %v242 = vadd.f32 %v107, %v241
  %v243 = vpop.f32.mrb[0].mxu0
  %244 = vmatprep.mubr.bf16.mxu0 0
  %245 = vmatmul.mubr.bf16.gmra.mrb[0].mxu0 %v79
  %v246 = vpop.f32.mrb[0].mxu0
  %v247 = vadd.f32 %v107, %v246
  %v248 = vpop.f32.mrb[0].mxu0
  %v249 = vpop.f32.mrb[0].mxu0
  %v250 = vadd.f32 %v107, %v249
  %v251 = vpop.f32.mrb[0].mxu0
  %252 = vdwg.mxu0
  %v253 = vld [vmem:[%s3] sm:$0xf]
  %v254 = vld [vmem:[%s3 + $0x4] sm:$0xf]
  %v255 = vld [vmem:[%s3 + $0x8] sm:$0xf]
  %v256 = vld [vmem:[%s3 + $0xc] sm:$0xf]
  %v257 = vld [vmem:[%s3 + $0x10] sm:$0xf]
  %v258 = vld [vmem:[%s3 + $0x14] sm:$0xf]
  %v259 = vld [vmem:[%s3 + $0x18] sm:$0xf]
  %v260 = vld [vmem:[%s3 + $0x1c] sm:$0xf]
  %v261 = vld [vmem:[%s3 + $0x20] sm:$0xf]
  %v262 = vld [vmem:[%s3 + $0x24] sm:$0xf]
  %v263 = vld [vmem:[%s3 + $0x28] sm:$0xf]
  %v264 = vld [vmem:[%s3 + $0x2c] sm:$0xf]
  %v265 = vld [vmem:[%s3 + $0x30] sm:$0xf]
  %v266 = vld [vmem:[%s3 + $0x34] sm:$0xf]
  %v267 = vld [vmem:[%s3 + $0x38] sm:$0xf]
  %v268 = vld [vmem:[%s3 + $0x3c] sm:$0xf]
  %v269 = vlaneseq
  %v270 = vshrl.u32 %v269, 7
  %v271 = vsub.s32 1, %v270
  %v272 = vrot.slane %v39, %v271
  %v289 = vunpack.c.l.b16 %v253
  %v290 = vunpack.c.l.b16 %v254
  %v291 = vunpack.c.l.b16 %v255
  %v292 = vunpack.c.l.b16 %v256
  %v293 = vunpack.c.l.b16 %v257
  %v294 = vunpack.c.l.b16 %v258
  %v295 = vunpack.c.l.b16 %v259
  %v296 = vunpack.c.l.b16 %v260
  %v297 = vunpack.c.l.b16 %v261
  %v298 = vunpack.c.l.b16 %v262
  %v299 = vunpack.c.l.b16 %v263
  %v300 = vunpack.c.l.b16 %v264
  %v301 = vunpack.c.l.b16 %v265
  %v302 = vunpack.c.l.b16 %v266
  %v303 = vunpack.c.l.b16 %v267
  %v304 = vunpack.c.l.b16 %v268
  %v305 = vpack.c.b16 %v290, %v289
  %v306 = vpack.c.b16 %v292, %v291
  %v307 = vpack.c.b16 %v294, %v293
  %v308 = vpack.c.b16 %v296, %v295
  %v309 = vpack.c.b16 %v298, %v297
  %v310 = vpack.c.b16 %v300, %v299
  %v311 = vpack.c.b16 %v302, %v301
  %v312 = vpack.c.b16 %v304, %v303
  %321 = vmatprep.subr.bf16.mxu0 0
  %322 = vmatpush1.bf16.msra.mxu0 %v305
  %323 = vmatprep.subr.bf16.mxu0 0
  %324 = vmatpush1.bf16.msra.mxu0 %v306
  %325 = vmatprep.subr.bf16.mxu0 0
  %326 = vmatpush1.bf16.msra.mxu0 %v307
  %327 = vmatprep.subr.bf16.mxu0 0
  %328 = vmatpush1.bf16.msra.mxu0 %v308
  %329 = vmatprep.subr.bf16.mxu0 0
  %330 = vmatpush1.bf16.msra.mxu0 %v309
  %331 = vmatprep.subr.bf16.mxu0 0
  %332 = vmatpush1.bf16.msra.mxu0 %v310
  %333 = vmatprep.subr.bf16.mxu0 0
  %334 = vmatpush1.bf16.msra.mxu0 %v311
  %335 = vmatprep.subr.bf16.mxu0 0
  %336 = vmatpush1.bf16.msra.mxu0 %v312
  %337 = vmatprep.subr.bf16.mxu0 0
  %338 = vmatpush1.bf16.msra.mxu0 0
  %339 = vmatprep.subr.bf16.mxu0 0
  %340 = vmatpush1.bf16.msra.mxu0 0
  %341 = vmatprep.subr.bf16.mxu0 0
  %342 = vmatpush1.bf16.msra.mxu0 0
  %343 = vmatprep.subr.bf16.mxu0 0
  %344 = vmatpush1.bf16.msra.mxu0 0
  %345 = vmatprep.subr.bf16.mxu0 0
  %346 = vmatpush1.bf16.msra.mxu0 0
  %347 = vmatprep.subr.bf16.mxu0 0
  %348 = vmatpush1.bf16.msra.mxu0 0
  %349 = vmatprep.subr.bf16.mxu0 0
  %350 = vmatpush1.bf16.msra.mxu0 0
  %351 = vmatprep.subr.bf16.mxu0 0
  %352 = vmatpush1.bf16.msra.mxu0 0
  %353 = vmatprep.mubr.bf16.mxu0 0
  %354 = vmatmul.mubr.bf16.gmra.mrb[0].mxu0 %v80
  %v355 = vpop.f32.mrb[0].mxu0
  %v356 = vadd.f32 %v272, %v355
  %v357 = vpop.f32.mrb[0].mxu0
  %v358 = vpop.f32.mrb[0].mxu0
  %v359 = vadd.f32 %v272, %v358
  %v360 = vpop.f32.mrb[0].mxu0
  %361 = vmatprep.mubr.bf16.mxu0 0
  %362 = vmatmul.mubr.bf16.gmra.mrb[0].mxu0 %v81
  %v363 = vpop.f32.mrb[0].mxu0
  %v364 = vadd.f32 %v272, %v363
  %v365 = vpop.f32.mrb[0].mxu0
  %v366 = vpop.f32.mrb[0].mxu0
  %v367 = vadd.f32 %v272, %v366
  %v368 = vpop.f32.mrb[0].mxu0
  %369 = vmatprep.mubr.bf16.mxu0 0
  %370 = vmatmul.mubr.bf16.gmra.mrb[0].mxu0 %v82
  %v371 = vpop.f32.mrb[0].mxu0
  %v372 = vadd.f32 %v272, %v371
  %v373 = vpop.f32.mrb[0].mxu0
  %v374 = vpop.f32.mrb[0].mxu0
  %v375 = vadd.f32 %v272, %v374
  %v376 = vpop.f32.mrb[0].mxu0
  %377 = vmatprep.mubr.bf16.mxu0 0
  %378 = vmatmul.mubr.bf16.gmra.mrb[0].mxu0 %v83
  %v379 = vpop.f32.mrb[0].mxu0
  %v380 = vadd.f32 %v272, %v379
  %v381 = vpop.f32.mrb[0].mxu0
  %v382 = vpop.f32.mrb[0].mxu0
  %v383 = vadd.f32 %v272, %v382
  %v384 = vpop.f32.mrb[0].mxu0
  %385 = vmatprep.mubr.bf16.mxu0 0
  %386 = vmatmul.mubr.bf16.gmra.mrb[0].mxu0 %v84
  %v387 = vpop.f32.mrb[0].mxu0
  %v388 = vadd.f32 %v272, %v387
  %v389 = vpop.f32.mrb[0].mxu0
  %v390 = vpop.f32.mrb[0].mxu0
  %v391 = vadd.f32 %v272, %v390
  %v392 = vpop.f32.mrb[0].mxu0
  %393 = vmatprep.mubr.bf16.mxu0 0
  %394 = vmatmul.mubr.bf16.gmra.mrb[0].mxu0 %v85
  %v395 = vpop.f32.mrb[0].mxu0
  %v396 = vadd.f32 %v272, %v395
  %v397 = vpop.f32.mrb[0].mxu0
  %v398 = vpop.f32.mrb[0].mxu0
  %v399 = vadd.f32 %v272, %v398
  %v400 = vpop.f32.mrb[0].mxu0
  %401 = vmatprep.mubr.bf16.mxu0 0
  %402 = vmatmul.mubr.bf16.gmra.mrb[0].mxu0 %v86
  %v403 = vpop.f32.mrb[0].mxu0
  %v404 = vadd.f32 %v272, %v403
  %v405 = vpop.f32.mrb[0].mxu0
  %v406 = vpop.f32.mrb[0].mxu0
  %v407 = vadd.f32 %v272, %v406
  %v408 = vpop.f32.mrb[0].mxu0
  %409 = vmatprep.mubr.bf16.mxu0 0
  %410 = vmatmul.mubr.bf16.gmra.mrb[0].mxu0 %v87
  %v411 = vpop.f32.mrb[0].mxu0
  %v412 = vadd.f32 %v272, %v411
  %v413 = vpop.f32.mrb[0].mxu0
  %v414 = vpop.f32.mrb[0].mxu0
  %v415 = vadd.f32 %v272, %v414
  %v416 = vpop.f32.mrb[0].mxu0
  %417 = vdwg.mxu0
  %v418 = vpack.c.bf16 %v194, %v191
  %v419 = vpack.c.bf16 %v202, %v199
  %v420 = vpack.c.bf16 %v210, %v207
  %v421 = vpack.c.bf16 %v218, %v215
  %v422 = vpack.c.bf16 %v226, %v223
  %v423 = vpack.c.bf16 %v234, %v231
  %v424 = vpack.c.bf16 %v242, %v239
  %v425 = vpack.c.bf16 %v250, %v247
  %v434 = vunpack.c.l.b16 %v418
  %v435 = vunpack.c.h.b16 %v418
  %v436 = vunpack.c.l.b16 %v419
  %v437 = vunpack.c.h.b16 %v419
  %v438 = vunpack.c.l.b16 %v420
  %v439 = vunpack.c.h.b16 %v420
  %v440 = vunpack.c.l.b16 %v421
  %v441 = vunpack.c.h.b16 %v421
  %v442 = vunpack.c.l.b16 %v422
  %v443 = vunpack.c.h.b16 %v422
  %v444 = vunpack.c.l.b16 %v423
  %v445 = vunpack.c.h.b16 %v423
  %v446 = vunpack.c.l.b16 %v424
  %v447 = vunpack.c.h.b16 %v424
  %v448 = vunpack.c.l.b16 %v425
  %v449 = vunpack.c.h.b16 %v425
  %v450 = vpack.c.b16 %v434, %v434
  %v451 = vpack.c.b16 %v435, %v435
  %v452 = vpack.c.b16 %v436, %v436
  %v453 = vpack.c.b16 %v437, %v437
  %v454 = vpack.c.b16 %v438, %v438
  %v455 = vpack.c.b16 %v439, %v439
  %v456 = vpack.c.b16 %v440, %v440
  %v457 = vpack.c.b16 %v441, %v441
  %v458 = vpack.c.b16 %v442, %v442
  %v459 = vpack.c.b16 %v443, %v443
  %v460 = vpack.c.b16 %v444, %v444
  %v461 = vpack.c.b16 %v445, %v445
  %v462 = vpack.c.b16 %v446, %v446
  %v463 = vpack.c.b16 %v447, %v447
  %v464 = vpack.c.b16 %v448, %v448
  %v465 = vpack.c.b16 %v449, %v449
  %482 = vst [vmem:[%s5] sm:$0xf] %v450
  %483 = vst [vmem:[%s5 + $0x4] sm:$0xf] %v451
  %484 = vst [vmem:[%s5 + $0x8] sm:$0xf] %v452
  %485 = vst [vmem:[%s5 + $0xc] sm:$0xf] %v453
  %486 = vst [vmem:[%s5 + $0x10] sm:$0xf] %v454
  %487 = vst [vmem:[%s5 + $0x14] sm:$0xf] %v455
  %488 = vst [vmem:[%s5 + $0x18] sm:$0xf] %v456
  %489 = vst [vmem:[%s5 + $0x1c] sm:$0xf] %v457
  %490 = vst [vmem:[%s5 + $0x20] sm:$0xf] %v458
  %491 = vst [vmem:[%s5 + $0x24] sm:$0xf] %v459
  %492 = vst [vmem:[%s5 + $0x28] sm:$0xf] %v460
  %493 = vst [vmem:[%s5 + $0x2c] sm:$0xf] %v461
  %494 = vst [vmem:[%s5 + $0x30] sm:$0xf] %v462
  %495 = vst [vmem:[%s5 + $0x34] sm:$0xf] %v463
  %496 = vst [vmem:[%s5 + $0x38] sm:$0xf] %v464
  %497 = vst [vmem:[%s5 + $0x3c] sm:$0xf] %v465
  %v498 = vpack.c.bf16 %v359, %v356
  %v499 = vpack.c.bf16 %v367, %v364
  %v500 = vpack.c.bf16 %v375, %v372
  %v501 = vpack.c.bf16 %v383, %v380
  %v502 = vpack.c.bf16 %v391, %v388
  %v503 = vpack.c.bf16 %v399, %v396
  %v504 = vpack.c.bf16 %v407, %v404
  %v505 = vpack.c.bf16 %v415, %v412
  %v514 = vunpack.c.l.b16 %v498
  %v515 = vunpack.c.h.b16 %v498
  %v516 = vunpack.c.l.b16 %v499
  %v517 = vunpack.c.h.b16 %v499
  %v518 = vunpack.c.l.b16 %v500
  %v519 = vunpack.c.h.b16 %v500
  %v520 = vunpack.c.l.b16 %v501
  %v521 = vunpack.c.h.b16 %v501
  %v522 = vunpack.c.l.b16 %v502
  %v523 = vunpack.c.h.b16 %v502
  %v524 = vunpack.c.l.b16 %v503
  %v525 = vunpack.c.h.b16 %v503
  %v526 = vunpack.c.l.b16 %v504
  %v527 = vunpack.c.h.b16 %v504
  %v528 = vunpack.c.l.b16 %v505
  %v529 = vunpack.c.h.b16 %v505
  %v530 = vpack.c.b16 %v514, %v514
  %v531 = vpack.c.b16 %v515, %v515
  %v532 = vpack.c.b16 %v516, %v516
  %v533 = vpack.c.b16 %v517, %v517
  %v534 = vpack.c.b16 %v518, %v518
  %v535 = vpack.c.b16 %v519, %v519
  %v536 = vpack.c.b16 %v520, %v520
  %v537 = vpack.c.b16 %v521, %v521
  %v538 = vpack.c.b16 %v522, %v522
  %v539 = vpack.c.b16 %v523, %v523
  %v540 = vpack.c.b16 %v524, %v524
  %v541 = vpack.c.b16 %v525, %v525
  %v542 = vpack.c.b16 %v526, %v526
  %v543 = vpack.c.b16 %v527, %v527
  %v544 = vpack.c.b16 %v528, %v528
  %v545 = vpack.c.b16 %v529, %v529
  %562 = vst [vmem:[%s6] sm:$0xf] %v530
  %563 = vst [vmem:[%s6 + $0x4] sm:$0xf] %v531
  %564 = vst [vmem:[%s6 + $0x8] sm:$0xf] %v532
  %565 = vst [vmem:[%s6 + $0xc] sm:$0xf] %v533
  %566 = vst [vmem:[%s6 + $0x10] sm:$0xf] %v534
  %567 = vst [vmem:[%s6 + $0x14] sm:$0xf] %v535
  %568 = vst [vmem:[%s6 + $0x18] sm:$0xf] %v536
  %569 = vst [vmem:[%s6 + $0x1c] sm:$0xf] %v537
  %570 = vst [vmem:[%s6 + $0x20] sm:$0xf] %v538
  %571 = vst [vmem:[%s6 + $0x24] sm:$0xf] %v539
  %572 = vst [vmem:[%s6 + $0x28] sm:$0xf] %v540
  %573 = vst [vmem:[%s6 + $0x2c] sm:$0xf] %v541
  %574 = vst [vmem:[%s6 + $0x30] sm:$0xf] %v542
  %575 = vst [vmem:[%s6 + $0x34] sm:$0xf] %v543
  %576 = vst [vmem:[%s6 + $0x38] sm:$0xf] %v544
  %577 = vst [vmem:[%s6 + $0x3c] sm:$0xf] %v545
  // Predicated region
  $region22: #{transformer_forward.37} parent=0 // pred_check
    _
  $region23: #{transformer_forward.37} parent=0 // pred_check_branch
    %579 = sbr.rel (0) target = $region25
  $region24: #{transformer_forward.37} parent=0 // pred_region
    _
  $region25: #{transformer_forward.37} parent=0 // pred_fallthru
    _
  // Predicated region
  $region26: #{transformer_forward.37} parent=0 // pred_check
    _
  $region27: #{transformer_forward.37} parent=0 // pred_check_branch
    %581 = sbr.rel (0) target = $region29
  $region28: #{transformer_forward.37} parent=0 // pred_region
    _
  $region29: #{transformer_forward.37} parent=0 // pred_fallthru
    _
  // Predicated region
  $region30: #{transformer_forward.37} parent=0 // pred_check
    _
  $region31: #{transformer_forward.37} parent=0 // pred_check_branch
    %583 = sbr.rel (0) target = $region33
  $region32: #{transformer_forward.37} parent=0 // pred_region
    _
  $region33: #{transformer_forward.37} parent=0 // pred_fallthru
    _
  // Predicated region
  $region34: #{transformer_forward.37} parent=0 // pred_check
    _
  $region35: #{transformer_forward.37} parent=0 // pred_check_branch
    %585 = sbr.rel (0) target = $region37
  $region36: #{transformer_forward.37} parent=0 // pred_region
    _
  $region37: #{transformer_forward.37} parent=0 // pred_fallthru
    _

// kernel: transformer_forward.33
$region0: #{transformer_forward.33}
  #allocation0 [shape = 'u32[]', space=smem, size = 0x4, offset = 0x4, fixed_abs, tag = 'smem constant byte address 0x4 - core index']
  #allocation1 [shape = 'u32[144,128]{1,0:T(1,128)}', space=vmem, size = 0x12000, scoped, tag = 'internal scratch']
  %s0 = inlined_call_operand.vmem [shape: f32[32,128], index: 0, kind: input, shape index: {}]
  %s1 = inlined_call_operand.vmem [shape: f32[32,128], index: 1, kind: input, shape index: {}]
  %s2 = inlined_call_operand.vmem [shape: bf16[128,128], index: 2, kind: input, shape index: {}]
  %s3 = inlined_call_operand.vmem [shape: bf16[128,128], index: 3, kind: input, shape index: {}]
  %s4 = inlined_call_operand.vmem [shape: bf16[128,128], index: 4, kind: input, shape index: {}]
  %s5 = inlined_call_operand.vmem [shape: f32[3,128], index: 5, kind: input, shape index: {}]
  %s6 = inlined_call_operand.vmem [shape: bf16[32,128], index: 6, kind: output, shape index: {0}]
  %s7 = inlined_call_operand.vmem [shape: bf16[32,128], index: 7, kind: output, shape index: {1}]
  %s8 = inlined_call_operand.vmem [shape: bf16[32,128], index: 8, kind: output, shape index: {2}]
  %9 = xla_tuple %s6, %s7, %s8
  %s10 = sld [smem:[#allocation0]]
  $region50: #{transformer_forward.33} parent=0
    _
  %s12 = ssub.s32 1, %s10
  %s13 = scalar_select 0, %s12, %s10
  // Predicated region
  $region2: #{transformer_forward.33} parent=0 // pred_check
    _
  $region3: #{transformer_forward.33} parent=0 // pred_check_branch
    %15 = sbr.rel (0) target = $region5
  $region4: #{transformer_forward.33} parent=0 // pred_region
    _
  $region5: #{transformer_forward.33} parent=0 // pred_fallthru
    _
  // Predicated region
  $region6: #{transformer_forward.33} parent=0 // pred_check
    _
  $region7: #{transformer_forward.33} parent=0 // pred_check_branch
    %17 = sbr.rel (0) target = $region9
  $region8: #{transformer_forward.33} parent=0 // pred_region
    _
  $region9: #{transformer_forward.33} parent=0 // pred_fallthru
    _
  // Predicated region
  $region10: #{transformer_forward.33} parent=0 // pred_check
    _
  $region11: #{transformer_forward.33} parent=0 // pred_check_branch
    %19 = sbr.rel (0) target = $region13
  $region12: #{transformer_forward.33} parent=0 // pred_region
    _
  $region13: #{transformer_forward.33} parent=0 // pred_fallthru
    _
  // Predicated region
  $region14: #{transformer_forward.33} parent=0 // pred_check
    _
  $region15: #{transformer_forward.33} parent=0 // pred_check_branch
    %21 = sbr.rel (0) target = $region17
  $region16: #{transformer_forward.33} parent=0 // pred_region
    _
  $region17: #{transformer_forward.33} parent=0 // pred_fallthru
    _
  // Predicated region
  $region18: #{transformer_forward.33} parent=0 // pred_check
    _
  $region19: #{transformer_forward.33} parent=0 // pred_check_branch
    %23 = sbr.rel (0) target = $region21
  $region20: #{transformer_forward.33} parent=0 // pred_region
    _
  $region21: #{transformer_forward.33} parent=0 // pred_fallthru
    _
  // Predicated region
  $region22: #{transformer_forward.33} parent=0 // pred_check
    _
  $region23: #{transformer_forward.33} parent=0 // pred_check_branch
    %25 = sbr.rel (0) target = $region25
  $region24: #{transformer_forward.33} parent=0 // pred_region
    _
  $region25: #{transformer_forward.33} parent=0 // pred_fallthru
    _
  %v27 = vld [vmem:[%s0] sm:$0xff]
  %v28 = vld [vmem:[%s0 + $0x8] sm:$0xff]
  %v29 = vld [vmem:[%s0 + $0x10] sm:$0xff]
  %v30 = vld [vmem:[%s0 + $0x18] sm:$0xff]
  %v31 = vld [vmem:[%s5] sm:$0x7]
  %v32 = vld [vmem:[%s1] sm:$0xff]
  %v33 = vld [vmem:[%s1 + $0x8] sm:$0xff]
  %v34 = vld [vmem:[%s1 + $0x10] sm:$0xff]
  %v35 = vld [vmem:[%s1 + $0x18] sm:$0xff]
  %v36 = vadd.f32 %v27, %v32
  %v37 = vadd.f32 %v28, %v33
  %v38 = vadd.f32 %v29, %v34
  %v39 = vadd.f32 %v30, %v35
  %v40 = vpack.c.bf16 %v37, %v36
  %v41 = vpack.c.bf16 %v39, %v38
  %v42 = vpack.c.bf16 %v28, %v27
  %v43 = vpack.c.bf16 %v30, %v29
  %v44 = vld [vmem:[%s2] sm:$0xf]
  %v45 = vld [vmem:[%s2 + $0x4] sm:$0xf]
  %v46 = vld [vmem:[%s2 + $0x8] sm:$0xf]
  %v47 = vld [vmem:[%s2 + $0xc] sm:$0xf]
  %v48 = vld [vmem:[%s2 + $0x10] sm:$0xf]
  %v49 = vld [vmem:[%s2 + $0x14] sm:$0xf]
  %v50 = vld [vmem:[%s2 + $0x18] sm:$0xf]
  %v51 = vld [vmem:[%s2 + $0x1c] sm:$0xf]
  %v52 = vld [vmem:[%s2 + $0x20] sm:$0xf]
  %v53 = vld [vmem:[%s2 + $0x24] sm:$0xf]
  %v54 = vld [vmem:[%s2 + $0x28] sm:$0xf]
  %v55 = vld [vmem:[%s2 + $0x2c] sm:$0xf]
  %v56 = vld [vmem:[%s2 + $0x30] sm:$0xf]
  %v57 = vld [vmem:[%s2 + $0x34] sm:$0xf]
  %v58 = vld [vmem:[%s2 + $0x38] sm:$0xf]
  %v59 = vld [vmem:[%s2 + $0x3c] sm:$0xf]
  %v60 = vlaneseq
  %v61 = vshrl.u32 %v60, 7
  %v62 = vsub.s32 0, %v61
  %v63 = vrot.slane %v31, %v62
  %v80 = vunpack.c.l.b16 %v44
  %v81 = vunpack.c.l.b16 %v45
  %v82 = vunpack.c.l.b16 %v46
  %v83 = vunpack.c.l.b16 %v47
  %v84 = vunpack.c.l.b16 %v48
  %v85 = vunpack.c.l.b16 %v49
  %v86 = vunpack.c.l.b16 %v50
  %v87 = vunpack.c.l.b16 %v51
  %v88 = vunpack.c.l.b16 %v52
  %v89 = vunpack.c.l.b16 %v53
  %v90 = vunpack.c.l.b16 %v54
  %v91 = vunpack.c.l.b16 %v55
  %v92 = vunpack.c.l.b16 %v56
  %v93 = vunpack.c.l.b16 %v57
  %v94 = vunpack.c.l.b16 %v58
  %v95 = vunpack.c.l.b16 %v59
  %v96 = vpack.c.b16 %v81, %v80
  %v97 = vpack.c.b16 %v83, %v82
  %v98 = vpack.c.b16 %v85, %v84
  %v99 = vpack.c.b16 %v87, %v86
  %v100 = vpack.c.b16 %v89, %v88
  %v101 = vpack.c.b16 %v91, %v90
  %v102 = vpack.c.b16 %v93, %v92
  %v103 = vpack.c.b16 %v95, %v94
  %112 = vmatprep.subr.bf16.mxu0 0
  %113 = vmatpush1.bf16.msra.mxu0 %v96
  %114 = vmatprep.subr.bf16.mxu0 0
  %115 = vmatpush1.bf16.msra.mxu0 %v97
  %116 = vmatprep.subr.bf16.mxu0 0
  %117 = vmatpush1.bf16.msra.mxu0 %v98
  %118 = vmatprep.subr.bf16.mxu0 0
  %119 = vmatpush1.bf16.msra.mxu0 %v99
  %120 = vmatprep.subr.bf16.mxu0 0
  %121 = vmatpush1.bf16.msra.mxu0 %v100
  %122 = vmatprep.subr.bf16.mxu0 0
  %123 = vmatpush1.bf16.msra.mxu0 %v101
  %124 = vmatprep.subr.bf16.mxu0 0
  %125 = vmatpush1.bf16.msra.mxu0 %v102
  %126 = vmatprep.subr.bf16.mxu0 0
  %127 = vmatpush1.bf16.msra.mxu0 %v103
  %128 = vmatprep.subr.bf16.mxu0 0
  %129 = vmatpush1.bf16.msra.mxu0 0
  %130 = vmatprep.subr.bf16.mxu0 0
  %131 = vmatpush1.bf16.msra.mxu0 0
  %132 = vmatprep.subr.bf16.mxu0 0
  %133 = vmatpush1.bf16.msra.mxu0 0
  %134 = vmatprep.subr.bf16.mxu0 0
  %135 = vmatpush1.bf16.msra.mxu0 0
  %136 = vmatprep.subr.bf16.mxu0 0
  %137 = vmatpush1.bf16.msra.mxu0 0
  %138 = vmatprep.subr.bf16.mxu0 0
  %139 = vmatpush1.bf16.msra.mxu0 0
  %140 = vmatprep.subr.bf16.mxu0 0
  %141 = vmatpush1.bf16.msra.mxu0 0
  %142 = vmatprep.subr.bf16.mxu0 0
  %143 = vmatpush1.bf16.msra.mxu0 0
  %144 = vmatprep.mubr.bf16.mxu0 0
  %145 = vmatmul.mubr.bf16.gmra.mrb[0].mxu0 %v40
  %v146 = vpop.f32.mrb[0].mxu0
  %v147 = vadd.f32 %v63, %v146
  %v148 = vpop.f32.mrb[0].mxu0
  %v149 = vpop.f32.mrb[0].mxu0
  %v150 = vadd.f32 %v63, %v149
  %v151 = vpop.f32.mrb[0].mxu0
  %152 = vmatprep.mubr.bf16.mxu0 0
  %153 = vmatmul.mubr.bf16.gmra.mrb[0].mxu0 %v41
  %v154 = vpop.f32.mrb[0].mxu0
  %v155 = vadd.f32 %v63, %v154
  %v156 = vpop.f32.mrb[0].mxu0
  %v157 = vpop.f32.mrb[0].mxu0
  %v158 = vadd.f32 %v63, %v157
  %v159 = vpop.f32.mrb[0].mxu0
  %160 = vdwg.mxu0
  %v161 = vld [vmem:[%s3] sm:$0xf]
  %v162 = vld [vmem:[%s3 + $0x4] sm:$0xf]
  %v163 = vld [vmem:[%s3 + $0x8] sm:$0xf]
  %v164 = vld [vmem:[%s3 + $0xc] sm:$0xf]
  %v165 = vld [vmem:[%s3 + $0x10] sm:$0xf]
  %v166 = vld [vmem:[%s3 + $0x14] sm:$0xf]
  %v167 = vld [vmem:[%s3 + $0x18] sm:$0xf]
  %v168 = vld [vmem:[%s3 + $0x1c] sm:$0xf]
  %v169 = vld [vmem:[%s3 + $0x20] sm:$0xf]
  %v170 = vld [vmem:[%s3 + $0x24] sm:$0xf]
  %v171 = vld [vmem:[%s3 + $0x28] sm:$0xf]
  %v172 = vld [vmem:[%s3 + $0x2c] sm:$0xf]
  %v173 = vld [vmem:[%s3 + $0x30] sm:$0xf]
  %v174 = vld [vmem:[%s3 + $0x34] sm:$0xf]
  %v175 = vld [vmem:[%s3 + $0x38] sm:$0xf]
  %v176 = vld [vmem:[%s3 + $0x3c] sm:$0xf]
  %v177 = vlaneseq
  %v178 = vshrl.u32 %v177, 7
  %v179 = vsub.s32 1, %v178
  %v180 = vrot.slane %v31, %v179
  %v197 = vunpack.c.l.b16 %v161
  %v198 = vunpack.c.l.b16 %v162
  %v199 = vunpack.c.l.b16 %v163
  %v200 = vunpack.c.l.b16 %v164
  %v201 = vunpack.c.l.b16 %v165
  %v202 = vunpack.c.l.b16 %v166
  %v203 = vunpack.c.l.b16 %v167
  %v204 = vunpack.c.l.b16 %v168
  %v205 = vunpack.c.l.b16 %v169
  %v206 = vunpack.c.l.b16 %v170
  %v207 = vunpack.c.l.b16 %v171
  %v208 = vunpack.c.l.b16 %v172
  %v209 = vunpack.c.l.b16 %v173
  %v210 = vunpack.c.l.b16 %v174
  %v211 = vunpack.c.l.b16 %v175
  %v212 = vunpack.c.l.b16 %v176
  %v213 = vpack.c.b16 %v198, %v197
  %v214 = vpack.c.b16 %v200, %v199
  %v215 = vpack.c.b16 %v202, %v201
  %v216 = vpack.c.b16 %v204, %v203
  %v217 = vpack.c.b16 %v206, %v205
  %v218 = vpack.c.b16 %v208, %v207
  %v219 = vpack.c.b16 %v210, %v209
  %v220 = vpack.c.b16 %v212, %v211
  %229 = vmatprep.subr.bf16.mxu0 0
  %230 = vmatpush1.bf16.msra.mxu0 %v213
  %231 = vmatprep.subr.bf16.mxu0 0
  %232 = vmatpush1.bf16.msra.mxu0 %v214
  %233 = vmatprep.subr.bf16.mxu0 0
  %234 = vmatpush1.bf16.msra.mxu0 %v215
  %235 = vmatprep.subr.bf16.mxu0 0
  %236 = vmatpush1.bf16.msra.mxu0 %v216
  %237 = vmatprep.subr.bf16.mxu0 0
  %238 = vmatpush1.bf16.msra.mxu0 %v217
  %239 = vmatprep.subr.bf16.mxu0 0
  %240 = vmatpush1.bf16.msra.mxu0 %v218
  %241 = vmatprep.subr.bf16.mxu0 0
  %242 = vmatpush1.bf16.msra.mxu0 %v219
  %243 = vmatprep.subr.bf16.mxu0 0
  %244 = vmatpush1.bf16.msra.mxu0 %v220
  %245 = vmatprep.subr.bf16.mxu0 0
  %246 = vmatpush1.bf16.msra.mxu0 0
  %247 = vmatprep.subr.bf16.mxu0 0
  %248 = vmatpush1.bf16.msra.mxu0 0
  %249 = vmatprep.subr.bf16.mxu0 0
  %250 = vmatpush1.bf16.msra.mxu0 0
  %251 = vmatprep.subr.bf16.mxu0 0
  %252 = vmatpush1.bf16.msra.mxu0 0
  %253 = vmatprep.subr.bf16.mxu0 0
  %254 = vmatpush1.bf16.msra.mxu0 0
  %255 = vmatprep.subr.bf16.mxu0 0
  %256 = vmatpush1.bf16.msra.mxu0 0
  %257 = vmatprep.subr.bf16.mxu0 0
  %258 = vmatpush1.bf16.msra.mxu0 0
  %259 = vmatprep.subr.bf16.mxu0 0
  %260 = vmatpush1.bf16.msra.mxu0 0
  %261 = vmatprep.mubr.bf16.mxu0 0
  %262 = vmatmul.mubr.bf16.gmra.mrb[0].mxu0 %v40
  %v263 = vpop.f32.mrb[0].mxu0
  %v264 = vadd.f32 %v180, %v263
  %v265 = vpop.f32.mrb[0].mxu0
  %v266 = vpop.f32.mrb[0].mxu0
  %v267 = vadd.f32 %v180, %v266
  %v268 = vpop.f32.mrb[0].mxu0
  %269 = vmatprep.mubr.bf16.mxu0 0
  %270 = vmatmul.mubr.bf16.gmra.mrb[0].mxu0 %v41
  %v271 = vpop.f32.mrb[0].mxu0
  %v272 = vadd.f32 %v180, %v271
  %v273 = vpop.f32.mrb[0].mxu0
  %v274 = vpop.f32.mrb[0].mxu0
  %v275 = vadd.f32 %v180, %v274
  %v276 = vpop.f32.mrb[0].mxu0
  %277 = vdwg.mxu0
  %v278 = vld [vmem:[%s4] sm:$0xf]
  %v279 = vld [vmem:[%s4 + $0x4] sm:$0xf]
  %v280 = vld [vmem:[%s4 + $0x8] sm:$0xf]
  %v281 = vld [vmem:[%s4 + $0xc] sm:$0xf]
  %v282 = vld [vmem:[%s4 + $0x10] sm:$0xf]
  %v283 = vld [vmem:[%s4 + $0x14] sm:$0xf]
  %v284 = vld [vmem:[%s4 + $0x18] sm:$0xf]
  %v285 = vld [vmem:[%s4 + $0x1c] sm:$0xf]
  %v286 = vld [vmem:[%s4 + $0x20] sm:$0xf]
  %v287 = vld [vmem:[%s4 + $0x24] sm:$0xf]
  %v288 = vld [vmem:[%s4 + $0x28] sm:$0xf]
  %v289 = vld [vmem:[%s4 + $0x2c] sm:$0xf]
  %v290 = vld [vmem:[%s4 + $0x30] sm:$0xf]
  %v291 = vld [vmem:[%s4 + $0x34] sm:$0xf]
  %v292 = vld [vmem:[%s4 + $0x38] sm:$0xf]
  %v293 = vld [vmem:[%s4 + $0x3c] sm:$0xf]
  %v294 = vlaneseq
  %v295 = vshrl.u32 %v294, 7
  %v296 = vsub.s32 2, %v295
  %v297 = vrot.slane %v31, %v296
  %v314 = vunpack.c.l.b16 %v278
  %v315 = vunpack.c.l.b16 %v279
  %v316 = vunpack.c.l.b16 %v280
  %v317 = vunpack.c.l.b16 %v281
  %v318 = vunpack.c.l.b16 %v282
  %v319 = vunpack.c.l.b16 %v283
  %v320 = vunpack.c.l.b16 %v284
  %v321 = vunpack.c.l.b16 %v285
  %v322 = vunpack.c.l.b16 %v286
  %v323 = vunpack.c.l.b16 %v287
  %v324 = vunpack.c.l.b16 %v288
  %v325 = vunpack.c.l.b16 %v289
  %v326 = vunpack.c.l.b16 %v290
  %v327 = vunpack.c.l.b16 %v291
  %v328 = vunpack.c.l.b16 %v292
  %v329 = vunpack.c.l.b16 %v293
  %v330 = vpack.c.b16 %v315, %v314
  %v331 = vpack.c.b16 %v317, %v316
  %v332 = vpack.c.b16 %v319, %v318
  %v333 = vpack.c.b16 %v321, %v320
  %v334 = vpack.c.b16 %v323, %v322
  %v335 = vpack.c.b16 %v325, %v324
  %v336 = vpack.c.b16 %v327, %v326
  %v337 = vpack.c.b16 %v329, %v328
  %346 = vmatprep.subr.bf16.mxu0 0
  %347 = vmatpush1.bf16.msra.mxu0 %v330
  %348 = vmatprep.subr.bf16.mxu0 0
  %349 = vmatpush1.bf16.msra.mxu0 %v331
  %350 = vmatprep.subr.bf16.mxu0 0
  %351 = vmatpush1.bf16.msra.mxu0 %v332
  %352 = vmatprep.subr.bf16.mxu0 0
  %353 = vmatpush1.bf16.msra.mxu0 %v333
  %354 = vmatprep.subr.bf16.mxu0 0
  %355 = vmatpush1.bf16.msra.mxu0 %v334
  %356 = vmatprep.subr.bf16.mxu0 0
  %357 = vmatpush1.bf16.msra.mxu0 %v335
  %358 = vmatprep.subr.bf16.mxu0 0
  %359 = vmatpush1.bf16.msra.mxu0 %v336
  %360 = vmatprep.subr.bf16.mxu0 0
  %361 = vmatpush1.bf16.msra.mxu0 %v337
  %362 = vmatprep.subr.bf16.mxu0 0
  %363 = vmatpush1.bf16.msra.mxu0 0
  %364 = vmatprep.subr.bf16.mxu0 0
  %365 = vmatpush1.bf16.msra.mxu0 0
  %366 = vmatprep.subr.bf16.mxu0 0
  %367 = vmatpush1.bf16.msra.mxu0 0
  %368 = vmatprep.subr.bf16.mxu0 0
  %369 = vmatpush1.bf16.msra.mxu0 0
  %370 = vmatprep.subr.bf16.mxu0 0
  %371 = vmatpush1.bf16.msra.mxu0 0
  %372 = vmatprep.subr.bf16.mxu0 0
  %373 = vmatpush1.bf16.msra.mxu0 0
  %374 = vmatprep.subr.bf16.mxu0 0
  %375 = vmatpush1.bf16.msra.mxu0 0
  %376 = vmatprep.subr.bf16.mxu0 0
  %377 = vmatpush1.bf16.msra.mxu0 0
  %378 = vmatprep.mubr.bf16.mxu0 0
  %379 = vmatmul.mubr.bf16.gmra.mrb[0].mxu0 %v42
  %v380 = vpop.f32.mrb[0].mxu0
  %v381 = vadd.f32 %v297, %v380
  %v382 = vpop.f32.mrb[0].mxu0
  %v383 = vpop.f32.mrb[0].mxu0
  %v384 = vadd.f32 %v297, %v383
  %v385 = vpop.f32.mrb[0].mxu0
  %386 = vmatprep.mubr.bf16.mxu0 0
  %387 = vmatmul.mubr.bf16.gmra.mrb[0].mxu0 %v43
  %v388 = vpop.f32.mrb[0].mxu0
  %v389 = vadd.f32 %v297, %v388
  %v390 = vpop.f32.mrb[0].mxu0
  %v391 = vpop.f32.mrb[0].mxu0
  %v392 = vadd.f32 %v297, %v391
  %v393 = vpop.f32.mrb[0].mxu0
  %394 = vdwg.mxu0
  %v395 = vpack.c.bf16 %v150, %v147
  %v396 = vpack.c.bf16 %v158, %v155
  %v399 = vunpack.c.l.b16 %v395
  %v400 = vunpack.c.h.b16 %v395
  %v401 = vunpack.c.l.b16 %v396
  %v402 = vunpack.c.h.b16 %v396
  %v403 = vpack.c.b16 %v399, %v399
  %v404 = vpack.c.b16 %v400, %v400
  %v405 = vpack.c.b16 %v401, %v401
  %v406 = vpack.c.b16 %v402, %v402
  %411 = vst [vmem:[%s6] sm:$0xf] %v403
  %412 = vst [vmem:[%s6 + $0x4] sm:$0xf] %v404
  %413 = vst [vmem:[%s6 + $0x8] sm:$0xf] %v405
  %414 = vst [vmem:[%s6 + $0xc] sm:$0xf] %v406
  %v415 = vpack.c.bf16 %v267, %v264
  %v416 = vpack.c.bf16 %v275, %v272
  %v419 = vunpack.c.l.b16 %v415
  %v420 = vunpack.c.h.b16 %v415
  %v421 = vunpack.c.l.b16 %v416
  %v422 = vunpack.c.h.b16 %v416
  %v423 = vpack.c.b16 %v419, %v419
  %v424 = vpack.c.b16 %v420, %v420
  %v425 = vpack.c.b16 %v421, %v421
  %v426 = vpack.c.b16 %v422, %v422
  %431 = vst [vmem:[%s7] sm:$0xf] %v423
  %432 = vst [vmem:[%s7 + $0x4] sm:$0xf] %v424
  %433 = vst [vmem:[%s7 + $0x8] sm:$0xf] %v425
  %434 = vst [vmem:[%s7 + $0xc] sm:$0xf] %v426
  %v435 = vpack.c.bf16 %v384, %v381
  %v436 = vpack.c.bf16 %v392, %v389
  %v439 = vunpack.c.l.b16 %v435
  %v440 = vunpack.c.h.b16 %v435
  %v441 = vunpack.c.l.b16 %v436
  %v442 = vunpack.c.h.b16 %v436
  %v443 = vpack.c.b16 %v439, %v439
  %v444 = vpack.c.b16 %v440, %v440
  %v445 = vpack.c.b16 %v441, %v441
  %v446 = vpack.c.b16 %v442, %v442
  %451 = vst [vmem:[%s8] sm:$0xf] %v443
  %452 = vst [vmem:[%s8 + $0x4] sm:$0xf] %v444
  %453 = vst [vmem:[%s8 + $0x8] sm:$0xf] %v445
  %454 = vst [vmem:[%s8 + $0xc] sm:$0xf] %v446
  // Predicated region
  $region26: #{transformer_forward.33} parent=0 // pred_check
    _
  $region27: #{transformer_forward.33} parent=0 // pred_check_branch
    %456 = sbr.rel (0) target = $region29
  $region28: #{transformer_forward.33} parent=0 // pred_region
    _
  $region29: #{transformer_forward.33} parent=0 // pred_fallthru
    _
  // Predicated region
  $region30: #{transformer_forward.33} parent=0 // pred_check
    _
  $region31: #{transformer_forward.33} parent=0 // pred_check_branch
    %458 = sbr.rel (0) target = $region33
  $region32: #{transformer_forward.33} parent=0 // pred_region
    _
  $region33: #{transformer_forward.33} parent=0 // pred_fallthru
    _
  // Predicated region
  $region34: #{transformer_forward.33} parent=0 // pred_check
    _
  $region35: #{transformer_forward.33} parent=0 // pred_check_branch
    %460 = sbr.rel (0) target = $region37
  $region36: #{transformer_forward.33} parent=0 // pred_region
    _
  $region37: #{transformer_forward.33} parent=0 // pred_fallthru
    _
  // Predicated region
  $region38: #{transformer_forward.33} parent=0 // pred_check
    _
  $region39: #{transformer_forward.33} parent=0 // pred_check_branch
    %462 = sbr.rel (0) target = $region41
  $region40: #{transformer_forward.33} parent=0 // pred_region
    _
  $region41: #{transformer_forward.33} parent=0 // pred_fallthru
    _
  // Predicated region
  $region42: #{transformer_forward.33} parent=0 // pred_check
    _
  $region43: #{transformer_forward.33} parent=0 // pred_check_branch
    %464 = sbr.rel (0) target = $region45
  $region44: #{transformer_forward.33} parent=0 // pred_region
    _
  $region45: #{transformer_forward.33} parent=0 // pred_fallthru
    _
  // Predicated region
  $region46: #{transformer_forward.33} parent=0 // pred_check
    _
  $region47: #{transformer_forward.33} parent=0 // pred_check_branch
    %466 = sbr.rel (0) target = $region49
  $region48: #{transformer_forward.33} parent=0 // pred_region
    _
  $region49: #{transformer_forward.33} parent=0 // pred_fallthru
    _

// kernel: transformer_forward.34
$region0: #{transformer_forward.34}
  #allocation0 [shape = 'u32[]', space=smem, size = 0x4, offset = 0x4, fixed_abs, tag = 'smem constant byte address 0x4 - core index']
  #allocation1 [shape = 'u32[144,128]{1,0:T(1,128)}', space=vmem, size = 0x12000, scoped, tag = 'internal scratch']
  %s0 = inlined_call_operand.vmem [shape: bf16[2,16,128], index: 0, kind: input, shape index: {}]
  %s1 = inlined_call_operand.vmem [shape: bf16[2,16,128], index: 1, kind: input, shape index: {}]
  %s2 = inlined_call_operand.vmem [shape: bf16[2,16,128], index: 2, kind: input, shape index: {}]
  %s3 = inlined_call_operand.vmem [shape: f32[2,1,16], index: 3, kind: input, shape index: {}]
  %s4 = inlined_call_operand.vmem [shape: f32[2,16,128], index: 4, kind: output, shape index: {}]
  %s5 = sld [smem:[#allocation0]]
  $region49: #{transformer_forward.34} parent=0
    _
  %s7 = ssub.s32 1, %s5
  %s8 = scalar_select 0, %s7, %s5
  loop: start=0, step=1, limit=4
  $region2: #{transformer_forward.34} parent=0 // loop_pre_header
    _
  $region3: #{transformer_forward.34} parent=0 // loop_header
    %s10 = sphi 0, %s14
    %p11 = scmp.ge.s32.totalorder %s10, 4
    %s17 = sphi 0, %s29
    %s18 = sphi 0, %s25
    %s19 = sphi 0, %s17
    %s20 = sphi 0, %s18
    %s21 = sphi 0, %s19
    %s22 = sphi 0, %s20
    %s34 = sphi 0, %s36
    %s37 = sphi 0, %s34
    %s38 = sphi 0, %s37
    %s54 = sphi 0, %s38
    %s60 = sphi 0, %s62
    %s63 = sphi 0, %s60
    %s64 = sphi 0, %s63
    %s80 = sphi 0, %s64
    %s86 = sphi 0, %s88
    %s89 = sphi 0, %s86
    %s90 = sphi 0, %s89
    %s106 = sphi 0, %s90
    %s112 = sphi 0, %s114
    %s115 = sphi 0, %s112
    %s116 = sphi 0, %s115
    %s132 = sphi 0, %s116
    %s140 = sphi 0, %s142
    %s143 = sphi 0, %s140
    %s144 = sphi 0, %s143
    %s160 = sphi 0, %s144
  $region4: #{transformer_forward.34} parent=0 // loop_header_branch
    %13 = sbr.rel (%p11) target = $region8
  $region5: #{transformer_forward.34} parent=0 // loop_body
    %s15 = ssub.s32 %s10, 1
    %s16 = ssub.s32 %s10, 2
    %s23 = sadd.s32 1, %s18
    %p24 = scmp.ge.s32.totalorder %s23, 1
    %s25 = scalar_select %p24, 0, %s23
    %s26 = sadd.s32 1, %s17
    %s27 = scalar_select %p24, %s26, %s17
    %p28 = scmp.ge.s32.totalorder %s27, 2
    %s29 = scalar_select %p28, 0, %s27
    %s30 = ssub.s32 %s17, %s29
    %s31 = ssub.s32 %s18, %s25
    %s32 = sor.u32 %s30, %s31
    %p33 = scmp.eq.s32.totalorder %s32, 0
    %s35 = sadd.s32 %s34, 1
    %s36 = scalar_select %p33, %s34, %s35
    %p39 = pneg %p33
    %p40 = scmp.eq.s32.totalorder %s10, 1
    %p41 = por %p39, %p40
    %p42 = scmp.ne.s32.totalorder %s34, %s37
    %p43 = scmp.eq.s32.totalorder %s10, 0
    %p44 = por %p42, %p43
    %p45 = scmp.ne.s32.totalorder %s34, %s37
    %p46 = scmp.eq.s32.totalorder %s15, 1
    %p47 = por %p45, %p46
    %p48 = scmp.ne.s32.totalorder %s37, %s38
    %p49 = scmp.eq.s32.totalorder %s15, 0
    %p50 = por %p48, %p49
    %p51 = scmp.ne.s32.totalorder %s37, %s38
    %p52 = scmp.eq.s32.totalorder %s16, 1
    %p53 = por %p51, %p52
    %p55 = scmp.ne.s32.totalorder %s38, %s54
    %p56 = scmp.eq.s32.totalorder %s16, 0
    %p57 = por %p55, %p56
    %s58 = ssub.s32 %s17, %s29
    %p59 = scmp.eq.s32.totalorder %s58, 0
    %s61 = sadd.s32 %s60, 1
    %s62 = scalar_select %p59, %s60, %s61
    %p65 = pneg %p59
    %p66 = scmp.eq.s32.totalorder %s10, 1
    %p67 = por %p65, %p66
    %p68 = scmp.ne.s32.totalorder %s60, %s63
    %p69 = scmp.eq.s32.totalorder %s10, 0
    %p70 = por %p68, %p69
    %p71 = scmp.ne.s32.totalorder %s60, %s63
    %p72 = scmp.eq.s32.totalorder %s15, 1
    %p73 = por %p71, %p72
    %p74 = scmp.ne.s32.totalorder %s63, %s64
    %p75 = scmp.eq.s32.totalorder %s15, 0
    %p76 = por %p74, %p75
    %p77 = scmp.ne.s32.totalorder %s63, %s64
    %p78 = scmp.eq.s32.totalorder %s16, 1
    %p79 = por %p77, %p78
    %p81 = scmp.ne.s32.totalorder %s64, %s80
    %p82 = scmp.eq.s32.totalorder %s16, 0
    %p83 = por %p81, %p82
    %s84 = ssub.s32 %s17, %s29
    %p85 = scmp.eq.s32.totalorder %s84, 0
    %s87 = sadd.s32 %s86, 1
    %s88 = scalar_select %p85, %s86, %s87
    %p91 = pneg %p85
    %p92 = scmp.eq.s32.totalorder %s10, 1
    %p93 = por %p91, %p92
    %p94 = scmp.ne.s32.totalorder %s86, %s89
    %p95 = scmp.eq.s32.totalorder %s10, 0
    %p96 = por %p94, %p95
    %p97 = scmp.ne.s32.totalorder %s86, %s89
    %p98 = scmp.eq.s32.totalorder %s15, 1
    %p99 = por %p97, %p98
    %p100 = scmp.ne.s32.totalorder %s89, %s90
    %p101 = scmp.eq.s32.totalorder %s15, 0
    %p102 = por %p100, %p101
    %p103 = scmp.ne.s32.totalorder %s89, %s90
    %p104 = scmp.eq.s32.totalorder %s16, 1
    %p105 = por %p103, %p104
    %p107 = scmp.ne.s32.totalorder %s90, %s106
    %p108 = scmp.eq.s32.totalorder %s16, 0
    %p109 = por %p107, %p108
    %s110 = ssub.s32 %s17, %s29
    %p111 = scmp.eq.s32.totalorder %s110, 0
    %s113 = sadd.s32 %s112, 1
    %s114 = scalar_select %p111, %s112, %s113
    %p117 = pneg %p111
    %p118 = scmp.eq.s32.totalorder %s10, 1
    %p119 = por %p117, %p118
    %p120 = scmp.ne.s32.totalorder %s112, %s115
    %p121 = scmp.eq.s32.totalorder %s10, 0
    %p122 = por %p120, %p121
    %p123 = scmp.ne.s32.totalorder %s112, %s115
    %p124 = scmp.eq.s32.totalorder %s15, 1
    %p125 = por %p123, %p124
    %p126 = scmp.ne.s32.totalorder %s115, %s116
    %p127 = scmp.eq.s32.totalorder %s15, 0
    %p128 = por %p126, %p127
    %p129 = scmp.ne.s32.totalorder %s115, %s116
    %p130 = scmp.eq.s32.totalorder %s16, 1
    %p131 = por %p129, %p130
    %p133 = scmp.ne.s32.totalorder %s116, %s132
    %p134 = scmp.eq.s32.totalorder %s16, 0
    %p135 = por %p133, %p134
    %s136 = ssub.s32 %s17, %s29
    %s137 = ssub.s32 %s18, %s25
    %s138 = sor.u32 %s136, %s137
    %p139 = scmp.eq.s32.totalorder %s138, 0
    %s141 = sadd.s32 %s140, 1
    %s142 = scalar_select %p139, %s140, %s141
    %p145 = pneg %p139
    %p146 = scmp.eq.s32.totalorder %s10, 1
    %p147 = por %p145, %p146
    %p148 = scmp.ne.s32.totalorder %s140, %s143
    %p149 = scmp.eq.s32.totalorder %s10, 0
    %p150 = por %p148, %p149
    %p151 = scmp.ne.s32.totalorder %s140, %s143
    %p152 = scmp.eq.s32.totalorder %s15, 1
    %p153 = por %p151, %p152
    %p154 = scmp.ne.s32.totalorder %s143, %s144
    %p155 = scmp.eq.s32.totalorder %s15, 0
    %p156 = por %p154, %p155
    %p157 = scmp.ne.s32.totalorder %s143, %s144
    %p158 = scmp.eq.s32.totalorder %s16, 1
    %p159 = por %p157, %p158
    %p161 = scmp.ne.s32.totalorder %s144, %s160
    %p162 = scmp.eq.s32.totalorder %s16, 0
    %p163 = por %p161, %p162
    %p164 = scmp.le.s32.totalorder 1, %s10
    %p165 = scmp.lt.s32.totalorder %s10, 3
    %p166 = pnand %p164, %p165
    %p167 = pneg %p166
    // Predicated region
    $region9: #{transformer_forward.34} parent=5 // pred_check
      _
    $region10: #{transformer_forward.34} parent=5 // pred_check_branch
      %169 = sbr.rel (%p166) target = $region12
    $region11: #{transformer_forward.34} parent=5 // pred_region
      %s170 = ssub.s32 %s10, 1
    $region12: #{transformer_forward.34} parent=5 // pred_fallthru
      _
    %p171 = scmp.lt.s32.totalorder %s10, 2
    // Predicated region
    $region13: #{transformer_forward.34} parent=5 // pred_check
      %p172 = pneg %p171
    $region14: #{transformer_forward.34} parent=5 // pred_check_branch
      %174 = sbr.rel (%p172) target = $region16
    $region15: #{transformer_forward.34} parent=5 // pred_region
      // Predicated region
      $region17: #{transformer_forward.34} parent=15 // pred_check
        %p175 = pneg %p44
      $region18: #{transformer_forward.34} parent=15 // pred_check_branch
        %177 = sbr.rel (%p175) target = $region20
      $region19: #{transformer_forward.34} parent=15 // pred_region
        %s178 = smul.u32 2, %s18
        %p179 = scmp.lt.s32.totalorder %s17, 1
        %s180 = scalar_select %p179, %s17, 1
        %p181 = scmp.lt.s32.totalorder %s178, 1
        %s182 = scalar_select %p181, %s178, 1
        %s183 = smul.addr %s180, 2
        %s184 = sadd.s32 %s182, %s183
        %s185 = smul.addr %s184, 4
        %s186 = scalar_lea.vmem %s0, %s185
        %s187 = smul.u32 2, %s18
      $region20: #{transformer_forward.34} parent=15 // pred_fallthru
        _
      // Predicated region
      $region21: #{transformer_forward.34} parent=15 // pred_check
        %p188 = pneg %p70
      $region22: #{transformer_forward.34} parent=15 // pred_check_branch
        %190 = sbr.rel (%p188) target = $region24
      $region23: #{transformer_forward.34} parent=15 // pred_region
        %p191 = scmp.lt.s32.totalorder %s17, 1
        %s192 = scalar_select %p191, %s17, 1
        %s193 = smul.addr %s192, 2
        %s194 = smul.addr %s193, 4
        %s195 = scalar_lea.vmem %s1, %s194
      $region24: #{transformer_forward.34} parent=15 // pred_fallthru
        _
      // Predicated region
      $region25: #{transformer_forward.34} parent=15 // pred_check
        %p196 = pneg %p96
      $region26: #{transformer_forward.34} parent=15 // pred_check_branch
        %198 = sbr.rel (%p196) target = $region28
      $region27: #{transformer_forward.34} parent=15 // pred_region
        %p199 = scmp.lt.s32.totalorder %s17, 1
        %s200 = scalar_select %p199, %s17, 1
        %s201 = smul.addr %s200, 2
        %s202 = smul.addr %s201, 4
        %s203 = scalar_lea.vmem %s2, %s202
      $region28: #{transformer_forward.34} parent=15 // pred_fallthru
        _
      // Predicated region
      $region29: #{transformer_forward.34} parent=15 // pred_check
        %p204 = pneg %p122
      $region30: #{transformer_forward.34} parent=15 // pred_check_branch
        %206 = sbr.rel (%p204) target = $region32
      $region31: #{transformer_forward.34} parent=15 // pred_region
        %p207 = scmp.lt.s32.totalorder %s17, 1
        %s208 = scalar_select %p207, %s17, 1
        %s209 = scalar_lea.vmem %s3, %s208
      $region32: #{transformer_forward.34} parent=15 // pred_fallthru
        _
    $region16: #{transformer_forward.34} parent=5 // pred_fallthru
      _
    %p210 = scmp.le.s32.totalorder 1, %s10
    %p211 = scmp.lt.s32.totalorder %s10, 3
    %p212 = pnand %p210, %p211
    %p213 = pneg %p212
    // Predicated region
    $region33: #{transformer_forward.34} parent=5 // pred_check
      _
    $region34: #{transformer_forward.34} parent=5 // pred_check_branch
      %215 = sbr.rel (%p212) target = $region36
    $region35: #{transformer_forward.34} parent=5 // pred_region
      %s216 = ssub.s32 %s10, 1
      %s217 = smul.u32 2, %s20
      %p218 = scmp.lt.s32.totalorder %s19, 1
      %s219 = scalar_select %p218, %s19, 1
      %p220 = scmp.lt.s32.totalorder %s217, 1
      %s221 = scalar_select %p220, %s217, 1
      %s222 = smul.addr %s219, 2
      %s223 = sadd.s32 %s221, %s222
      %s224 = smul.addr %s223, 4
      %s225 = scalar_lea.vmem %s0, %s224
      %p226 = pneg %p50
      %p227 = pneg %p47
      %p228 = scmp.lt.s32.totalorder %s19, 1
      %s229 = scalar_select %p228, %s19, 1
      %s230 = smul.addr %s229, 2
      %s231 = smul.addr %s230, 4
      %s232 = scalar_lea.vmem %s1, %s231
      %p233 = pneg %p76
      %p234 = pneg %p73
      %p235 = scmp.lt.s32.totalorder %s19, 1
      %s236 = scalar_select %p235, %s19, 1
      %s237 = smul.addr %s236, 2
      %s238 = smul.addr %s237, 4
      %s239 = scalar_lea.vmem %s2, %s238
      %p240 = pneg %p102
      %p241 = pneg %p99
      %p242 = scmp.lt.s32.totalorder %s19, 1
      %s243 = scalar_select %p242, %s19, 1
      %s244 = scalar_lea.vmem %s3, %s243
      %p245 = pneg %p128
      %p246 = pneg %p125
      %p247 = pneg %p156
      %p248 = pneg %p153
      %s249 = smul.u32 2, %s20
      %p250 = scmp.lt.s32.totalorder %s19, 1
      %s251 = scalar_select %p250, %s19, 1
      %p252 = scmp.lt.s32.totalorder %s249, 1
      %s253 = scalar_select %p252, %s249, 1
      %s254 = smul.addr %s251, 2
      %s255 = sadd.s32 %s253, %s254
      %s256 = smul.addr %s255, 8
      %s257 = scalar_lea.vmem %s4, %s256
      %s258 = smul.u32 2, %s20
      %p259 = scmp.lt.s32.totalorder %s19, 1
      %s260 = scalar_select %p259, %s19, 1
      %p261 = scmp.lt.s32.totalorder %s258, 1
      %s262 = scalar_select %p261, %s258, 1
      %s263 = smul.addr %s260, 2
      %s264 = sadd.s32 %s262, %s263
      %s265 = smul.addr %s264, 4
      %s266 = scalar_lea.vmem %s0, %s265
      %s267 = smul.u32 2, %s20
      %p268 = scmp.lt.s32.totalorder %s19, 1
      %s269 = scalar_select %p268, %s19, 1
      %s270 = smul.addr %s269, 2
      %s271 = smul.addr %s270, 4
      %s272 = scalar_lea.vmem %s1, %s271
      %p273 = scmp.lt.s32.totalorder %s19, 1
      %s274 = scalar_select %p273, %s19, 1
      %s275 = smul.addr %s274, 2
      %s276 = smul.addr %s275, 4
      %s277 = scalar_lea.vmem %s2, %s276
      %p278 = scmp.lt.s32.totalorder %s19, 1
      %s279 = scalar_select %p278, %s19, 1
      %s280 = scalar_lea.vmem %s3, %s279
      %s281 = smul.u32 2, %s20
      %p282 = scmp.lt.s32.totalorder %s19, 1
      %s283 = scalar_select %p282, %s19, 1
      %p284 = scmp.lt.s32.totalorder %s281, 1
      %s285 = scalar_select %p284, %s281, 1
      %s286 = smul.addr %s283, 2
      %s287 = sadd.s32 %s285, %s286
      %s288 = smul.addr %s287, 8
      %s289 = scalar_lea.vmem %s4, %s288
      %s290 = smul.u32 2, %s20
      %v292 = vld [vmem:[%s266] sm:$0xf]
      %v293 = vld [vmem:[%s266 + $0x4] sm:$0xf]
      %v294 = vld [vmem:[%s272] sm:$0xf]
      %v295 = vld [vmem:[%s272 + $0x4] sm:$0xf]
      %v296 = vld [vmem:[%s277] sm:$0xf]
      %v297 = vld [vmem:[%s277 + $0x4] sm:$0xf]
      %v298 = vld [vmem:[%s280] sm:$0x1]
      %v301 = vunpack.c.l.b16 %v292
      %v302 = vunpack.c.l.b16 %v293
      %v303 = vpack.c.b16 %v302, %v301
      %v306 = vunpack.c.l.b16 %v294
      %v307 = vunpack.c.l.b16 %v295
      %v308 = vpack.c.b16 %v307, %v306
      %vm309 = vcmask 261120
      %v311 = vsel %vm309, %v303, 0
      %v314 = vsel %vm309, %v308, 0
      %316 = vmatprep.subr.bf16.mxu0 0
      %317 = vmatpush1.bf16.xpose.msra.mxu0 %v314
      %318 = vmatprep.subr.bf16.mxu0 0
      %319 = vmatpush1.bf16.xpose.msra.mxu0 0
      %320 = vmatprep.subr.bf16.mxu0 0
      %321 = vmatpush1.bf16.xpose.msra.mxu0 0
      %322 = vmatprep.subr.bf16.mxu0 0
      %323 = vmatpush1.bf16.xpose.msra.mxu0 0
      %324 = vmatprep.subr.bf16.mxu0 0
      %325 = vmatpush1.bf16.xpose.msra.mxu0 0
      %326 = vmatprep.subr.bf16.mxu0 0
      %327 = vmatpush1.bf16.xpose.msra.mxu0 0
      %328 = vmatprep.subr.bf16.mxu0 0
      %329 = vmatpush1.bf16.xpose.msra.mxu0 0
      %330 = vmatprep.subr.bf16.mxu0 0
      %331 = vmatpush1.bf16.xpose.msra.mxu0 0
      %332 = vmatprep.subr.bf16.mxu0 0
      %333 = vmatpush1.bf16.xpose.msra.mxu0 0
      %334 = vmatprep.subr.bf16.mxu0 0
      %335 = vmatpush1.bf16.xpose.msra.mxu0 0
      %336 = vmatprep.subr.bf16.mxu0 0
      %337 = vmatpush1.bf16.xpose.msra.mxu0 0
      %338 = vmatprep.subr.bf16.mxu0 0
      %339 = vmatpush1.bf16.xpose.msra.mxu0 0
      %340 = vmatprep.subr.bf16.mxu0 0
      %341 = vmatpush1.bf16.xpose.msra.mxu0 0
      %342 = vmatprep.subr.bf16.mxu0 0
      %343 = vmatpush1.bf16.xpose.msra.mxu0 0
      %344 = vmatprep.subr.bf16.mxu0 0
      %345 = vmatpush1.bf16.xpose.msra.mxu0 0
      %346 = vmatprep.subr.bf16.mxu0 0
      %347 = vmatpush1.bf16.xpose.msra.mxu0 0
      %348 = vmatprep.mubr.bf16.mxu0 0
      %349 = vmatmul.mubr.bf16.gmra.mrb[0].mxu0 %v311
      %v350 = vpop.f32.mrb[0].mxu0
      %v351 = vadd.f32 0.0, %v350
      %v352 = vpop.f32.mrb[0].mxu0
      %v353 = vpop.f32.mrb[0].mxu0
      %v354 = vadd.f32 0.0, %v353
      %v355 = vpop.f32.mrb[0].mxu0
      %356 = vdwg.mxu0
      %v357 = vmul.f32 %v351, 0.17677669
      %v358 = vmul.f32 %v354, 0.17677669
      %v360 = vlaneseq
      %v361 = vshrl.u32 %v360, 7
      %v362 = vsub.s32 0, %v361
      %v363 = vrot.slane %v298, %v362
      %v365 = vadd.f32 %v357, %v363
      %v366 = vadd.f32 %v358, %v363
      %vm367 = vcmask 130048
      %v368 = vsel %vm367, %v365, -inf
      %369 = vmax.xlane.f32.xlu0 %v368
      %v370 = vpop.xlane.xlu0 %369
      %v371 = vsel %vm367, %v366, -inf
      %372 = vmax.xlane.f32.xlu0 %v371
      %v373 = vpop.xlane.xlu0 %372
      %v374 = vsub.f32 %v365, %v370
      %v375 = vsub.f32 %v366, %v373
      %v376 = vmul.f32 %v374, 1.442695
      %v377 = vpow.pop %v376
      %v378 = vmul.f32 %v375, 1.442695
      %v379 = vpow.pop %v378
      %v380 = vsel %vm367, %v377, 0.0
      %381 = vadd.xlane.f32.xlu0 %v380
      %v382 = vpop.xlane.xlu0 %381
      %v383 = vsel %vm367, %v379, 0.0
      %384 = vadd.xlane.f32.xlu0 %v383
      %v385 = vpop.xlane.xlu0 %384
      %v386 = vrcp.pop %v382
      %v387 = vrcp.pop %v385
      %v388 = vmul.f32 %v377, %v386
      %v389 = vmul.f32 %v379, %v387
      %v390 = vpack.c.bf16 %v389, %v388
      %v393 = vunpack.c.l.b16 %v296
      %v394 = vunpack.c.l.b16 %v297
      %v395 = vpack.c.b16 %v394, %v393
      %v398 = vsel %vm367, %v390, 0
      %400 = vmatprep.subr.bf16.mxu0 0
      %401 = vmatpush1.bf16.msra.mxu0 %v395
      %402 = vmatprep.subr.bf16.mxu0 0
      %403 = vmatpush1.bf16.msra.mxu0 0
      %404 = vmatprep.subr.bf16.mxu0 0
      %405 = vmatpush1.bf16.msra.mxu0 0
      %406 = vmatprep.subr.bf16.mxu0 0
      %407 = vmatpush1.bf16.msra.mxu0 0
      %408 = vmatprep.subr.bf16.mxu0 0
      %409 = vmatpush1.bf16.msra.mxu0 0
      %410 = vmatprep.subr.bf16.mxu0 0
      %411 = vmatpush1.bf16.msra.mxu0 0
      %412 = vmatprep.subr.bf16.mxu0 0
      %413 = vmatpush1.bf16.msra.mxu0 0
      %414 = vmatprep.subr.bf16.mxu0 0
      %415 = vmatpush1.bf16.msra.mxu0 0
      %416 = vmatprep.subr.bf16.mxu0 0
      %417 = vmatpush1.bf16.msra.mxu0 0
      %418 = vmatprep.subr.bf16.mxu0 0
      %419 = vmatpush1.bf16.msra.mxu0 0
      %420 = vmatprep.subr.bf16.mxu0 0
      %421 = vmatpush1.bf16.msra.mxu0 0
      %422 = vmatprep.subr.bf16.mxu0 0
      %423 = vmatpush1.bf16.msra.mxu0 0
      %424 = vmatprep.subr.bf16.mxu0 0
      %425 = vmatpush1.bf16.msra.mxu0 0
      %426 = vmatprep.subr.bf16.mxu0 0
      %427 = vmatpush1.bf16.msra.mxu0 0
      %428 = vmatprep.subr.bf16.mxu0 0
      %429 = vmatpush1.bf16.msra.mxu0 0
      %430 = vmatprep.subr.bf16.mxu0 0
      %431 = vmatpush1.bf16.msra.mxu0 0
      %432 = vmatprep.mubr.bf16.mxu0 0
      %433 = vmatmul.mubr.bf16.gmra.mrb[0].mxu0 %v398
      %v434 = vpop.f32.mrb[0].mxu0
      %v435 = vadd.f32 0.0, %v434
      %v436 = vpop.f32.mrb[0].mxu0
      %v437 = vpop.f32.mrb[0].mxu0
      %v438 = vadd.f32 0.0, %v437
      %v439 = vpop.f32.mrb[0].mxu0
      %440 = vdwg.mxu0
      %441 = vrot.lane.b32.xlu0 %v303, 96
      %v442 = vpop.permute.xlu0 %441
      %443 = vrot.lane.b32.xlu0 %v308, 96
      %v444 = vpop.permute.xlu0 %443
      %v446 = vsel %vm309, %v442, 0
      %v449 = vsel %vm309, %v444, 0
      %451 = vmatprep.subr.bf16.mxu0 0
      %452 = vmatpush1.bf16.xpose.msra.mxu0 %v449
      %453 = vmatprep.subr.bf16.mxu0 0
      %454 = vmatpush1.bf16.xpose.msra.mxu0 0
      %455 = vmatprep.subr.bf16.mxu0 0
      %456 = vmatpush1.bf16.xpose.msra.mxu0 0
      %457 = vmatprep.subr.bf16.mxu0 0
      %458 = vmatpush1.bf16.xpose.msra.mxu0 0
      %459 = vmatprep.subr.bf16.mxu0 0
      %460 = vmatpush1.bf16.xpose.msra.mxu0 0
      %461 = vmatprep.subr.bf16.mxu0 0
      %462 = vmatpush1.bf16.xpose.msra.mxu0 0
      %463 = vmatprep.subr.bf16.mxu0 0
      %464 = vmatpush1.bf16.xpose.msra.mxu0 0
      %465 = vmatprep.subr.bf16.mxu0 0
      %466 = vmatpush1.bf16.xpose.msra.mxu0 0
      %467 = vmatprep.subr.bf16.mxu0 0
      %468 = vmatpush1.bf16.xpose.msra.mxu0 0
      %469 = vmatprep.subr.bf16.mxu0 0
      %470 = vmatpush1.bf16.xpose.msra.mxu0 0
      %471 = vmatprep.subr.bf16.mxu0 0
      %472 = vmatpush1.bf16.xpose.msra.mxu0 0
      %473 = vmatprep.subr.bf16.mxu0 0
      %474 = vmatpush1.bf16.xpose.msra.mxu0 0
      %475 = vmatprep.subr.bf16.mxu0 0
      %476 = vmatpush1.bf16.xpose.msra.mxu0 0
      %477 = vmatprep.subr.bf16.mxu0 0
      %478 = vmatpush1.bf16.xpose.msra.mxu0 0
      %479 = vmatprep.subr.bf16.mxu0 0
      %480 = vmatpush1.bf16.xpose.msra.mxu0 0
      %481 = vmatprep.subr.bf16.mxu0 0
      %482 = vmatpush1.bf16.xpose.msra.mxu0 0
      %483 = vmatprep.mubr.bf16.mxu0 0
      %484 = vmatmul.mubr.bf16.gmra.mrb[0].mxu0 %v446
      %v485 = vpop.f32.mrb[0].mxu0
      %v486 = vadd.f32 0.0, %v485
      %v487 = vpop.f32.mrb[0].mxu0
      %v488 = vpop.f32.mrb[0].mxu0
      %v489 = vadd.f32 0.0, %v488
      %v490 = vpop.f32.mrb[0].mxu0
      %491 = vdwg.mxu0
      %v492 = vmul.f32 %v486, 0.17677669
      %v493 = vmul.f32 %v489, 0.17677669
      %v494 = vadd.f32 %v492, %v363
      %v495 = vadd.f32 %v493, %v363
      %v496 = vsel %vm367, %v494, -inf
      %497 = vmax.xlane.f32.xlu0 %v496
      %v498 = vpop.xlane.xlu0 %497
      %v499 = vsel %vm367, %v495, -inf
      %500 = vmax.xlane.f32.xlu0 %v499
      %v501 = vpop.xlane.xlu0 %500
      %v502 = vsub.f32 %v494, %v498
      %v503 = vsub.f32 %v495, %v501
      %v504 = vmul.f32 %v502, 1.442695
      %v505 = vpow.pop %v504
      %v506 = vmul.f32 %v503, 1.442695
      %v507 = vpow.pop %v506
      %v508 = vsel %vm367, %v505, 0.0
      %509 = vadd.xlane.f32.xlu0 %v508
      %v510 = vpop.xlane.xlu0 %509
      %v511 = vsel %vm367, %v507, 0.0
      %512 = vadd.xlane.f32.xlu0 %v511
      %v513 = vpop.xlane.xlu0 %512
      %v514 = vrcp.pop %v510
      %v515 = vrcp.pop %v513
      %v516 = vmul.f32 %v505, %v514
      %v517 = vmul.f32 %v507, %v515
      %v518 = vpack.c.bf16 %v517, %v516
      %519 = vrot.lane.b32.xlu0 %v395, 96
      %v520 = vpop.permute.xlu0 %519
      %v523 = vsel %vm367, %v518, 0
      %525 = vmatprep.subr.bf16.mxu0 0
      %526 = vmatpush1.bf16.msra.mxu0 %v520
      %527 = vmatprep.subr.bf16.mxu0 0
      %528 = vmatpush1.bf16.msra.mxu0 0
      %529 = vmatprep.subr.bf16.mxu0 0
      %530 = vmatpush1.bf16.msra.mxu0 0
      %531 = vmatprep.subr.bf16.mxu0 0
      %532 = vmatpush1.bf16.msra.mxu0 0
      %533 = vmatprep.subr.bf16.mxu0 0
      %534 = vmatpush1.bf16.msra.mxu0 0
      %535 = vmatprep.subr.bf16.mxu0 0
      %536 = vmatpush1.bf16.msra.mxu0 0
      %537 = vmatprep.subr.bf16.mxu0 0
      %538 = vmatpush1.bf16.msra.mxu0 0
      %539 = vmatprep.subr.bf16.mxu0 0
      %540 = vmatpush1.bf16.msra.mxu0 0
      %541 = vmatprep.subr.bf16.mxu0 0
      %542 = vmatpush1.bf16.msra.mxu0 0
      %543 = vmatprep.subr.bf16.mxu0 0
      %544 = vmatpush1.bf16.msra.mxu0 0
      %545 = vmatprep.subr.bf16.mxu0 0
      %546 = vmatpush1.bf16.msra.mxu0 0
      %547 = vmatprep.subr.bf16.mxu0 0
      %548 = vmatpush1.bf16.msra.mxu0 0
      %549 = vmatprep.subr.bf16.mxu0 0
      %550 = vmatpush1.bf16.msra.mxu0 0
      %551 = vmatprep.subr.bf16.mxu0 0
      %552 = vmatpush1.bf16.msra.mxu0 0
      %553 = vmatprep.subr.bf16.mxu0 0
      %554 = vmatpush1.bf16.msra.mxu0 0
      %555 = vmatprep.subr.bf16.mxu0 0
      %556 = vmatpush1.bf16.msra.mxu0 0
      %557 = vmatprep.mubr.bf16.mxu0 0
      %558 = vmatmul.mubr.bf16.gmra.mrb[0].mxu0 %v523
      %v559 = vpop.f32.mrb[0].mxu0
      %v560 = vadd.f32 0.0, %v559
      %v561 = vpop.f32.mrb[0].mxu0
      %v562 = vpop.f32.mrb[0].mxu0
      %v563 = vadd.f32 0.0, %v562
      %v564 = vpop.f32.mrb[0].mxu0
      %565 = vdwg.mxu0
      %566 = vrot.lane.b32.xlu0 %v303, 64
      %v567 = vpop.permute.xlu0 %566
      %568 = vrot.lane.b32.xlu0 %v308, 64
      %v569 = vpop.permute.xlu0 %568
      %v571 = vsel %vm309, %v567, 0
      %v574 = vsel %vm309, %v569, 0
      %576 = vmatprep.subr.bf16.mxu0 0
      %577 = vmatpush1.bf16.xpose.msra.mxu0 %v574
      %578 = vmatprep.subr.bf16.mxu0 0
      %579 = vmatpush1.bf16.xpose.msra.mxu0 0
      %580 = vmatprep.subr.bf16.mxu0 0
      %581 = vmatpush1.bf16.xpose.msra.mxu0 0
      %582 = vmatprep.subr.bf16.mxu0 0
      %583 = vmatpush1.bf16.xpose.msra.mxu0 0
      %584 = vmatprep.subr.bf16.mxu0 0
      %585 = vmatpush1.bf16.xpose.msra.mxu0 0
      %586 = vmatprep.subr.bf16.mxu0 0
      %587 = vmatpush1.bf16.xpose.msra.mxu0 0
      %588 = vmatprep.subr.bf16.mxu0 0
      %589 = vmatpush1.bf16.xpose.msra.mxu0 0
      %590 = vmatprep.subr.bf16.mxu0 0
      %591 = vmatpush1.bf16.xpose.msra.mxu0 0
      %592 = vmatprep.subr.bf16.mxu0 0
      %593 = vmatpush1.bf16.xpose.msra.mxu0 0
      %594 = vmatprep.subr.bf16.mxu0 0
      %595 = vmatpush1.bf16.xpose.msra.mxu0 0
      %596 = vmatprep.subr.bf16.mxu0 0
      %597 = vmatpush1.bf16.xpose.msra.mxu0 0
      %598 = vmatprep.subr.bf16.mxu0 0
      %599 = vmatpush1.bf16.xpose.msra.mxu0 0
      %600 = vmatprep.subr.bf16.mxu0 0
      %601 = vmatpush1.bf16.xpose.msra.mxu0 0
      %602 = vmatprep.subr.bf16.mxu0 0
      %603 = vmatpush1.bf16.xpose.msra.mxu0 0
      %604 = vmatprep.subr.bf16.mxu0 0
      %605 = vmatpush1.bf16.xpose.msra.mxu0 0
      %606 = vmatprep.subr.bf16.mxu0 0
      %607 = vmatpush1.bf16.xpose.msra.mxu0 0
      %608 = vmatprep.mubr.bf16.mxu0 0
      %609 = vmatmul.mubr.bf16.gmra.mrb[0].mxu0 %v571
      %v610 = vpop.f32.mrb[0].mxu0
      %v611 = vadd.f32 0.0, %v610
      %v612 = vpop.f32.mrb[0].mxu0
      %v613 = vpop.f32.mrb[0].mxu0
      %v614 = vadd.f32 0.0, %v613
      %v615 = vpop.f32.mrb[0].mxu0
      %616 = vdwg.mxu0
      %v617 = vmul.f32 %v611, 0.17677669
      %v618 = vmul.f32 %v614, 0.17677669
      %v619 = vadd.f32 %v617, %v363
      %v620 = vadd.f32 %v618, %v363
      %v621 = vsel %vm367, %v619, -inf
      %622 = vmax.xlane.f32.xlu0 %v621
      %v623 = vpop.xlane.xlu0 %622
      %v624 = vsel %vm367, %v620, -inf
      %625 = vmax.xlane.f32.xlu0 %v624
      %v626 = vpop.xlane.xlu0 %625
      %v627 = vsub.f32 %v619, %v623
      %v628 = vsub.f32 %v620, %v626
      %v629 = vmul.f32 %v627, 1.442695
      %v630 = vpow.pop %v629
      %v631 = vmul.f32 %v628, 1.442695
      %v632 = vpow.pop %v631
      %v633 = vsel %vm367, %v630, 0.0
      %634 = vadd.xlane.f32.xlu0 %v633
      %v635 = vpop.xlane.xlu0 %634
      %v636 = vsel %vm367, %v632, 0.0
      %637 = vadd.xlane.f32.xlu0 %v636
      %v638 = vpop.xlane.xlu0 %637
      %v639 = vrcp.pop %v635
      %v640 = vrcp.pop %v638
      %v641 = vmul.f32 %v630, %v639
      %v642 = vmul.f32 %v632, %v640
      %v643 = vpack.c.bf16 %v642, %v641
      %644 = vrot.lane.b32.xlu0 %v395, 64
      %v645 = vpop.permute.xlu0 %644
      %v648 = vsel %vm367, %v643, 0
      %650 = vmatprep.subr.bf16.mxu0 0
      %651 = vmatpush1.bf16.msra.mxu0 %v645
      %652 = vmatprep.subr.bf16.mxu0 0
      %653 = vmatpush1.bf16.msra.mxu0 0
      %654 = vmatprep.subr.bf16.mxu0 0
      %655 = vmatpush1.bf16.msra.mxu0 0
      %656 = vmatprep.subr.bf16.mxu0 0
      %657 = vmatpush1.bf16.msra.mxu0 0
      %658 = vmatprep.subr.bf16.mxu0 0
      %659 = vmatpush1.bf16.msra.mxu0 0
      %660 = vmatprep.subr.bf16.mxu0 0
      %661 = vmatpush1.bf16.msra.mxu0 0
      %662 = vmatprep.subr.bf16.mxu0 0
      %663 = vmatpush1.bf16.msra.mxu0 0
      %664 = vmatprep.subr.bf16.mxu0 0
      %665 = vmatpush1.bf16.msra.mxu0 0
      %666 = vmatprep.subr.bf16.mxu0 0
      %667 = vmatpush1.bf16.msra.mxu0 0
      %668 = vmatprep.subr.bf16.mxu0 0
      %669 = vmatpush1.bf16.msra.mxu0 0
      %670 = vmatprep.subr.bf16.mxu0 0
      %671 = vmatpush1.bf16.msra.mxu0 0
      %672 = vmatprep.subr.bf16.mxu0 0
      %673 = vmatpush1.bf16.msra.mxu0 0
      %674 = vmatprep.subr.bf16.mxu0 0
      %675 = vmatpush1.bf16.msra.mxu0 0
      %676 = vmatprep.subr.bf16.mxu0 0
      %677 = vmatpush1.bf16.msra.mxu0 0
      %678 = vmatprep.subr.bf16.mxu0 0
      %679 = vmatpush1.bf16.msra.mxu0 0
      %680 = vmatprep.subr.bf16.mxu0 0
      %681 = vmatpush1.bf16.msra.mxu0 0
      %682 = vmatprep.mubr.bf16.mxu0 0
      %683 = vmatmul.mubr.bf16.gmra.mrb[0].mxu0 %v648
      %v684 = vpop.f32.mrb[0].mxu0
      %v685 = vadd.f32 0.0, %v684
      %v686 = vpop.f32.mrb[0].mxu0
      %v687 = vpop.f32.mrb[0].mxu0
      %v688 = vadd.f32 0.0, %v687
      %v689 = vpop.f32.mrb[0].mxu0
      %690 = vdwg.mxu0
      %691 = vrot.lane.b32.xlu0 %v303, 32
      %v692 = vpop.permute.xlu0 %691
      %693 = vrot.lane.b32.xlu0 %v308, 32
      %v694 = vpop.permute.xlu0 %693
      %v696 = vsel %vm309, %v692, 0
      %v699 = vsel %vm309, %v694, 0
      %701 = vmatprep.subr.bf16.mxu0 0
      %702 = vmatpush1.bf16.xpose.msra.mxu0 %v699
      %703 = vmatprep.subr.bf16.mxu0 0
      %704 = vmatpush1.bf16.xpose.msra.mxu0 0
      %705 = vmatprep.subr.bf16.mxu0 0
      %706 = vmatpush1.bf16.xpose.msra.mxu0 0
      %707 = vmatprep.subr.bf16.mxu0 0
      %708 = vmatpush1.bf16.xpose.msra.mxu0 0
      %709 = vmatprep.subr.bf16.mxu0 0
      %710 = vmatpush1.bf16.xpose.msra.mxu0 0
      %711 = vmatprep.subr.bf16.mxu0 0
      %712 = vmatpush1.bf16.xpose.msra.mxu0 0
      %713 = vmatprep.subr.bf16.mxu0 0
      %714 = vmatpush1.bf16.xpose.msra.mxu0 0
      %715 = vmatprep.subr.bf16.mxu0 0
      %716 = vmatpush1.bf16.xpose.msra.mxu0 0
      %717 = vmatprep.subr.bf16.mxu0 0
      %718 = vmatpush1.bf16.xpose.msra.mxu0 0
      %719 = vmatprep.subr.bf16.mxu0 0
      %720 = vmatpush1.bf16.xpose.msra.mxu0 0
      %721 = vmatprep.subr.bf16.mxu0 0
      %722 = vmatpush1.bf16.xpose.msra.mxu0 0
      %723 = vmatprep.subr.bf16.mxu0 0
      %724 = vmatpush1.bf16.xpose.msra.mxu0 0
      %725 = vmatprep.subr.bf16.mxu0 0
      %726 = vmatpush1.bf16.xpose.msra.mxu0 0
      %727 = vmatprep.subr.bf16.mxu0 0
      %728 = vmatpush1.bf16.xpose.msra.mxu0 0
      %729 = vmatprep.subr.bf16.mxu0 0
      %730 = vmatpush1.bf16.xpose.msra.mxu0 0
      %731 = vmatprep.subr.bf16.mxu0 0
      %732 = vmatpush1.bf16.xpose.msra.mxu0 0
      %733 = vmatprep.mubr.bf16.mxu0 0
      %734 = vmatmul.mubr.bf16.gmra.mrb[0].mxu0 %v696
      %v735 = vpop.f32.mrb[0].mxu0
      %v736 = vadd.f32 0.0, %v735
      %v737 = vpop.f32.mrb[0].mxu0
      %v738 = vpop.f32.mrb[0].mxu0
      %v739 = vadd.f32 0.0, %v738
      %v740 = vpop.f32.mrb[0].mxu0
      %741 = vdwg.mxu0
      %v742 = vmul.f32 %v736, 0.17677669
      %v743 = vmul.f32 %v739, 0.17677669
      %v744 = vadd.f32 %v742, %v363
      %v745 = vadd.f32 %v743, %v363
      %v746 = vsel %vm367, %v744, -inf
      %747 = vmax.xlane.f32.xlu0 %v746
      %v748 = vpop.xlane.xlu0 %747
      %v749 = vsel %vm367, %v745, -inf
      %750 = vmax.xlane.f32.xlu0 %v749
      %v751 = vpop.xlane.xlu0 %750
      %v752 = vsub.f32 %v744, %v748
      %v753 = vsub.f32 %v745, %v751
      %v754 = vmul.f32 %v752, 1.442695
      %v755 = vpow.pop %v754
      %v756 = vmul.f32 %v753, 1.442695
      %v757 = vpow.pop %v756
      %v758 = vsel %vm367, %v755, 0.0
      %759 = vadd.xlane.f32.xlu0 %v758
      %v760 = vpop.xlane.xlu0 %759
      %v761 = vsel %vm367, %v757, 0.0
      %762 = vadd.xlane.f32.xlu0 %v761
      %v763 = vpop.xlane.xlu0 %762
      %v764 = vrcp.pop %v760
      %v765 = vrcp.pop %v763
      %v766 = vmul.f32 %v755, %v764
      %v767 = vmul.f32 %v757, %v765
      %v768 = vpack.c.bf16 %v767, %v766
      %769 = vrot.lane.b32.xlu0 %v395, 32
      %v770 = vpop.permute.xlu0 %769
      %v773 = vsel %vm367, %v768, 0
      %775 = vmatprep.subr.bf16.mxu0 0
      %776 = vmatpush1.bf16.msra.mxu0 %v770
      %777 = vmatprep.subr.bf16.mxu0 0
      %778 = vmatpush1.bf16.msra.mxu0 0
      %779 = vmatprep.subr.bf16.mxu0 0
      %780 = vmatpush1.bf16.msra.mxu0 0
      %781 = vmatprep.subr.bf16.mxu0 0
      %782 = vmatpush1.bf16.msra.mxu0 0
      %783 = vmatprep.subr.bf16.mxu0 0
      %784 = vmatpush1.bf16.msra.mxu0 0
      %785 = vmatprep.subr.bf16.mxu0 0
      %786 = vmatpush1.bf16.msra.mxu0 0
      %787 = vmatprep.subr.bf16.mxu0 0
      %788 = vmatpush1.bf16.msra.mxu0 0
      %789 = vmatprep.subr.bf16.mxu0 0
      %790 = vmatpush1.bf16.msra.mxu0 0
      %791 = vmatprep.subr.bf16.mxu0 0
      %792 = vmatpush1.bf16.msra.mxu0 0
      %793 = vmatprep.subr.bf16.mxu0 0
      %794 = vmatpush1.bf16.msra.mxu0 0
      %795 = vmatprep.subr.bf16.mxu0 0
      %796 = vmatpush1.bf16.msra.mxu0 0
      %797 = vmatprep.subr.bf16.mxu0 0
      %798 = vmatpush1.bf16.msra.mxu0 0
      %799 = vmatprep.subr.bf16.mxu0 0
      %800 = vmatpush1.bf16.msra.mxu0 0
      %801 = vmatprep.subr.bf16.mxu0 0
      %802 = vmatpush1.bf16.msra.mxu0 0
      %803 = vmatprep.subr.bf16.mxu0 0
      %804 = vmatpush1.bf16.msra.mxu0 0
      %805 = vmatprep.subr.bf16.mxu0 0
      %806 = vmatpush1.bf16.msra.mxu0 0
      %807 = vmatprep.mubr.bf16.mxu0 0
      %808 = vmatmul.mubr.bf16.gmra.mrb[0].mxu0 %v773
      %v809 = vpop.f32.mrb[0].mxu0
      %v810 = vadd.f32 0.0, %v809
      %v811 = vpop.f32.mrb[0].mxu0
      %v812 = vpop.f32.mrb[0].mxu0
      %v813 = vadd.f32 0.0, %v812
      %v814 = vpop.f32.mrb[0].mxu0
      %815 = vdwg.mxu0
      %818 = vrot.lane.b32.xlu0 %v560, 32
      %v819 = vpop.permute.xlu0 %818
      %820 = vrot.lane.b32.xlu0 %v563, 32
      %v821 = vpop.permute.xlu0 %820
      %826 = vrot.lane.b32.xlu0 %v685, 64
      %v827 = vpop.permute.xlu0 %826
      %828 = vrot.lane.b32.xlu0 %v688, 64
      %v829 = vpop.permute.xlu0 %828
      %834 = vrot.lane.b32.xlu0 %v810, 96
      %v835 = vpop.permute.xlu0 %834
      %836 = vrot.lane.b32.xlu0 %v813, 96
      %v837 = vpop.permute.xlu0 %836
      %v840 = vsel %vm309, %v435, %v819
      %v841 = vsel %vm309, %v438, %v821
      %vm842 = vcmask 523264
      %v843 = vsel %vm842, %v840, %v827
      %v844 = vsel %vm842, %v841, %v829
      %vm845 = vcmask 785408
      %v846 = vsel %vm845, %v843, %v835
      %v847 = vsel %vm845, %v844, %v837
      %848 = vst [vmem:[%s289] sm:$0xff] %v846
      %849 = vst [vmem:[%s289 + $0x8] sm:$0xff] %v847
      %s850 = smul.u32 2, %s20
      %p851 = scmp.lt.s32.totalorder %s19, 1
      %s852 = scalar_select %p851, %s19, 1
      %p853 = scmp.lt.s32.totalorder %s850, 1
      %s854 = scalar_select %p853, %s850, 1
      %s855 = smul.addr %s852, 2
      %s856 = sadd.s32 %s854, %s855
      %s857 = smul.addr %s856, 8
      %s858 = scalar_lea.vmem %s4, %s857
      // Predicated region
      $region37: #{transformer_forward.34} parent=35 // pred_check
        %p859 = pneg %p153
      $region38: #{transformer_forward.34} parent=35 // pred_check_branch
        %861 = sbr.rel (%p859) target = $region40
      $region39: #{transformer_forward.34} parent=35 // pred_region
        %s862 = smul.u32 2, %s20
      $region40: #{transformer_forward.34} parent=35 // pred_fallthru
        _
    $region36: #{transformer_forward.34} parent=5 // pred_fallthru
      _
    %p863 = scmp.le.s32.totalorder 2, %s10
    // Predicated region
    $region41: #{transformer_forward.34} parent=5 // pred_check
      %p864 = pneg %p863
    $region42: #{transformer_forward.34} parent=5 // pred_check_branch
      %866 = sbr.rel (%p864) target = $region44
    $region43: #{transformer_forward.34} parent=5 // pred_region
      %s867 = ssub.s32 %s10, 2
      // Predicated region
      $region45: #{transformer_forward.34} parent=43 // pred_check
        %p868 = pneg %p159
      $region46: #{transformer_forward.34} parent=43 // pred_check_branch
        %870 = sbr.rel (%p868) target = $region48
      $region47: #{transformer_forward.34} parent=43 // pred_region
        %s871 = smul.u32 2, %s22
        %p872 = scmp.lt.s32.totalorder %s21, 1
        %s873 = scalar_select %p872, %s21, 1
        %p874 = scmp.lt.s32.totalorder %s871, 1
        %s875 = scalar_select %p874, %s871, 1
        %s876 = smul.addr %s873, 2
        %s877 = sadd.s32 %s875, %s876
        %s878 = smul.addr %s877, 8
        %s879 = scalar_lea.vmem %s4, %s878
      $region48: #{transformer_forward.34} parent=43 // pred_fallthru
        _
    $region44: #{transformer_forward.34} parent=5 // pred_fallthru
      _
  $region6: #{transformer_forward.34} parent=0 // loop_footer
    %s14 = sadd.s32 1, %s10
  $region7: #{transformer_forward.34} parent=0 // loop_footer_branch
    %9 = sbr.rel target = $region3
  $region8: #{transformer_forward.34} parent=0 // loop_exit
    _

// kernel: transformer_forward.36
$region0: #{transformer_forward.36}
  #allocation0 [shape = 'u32[]', space=smem, size = 0x4, offset = 0x4, fixed_abs, tag = 'smem constant byte address 0x4 - core index']
  #allocation1 [shape = 'u32[144,128]{1,0:T(1,128)}', space=vmem, size = 0x12000, scoped, tag = 'internal scratch']
  %s0 = inlined_call_operand.vmem [shape: f32[32,128], index: 0, kind: input, shape index: {}]
  %s1 = inlined_call_operand.vmem [shape: f32[32,128], index: 1, kind: input, shape index: {}]
  %s2 = inlined_call_operand.vmem [shape: bf16[128,128], index: 2, kind: input, shape index: {}]
  %s3 = inlined_call_operand.vmem [shape: f32[1,128], index: 3, kind: input, shape index: {}]
  %s4 = inlined_call_operand.vmem [shape: bf16[32,128], index: 4, kind: output, shape index: {}]
  %s5 = sld [smem:[#allocation0]]
  $region26: #{transformer_forward.36} parent=0
    _
  %s7 = ssub.s32 1, %s5
  %s8 = scalar_select 0, %s7, %s5
  // Predicated region
  $region2: #{transformer_forward.36} parent=0 // pred_check
    _
  $region3: #{transformer_forward.36} parent=0 // pred_check_branch
    %10 = sbr.rel (0) target = $region5
  $region4: #{transformer_forward.36} parent=0 // pred_region
    _
  $region5: #{transformer_forward.36} parent=0 // pred_fallthru
    _
  // Predicated region
  $region6: #{transformer_forward.36} parent=0 // pred_check
    _
  $region7: #{transformer_forward.36} parent=0 // pred_check_branch
    %12 = sbr.rel (0) target = $region9
  $region8: #{transformer_forward.36} parent=0 // pred_region
    _
  $region9: #{transformer_forward.36} parent=0 // pred_fallthru
    _
  // Predicated region
  $region10: #{transformer_forward.36} parent=0 // pred_check
    _
  $region11: #{transformer_forward.36} parent=0 // pred_check_branch
    %14 = sbr.rel (0) target = $region13
  $region12: #{transformer_forward.36} parent=0 // pred_region
    _
  $region13: #{transformer_forward.36} parent=0 // pred_fallthru
    _
  // Predicated region
  $region14: #{transformer_forward.36} parent=0 // pred_check
    _
  $region15: #{transformer_forward.36} parent=0 // pred_check_branch
    %16 = sbr.rel (0) target = $region17
  $region16: #{transformer_forward.36} parent=0 // pred_region
    _
  $region17: #{transformer_forward.36} parent=0 // pred_fallthru
    _
  %v18 = vld [vmem:[%s0] sm:$0xff]
  %v19 = vld [vmem:[%s0 + $0x8] sm:$0xff]
  %v20 = vld [vmem:[%s0 + $0x10] sm:$0xff]
  %v21 = vld [vmem:[%s0 + $0x18] sm:$0xff]
  %v22 = vld [vmem:[%s1] sm:$0xff]
  %v23 = vld [vmem:[%s1 + $0x8] sm:$0xff]
  %v24 = vld [vmem:[%s1 + $0x10] sm:$0xff]
  %v25 = vld [vmem:[%s1 + $0x18] sm:$0xff]
  %v26 = vadd.f32 %v18, %v22
  %v27 = vadd.f32 %v19, %v23
  %v28 = vadd.f32 %v20, %v24
  %v29 = vadd.f32 %v21, %v25
  %v30 = vpack.c.bf16 %v27, %v26
  %v31 = vpack.c.bf16 %v29, %v28
  %v32 = vld [vmem:[%s2] sm:$0xf]
  %v33 = vld [vmem:[%s2 + $0x4] sm:$0xf]
  %v34 = vld [vmem:[%s2 + $0x8] sm:$0xf]
  %v35 = vld [vmem:[%s2 + $0xc] sm:$0xf]
  %v36 = vld [vmem:[%s2 + $0x10] sm:$0xf]
  %v37 = vld [vmem:[%s2 + $0x14] sm:$0xf]
  %v38 = vld [vmem:[%s2 + $0x18] sm:$0xf]
  %v39 = vld [vmem:[%s2 + $0x1c] sm:$0xf]
  %v40 = vld [vmem:[%s2 + $0x20] sm:$0xf]
  %v41 = vld [vmem:[%s2 + $0x24] sm:$0xf]
  %v42 = vld [vmem:[%s2 + $0x28] sm:$0xf]
  %v43 = vld [vmem:[%s2 + $0x2c] sm:$0xf]
  %v44 = vld [vmem:[%s2 + $0x30] sm:$0xf]
  %v45 = vld [vmem:[%s2 + $0x34] sm:$0xf]
  %v46 = vld [vmem:[%s2 + $0x38] sm:$0xf]
  %v47 = vld [vmem:[%s2 + $0x3c] sm:$0xf]
  %v48 = vld [vmem:[%s3] sm:$0x1]
  %v50 = vlaneseq
  %v51 = vshrl.u32 %v50, 7
  %v52 = vsub.s32 0, %v51
  %v53 = vrot.slane %v48, %v52
  %v71 = vunpack.c.l.b16 %v32
  %v72 = vunpack.c.l.b16 %v33
  %v73 = vunpack.c.l.b16 %v34
  %v74 = vunpack.c.l.b16 %v35
  %v75 = vunpack.c.l.b16 %v36
  %v76 = vunpack.c.l.b16 %v37
  %v77 = vunpack.c.l.b16 %v38
  %v78 = vunpack.c.l.b16 %v39
  %v79 = vunpack.c.l.b16 %v40
  %v80 = vunpack.c.l.b16 %v41
  %v81 = vunpack.c.l.b16 %v42
  %v82 = vunpack.c.l.b16 %v43
  %v83 = vunpack.c.l.b16 %v44
  %v84 = vunpack.c.l.b16 %v45
  %v85 = vunpack.c.l.b16 %v46
  %v86 = vunpack.c.l.b16 %v47
  %v87 = vpack.c.b16 %v72, %v71
  %v88 = vpack.c.b16 %v74, %v73
  %v89 = vpack.c.b16 %v76, %v75
  %v90 = vpack.c.b16 %v78, %v77
  %v91 = vpack.c.b16 %v80, %v79
  %v92 = vpack.c.b16 %v82, %v81
  %v93 = vpack.c.b16 %v84, %v83
  %v94 = vpack.c.b16 %v86, %v85
  %103 = vmatprep.subr.bf16.mxu0 0
  %104 = vmatpush1.bf16.msra.mxu0 %v87
  %105 = vmatprep.subr.bf16.mxu0 0
  %106 = vmatpush1.bf16.msra.mxu0 %v88
  %107 = vmatprep.subr.bf16.mxu0 0
  %108 = vmatpush1.bf16.msra.mxu0 %v89
  %109 = vmatprep.subr.bf16.mxu0 0
  %110 = vmatpush1.bf16.msra.mxu0 %v90
  %111 = vmatprep.subr.bf16.mxu0 0
  %112 = vmatpush1.bf16.msra.mxu0 %v91
  %113 = vmatprep.subr.bf16.mxu0 0
  %114 = vmatpush1.bf16.msra.mxu0 %v92
  %115 = vmatprep.subr.bf16.mxu0 0
  %116 = vmatpush1.bf16.msra.mxu0 %v93
  %117 = vmatprep.subr.bf16.mxu0 0
  %118 = vmatpush1.bf16.msra.mxu0 %v94
  %119 = vmatprep.subr.bf16.mxu0 0
  %120 = vmatpush1.bf16.msra.mxu0 0
  %121 = vmatprep.subr.bf16.mxu0 0
  %122 = vmatpush1.bf16.msra.mxu0 0
  %123 = vmatprep.subr.bf16.mxu0 0
  %124 = vmatpush1.bf16.msra.mxu0 0
  %125 = vmatprep.subr.bf16.mxu0 0
  %126 = vmatpush1.bf16.msra.mxu0 0
  %127 = vmatprep.subr.bf16.mxu0 0
  %128 = vmatpush1.bf16.msra.mxu0 0
  %129 = vmatprep.subr.bf16.mxu0 0
  %130 = vmatpush1.bf16.msra.mxu0 0
  %131 = vmatprep.subr.bf16.mxu0 0
  %132 = vmatpush1.bf16.msra.mxu0 0
  %133 = vmatprep.subr.bf16.mxu0 0
  %134 = vmatpush1.bf16.msra.mxu0 0
  %135 = vmatprep.mubr.bf16.mxu0 0
  %136 = vmatmul.mubr.bf16.gmra.mrb[0].mxu0 %v30
  %v137 = vpop.f32.mrb[0].mxu0
  %v138 = vadd.f32 %v53, %v137
  %v139 = vpop.f32.mrb[0].mxu0
  %v140 = vpop.f32.mrb[0].mxu0
  %v141 = vadd.f32 %v53, %v140
  %v142 = vpop.f32.mrb[0].mxu0
  %143 = vmatprep.mubr.bf16.mxu0 0
  %144 = vmatmul.mubr.bf16.gmra.mrb[0].mxu0 %v31
  %v145 = vpop.f32.mrb[0].mxu0
  %v146 = vadd.f32 %v53, %v145
  %v147 = vpop.f32.mrb[0].mxu0
  %v148 = vpop.f32.mrb[0].mxu0
  %v149 = vadd.f32 %v53, %v148
  %v150 = vpop.f32.mrb[0].mxu0
  %151 = vdwg.mxu0
  %v152 = vpack.c.bf16 %v141, %v138
  %v153 = vpack.c.bf16 %v149, %v146
  %v156 = vunpack.c.l.b16 %v152
  %v157 = vunpack.c.h.b16 %v152
  %v158 = vunpack.c.l.b16 %v153
  %v159 = vunpack.c.h.b16 %v153
  %v160 = vpack.c.b16 %v156, %v156
  %v161 = vpack.c.b16 %v157, %v157
  %v162 = vpack.c.b16 %v158, %v158
  %v163 = vpack.c.b16 %v159, %v159
  %168 = vst [vmem:[%s4] sm:$0xf] %v160
  %169 = vst [vmem:[%s4 + $0x4] sm:$0xf] %v161
  %170 = vst [vmem:[%s4 + $0x8] sm:$0xf] %v162
  %171 = vst [vmem:[%s4 + $0xc] sm:$0xf] %v163
  // Predicated region
  $region18: #{transformer_forward.36} parent=0 // pred_check
    _
  $region19: #{transformer_forward.36} parent=0 // pred_check_branch
    %173 = sbr.rel (0) target = $region21
  $region20: #{transformer_forward.36} parent=0 // pred_region
    _
  $region21: #{transformer_forward.36} parent=0 // pred_fallthru
    _
  // Predicated region
  $region22: #{transformer_forward.36} parent=0 // pred_check
    _
  $region23: #{transformer_forward.36} parent=0 // pred_check_branch
    %175 = sbr.rel (0) target = $region25
  $region24: #{transformer_forward.36} parent=0 // pred_region
    _
  $region25: #{transformer_forward.36} parent=0 // pred_fallthru
    _

// kernel: transformer_forward.35
$region0: #{transformer_forward.35}
  #allocation0 [shape = 'u32[]', space=smem, size = 0x4, offset = 0x4, fixed_abs, tag = 'smem constant byte address 0x4 - core index']
  #allocation1 [shape = 'u32[144,128]{1,0:T(1,128)}', space=vmem, size = 0x12000, scoped, tag = 'internal scratch']
  %s0 = inlined_call_operand.vmem [shape: f32[32,128], index: 0, kind: input, shape index: {}]
  %s1 = inlined_call_operand.vmem [shape: f32[32,128], index: 1, kind: input, shape index: {}]
  %s2 = inlined_call_operand.vmem [shape: bf16[128,128], index: 2, kind: input, shape index: {}]
  %s3 = inlined_call_operand.vmem [shape: f32[1,128], index: 3, kind: input, shape index: {}]
  %s4 = inlined_call_operand.vmem [shape: f32[1,128], index: 4, kind: input, shape index: {}]
  %s5 = inlined_call_operand.vmem [shape: f32[1,128], index: 5, kind: input, shape index: {}]
  %s6 = inlined_call_operand.vmem [shape: f32[32,128], index: 6, kind: output, shape index: {}]
  %s7 = sld [smem:[#allocation0]]
  $region34: #{transformer_forward.35} parent=0
    _
  %s9 = ssub.s32 1, %s7
  %s10 = scalar_select 0, %s9, %s7
  // Predicated region
  $region2: #{transformer_forward.35} parent=0 // pred_check
    _
  $region3: #{transformer_forward.35} parent=0 // pred_check_branch
    %12 = sbr.rel (0) target = $region5
  $region4: #{transformer_forward.35} parent=0 // pred_region
    _
  $region5: #{transformer_forward.35} parent=0 // pred_fallthru
    _
  // Predicated region
  $region6: #{transformer_forward.35} parent=0 // pred_check
    _
  $region7: #{transformer_forward.35} parent=0 // pred_check_branch
    %14 = sbr.rel (0) target = $region9
  $region8: #{transformer_forward.35} parent=0 // pred_region
    _
  $region9: #{transformer_forward.35} parent=0 // pred_fallthru
    _
  // Predicated region
  $region10: #{transformer_forward.35} parent=0 // pred_check
    _
  $region11: #{transformer_forward.35} parent=0 // pred_check_branch
    %16 = sbr.rel (0) target = $region13
  $region12: #{transformer_forward.35} parent=0 // pred_region
    _
  $region13: #{transformer_forward.35} parent=0 // pred_fallthru
    _
  // Predicated region
  $region14: #{transformer_forward.35} parent=0 // pred_check
    _
  $region15: #{transformer_forward.35} parent=0 // pred_check_branch
    %18 = sbr.rel (0) target = $region17
  $region16: #{transformer_forward.35} parent=0 // pred_region
    _
  $region17: #{transformer_forward.35} parent=0 // pred_fallthru
    _
  // Predicated region
  $region18: #{transformer_forward.35} parent=0 // pred_check
    _
  $region19: #{transformer_forward.35} parent=0 // pred_check_branch
    %20 = sbr.rel (0) target = $region21
  $region20: #{transformer_forward.35} parent=0 // pred_region
    _
  $region21: #{transformer_forward.35} parent=0 // pred_fallthru
    _
  // Predicated region
  $region22: #{transformer_forward.35} parent=0 // pred_check
    _
  $region23: #{transformer_forward.35} parent=0 // pred_check_branch
    %22 = sbr.rel (0) target = $region25
  $region24: #{transformer_forward.35} parent=0 // pred_region
    _
  $region25: #{transformer_forward.35} parent=0 // pred_fallthru
    _
  %v24 = vld [vmem:[%s0] sm:$0xff]
  %v25 = vld [vmem:[%s0 + $0x8] sm:$0xff]
  %v26 = vld [vmem:[%s0 + $0x10] sm:$0xff]
  %v27 = vld [vmem:[%s0 + $0x18] sm:$0xff]
  %v28 = vpack.c.bf16 %v25, %v24
  %v29 = vpack.c.bf16 %v27, %v26
  %v30 = vld [vmem:[%s2] sm:$0xf]
  %v31 = vld [vmem:[%s2 + $0x4] sm:$0xf]
  %v32 = vld [vmem:[%s2 + $0x8] sm:$0xf]
  %v33 = vld [vmem:[%s2 + $0xc] sm:$0xf]
  %v34 = vld [vmem:[%s2 + $0x10] sm:$0xf]
  %v35 = vld [vmem:[%s2 + $0x14] sm:$0xf]
  %v36 = vld [vmem:[%s2 + $0x18] sm:$0xf]
  %v37 = vld [vmem:[%s2 + $0x1c] sm:$0xf]
  %v38 = vld [vmem:[%s2 + $0x20] sm:$0xf]
  %v39 = vld [vmem:[%s2 + $0x24] sm:$0xf]
  %v40 = vld [vmem:[%s2 + $0x28] sm:$0xf]
  %v41 = vld [vmem:[%s2 + $0x2c] sm:$0xf]
  %v42 = vld [vmem:[%s2 + $0x30] sm:$0xf]
  %v43 = vld [vmem:[%s2 + $0x34] sm:$0xf]
  %v44 = vld [vmem:[%s2 + $0x38] sm:$0xf]
  %v45 = vld [vmem:[%s2 + $0x3c] sm:$0xf]
  %v46 = vld [vmem:[%s3] sm:$0x1]
  %v48 = vlaneseq
  %v49 = vshrl.u32 %v48, 7
  %v50 = vsub.s32 0, %v49
  %v51 = vrot.slane %v46, %v50
  %v69 = vunpack.c.l.b16 %v30
  %v70 = vunpack.c.l.b16 %v31
  %v71 = vunpack.c.l.b16 %v32
  %v72 = vunpack.c.l.b16 %v33
  %v73 = vunpack.c.l.b16 %v34
  %v74 = vunpack.c.l.b16 %v35
  %v75 = vunpack.c.l.b16 %v36
  %v76 = vunpack.c.l.b16 %v37
  %v77 = vunpack.c.l.b16 %v38
  %v78 = vunpack.c.l.b16 %v39
  %v79 = vunpack.c.l.b16 %v40
  %v80 = vunpack.c.l.b16 %v41
  %v81 = vunpack.c.l.b16 %v42
  %v82 = vunpack.c.l.b16 %v43
  %v83 = vunpack.c.l.b16 %v44
  %v84 = vunpack.c.l.b16 %v45
  %v85 = vpack.c.b16 %v70, %v69
  %v86 = vpack.c.b16 %v72, %v71
  %v87 = vpack.c.b16 %v74, %v73
  %v88 = vpack.c.b16 %v76, %v75
  %v89 = vpack.c.b16 %v78, %v77
  %v90 = vpack.c.b16 %v80, %v79
  %v91 = vpack.c.b16 %v82, %v81
  %v92 = vpack.c.b16 %v84, %v83
  %101 = vmatprep.subr.bf16.mxu0 0
  %102 = vmatpush1.bf16.msra.mxu0 %v85
  %103 = vmatprep.subr.bf16.mxu0 0
  %104 = vmatpush1.bf16.msra.mxu0 %v86
  %105 = vmatprep.subr.bf16.mxu0 0
  %106 = vmatpush1.bf16.msra.mxu0 %v87
  %107 = vmatprep.subr.bf16.mxu0 0
  %108 = vmatpush1.bf16.msra.mxu0 %v88
  %109 = vmatprep.subr.bf16.mxu0 0
  %110 = vmatpush1.bf16.msra.mxu0 %v89
  %111 = vmatprep.subr.bf16.mxu0 0
  %112 = vmatpush1.bf16.msra.mxu0 %v90
  %113 = vmatprep.subr.bf16.mxu0 0
  %114 = vmatpush1.bf16.msra.mxu0 %v91
  %115 = vmatprep.subr.bf16.mxu0 0
  %116 = vmatpush1.bf16.msra.mxu0 %v92
  %117 = vmatprep.subr.bf16.mxu0 0
  %118 = vmatpush1.bf16.msra.mxu0 0
  %119 = vmatprep.subr.bf16.mxu0 0
  %120 = vmatpush1.bf16.msra.mxu0 0
  %121 = vmatprep.subr.bf16.mxu0 0
  %122 = vmatpush1.bf16.msra.mxu0 0
  %123 = vmatprep.subr.bf16.mxu0 0
  %124 = vmatpush1.bf16.msra.mxu0 0
  %125 = vmatprep.subr.bf16.mxu0 0
  %126 = vmatpush1.bf16.msra.mxu0 0
  %127 = vmatprep.subr.bf16.mxu0 0
  %128 = vmatpush1.bf16.msra.mxu0 0
  %129 = vmatprep.subr.bf16.mxu0 0
  %130 = vmatpush1.bf16.msra.mxu0 0
  %131 = vmatprep.subr.bf16.mxu0 0
  %132 = vmatpush1.bf16.msra.mxu0 0
  %133 = vmatprep.mubr.bf16.mxu0 0
  %134 = vmatmul.mubr.bf16.gmra.mrb[0].mxu0 %v28
  %v135 = vpop.f32.mrb[0].mxu0
  %v136 = vadd.f32 %v51, %v135
  %v137 = vpop.f32.mrb[0].mxu0
  %v138 = vpop.f32.mrb[0].mxu0
  %v139 = vadd.f32 %v51, %v138
  %v140 = vpop.f32.mrb[0].mxu0
  %141 = vmatprep.mubr.bf16.mxu0 0
  %142 = vmatmul.mubr.bf16.gmra.mrb[0].mxu0 %v29
  %v143 = vpop.f32.mrb[0].mxu0
  %v144 = vadd.f32 %v51, %v143
  %v145 = vpop.f32.mrb[0].mxu0
  %v146 = vpop.f32.mrb[0].mxu0
  %v147 = vadd.f32 %v51, %v146
  %v148 = vpop.f32.mrb[0].mxu0
  %149 = vdwg.mxu0
  %v150 = vld [vmem:[%s1] sm:$0xff]
  %v151 = vld [vmem:[%s1 + $0x8] sm:$0xff]
  %v152 = vld [vmem:[%s1 + $0x10] sm:$0xff]
  %v153 = vld [vmem:[%s1 + $0x18] sm:$0xff]
  %v154 = vadd.f32 %v150, %v136
  %v155 = vadd.f32 %v151, %v139
  %v156 = vadd.f32 %v152, %v144
  %v157 = vadd.f32 %v153, %v147
  %v158 = vld [vmem:[%s4] sm:$0x1]
  %v159 = vld [vmem:[%s5] sm:$0x1]
  %160 = vadd.xlane.f32.xlu0 %v154
  %v161 = vpop.xlane.xlu0 %160
  %162 = vadd.xlane.f32.xlu0 %v155
  %v163 = vpop.xlane.xlu0 %162
  %164 = vadd.xlane.f32.xlu0 %v156
  %v165 = vpop.xlane.xlu0 %164
  %166 = vadd.xlane.f32.xlu0 %v157
  %v167 = vpop.xlane.xlu0 %166
  %v168 = vrcp.pop 128.0
  %v169 = vmul.f32 %v161, %v168
  %v170 = vmul.f32 %v163, %v168
  %v171 = vmul.f32 %v165, %v168
  %v172 = vmul.f32 %v167, %v168
  %v173 = vsub.f32 %v154, %v169
  %v174 = vsub.f32 %v155, %v170
  %v175 = vsub.f32 %v156, %v171
  %v176 = vsub.f32 %v157, %v172
  %v177 = vmul.f32 %v173, %v173
  %v178 = vmul.f32 %v174, %v174
  %v179 = vmul.f32 %v175, %v175
  %v180 = vmul.f32 %v176, %v176
  %181 = vadd.xlane.f32.xlu0 %v177
  %v182 = vpop.xlane.xlu0 %181
  %183 = vadd.xlane.f32.xlu0 %v178
  %v184 = vpop.xlane.xlu0 %183
  %185 = vadd.xlane.f32.xlu0 %v179
  %v186 = vpop.xlane.xlu0 %185
  %187 = vadd.xlane.f32.xlu0 %v180
  %v188 = vpop.xlane.xlu0 %187
  %v189 = vmul.f32 %v182, %v168
  %v190 = vmul.f32 %v184, %v168
  %v191 = vmul.f32 %v186, %v168
  %v192 = vmul.f32 %v188, %v168
  %v193 = vadd.f32 %v189, 1e-05
  %v194 = vadd.f32 %v190, 1e-05
  %v195 = vadd.f32 %v191, 1e-05
  %v196 = vadd.f32 %v192, 1e-05
  %v197 = vrsqrt.pop %v193
  %v198 = vrsqrt.pop %v194
  %v199 = vrsqrt.pop %v195
  %v200 = vrsqrt.pop %v196
  %v201 = vmul.f32 %v173, %v197
  %v202 = vmul.f32 %v174, %v198
  %v203 = vmul.f32 %v175, %v199
  %v204 = vmul.f32 %v176, %v200
  %v206 = vlaneseq
  %v207 = vshrl.u32 %v206, 7
  %v208 = vsub.s32 0, %v207
  %v209 = vrot.slane %v158, %v208
  %v211 = vmul.f32 %v201, %v209
  %v212 = vmul.f32 %v202, %v209
  %v213 = vmul.f32 %v203, %v209
  %v214 = vmul.f32 %v204, %v209
  %v216 = vlaneseq
  %v217 = vshrl.u32 %v216, 7
  %v218 = vsub.s32 0, %v217
  %v219 = vrot.slane %v159, %v218
  %v221 = vadd.f32 %v211, %v219
  %v222 = vadd.f32 %v212, %v219
  %v223 = vadd.f32 %v213, %v219
  %v224 = vadd.f32 %v214, %v219
  %225 = vst [vmem:[%s6] sm:$0xff] %v221
  %226 = vst [vmem:[%s6 + $0x8] sm:$0xff] %v222
  %227 = vst [vmem:[%s6 + $0x10] sm:$0xff] %v223
  %228 = vst [vmem:[%s6 + $0x18] sm:$0xff] %v224
  // Predicated region
  $region26: #{transformer_forward.35} parent=0 // pred_check
    _
  $region27: #{transformer_forward.35} parent=0 // pred_check_branch
    %230 = sbr.rel (0) target = $region29
  $region28: #{transformer_forward.35} parent=0 // pred_region
    _
  $region29: #{transformer_forward.35} parent=0 // pred_fallthru
    _
  // Predicated region
  $region30: #{transformer_forward.35} parent=0 // pred_check
    _
  $region31: #{transformer_forward.35} parent=0 // pred_check_branch
    %232 = sbr.rel (0) target = $region33
  $region32: #{transformer_forward.35} parent=0 // pred_region
    _
  $region33: #{transformer_forward.35} parent=0 // pred_fallthru
    _

// kernel: transformer_forward.49
$region0: #{transformer_forward.49}
  #allocation0 [shape = 'u32[]', space=smem, size = 0x4, offset = 0x4, fixed_abs, tag = 'smem constant byte address 0x4 - core index']
  #allocation1 [shape = 'u32[144,128]{1,0:T(1,128)}', space=vmem, size = 0x12000, scoped, tag = 'internal scratch']
  %s0 = inlined_call_operand.vmem [shape: f32[32,128], index: 0, kind: input, shape index: {}]
  %s1 = inlined_call_operand.vmem [shape: f32[1,128], index: 1, kind: input, shape index: {}]
  %s2 = inlined_call_operand.vmem [shape: f32[1,128], index: 2, kind: input, shape index: {}]
  %s3 = inlined_call_operand.hbm [shape: f32[32,128], index: 3, kind: output, shape index: {}]
  %s4 = sld [smem:[#allocation0]]
  $region22: #{transformer_forward.49} parent=0
    _
  %s6 = ssub.s32 1, %s4
  %s7 = scalar_select 0, %s6, %s4
  $region1: #{transformer_forward.49} parent=0
    #allocation2 [shape = 'u8[16384]{0}', space=vmem, size = 0x4000, scoped, tag = 'output window, operand 0, single buffered']
    #allocation3 [shape = 's32[1]{0}', space=sflag, size = 0x4, scoped, tag = 'scoped memory for transformer_forward.49']
    %8 = vsyncpa [#allocation3], 0
    // Predicated region
    $region2: #{transformer_forward.49} parent=1 // pred_check
      _
    $region3: #{transformer_forward.49} parent=1 // pred_check_branch
      %10 = sbr.rel (0) target = $region5
    $region4: #{transformer_forward.49} parent=1 // pred_region
      _
    $region5: #{transformer_forward.49} parent=1 // pred_fallthru
      _
    // Predicated region
    $region6: #{transformer_forward.49} parent=1 // pred_check
      _
    $region7: #{transformer_forward.49} parent=1 // pred_check_branch
      %12 = sbr.rel (0) target = $region9
    $region8: #{transformer_forward.49} parent=1 // pred_region
      _
    $region9: #{transformer_forward.49} parent=1 // pred_fallthru
      _
    // Predicated region
    $region10: #{transformer_forward.49} parent=1 // pred_check
      _
    $region11: #{transformer_forward.49} parent=1 // pred_check_branch
      %14 = sbr.rel (0) target = $region13
    $region12: #{transformer_forward.49} parent=1 // pred_region
      _
    $region13: #{transformer_forward.49} parent=1 // pred_fallthru
      _
    %v15 = vld [vmem:[%s0] sm:$0xff]
    %v16 = vld [vmem:[%s0 + $0x8] sm:$0xff]
    %v17 = vld [vmem:[%s0 + $0x10] sm:$0xff]
    %v18 = vld [vmem:[%s0 + $0x18] sm:$0xff]
    %v19 = vld [vmem:[%s1] sm:$0x1]
    %v20 = vld [vmem:[%s2] sm:$0x1]
    %21 = vadd.xlane.f32.xlu0 %v15
    %v22 = vpop.xlane.xlu0 %21
    %23 = vadd.xlane.f32.xlu0 %v16
    %v24 = vpop.xlane.xlu0 %23
    %25 = vadd.xlane.f32.xlu0 %v17
    %v26 = vpop.xlane.xlu0 %25
    %27 = vadd.xlane.f32.xlu0 %v18
    %v28 = vpop.xlane.xlu0 %27
    %v29 = vrcp.pop 128.0
    %v30 = vmul.f32 %v22, %v29
    %v31 = vmul.f32 %v24, %v29
    %v32 = vmul.f32 %v26, %v29
    %v33 = vmul.f32 %v28, %v29
    %v34 = vsub.f32 %v15, %v30
    %v35 = vsub.f32 %v16, %v31
    %v36 = vsub.f32 %v17, %v32
    %v37 = vsub.f32 %v18, %v33
    %v38 = vmul.f32 %v34, %v34
    %v39 = vmul.f32 %v35, %v35
    %v40 = vmul.f32 %v36, %v36
    %v41 = vmul.f32 %v37, %v37
    %42 = vadd.xlane.f32.xlu0 %v38
    %v43 = vpop.xlane.xlu0 %42
    %44 = vadd.xlane.f32.xlu0 %v39
    %v45 = vpop.xlane.xlu0 %44
    %46 = vadd.xlane.f32.xlu0 %v40
    %v47 = vpop.xlane.xlu0 %46
    %48 = vadd.xlane.f32.xlu0 %v41
    %v49 = vpop.xlane.xlu0 %48
    %v50 = vmul.f32 %v43, %v29
    %v51 = vmul.f32 %v45, %v29
    %v52 = vmul.f32 %v47, %v29
    %v53 = vmul.f32 %v49, %v29
    %v54 = vadd.f32 %v50, 1e-05
    %v55 = vadd.f32 %v51, 1e-05
    %v56 = vadd.f32 %v52, 1e-05
    %v57 = vadd.f32 %v53, 1e-05
    %v58 = vrsqrt.pop %v54
    %v59 = vrsqrt.pop %v55
    %v60 = vrsqrt.pop %v56
    %v61 = vrsqrt.pop %v57
    %v62 = vmul.f32 %v34, %v58
    %v63 = vmul.f32 %v35, %v59
    %v64 = vmul.f32 %v36, %v60
    %v65 = vmul.f32 %v37, %v61
    %v67 = vlaneseq
    %v68 = vshrl.u32 %v67, 7
    %v69 = vsub.s32 0, %v68
    %v70 = vrot.slane %v19, %v69
    %v72 = vmul.f32 %v62, %v70
    %v73 = vmul.f32 %v63, %v70
    %v74 = vmul.f32 %v64, %v70
    %v75 = vmul.f32 %v65, %v70
    %v77 = vlaneseq
    %v78 = vshrl.u32 %v77, 7
    %v79 = vsub.s32 0, %v78
    %v80 = vrot.slane %v20, %v79
    %v82 = vadd.f32 %v72, %v80
    %v83 = vadd.f32 %v73, %v80
    %v84 = vadd.f32 %v74, %v80
    %v85 = vadd.f32 %v75, %v80
    %86 = vst [vmem:[#allocation2] sm:$0xff] %v82
    %87 = vst [vmem:[#allocation2 + $0x8] sm:$0xff] %v83
    %88 = vst [vmem:[#allocation2 + $0x10] sm:$0xff] %v84
    %89 = vst [vmem:[#allocation2 + $0x18] sm:$0xff] %v85
    // Predicated region
    $region14: #{transformer_forward.49} parent=1 // pred_check
      _
    $region15: #{transformer_forward.49} parent=1 // pred_check_branch
      %91 = sbr.rel (0) target = $region17
    $region16: #{transformer_forward.49} parent=1 // pred_region
      %s93 = ssub.s32 512, 512
      %94 = vsyncadd [#allocation3], %s93
      %s95 = sshll.u32 [#allocation2], 4
      %s96 = int_to_ptr.vmem [resolvable:$true] %s95
      %101 = dma.vmem_to_hbm [thread:$0]  %s96, 512, %s3, [#allocation3], 128, 128, 8
    $region17: #{transformer_forward.49} parent=1 // pred_fallthru
      _
    // Predicated region
    $region18: #{transformer_forward.49} parent=1 // pred_check
      _
    $region19: #{transformer_forward.49} parent=1 // pred_check_branch
      %103 = sbr.rel (0) target = $region21
    $region20: #{transformer_forward.49} parent=1 // pred_region
      %104 = dma.done [#allocation3], 512
    $region21: #{transformer_forward.49} parent=1 // pred_fallthru
      _
    %105 = vsyncpa [#allocation3], 1

// kernel: transformer_forward.38
$region0: #{transformer_forward.38}
  #allocation0 [shape = 'u32[]', space=smem, size = 0x4, offset = 0x4, fixed_abs, tag = 'smem constant byte address 0x4 - core index']
  #allocation1 [shape = 'u32[144,128]{1,0:T(1,128)}', space=vmem, size = 0x12000, scoped, tag = 'internal scratch']
  %s0 = inlined_call_operand.vmem [shape: bf16[2,16,128], index: 0, kind: input, shape index: {}]
  %s1 = inlined_call_operand.vmem [shape: bf16[2,64,128], index: 1, kind: input, shape index: {}]
  %s2 = inlined_call_operand.vmem [shape: bf16[2,64,128], index: 2, kind: input, shape index: {}]
  %s3 = inlined_call_operand.vmem [shape: f32[2,1,64], index: 3, kind: input, shape index: {}]
  %s4 = inlined_call_operand.vmem [shape: f32[2,16,128], index: 4, kind: output, shape index: {}]
  %s5 = sld [smem:[#allocation0]]
  $region49: #{transformer_forward.38} parent=0
    _
  %s7 = ssub.s32 1, %s5
  %s8 = scalar_select 0, %s7, %s5
  loop: start=0, step=1, limit=4
  $region2: #{transformer_forward.38} parent=0 // loop_pre_header
    _
  $region3: #{transformer_forward.38} parent=0 // loop_header
    %s10 = sphi 0, %s14
    %p11 = scmp.ge.s32.totalorder %s10, 4
    %s17 = sphi 0, %s29
    %s18 = sphi 0, %s25
    %s19 = sphi 0, %s17
    %s20 = sphi 0, %s18
    %s21 = sphi 0, %s19
    %s22 = sphi 0, %s20
    %s34 = sphi 0, %s36
    %s37 = sphi 0, %s34
    %s38 = sphi 0, %s37
    %s54 = sphi 0, %s38
    %s60 = sphi 0, %s62
    %s63 = sphi 0, %s60
    %s64 = sphi 0, %s63
    %s80 = sphi 0, %s64
    %s86 = sphi 0, %s88
    %s89 = sphi 0, %s86
    %s90 = sphi 0, %s89
    %s106 = sphi 0, %s90
    %s112 = sphi 0, %s114
    %s115 = sphi 0, %s112
    %s116 = sphi 0, %s115
    %s132 = sphi 0, %s116
    %s140 = sphi 0, %s142
    %s143 = sphi 0, %s140
    %s144 = sphi 0, %s143
    %s160 = sphi 0, %s144
  $region4: #{transformer_forward.38} parent=0 // loop_header_branch
    %13 = sbr.rel (%p11) target = $region8
  $region5: #{transformer_forward.38} parent=0 // loop_body
    %s15 = ssub.s32 %s10, 1
    %s16 = ssub.s32 %s10, 2
    %s23 = sadd.s32 1, %s18
    %p24 = scmp.ge.s32.totalorder %s23, 1
    %s25 = scalar_select %p24, 0, %s23
    %s26 = sadd.s32 1, %s17
    %s27 = scalar_select %p24, %s26, %s17
    %p28 = scmp.ge.s32.totalorder %s27, 2
    %s29 = scalar_select %p28, 0, %s27
    %s30 = ssub.s32 %s17, %s29
    %s31 = ssub.s32 %s18, %s25
    %s32 = sor.u32 %s30, %s31
    %p33 = scmp.eq.s32.totalorder %s32, 0
    %s35 = sadd.s32 %s34, 1
    %s36 = scalar_select %p33, %s34, %s35
    %p39 = pneg %p33
    %p40 = scmp.eq.s32.totalorder %s10, 1
    %p41 = por %p39, %p40
    %p42 = scmp.ne.s32.totalorder %s34, %s37
    %p43 = scmp.eq.s32.totalorder %s10, 0
    %p44 = por %p42, %p43
    %p45 = scmp.ne.s32.totalorder %s34, %s37
    %p46 = scmp.eq.s32.totalorder %s15, 1
    %p47 = por %p45, %p46
    %p48 = scmp.ne.s32.totalorder %s37, %s38
    %p49 = scmp.eq.s32.totalorder %s15, 0
    %p50 = por %p48, %p49
    %p51 = scmp.ne.s32.totalorder %s37, %s38
    %p52 = scmp.eq.s32.totalorder %s16, 1
    %p53 = por %p51, %p52
    %p55 = scmp.ne.s32.totalorder %s38, %s54
    %p56 = scmp.eq.s32.totalorder %s16, 0
    %p57 = por %p55, %p56
    %s58 = ssub.s32 %s17, %s29
    %p59 = scmp.eq.s32.totalorder %s58, 0
    %s61 = sadd.s32 %s60, 1
    %s62 = scalar_select %p59, %s60, %s61
    %p65 = pneg %p59
    %p66 = scmp.eq.s32.totalorder %s10, 1
    %p67 = por %p65, %p66
    %p68 = scmp.ne.s32.totalorder %s60, %s63
    %p69 = scmp.eq.s32.totalorder %s10, 0
    %p70 = por %p68, %p69
    %p71 = scmp.ne.s32.totalorder %s60, %s63
    %p72 = scmp.eq.s32.totalorder %s15, 1
    %p73 = por %p71, %p72
    %p74 = scmp.ne.s32.totalorder %s63, %s64
    %p75 = scmp.eq.s32.totalorder %s15, 0
    %p76 = por %p74, %p75
    %p77 = scmp.ne.s32.totalorder %s63, %s64
    %p78 = scmp.eq.s32.totalorder %s16, 1
    %p79 = por %p77, %p78
    %p81 = scmp.ne.s32.totalorder %s64, %s80
    %p82 = scmp.eq.s32.totalorder %s16, 0
    %p83 = por %p81, %p82
    %s84 = ssub.s32 %s17, %s29
    %p85 = scmp.eq.s32.totalorder %s84, 0
    %s87 = sadd.s32 %s86, 1
    %s88 = scalar_select %p85, %s86, %s87
    %p91 = pneg %p85
    %p92 = scmp.eq.s32.totalorder %s10, 1
    %p93 = por %p91, %p92
    %p94 = scmp.ne.s32.totalorder %s86, %s89
    %p95 = scmp.eq.s32.totalorder %s10, 0
    %p96 = por %p94, %p95
    %p97 = scmp.ne.s32.totalorder %s86, %s89
    %p98 = scmp.eq.s32.totalorder %s15, 1
    %p99 = por %p97, %p98
    %p100 = scmp.ne.s32.totalorder %s89, %s90
    %p101 = scmp.eq.s32.totalorder %s15, 0
    %p102 = por %p100, %p101
    %p103 = scmp.ne.s32.totalorder %s89, %s90
    %p104 = scmp.eq.s32.totalorder %s16, 1
    %p105 = por %p103, %p104
    %p107 = scmp.ne.s32.totalorder %s90, %s106
    %p108 = scmp.eq.s32.totalorder %s16, 0
    %p109 = por %p107, %p108
    %s110 = ssub.s32 %s17, %s29
    %p111 = scmp.eq.s32.totalorder %s110, 0
    %s113 = sadd.s32 %s112, 1
    %s114 = scalar_select %p111, %s112, %s113
    %p117 = pneg %p111
    %p118 = scmp.eq.s32.totalorder %s10, 1
    %p119 = por %p117, %p118
    %p120 = scmp.ne.s32.totalorder %s112, %s115
    %p121 = scmp.eq.s32.totalorder %s10, 0
    %p122 = por %p120, %p121
    %p123 = scmp.ne.s32.totalorder %s112, %s115
    %p124 = scmp.eq.s32.totalorder %s15, 1
    %p125 = por %p123, %p124
    %p126 = scmp.ne.s32.totalorder %s115, %s116
    %p127 = scmp.eq.s32.totalorder %s15, 0
    %p128 = por %p126, %p127
    %p129 = scmp.ne.s32.totalorder %s115, %s116
    %p130 = scmp.eq.s32.totalorder %s16, 1
    %p131 = por %p129, %p130
    %p133 = scmp.ne.s32.totalorder %s116, %s132
    %p134 = scmp.eq.s32.totalorder %s16, 0
    %p135 = por %p133, %p134
    %s136 = ssub.s32 %s17, %s29
    %s137 = ssub.s32 %s18, %s25
    %s138 = sor.u32 %s136, %s137
    %p139 = scmp.eq.s32.totalorder %s138, 0
    %s141 = sadd.s32 %s140, 1
    %s142 = scalar_select %p139, %s140, %s141
    %p145 = pneg %p139
    %p146 = scmp.eq.s32.totalorder %s10, 1
    %p147 = por %p145, %p146
    %p148 = scmp.ne.s32.totalorder %s140, %s143
    %p149 = scmp.eq.s32.totalorder %s10, 0
    %p150 = por %p148, %p149
    %p151 = scmp.ne.s32.totalorder %s140, %s143
    %p152 = scmp.eq.s32.totalorder %s15, 1
    %p153 = por %p151, %p152
    %p154 = scmp.ne.s32.totalorder %s143, %s144
    %p155 = scmp.eq.s32.totalorder %s15, 0
    %p156 = por %p154, %p155
    %p157 = scmp.ne.s32.totalorder %s143, %s144
    %p158 = scmp.eq.s32.totalorder %s16, 1
    %p159 = por %p157, %p158
    %p161 = scmp.ne.s32.totalorder %s144, %s160
    %p162 = scmp.eq.s32.totalorder %s16, 0
    %p163 = por %p161, %p162
    %p164 = scmp.le.s32.totalorder 1, %s10
    %p165 = scmp.lt.s32.totalorder %s10, 3
    %p166 = pnand %p164, %p165
    %p167 = pneg %p166
    // Predicated region
    $region9: #{transformer_forward.38} parent=5 // pred_check
      _
    $region10: #{transformer_forward.38} parent=5 // pred_check_branch
      %169 = sbr.rel (%p166) target = $region12
    $region11: #{transformer_forward.38} parent=5 // pred_region
      %s170 = ssub.s32 %s10, 1
    $region12: #{transformer_forward.38} parent=5 // pred_fallthru
      _
    %p171 = scmp.lt.s32.totalorder %s10, 2
    // Predicated region
    $region13: #{transformer_forward.38} parent=5 // pred_check
      %p172 = pneg %p171
    $region14: #{transformer_forward.38} parent=5 // pred_check_branch
      %174 = sbr.rel (%p172) target = $region16
    $region15: #{transformer_forward.38} parent=5 // pred_region
      // Predicated region
      $region17: #{transformer_forward.38} parent=15 // pred_check
        %p175 = pneg %p44
      $region18: #{transformer_forward.38} parent=15 // pred_check_branch
        %177 = sbr.rel (%p175) target = $region20
      $region19: #{transformer_forward.38} parent=15 // pred_region
        %s178 = smul.u32 2, %s18
        %p179 = scmp.lt.s32.totalorder %s17, 1
        %s180 = scalar_select %p179, %s17, 1
        %p181 = scmp.lt.s32.totalorder %s178, 1
        %s182 = scalar_select %p181, %s178, 1
        %s183 = smul.addr %s180, 2
        %s184 = sadd.s32 %s182, %s183
        %s185 = smul.addr %s184, 4
        %s186 = scalar_lea.vmem %s0, %s185
        %s187 = smul.u32 2, %s18
      $region20: #{transformer_forward.38} parent=15 // pred_fallthru
        _
      // Predicated region
      $region21: #{transformer_forward.38} parent=15 // pred_check
        %p188 = pneg %p70
      $region22: #{transformer_forward.38} parent=15 // pred_check_branch
        %190 = sbr.rel (%p188) target = $region24
      $region23: #{transformer_forward.38} parent=15 // pred_region
        %p191 = scmp.lt.s32.totalorder %s17, 1
        %s192 = scalar_select %p191, %s17, 1
        %s193 = smul.addr %s192, 8
        %s194 = smul.addr %s193, 4
        %s195 = scalar_lea.vmem %s1, %s194
      $region24: #{transformer_forward.38} parent=15 // pred_fallthru
        _
      // Predicated region
      $region25: #{transformer_forward.38} parent=15 // pred_check
        %p196 = pneg %p96
      $region26: #{transformer_forward.38} parent=15 // pred_check_branch
        %198 = sbr.rel (%p196) target = $region28
      $region27: #{transformer_forward.38} parent=15 // pred_region
        %p199 = scmp.lt.s32.totalorder %s17, 1
        %s200 = scalar_select %p199, %s17, 1
        %s201 = smul.addr %s200, 8
        %s202 = smul.addr %s201, 4
        %s203 = scalar_lea.vmem %s2, %s202
      $region28: #{transformer_forward.38} parent=15 // pred_fallthru
        _
      // Predicated region
      $region29: #{transformer_forward.38} parent=15 // pred_check
        %p204 = pneg %p122
      $region30: #{transformer_forward.38} parent=15 // pred_check_branch
        %206 = sbr.rel (%p204) target = $region32
      $region31: #{transformer_forward.38} parent=15 // pred_region
        %p207 = scmp.lt.s32.totalorder %s17, 1
        %s208 = scalar_select %p207, %s17, 1
        %s209 = scalar_lea.vmem %s3, %s208
      $region32: #{transformer_forward.38} parent=15 // pred_fallthru
        _
    $region16: #{transformer_forward.38} parent=5 // pred_fallthru
      _
    %p210 = scmp.le.s32.totalorder 1, %s10
    %p211 = scmp.lt.s32.totalorder %s10, 3
    %p212 = pnand %p210, %p211
    %p213 = pneg %p212
    // Predicated region
    $region33: #{transformer_forward.38} parent=5 // pred_check
      _
    $region34: #{transformer_forward.38} parent=5 // pred_check_branch
      %215 = sbr.rel (%p212) target = $region36
    $region35: #{transformer_forward.38} parent=5 // pred_region
      %s216 = ssub.s32 %s10, 1
      %s217 = smul.u32 2, %s20
      %p218 = scmp.lt.s32.totalorder %s19, 1
      %s219 = scalar_select %p218, %s19, 1
      %p220 = scmp.lt.s32.totalorder %s217, 1
      %s221 = scalar_select %p220, %s217, 1
      %s222 = smul.addr %s219, 2
      %s223 = sadd.s32 %s221, %s222
      %s224 = smul.addr %s223, 4
      %s225 = scalar_lea.vmem %s0, %s224
      %p226 = pneg %p50
      %p227 = pneg %p47
      %p228 = scmp.lt.s32.totalorder %s19, 1
      %s229 = scalar_select %p228, %s19, 1
      %s230 = smul.addr %s229, 8
      %s231 = smul.addr %s230, 4
      %s232 = scalar_lea.vmem %s1, %s231
      %p233 = pneg %p76
      %p234 = pneg %p73
      %p235 = scmp.lt.s32.totalorder %s19, 1
      %s236 = scalar_select %p235, %s19, 1
      %s237 = smul.addr %s236, 8
      %s238 = smul.addr %s237, 4
      %s239 = scalar_lea.vmem %s2, %s238
      %p240 = pneg %p102
      %p241 = pneg %p99
      %p242 = scmp.lt.s32.totalorder %s19, 1
      %s243 = scalar_select %p242, %s19, 1
      %s244 = scalar_lea.vmem %s3, %s243
      %p245 = pneg %p128
      %p246 = pneg %p125
      %p247 = pneg %p156
      %p248 = pneg %p153
      %s249 = smul.u32 2, %s20
      %p250 = scmp.lt.s32.totalorder %s19, 1
      %s251 = scalar_select %p250, %s19, 1
      %p252 = scmp.lt.s32.totalorder %s249, 1
      %s253 = scalar_select %p252, %s249, 1
      %s254 = smul.addr %s251, 2
      %s255 = sadd.s32 %s253, %s254
      %s256 = smul.addr %s255, 8
      %s257 = scalar_lea.vmem %s4, %s256
      %s258 = smul.u32 2, %s20
      %p259 = scmp.lt.s32.totalorder %s19, 1
      %s260 = scalar_select %p259, %s19, 1
      %p261 = scmp.lt.s32.totalorder %s258, 1
      %s262 = scalar_select %p261, %s258, 1
      %s263 = smul.addr %s260, 2
      %s264 = sadd.s32 %s262, %s263
      %s265 = smul.addr %s264, 4
      %s266 = scalar_lea.vmem %s0, %s265
      %s267 = smul.u32 2, %s20
      %p268 = scmp.lt.s32.totalorder %s19, 1
      %s269 = scalar_select %p268, %s19, 1
      %s270 = smul.addr %s269, 8
      %s271 = smul.addr %s270, 4
      %s272 = scalar_lea.vmem %s1, %s271
      %p273 = scmp.lt.s32.totalorder %s19, 1
      %s274 = scalar_select %p273, %s19, 1
      %s275 = smul.addr %s274, 8
      %s276 = smul.addr %s275, 4
      %s277 = scalar_lea.vmem %s2, %s276
      %p278 = scmp.lt.s32.totalorder %s19, 1
      %s279 = scalar_select %p278, %s19, 1
      %s280 = scalar_lea.vmem %s3, %s279
      %s281 = smul.u32 2, %s20
      %p282 = scmp.lt.s32.totalorder %s19, 1
      %s283 = scalar_select %p282, %s19, 1
      %p284 = scmp.lt.s32.totalorder %s281, 1
      %s285 = scalar_select %p284, %s281, 1
      %s286 = smul.addr %s283, 2
      %s287 = sadd.s32 %s285, %s286
      %s288 = smul.addr %s287, 8
      %s289 = scalar_lea.vmem %s4, %s288
      %s290 = smul.u32 2, %s20
      %v292 = vld [vmem:[%s266] sm:$0xf]
      %v293 = vld [vmem:[%s266 + $0x4] sm:$0xf]
      %v294 = vld [vmem:[%s272] sm:$0xf]
      %v295 = vld [vmem:[%s272 + $0x4] sm:$0xf]
      %v296 = vld [vmem:[%s272 + $0x8] sm:$0xf]
      %v297 = vld [vmem:[%s272 + $0xc] sm:$0xf]
      %v298 = vld [vmem:[%s272 + $0x10] sm:$0xf]
      %v299 = vld [vmem:[%s272 + $0x14] sm:$0xf]
      %v300 = vld [vmem:[%s272 + $0x18] sm:$0xf]
      %v301 = vld [vmem:[%s272 + $0x1c] sm:$0xf]
      %v302 = vld [vmem:[%s277] sm:$0xf]
      %v303 = vld [vmem:[%s277 + $0x4] sm:$0xf]
      %v304 = vld [vmem:[%s277 + $0x8] sm:$0xf]
      %v305 = vld [vmem:[%s277 + $0xc] sm:$0xf]
      %v306 = vld [vmem:[%s277 + $0x10] sm:$0xf]
      %v307 = vld [vmem:[%s277 + $0x14] sm:$0xf]
      %v308 = vld [vmem:[%s277 + $0x18] sm:$0xf]
      %v309 = vld [vmem:[%s277 + $0x1c] sm:$0xf]
      %v310 = vld [vmem:[%s280] sm:$0x1]
      %v313 = vunpack.c.l.b16 %v292
      %v314 = vunpack.c.l.b16 %v293
      %v315 = vpack.c.b16 %v314, %v313
      %v324 = vunpack.c.l.b16 %v294
      %v325 = vunpack.c.l.b16 %v295
      %v326 = vunpack.c.l.b16 %v296
      %v327 = vunpack.c.l.b16 %v297
      %v328 = vunpack.c.l.b16 %v298
      %v329 = vunpack.c.l.b16 %v299
      %v330 = vunpack.c.l.b16 %v300
      %v331 = vunpack.c.l.b16 %v301
      %v332 = vpack.c.b16 %v325, %v324
      %v333 = vpack.c.b16 %v327, %v326
      %v334 = vpack.c.b16 %v329, %v328
      %v335 = vpack.c.b16 %v331, %v330
      %vm336 = vcmask 261120
      %v338 = vsel %vm336, %v315, 0
      %v341 = vsel %vm336, %v332, 0
      %v344 = vsel %vm336, %v333, 0
      %v347 = vsel %vm336, %v334, 0
      %v350 = vsel %vm336, %v335, 0
      %352 = vmatprep.subr.bf16.mxu0 0
      %353 = vmatpush1.bf16.xpose.msra.mxu0 %v341
      %354 = vmatprep.subr.bf16.mxu0 0
      %355 = vmatpush1.bf16.xpose.msra.mxu0 %v344
      %356 = vmatprep.subr.bf16.mxu0 0
      %357 = vmatpush1.bf16.xpose.msra.mxu0 %v347
      %358 = vmatprep.subr.bf16.mxu0 0
      %359 = vmatpush1.bf16.xpose.msra.mxu0 %v350
      %360 = vmatprep.subr.bf16.mxu0 0
      %361 = vmatpush1.bf16.xpose.msra.mxu0 0
      %362 = vmatprep.subr.bf16.mxu0 0
      %363 = vmatpush1.bf16.xpose.msra.mxu0 0
      %364 = vmatprep.subr.bf16.mxu0 0
      %365 = vmatpush1.bf16.xpose.msra.mxu0 0
      %366 = vmatprep.subr.bf16.mxu0 0
      %367 = vmatpush1.bf16.xpose.msra.mxu0 0
      %368 = vmatprep.subr.bf16.mxu0 0
      %369 = vmatpush1.bf16.xpose.msra.mxu0 0
      %370 = vmatprep.subr.bf16.mxu0 0
      %371 = vmatpush1.bf16.xpose.msra.mxu0 0
      %372 = vmatprep.subr.bf16.mxu0 0
      %373 = vmatpush1.bf16.xpose.msra.mxu0 0
      %374 = vmatprep.subr.bf16.mxu0 0
      %375 = vmatpush1.bf16.xpose.msra.mxu0 0
      %376 = vmatprep.subr.bf16.mxu0 0
      %377 = vmatpush1.bf16.xpose.msra.mxu0 0
      %378 = vmatprep.subr.bf16.mxu0 0
      %379 = vmatpush1.bf16.xpose.msra.mxu0 0
      %380 = vmatprep.subr.bf16.mxu0 0
      %381 = vmatpush1.bf16.xpose.msra.mxu0 0
      %382 = vmatprep.subr.bf16.mxu0 0
      %383 = vmatpush1.bf16.xpose.msra.mxu0 0
      %384 = vmatprep.mubr.bf16.mxu0 0
      %385 = vmatmul.mubr.bf16.gmra.mrb[0].mxu0 %v338
      %v386 = vpop.f32.mrb[0].mxu0
      %v387 = vadd.f32 0.0, %v386
      %v388 = vpop.f32.mrb[0].mxu0
      %v389 = vpop.f32.mrb[0].mxu0
      %v390 = vadd.f32 0.0, %v389
      %v391 = vpop.f32.mrb[0].mxu0
      %392 = vdwg.mxu0
      %v393 = vmul.f32 %v387, 0.17677669
      %v394 = vmul.f32 %v390, 0.17677669
      %v396 = vlaneseq
      %v397 = vshrl.u32 %v396, 7
      %v398 = vsub.s32 0, %v397
      %v399 = vrot.slane %v310, %v398
      %v401 = vadd.f32 %v393, %v399
      %v402 = vadd.f32 %v394, %v399
      %vm403 = vcmask 523264
      %v404 = vsel %vm403, %v401, -inf
      %405 = vmax.xlane.f32.xlu0 %v404
      %v406 = vpop.xlane.xlu0 %405
      %v407 = vsel %vm403, %v402, -inf
      %408 = vmax.xlane.f32.xlu0 %v407
      %v409 = vpop.xlane.xlu0 %408
      %v410 = vsub.f32 %v401, %v406
      %v411 = vsub.f32 %v402, %v409
      %v412 = vmul.f32 %v410, 1.442695
      %v413 = vpow.pop %v412
      %v414 = vmul.f32 %v411, 1.442695
      %v415 = vpow.pop %v414
      %v416 = vsel %vm403, %v413, 0.0
      %417 = vadd.xlane.f32.xlu0 %v416
      %v418 = vpop.xlane.xlu0 %417
      %v419 = vsel %vm403, %v415, 0.0
      %420 = vadd.xlane.f32.xlu0 %v419
      %v421 = vpop.xlane.xlu0 %420
      %v422 = vrcp.pop %v418
      %v423 = vrcp.pop %v421
      %v424 = vmul.f32 %v413, %v422
      %v425 = vmul.f32 %v415, %v423
      %v426 = vpack.c.bf16 %v425, %v424
      %v435 = vunpack.c.l.b16 %v302
      %v436 = vunpack.c.l.b16 %v303
      %v437 = vunpack.c.l.b16 %v304
      %v438 = vunpack.c.l.b16 %v305
      %v439 = vunpack.c.l.b16 %v306
      %v440 = vunpack.c.l.b16 %v307
      %v441 = vunpack.c.l.b16 %v308
      %v442 = vunpack.c.l.b16 %v309
      %v443 = vpack.c.b16 %v436, %v435
      %v444 = vpack.c.b16 %v438, %v437
      %v445 = vpack.c.b16 %v440, %v439
      %v446 = vpack.c.b16 %v442, %v441
      %v452 = vsel %vm403, %v426, 0
      %454 = vmatprep.subr.bf16.mxu0 0
      %455 = vmatpush1.bf16.msra.mxu0 %v443
      %456 = vmatprep.subr.bf16.mxu0 0
      %457 = vmatpush1.bf16.msra.mxu0 %v444
      %458 = vmatprep.subr.bf16.mxu0 0
      %459 = vmatpush1.bf16.msra.mxu0 %v445
      %460 = vmatprep.subr.bf16.mxu0 0
      %461 = vmatpush1.bf16.msra.mxu0 %v446
      %462 = vmatprep.subr.bf16.mxu0 0
      %463 = vmatpush1.bf16.msra.mxu0 0
      %464 = vmatprep.subr.bf16.mxu0 0
      %465 = vmatpush1.bf16.msra.mxu0 0
      %466 = vmatprep.subr.bf16.mxu0 0
      %467 = vmatpush1.bf16.msra.mxu0 0
      %468 = vmatprep.subr.bf16.mxu0 0
      %469 = vmatpush1.bf16.msra.mxu0 0
      %470 = vmatprep.subr.bf16.mxu0 0
      %471 = vmatpush1.bf16.msra.mxu0 0
      %472 = vmatprep.subr.bf16.mxu0 0
      %473 = vmatpush1.bf16.msra.mxu0 0
      %474 = vmatprep.subr.bf16.mxu0 0
      %475 = vmatpush1.bf16.msra.mxu0 0
      %476 = vmatprep.subr.bf16.mxu0 0
      %477 = vmatpush1.bf16.msra.mxu0 0
      %478 = vmatprep.subr.bf16.mxu0 0
      %479 = vmatpush1.bf16.msra.mxu0 0
      %480 = vmatprep.subr.bf16.mxu0 0
      %481 = vmatpush1.bf16.msra.mxu0 0
      %482 = vmatprep.subr.bf16.mxu0 0
      %483 = vmatpush1.bf16.msra.mxu0 0
      %484 = vmatprep.subr.bf16.mxu0 0
      %485 = vmatpush1.bf16.msra.mxu0 0
      %486 = vmatprep.mubr.bf16.mxu0 0
      %487 = vmatmul.mubr.bf16.gmra.mrb[0].mxu0 %v452
      %v488 = vpop.f32.mrb[0].mxu0
      %v489 = vadd.f32 0.0, %v488
      %v490 = vpop.f32.mrb[0].mxu0
      %v491 = vpop.f32.mrb[0].mxu0
      %v492 = vadd.f32 0.0, %v491
      %v493 = vpop.f32.mrb[0].mxu0
      %494 = vdwg.mxu0
      %495 = vrot.lane.b32.xlu0 %v315, 96
      %v496 = vpop.permute.xlu0 %495
      %497 = vrot.lane.b32.xlu0 %v332, 96
      %v498 = vpop.permute.xlu0 %497
      %499 = vrot.lane.b32.xlu0 %v333, 96
      %v500 = vpop.permute.xlu0 %499
      %501 = vrot.lane.b32.xlu0 %v334, 96
      %v502 = vpop.permute.xlu0 %501
      %503 = vrot.lane.b32.xlu0 %v335, 96
      %v504 = vpop.permute.xlu0 %503
      %v506 = vsel %vm336, %v496, 0
      %v509 = vsel %vm336, %v498, 0
      %v512 = vsel %vm336, %v500, 0
      %v515 = vsel %vm336, %v502, 0
      %v518 = vsel %vm336, %v504, 0
      %520 = vmatprep.subr.bf16.mxu0 0
      %521 = vmatpush1.bf16.xpose.msra.mxu0 %v509
      %522 = vmatprep.subr.bf16.mxu0 0
      %523 = vmatpush1.bf16.xpose.msra.mxu0 %v512
      %524 = vmatprep.subr.bf16.mxu0 0
      %525 = vmatpush1.bf16.xpose.msra.mxu0 %v515
      %526 = vmatprep.subr.bf16.mxu0 0
      %527 = vmatpush1.bf16.xpose.msra.mxu0 %v518
      %528 = vmatprep.subr.bf16.mxu0 0
      %529 = vmatpush1.bf16.xpose.msra.mxu0 0
      %530 = vmatprep.subr.bf16.mxu0 0
      %531 = vmatpush1.bf16.xpose.msra.mxu0 0
      %532 = vmatprep.subr.bf16.mxu0 0
      %533 = vmatpush1.bf16.xpose.msra.mxu0 0
      %534 = vmatprep.subr.bf16.mxu0 0
      %535 = vmatpush1.bf16.xpose.msra.mxu0 0
      %536 = vmatprep.subr.bf16.mxu0 0
      %537 = vmatpush1.bf16.xpose.msra.mxu0 0
      %538 = vmatprep.subr.bf16.mxu0 0
      %539 = vmatpush1.bf16.xpose.msra.mxu0 0
      %540 = vmatprep.subr.bf16.mxu0 0
      %541 = vmatpush1.bf16.xpose.msra.mxu0 0
      %542 = vmatprep.subr.bf16.mxu0 0
      %543 = vmatpush1.bf16.xpose.msra.mxu0 0
      %544 = vmatprep.subr.bf16.mxu0 0
      %545 = vmatpush1.bf16.xpose.msra.mxu0 0
      %546 = vmatprep.subr.bf16.mxu0 0
      %547 = vmatpush1.bf16.xpose.msra.mxu0 0
      %548 = vmatprep.subr.bf16.mxu0 0
      %549 = vmatpush1.bf16.xpose.msra.mxu0 0
      %550 = vmatprep.subr.bf16.mxu0 0
      %551 = vmatpush1.bf16.xpose.msra.mxu0 0
      %552 = vmatprep.mubr.bf16.mxu0 0
      %553 = vmatmul.mubr.bf16.gmra.mrb[0].mxu0 %v506
      %v554 = vpop.f32.mrb[0].mxu0
      %v555 = vadd.f32 0.0, %v554
      %v556 = vpop.f32.mrb[0].mxu0
      %v557 = vpop.f32.mrb[0].mxu0
      %v558 = vadd.f32 0.0, %v557
      %v559 = vpop.f32.mrb[0].mxu0
      %560 = vdwg.mxu0
      %v561 = vmul.f32 %v555, 0.17677669
      %v562 = vmul.f32 %v558, 0.17677669
      %v563 = vadd.f32 %v561, %v399
      %v564 = vadd.f32 %v562, %v399
      %v565 = vsel %vm403, %v563, -inf
      %566 = vmax.xlane.f32.xlu0 %v565
      %v567 = vpop.xlane.xlu0 %566
      %v568 = vsel %vm403, %v564, -inf
      %569 = vmax.xlane.f32.xlu0 %v568
      %v570 = vpop.xlane.xlu0 %569
      %v571 = vsub.f32 %v563, %v567
      %v572 = vsub.f32 %v564, %v570
      %v573 = vmul.f32 %v571, 1.442695
      %v574 = vpow.pop %v573
      %v575 = vmul.f32 %v572, 1.442695
      %v576 = vpow.pop %v575
      %v577 = vsel %vm403, %v574, 0.0
      %578 = vadd.xlane.f32.xlu0 %v577
      %v579 = vpop.xlane.xlu0 %578
      %v580 = vsel %vm403, %v576, 0.0
      %581 = vadd.xlane.f32.xlu0 %v580
      %v582 = vpop.xlane.xlu0 %581
      %v583 = vrcp.pop %v579
      %v584 = vrcp.pop %v582
      %v585 = vmul.f32 %v574, %v583
      %v586 = vmul.f32 %v576, %v584
      %v587 = vpack.c.bf16 %v586, %v585
      %588 = vrot.lane.b32.xlu0 %v443, 96
      %v589 = vpop.permute.xlu0 %588
      %590 = vrot.lane.b32.xlu0 %v444, 96
      %v591 = vpop.permute.xlu0 %590
      %592 = vrot.lane.b32.xlu0 %v445, 96
      %v593 = vpop.permute.xlu0 %592
      %594 = vrot.lane.b32.xlu0 %v446, 96
      %v595 = vpop.permute.xlu0 %594
      %v601 = vsel %vm403, %v587, 0
      %603 = vmatprep.subr.bf16.mxu0 0
      %604 = vmatpush1.bf16.msra.mxu0 %v589
      %605 = vmatprep.subr.bf16.mxu0 0
      %606 = vmatpush1.bf16.msra.mxu0 %v591
      %607 = vmatprep.subr.bf16.mxu0 0
      %608 = vmatpush1.bf16.msra.mxu0 %v593
      %609 = vmatprep.subr.bf16.mxu0 0
      %610 = vmatpush1.bf16.msra.mxu0 %v595
      %611 = vmatprep.subr.bf16.mxu0 0
      %612 = vmatpush1.bf16.msra.mxu0 0
      %613 = vmatprep.subr.bf16.mxu0 0
      %614 = vmatpush1.bf16.msra.mxu0 0
      %615 = vmatprep.subr.bf16.mxu0 0
      %616 = vmatpush1.bf16.msra.mxu0 0
      %617 = vmatprep.subr.bf16.mxu0 0
      %618 = vmatpush1.bf16.msra.mxu0 0
      %619 = vmatprep.subr.bf16.mxu0 0
      %620 = vmatpush1.bf16.msra.mxu0 0
      %621 = vmatprep.subr.bf16.mxu0 0
      %622 = vmatpush1.bf16.msra.mxu0 0
      %623 = vmatprep.subr.bf16.mxu0 0
      %624 = vmatpush1.bf16.msra.mxu0 0
      %625 = vmatprep.subr.bf16.mxu0 0
      %626 = vmatpush1.bf16.msra.mxu0 0
      %627 = vmatprep.subr.bf16.mxu0 0
      %628 = vmatpush1.bf16.msra.mxu0 0
      %629 = vmatprep.subr.bf16.mxu0 0
      %630 = vmatpush1.bf16.msra.mxu0 0
      %631 = vmatprep.subr.bf16.mxu0 0
      %632 = vmatpush1.bf16.msra.mxu0 0
      %633 = vmatprep.subr.bf16.mxu0 0
      %634 = vmatpush1.bf16.msra.mxu0 0
      %635 = vmatprep.mubr.bf16.mxu0 0
      %636 = vmatmul.mubr.bf16.gmra.mrb[0].mxu0 %v601
      %v637 = vpop.f32.mrb[0].mxu0
      %v638 = vadd.f32 0.0, %v637
      %v639 = vpop.f32.mrb[0].mxu0
      %v640 = vpop.f32.mrb[0].mxu0
      %v641 = vadd.f32 0.0, %v640
      %v642 = vpop.f32.mrb[0].mxu0
      %643 = vdwg.mxu0
      %644 = vrot.lane.b32.xlu0 %v315, 64
      %v645 = vpop.permute.xlu0 %644
      %646 = vrot.lane.b32.xlu0 %v332, 64
      %v647 = vpop.permute.xlu0 %646
      %648 = vrot.lane.b32.xlu0 %v333, 64
      %v649 = vpop.permute.xlu0 %648
      %650 = vrot.lane.b32.xlu0 %v334, 64
      %v651 = vpop.permute.xlu0 %650
      %652 = vrot.lane.b32.xlu0 %v335, 64
      %v653 = vpop.permute.xlu0 %652
      %v655 = vsel %vm336, %v645, 0
      %v658 = vsel %vm336, %v647, 0
      %v661 = vsel %vm336, %v649, 0
      %v664 = vsel %vm336, %v651, 0
      %v667 = vsel %vm336, %v653, 0
      %669 = vmatprep.subr.bf16.mxu0 0
      %670 = vmatpush1.bf16.xpose.msra.mxu0 %v658
      %671 = vmatprep.subr.bf16.mxu0 0
      %672 = vmatpush1.bf16.xpose.msra.mxu0 %v661
      %673 = vmatprep.subr.bf16.mxu0 0
      %674 = vmatpush1.bf16.xpose.msra.mxu0 %v664
      %675 = vmatprep.subr.bf16.mxu0 0
      %676 = vmatpush1.bf16.xpose.msra.mxu0 %v667
      %677 = vmatprep.subr.bf16.mxu0 0
      %678 = vmatpush1.bf16.xpose.msra.mxu0 0
      %679 = vmatprep.subr.bf16.mxu0 0
      %680 = vmatpush1.bf16.xpose.msra.mxu0 0
      %681 = vmatprep.subr.bf16.mxu0 0
      %682 = vmatpush1.bf16.xpose.msra.mxu0 0
      %683 = vmatprep.subr.bf16.mxu0 0
      %684 = vmatpush1.bf16.xpose.msra.mxu0 0
      %685 = vmatprep.subr.bf16.mxu0 0
      %686 = vmatpush1.bf16.xpose.msra.mxu0 0
      %687 = vmatprep.subr.bf16.mxu0 0
      %688 = vmatpush1.bf16.xpose.msra.mxu0 0
      %689 = vmatprep.subr.bf16.mxu0 0
      %690 = vmatpush1.bf16.xpose.msra.mxu0 0
      %691 = vmatprep.subr.bf16.mxu0 0
      %692 = vmatpush1.bf16.xpose.msra.mxu0 0
      %693 = vmatprep.subr.bf16.mxu0 0
      %694 = vmatpush1.bf16.xpose.msra.mxu0 0
      %695 = vmatprep.subr.bf16.mxu0 0
      %696 = vmatpush1.bf16.xpose.msra.mxu0 0
      %697 = vmatprep.subr.bf16.mxu0 0
      %698 = vmatpush1.bf16.xpose.msra.mxu0 0
      %699 = vmatprep.subr.bf16.mxu0 0
      %700 = vmatpush1.bf16.xpose.msra.mxu0 0
      %701 = vmatprep.mubr.bf16.mxu0 0
      %702 = vmatmul.mubr.bf16.gmra.mrb[0].mxu0 %v655
      %v703 = vpop.f32.mrb[0].mxu0
      %v704 = vadd.f32 0.0, %v703
      %v705 = vpop.f32.mrb[0].mxu0
      %v706 = vpop.f32.mrb[0].mxu0
      %v707 = vadd.f32 0.0, %v706
      %v708 = vpop.f32.mrb[0].mxu0
      %709 = vdwg.mxu0
      %v710 = vmul.f32 %v704, 0.17677669
      %v711 = vmul.f32 %v707, 0.17677669
      %v712 = vadd.f32 %v710, %v399
      %v713 = vadd.f32 %v711, %v399
      %v714 = vsel %vm403, %v712, -inf
      %715 = vmax.xlane.f32.xlu0 %v714
      %v716 = vpop.xlane.xlu0 %715
      %v717 = vsel %vm403, %v713, -inf
      %718 = vmax.xlane.f32.xlu0 %v717
      %v719 = vpop.xlane.xlu0 %718
      %v720 = vsub.f32 %v712, %v716
      %v721 = vsub.f32 %v713, %v719
      %v722 = vmul.f32 %v720, 1.442695
      %v723 = vpow.pop %v722
      %v724 = vmul.f32 %v721, 1.442695
      %v725 = vpow.pop %v724
      %v726 = vsel %vm403, %v723, 0.0
      %727 = vadd.xlane.f32.xlu0 %v726
      %v728 = vpop.xlane.xlu0 %727
      %v729 = vsel %vm403, %v725, 0.0
      %730 = vadd.xlane.f32.xlu0 %v729
      %v731 = vpop.xlane.xlu0 %730
      %v732 = vrcp.pop %v728
      %v733 = vrcp.pop %v731
      %v734 = vmul.f32 %v723, %v732
      %v735 = vmul.f32 %v725, %v733
      %v736 = vpack.c.bf16 %v735, %v734
      %737 = vrot.lane.b32.xlu0 %v443, 64
      %v738 = vpop.permute.xlu0 %737
      %739 = vrot.lane.b32.xlu0 %v444, 64
      %v740 = vpop.permute.xlu0 %739
      %741 = vrot.lane.b32.xlu0 %v445, 64
      %v742 = vpop.permute.xlu0 %741
      %743 = vrot.lane.b32.xlu0 %v446, 64
      %v744 = vpop.permute.xlu0 %743
      %v750 = vsel %vm403, %v736, 0
      %752 = vmatprep.subr.bf16.mxu0 0
      %753 = vmatpush1.bf16.msra.mxu0 %v738
      %754 = vmatprep.subr.bf16.mxu0 0
      %755 = vmatpush1.bf16.msra.mxu0 %v740
      %756 = vmatprep.subr.bf16.mxu0 0
      %757 = vmatpush1.bf16.msra.mxu0 %v742
      %758 = vmatprep.subr.bf16.mxu0 0
      %759 = vmatpush1.bf16.msra.mxu0 %v744
      %760 = vmatprep.subr.bf16.mxu0 0
      %761 = vmatpush1.bf16.msra.mxu0 0
      %762 = vmatprep.subr.bf16.mxu0 0
      %763 = vmatpush1.bf16.msra.mxu0 0
      %764 = vmatprep.subr.bf16.mxu0 0
      %765 = vmatpush1.bf16.msra.mxu0 0
      %766 = vmatprep.subr.bf16.mxu0 0
      %767 = vmatpush1.bf16.msra.mxu0 0
      %768 = vmatprep.subr.bf16.mxu0 0
      %769 = vmatpush1.bf16.msra.mxu0 0
      %770 = vmatprep.subr.bf16.mxu0 0
      %771 = vmatpush1.bf16.msra.mxu0 0
      %772 = vmatprep.subr.bf16.mxu0 0
      %773 = vmatpush1.bf16.msra.mxu0 0
      %774 = vmatprep.subr.bf16.mxu0 0
      %775 = vmatpush1.bf16.msra.mxu0 0
      %776 = vmatprep.subr.bf16.mxu0 0
      %777 = vmatpush1.bf16.msra.mxu0 0
      %778 = vmatprep.subr.bf16.mxu0 0
      %779 = vmatpush1.bf16.msra.mxu0 0
      %780 = vmatprep.subr.bf16.mxu0 0
      %781 = vmatpush1.bf16.msra.mxu0 0
      %782 = vmatprep.subr.bf16.mxu0 0
      %783 = vmatpush1.bf16.msra.mxu0 0
      %784 = vmatprep.mubr.bf16.mxu0 0
      %785 = vmatmul.mubr.bf16.gmra.mrb[0].mxu0 %v750
      %v786 = vpop.f32.mrb[0].mxu0
      %v787 = vadd.f32 0.0, %v786
      %v788 = vpop.f32.mrb[0].mxu0
      %v789 = vpop.f32.mrb[0].mxu0
      %v790 = vadd.f32 0.0, %v789
      %v791 = vpop.f32.mrb[0].mxu0
      %792 = vdwg.mxu0
      %793 = vrot.lane.b32.xlu0 %v315, 32
      %v794 = vpop.permute.xlu0 %793
      %795 = vrot.lane.b32.xlu0 %v332, 32
      %v796 = vpop.permute.xlu0 %795
      %797 = vrot.lane.b32.xlu0 %v333, 32
      %v798 = vpop.permute.xlu0 %797
      %799 = vrot.lane.b32.xlu0 %v334, 32
      %v800 = vpop.permute.xlu0 %799
      %801 = vrot.lane.b32.xlu0 %v335, 32
      %v802 = vpop.permute.xlu0 %801
      %v804 = vsel %vm336, %v794, 0
      %v807 = vsel %vm336, %v796, 0
      %v810 = vsel %vm336, %v798, 0
      %v813 = vsel %vm336, %v800, 0
      %v816 = vsel %vm336, %v802, 0
      %818 = vmatprep.subr.bf16.mxu0 0
      %819 = vmatpush1.bf16.xpose.msra.mxu0 %v807
      %820 = vmatprep.subr.bf16.mxu0 0
      %821 = vmatpush1.bf16.xpose.msra.mxu0 %v810
      %822 = vmatprep.subr.bf16.mxu0 0
      %823 = vmatpush1.bf16.xpose.msra.mxu0 %v813
      %824 = vmatprep.subr.bf16.mxu0 0
      %825 = vmatpush1.bf16.xpose.msra.mxu0 %v816
      %826 = vmatprep.subr.bf16.mxu0 0
      %827 = vmatpush1.bf16.xpose.msra.mxu0 0
      %828 = vmatprep.subr.bf16.mxu0 0
      %829 = vmatpush1.bf16.xpose.msra.mxu0 0
      %830 = vmatprep.subr.bf16.mxu0 0
      %831 = vmatpush1.bf16.xpose.msra.mxu0 0
      %832 = vmatprep.subr.bf16.mxu0 0
      %833 = vmatpush1.bf16.xpose.msra.mxu0 0
      %834 = vmatprep.subr.bf16.mxu0 0
      %835 = vmatpush1.bf16.xpose.msra.mxu0 0
      %836 = vmatprep.subr.bf16.mxu0 0
      %837 = vmatpush1.bf16.xpose.msra.mxu0 0
      %838 = vmatprep.subr.bf16.mxu0 0
      %839 = vmatpush1.bf16.xpose.msra.mxu0 0
      %840 = vmatprep.subr.bf16.mxu0 0
      %841 = vmatpush1.bf16.xpose.msra.mxu0 0
      %842 = vmatprep.subr.bf16.mxu0 0
      %843 = vmatpush1.bf16.xpose.msra.mxu0 0
      %844 = vmatprep.subr.bf16.mxu0 0
      %845 = vmatpush1.bf16.xpose.msra.mxu0 0
      %846 = vmatprep.subr.bf16.mxu0 0
      %847 = vmatpush1.bf16.xpose.msra.mxu0 0
      %848 = vmatprep.subr.bf16.mxu0 0
      %849 = vmatpush1.bf16.xpose.msra.mxu0 0
      %850 = vmatprep.mubr.bf16.mxu0 0
      %851 = vmatmul.mubr.bf16.gmra.mrb[0].mxu0 %v804
      %v852 = vpop.f32.mrb[0].mxu0
      %v853 = vadd.f32 0.0, %v852
      %v854 = vpop.f32.mrb[0].mxu0
      %v855 = vpop.f32.mrb[0].mxu0
      %v856 = vadd.f32 0.0, %v855
      %v857 = vpop.f32.mrb[0].mxu0
      %858 = vdwg.mxu0
      %v859 = vmul.f32 %v853, 0.17677669
      %v860 = vmul.f32 %v856, 0.17677669
      %v861 = vadd.f32 %v859, %v399
      %v862 = vadd.f32 %v860, %v399
      %v863 = vsel %vm403, %v861, -inf
      %864 = vmax.xlane.f32.xlu0 %v863
      %v865 = vpop.xlane.xlu0 %864
      %v866 = vsel %vm403, %v862, -inf
      %867 = vmax.xlane.f32.xlu0 %v866
      %v868 = vpop.xlane.xlu0 %867
      %v869 = vsub.f32 %v861, %v865
      %v870 = vsub.f32 %v862, %v868
      %v871 = vmul.f32 %v869, 1.442695
      %v872 = vpow.pop %v871
      %v873 = vmul.f32 %v870, 1.442695
      %v874 = vpow.pop %v873
      %v875 = vsel %vm403, %v872, 0.0
      %876 = vadd.xlane.f32.xlu0 %v875
      %v877 = vpop.xlane.xlu0 %876
      %v878 = vsel %vm403, %v874, 0.0
      %879 = vadd.xlane.f32.xlu0 %v878
      %v880 = vpop.xlane.xlu0 %879
      %v881 = vrcp.pop %v877
      %v882 = vrcp.pop %v880
      %v883 = vmul.f32 %v872, %v881
      %v884 = vmul.f32 %v874, %v882
      %v885 = vpack.c.bf16 %v884, %v883
      %886 = vrot.lane.b32.xlu0 %v443, 32
      %v887 = vpop.permute.xlu0 %886
      %888 = vrot.lane.b32.xlu0 %v444, 32
      %v889 = vpop.permute.xlu0 %888
      %890 = vrot.lane.b32.xlu0 %v445, 32
      %v891 = vpop.permute.xlu0 %890
      %892 = vrot.lane.b32.xlu0 %v446, 32
      %v893 = vpop.permute.xlu0 %892
      %v899 = vsel %vm403, %v885, 0
      %901 = vmatprep.subr.bf16.mxu0 0
      %902 = vmatpush1.bf16.msra.mxu0 %v887
      %903 = vmatprep.subr.bf16.mxu0 0
      %904 = vmatpush1.bf16.msra.mxu0 %v889
      %905 = vmatprep.subr.bf16.mxu0 0
      %906 = vmatpush1.bf16.msra.mxu0 %v891
      %907 = vmatprep.subr.bf16.mxu0 0
      %908 = vmatpush1.bf16.msra.mxu0 %v893
      %909 = vmatprep.subr.bf16.mxu0 0
      %910 = vmatpush1.bf16.msra.mxu0 0
      %911 = vmatprep.subr.bf16.mxu0 0
      %912 = vmatpush1.bf16.msra.mxu0 0
      %913 = vmatprep.subr.bf16.mxu0 0
      %914 = vmatpush1.bf16.msra.mxu0 0
      %915 = vmatprep.subr.bf16.mxu0 0
      %916 = vmatpush1.bf16.msra.mxu0 0
      %917 = vmatprep.subr.bf16.mxu0 0
      %918 = vmatpush1.bf16.msra.mxu0 0
      %919 = vmatprep.subr.bf16.mxu0 0
      %920 = vmatpush1.bf16.msra.mxu0 0
      %921 = vmatprep.subr.bf16.mxu0 0
      %922 = vmatpush1.bf16.msra.mxu0 0
      %923 = vmatprep.subr.bf16.mxu0 0
      %924 = vmatpush1.bf16.msra.mxu0 0
      %925 = vmatprep.subr.bf16.mxu0 0
      %926 = vmatpush1.bf16.msra.mxu0 0
      %927 = vmatprep.subr.bf16.mxu0 0
      %928 = vmatpush1.bf16.msra.mxu0 0
      %929 = vmatprep.subr.bf16.mxu0 0
      %930 = vmatpush1.bf16.msra.mxu0 0
      %931 = vmatprep.subr.bf16.mxu0 0
      %932 = vmatpush1.bf16.msra.mxu0 0
      %933 = vmatprep.mubr.bf16.mxu0 0
      %934 = vmatmul.mubr.bf16.gmra.mrb[0].mxu0 %v899
      %v935 = vpop.f32.mrb[0].mxu0
      %v936 = vadd.f32 0.0, %v935
      %v937 = vpop.f32.mrb[0].mxu0
      %v938 = vpop.f32.mrb[0].mxu0
      %v939 = vadd.f32 0.0, %v938
      %v940 = vpop.f32.mrb[0].mxu0
      %941 = vdwg.mxu0
      %944 = vrot.lane.b32.xlu0 %v638, 32
      %v945 = vpop.permute.xlu0 %944
      %946 = vrot.lane.b32.xlu0 %v641, 32
      %v947 = vpop.permute.xlu0 %946
      %952 = vrot.lane.b32.xlu0 %v787, 64
      %v953 = vpop.permute.xlu0 %952
      %954 = vrot.lane.b32.xlu0 %v790, 64
      %v955 = vpop.permute.xlu0 %954
      %960 = vrot.lane.b32.xlu0 %v936, 96
      %v961 = vpop.permute.xlu0 %960
      %962 = vrot.lane.b32.xlu0 %v939, 96
      %v963 = vpop.permute.xlu0 %962
      %v966 = vsel %vm336, %v489, %v945
      %v967 = vsel %vm336, %v492, %v947
      %v968 = vsel %vm403, %v966, %v953
      %v969 = vsel %vm403, %v967, %v955
      %vm970 = vcmask 785408
      %v971 = vsel %vm970, %v968, %v961
      %v972 = vsel %vm970, %v969, %v963
      %973 = vst [vmem:[%s289] sm:$0xff] %v971
      %974 = vst [vmem:[%s289 + $0x8] sm:$0xff] %v972
      %s975 = smul.u32 2, %s20
      %p976 = scmp.lt.s32.totalorder %s19, 1
      %s977 = scalar_select %p976, %s19, 1
      %p978 = scmp.lt.s32.totalorder %s975, 1
      %s979 = scalar_select %p978, %s975, 1
      %s980 = smul.addr %s977, 2
      %s981 = sadd.s32 %s979, %s980
      %s982 = smul.addr %s981, 8
      %s983 = scalar_lea.vmem %s4, %s982
      // Predicated region
      $region37: #{transformer_forward.38} parent=35 // pred_check
        %p984 = pneg %p153
      $region38: #{transformer_forward.38} parent=35 // pred_check_branch
        %986 = sbr.rel (%p984) target = $region40
      $region39: #{transformer_forward.38} parent=35 // pred_region
        %s987 = smul.u32 2, %s20
      $region40: #{transformer_forward.38} parent=35 // pred_fallthru
        _
    $region36: #{transformer_forward.38} parent=5 // pred_fallthru
      _
    %p988 = scmp.le.s32.totalorder 2, %s10
    // Predicated region
    $region41: #{transformer_forward.38} parent=5 // pred_check
      %p989 = pneg %p988
    $region42: #{transformer_forward.38} parent=5 // pred_check_branch
      %991 = sbr.rel (%p989) target = $region44
    $region43: #{transformer_forward.38} parent=5 // pred_region
      %s992 = ssub.s32 %s10, 2
      // Predicated region
      $region45: #{transformer_forward.38} parent=43 // pred_check
        %p993 = pneg %p159
      $region46: #{transformer_forward.38} parent=43 // pred_check_branch
        %995 = sbr.rel (%p993) target = $region48
      $region47: #{transformer_forward.38} parent=43 // pred_region
        %s996 = smul.u32 2, %s22
        %p997 = scmp.lt.s32.totalorder %s21, 1
        %s998 = scalar_select %p997, %s21, 1
        %p999 = scmp.lt.s32.totalorder %s996, 1
        %s1000 = scalar_select %p999, %s996, 1
        %s1001 = smul.addr %s998, 2
        %s1002 = sadd.s32 %s1000, %s1001
        %s1003 = smul.addr %s1002, 8
        %s1004 = scalar_lea.vmem %s4, %s1003
      $region48: #{transformer_forward.38} parent=43 // pred_fallthru
        _
    $region44: #{transformer_forward.38} parent=5 // pred_fallthru
      _
  $region6: #{transformer_forward.38} parent=0 // loop_footer
    %s14 = sadd.s32 1, %s10
  $region7: #{transformer_forward.38} parent=0 // loop_footer_branch
    %9 = sbr.rel target = $region3
  $region8: #{transformer_forward.38} parent=0 // loop_exit
    _

// kernel: transformer_forward.40
$region0: #{transformer_forward.40}
  #allocation0 [shape = 'u32[]', space=smem, size = 0x4, offset = 0x4, fixed_abs, tag = 'smem constant byte address 0x4 - core index']
  #allocation1 [shape = 'u32[144,128]{1,0:T(1,128)}', space=vmem, size = 0x12000, scoped, tag = 'internal scratch']
  %s0 = inlined_call_operand.vmem [shape: f32[32,128], index: 0, kind: input, shape index: {}]
  %s1 = inlined_call_operand.vmem [shape: bf16[128,256], index: 1, kind: input, shape index: {}]
  %s2 = inlined_call_operand.vmem [shape: f32[1,256], index: 2, kind: input, shape index: {}]
  %s3 = inlined_call_operand.vmem [shape: bf16[256,128], index: 3, kind: input, shape index: {}]
  %s4 = inlined_call_operand.vmem [shape: f32[1,128], index: 4, kind: input, shape index: {}]
  %s5 = inlined_call_operand.vmem [shape: f32[1,128], index: 5, kind: input, shape index: {}]
  %s6 = inlined_call_operand.vmem [shape: f32[1,128], index: 6, kind: input, shape index: {}]
  %s7 = inlined_call_operand.vmem [shape: f32[32,128], index: 7, kind: output, shape index: {}]
  %s8 = sld [smem:[#allocation0]]
  $region38: #{transformer_forward.40} parent=0
    _
  %s10 = ssub.s32 1, %s8
  %s11 = scalar_select 0, %s10, %s8
  // Predicated region
  $region2: #{transformer_forward.40} parent=0 // pred_check
    _
  $region3: #{transformer_forward.40} parent=0 // pred_check_branch
    %13 = sbr.rel (0) target = $region5
  $region4: #{transformer_forward.40} parent=0 // pred_region
    _
  $region5: #{transformer_forward.40} parent=0 // pred_fallthru
    _
  // Predicated region
  $region6: #{transformer_forward.40} parent=0 // pred_check
    _
  $region7: #{transformer_forward.40} parent=0 // pred_check_branch
    %15 = sbr.rel (0) target = $region9
  $region8: #{transformer_forward.40} parent=0 // pred_region
    _
  $region9: #{transformer_forward.40} parent=0 // pred_fallthru
    _
  // Predicated region
  $region10: #{transformer_forward.40} parent=0 // pred_check
    _
  $region11: #{transformer_forward.40} parent=0 // pred_check_branch
    %17 = sbr.rel (0) target = $region13
  $region12: #{transformer_forward.40} parent=0 // pred_region
    _
  $region13: #{transformer_forward.40} parent=0 // pred_fallthru
    _
  // Predicated region
  $region14: #{transformer_forward.40} parent=0 // pred_check
    _
  $region15: #{transformer_forward.40} parent=0 // pred_check_branch
    %19 = sbr.rel (0) target = $region17
  $region16: #{transformer_forward.40} parent=0 // pred_region
    _
  $region17: #{transformer_forward.40} parent=0 // pred_fallthru
    _
  // Predicated region
  $region18: #{transformer_forward.40} parent=0 // pred_check
    _
  $region19: #{transformer_forward.40} parent=0 // pred_check_branch
    %21 = sbr.rel (0) target = $region21
  $region20: #{transformer_forward.40} parent=0 // pred_region
    _
  $region21: #{transformer_forward.40} parent=0 // pred_fallthru
    _
  // Predicated region
  $region22: #{transformer_forward.40} parent=0 // pred_check
    _
  $region23: #{transformer_forward.40} parent=0 // pred_check_branch
    %23 = sbr.rel (0) target = $region25
  $region24: #{transformer_forward.40} parent=0 // pred_region
    _
  $region25: #{transformer_forward.40} parent=0 // pred_fallthru
    _
  // Predicated region
  $region26: #{transformer_forward.40} parent=0 // pred_check
    _
  $region27: #{transformer_forward.40} parent=0 // pred_check_branch
    %25 = sbr.rel (0) target = $region29
  $region28: #{transformer_forward.40} parent=0 // pred_region
    _
  $region29: #{transformer_forward.40} parent=0 // pred_fallthru
    _
  %v27 = vld [vmem:[%s0] sm:$0xff]
  %v28 = vld [vmem:[%s0 + $0x8] sm:$0xff]
  %v29 = vld [vmem:[%s0 + $0x10] sm:$0xff]
  %v30 = vld [vmem:[%s0 + $0x18] sm:$0xff]
  %v31 = vpack.c.bf16 %v28, %v27
  %v32 = vpack.c.bf16 %v30, %v29
  %v33 = vld [vmem:[%s1] sm:$0xff]
  %v34 = vld [vmem:[%s1 + $0x8] sm:$0xff]
  %v35 = vld [vmem:[%s1 + $0x10] sm:$0xff]
  %v36 = vld [vmem:[%s1 + $0x18] sm:$0xff]
  %v37 = vld [vmem:[%s1 + $0x20] sm:$0xff]
  %v38 = vld [vmem:[%s1 + $0x28] sm:$0xff]
  %v39 = vld [vmem:[%s1 + $0x30] sm:$0xff]
  %v40 = vld [vmem:[%s1 + $0x38] sm:$0xff]
  %v41 = vld [vmem:[%s1 + $0x40] sm:$0xff]
  %v42 = vld [vmem:[%s1 + $0x48] sm:$0xff]
  %v43 = vld [vmem:[%s1 + $0x50] sm:$0xff]
  %v44 = vld [vmem:[%s1 + $0x58] sm:$0xff]
  %v45 = vld [vmem:[%s1 + $0x60] sm:$0xff]
  %v46 = vld [vmem:[%s1 + $0x68] sm:$0xff]
  %v47 = vld [vmem:[%s1 + $0x70] sm:$0xff]
  %v48 = vld [vmem:[%s1 + $0x78] sm:$0xff]
  %v49 = vld [vmem:[%s2] sm:$0x3]
  %v51 = vlaneseq
  %v52 = vshrl.u32 %v51, 7
  %v53 = vsub.s32 0, %v52
  %v54 = vrot.slane %v49, %v53
  %v55 = vlaneseq
  %v56 = vshrl.u32 %v55, 7
  %v57 = vsub.s32 1, %v56
  %v58 = vrot.slane %v49, %v57
  %v77 = vunpack.c.l.b16 %v33
  %v78 = vunpack.c.h.b16 %v33
  %v79 = vunpack.c.l.b16 %v34
  %v80 = vunpack.c.h.b16 %v34
  %v81 = vunpack.c.l.b16 %v35
  %v82 = vunpack.c.h.b16 %v35
  %v83 = vunpack.c.l.b16 %v36
  %v84 = vunpack.c.h.b16 %v36
  %v85 = vunpack.c.l.b16 %v37
  %v86 = vunpack.c.h.b16 %v37
  %v87 = vunpack.c.l.b16 %v38
  %v88 = vunpack.c.h.b16 %v38
  %v89 = vunpack.c.l.b16 %v39
  %v90 = vunpack.c.h.b16 %v39
  %v91 = vunpack.c.l.b16 %v40
  %v92 = vunpack.c.h.b16 %v40
  %v93 = vunpack.c.l.b16 %v41
  %v94 = vunpack.c.h.b16 %v41
  %v95 = vunpack.c.l.b16 %v42
  %v96 = vunpack.c.h.b16 %v42
  %v97 = vunpack.c.l.b16 %v43
  %v98 = vunpack.c.h.b16 %v43
  %v99 = vunpack.c.l.b16 %v44
  %v100 = vunpack.c.h.b16 %v44
  %v101 = vunpack.c.l.b16 %v45
  %v102 = vunpack.c.h.b16 %v45
  %v103 = vunpack.c.l.b16 %v46
  %v104 = vunpack.c.h.b16 %v46
  %v105 = vunpack.c.l.b16 %v47
  %v106 = vunpack.c.h.b16 %v47
  %v107 = vunpack.c.l.b16 %v48
  %v108 = vunpack.c.h.b16 %v48
  %v109 = vpack.c.b16 %v79, %v77
  %v110 = vpack.c.b16 %v80, %v78
  %v111 = vpack.c.b16 %v83, %v81
  %v112 = vpack.c.b16 %v84, %v82
  %v113 = vpack.c.b16 %v87, %v85
  %v114 = vpack.c.b16 %v88, %v86
  %v115 = vpack.c.b16 %v91, %v89
  %v116 = vpack.c.b16 %v92, %v90
  %v117 = vpack.c.b16 %v95, %v93
  %v118 = vpack.c.b16 %v96, %v94
  %v119 = vpack.c.b16 %v99, %v97
  %v120 = vpack.c.b16 %v100, %v98
  %v121 = vpack.c.b16 %v103, %v101
  %v122 = vpack.c.b16 %v104, %v102
  %v123 = vpack.c.b16 %v107, %v105
  %v124 = vpack.c.b16 %v108, %v106
  %141 = vmatprep.subr.bf16.mxu0 %v110
  %142 = vmatpush1.bf16.msra.mxu0 %v109
  %143 = vmatprep.subr.bf16.mxu0 %v112
  %144 = vmatpush1.bf16.msra.mxu0 %v111
  %145 = vmatprep.subr.bf16.mxu0 %v114
  %146 = vmatpush1.bf16.msra.mxu0 %v113
  %147 = vmatprep.subr.bf16.mxu0 %v116
  %148 = vmatpush1.bf16.msra.mxu0 %v115
  %149 = vmatprep.subr.bf16.mxu0 %v118
  %150 = vmatpush1.bf16.msra.mxu0 %v117
  %151 = vmatprep.subr.bf16.mxu0 %v120
  %152 = vmatpush1.bf16.msra.mxu0 %v119
  %153 = vmatprep.subr.bf16.mxu0 %v122
  %154 = vmatpush1.bf16.msra.mxu0 %v121
  %155 = vmatprep.subr.bf16.mxu0 %v124
  %156 = vmatpush1.bf16.msra.mxu0 %v123
  %157 = vmatprep.subr.bf16.mxu0 0
  %158 = vmatpush1.bf16.msra.mxu0 0
  %159 = vmatprep.subr.bf16.mxu0 0
  %160 = vmatpush1.bf16.msra.mxu0 0
  %161 = vmatprep.subr.bf16.mxu0 0
  %162 = vmatpush1.bf16.msra.mxu0 0
  %163 = vmatprep.subr.bf16.mxu0 0
  %164 = vmatpush1.bf16.msra.mxu0 0
  %165 = vmatprep.subr.bf16.mxu0 0
  %166 = vmatpush1.bf16.msra.mxu0 0
  %167 = vmatprep.subr.bf16.mxu0 0
  %168 = vmatpush1.bf16.msra.mxu0 0
  %169 = vmatprep.subr.bf16.mxu0 0
  %170 = vmatpush1.bf16.msra.mxu0 0
  %171 = vmatprep.subr.bf16.mxu0 0
  %172 = vmatpush1.bf16.msra.mxu0 0
  %173 = vmatprep.mubr.bf16.mxu0 0
  %174 = vmatmul.mubr.bf16.gmra.mrb[0].mxu0 %v31
  %v175 = vpop.f32.mrb[0].mxu0
  %v176 = vadd.f32 %v54, %v175
  %v177 = vpop.f32.mrb[0].mxu0
  %v178 = vadd.f32 %v58, %v177
  %v179 = vpop.f32.mrb[0].mxu0
  %v180 = vadd.f32 %v54, %v179
  %v181 = vpop.f32.mrb[0].mxu0
  %v182 = vadd.f32 %v58, %v181
  %183 = vmatprep.mubr.bf16.mxu0 0
  %184 = vmatmul.mubr.bf16.gmra.mrb[0].mxu0 %v32
  %v185 = vpop.f32.mrb[0].mxu0
  %v186 = vadd.f32 %v54, %v185
  %v187 = vpop.f32.mrb[0].mxu0
  %v188 = vadd.f32 %v58, %v187
  %v189 = vpop.f32.mrb[0].mxu0
  %v190 = vadd.f32 %v54, %v189
  %v191 = vpop.f32.mrb[0].mxu0
  %v192 = vadd.f32 %v58, %v191
  %193 = vdwg.mxu0
  %v194 = vmax.f32 %v176, 0.0
  %v195 = vmax.f32 %v178, 0.0
  %v196 = vmax.f32 %v180, 0.0
  %v197 = vmax.f32 %v182, 0.0
  %v198 = vmax.f32 %v186, 0.0
  %v199 = vmax.f32 %v188, 0.0
  %v200 = vmax.f32 %v190, 0.0
  %v201 = vmax.f32 %v192, 0.0
  %v202 = vpack.c.bf16 %v196, %v194
  %v203 = vpack.c.bf16 %v197, %v195
  %v204 = vpack.c.bf16 %v200, %v198
  %v205 = vpack.c.bf16 %v201, %v199
  %v206 = vld [vmem:[%s3] sm:$0xf]
  %v207 = vld [vmem:[%s3 + $0x4] sm:$0xf]
  %v208 = vld [vmem:[%s3 + $0x8] sm:$0xf]
  %v209 = vld [vmem:[%s3 + $0xc] sm:$0xf]
  %v210 = vld [vmem:[%s3 + $0x10] sm:$0xf]
  %v211 = vld [vmem:[%s3 + $0x14] sm:$0xf]
  %v212 = vld [vmem:[%s3 + $0x18] sm:$0xf]
  %v213 = vld [vmem:[%s3 + $0x1c] sm:$0xf]
  %v214 = vld [vmem:[%s3 + $0x20] sm:$0xf]
  %v215 = vld [vmem:[%s3 + $0x24] sm:$0xf]
  %v216 = vld [vmem:[%s3 + $0x28] sm:$0xf]
  %v217 = vld [vmem:[%s3 + $0x2c] sm:$0xf]
  %v218 = vld [vmem:[%s3 + $0x30] sm:$0xf]
  %v219 = vld [vmem:[%s3 + $0x34] sm:$0xf]
  %v220 = vld [vmem:[%s3 + $0x38] sm:$0xf]
  %v221 = vld [vmem:[%s3 + $0x3c] sm:$0xf]
  %v222 = vld [vmem:[%s3 + $0x40] sm:$0xf]
  %v223 = vld [vmem:[%s3 + $0x44] sm:$0xf]
  %v224 = vld [vmem:[%s3 + $0x48] sm:$0xf]
  %v225 = vld [vmem:[%s3 + $0x4c] sm:$0xf]
  %v226 = vld [vmem:[%s3 + $0x50] sm:$0xf]
  %v227 = vld [vmem:[%s3 + $0x54] sm:$0xf]
  %v228 = vld [vmem:[%s3 + $0x58] sm:$0xf]
  %v229 = vld [vmem:[%s3 + $0x5c] sm:$0xf]
  %v230 = vld [vmem:[%s3 + $0x60] sm:$0xf]
  %v231 = vld [vmem:[%s3 + $0x64] sm:$0xf]
  %v232 = vld [vmem:[%s3 + $0x68] sm:$0xf]
  %v233 = vld [vmem:[%s3 + $0x6c] sm:$0xf]
  %v234 = vld [vmem:[%s3 + $0x70] sm:$0xf]
  %v235 = vld [vmem:[%s3 + $0x74] sm:$0xf]
  %v236 = vld [vmem:[%s3 + $0x78] sm:$0xf]
  %v237 = vld [vmem:[%s3 + $0x7c] sm:$0xf]
  %v238 = vld [vmem:[%s4] sm:$0x1]
  %v240 = vlaneseq
  %v241 = vshrl.u32 %v240, 7
  %v242 = vsub.s32 0, %v241
  %v243 = vrot.slane %v238, %v242
  %v277 = vunpack.c.l.b16 %v206
  %v278 = vunpack.c.l.b16 %v207
  %v279 = vunpack.c.l.b16 %v208
  %v280 = vunpack.c.l.b16 %v209
  %v281 = vunpack.c.l.b16 %v210
  %v282 = vunpack.c.l.b16 %v211
  %v283 = vunpack.c.l.b16 %v212
  %v284 = vunpack.c.l.b16 %v213
  %v285 = vunpack.c.l.b16 %v214
  %v286 = vunpack.c.l.b16 %v215
  %v287 = vunpack.c.l.b16 %v216
  %v288 = vunpack.c.l.b16 %v217
  %v289 = vunpack.c.l.b16 %v218
  %v290 = vunpack.c.l.b16 %v219
  %v291 = vunpack.c.l.b16 %v220
  %v292 = vunpack.c.l.b16 %v221
  %v293 = vunpack.c.l.b16 %v222
  %v294 = vunpack.c.l.b16 %v223
  %v295 = vunpack.c.l.b16 %v224
  %v296 = vunpack.c.l.b16 %v225
  %v297 = vunpack.c.l.b16 %v226
  %v298 = vunpack.c.l.b16 %v227
  %v299 = vunpack.c.l.b16 %v228
  %v300 = vunpack.c.l.b16 %v229
  %v301 = vunpack.c.l.b16 %v230
  %v302 = vunpack.c.l.b16 %v231
  %v303 = vunpack.c.l.b16 %v232
  %v304 = vunpack.c.l.b16 %v233
  %v305 = vunpack.c.l.b16 %v234
  %v306 = vunpack.c.l.b16 %v235
  %v307 = vunpack.c.l.b16 %v236
  %v308 = vunpack.c.l.b16 %v237
  %v309 = vpack.c.b16 %v278, %v277
  %v310 = vpack.c.b16 %v280, %v279
  %v311 = vpack.c.b16 %v282, %v281
  %v312 = vpack.c.b16 %v284, %v283
  %v313 = vpack.c.b16 %v286, %v285
  %v314 = vpack.c.b16 %v288, %v287
  %v315 = vpack.c.b16 %v290, %v289
  %v316 = vpack.c.b16 %v292, %v291
  %v317 = vpack.c.b16 %v294, %v293
  %v318 = vpack.c.b16 %v296, %v295
  %v319 = vpack.c.b16 %v298, %v297
  %v320 = vpack.c.b16 %v300, %v299
  %v321 = vpack.c.b16 %v302, %v301
  %v322 = vpack.c.b16 %v304, %v303
  %v323 = vpack.c.b16 %v306, %v305
  %v324 = vpack.c.b16 %v308, %v307
  %341 = vmatprep.subr.bf16.mxu0 0
  %342 = vmatpush1.bf16.msra.mxu0 %v309
  %343 = vmatprep.subr.bf16.mxu0 0
  %344 = vmatpush1.bf16.msra.mxu0 %v310
  %345 = vmatprep.subr.bf16.mxu0 0
  %346 = vmatpush1.bf16.msra.mxu0 %v311
  %347 = vmatprep.subr.bf16.mxu0 0
  %348 = vmatpush1.bf16.msra.mxu0 %v312
  %349 = vmatprep.subr.bf16.mxu0 0
  %350 = vmatpush1.bf16.msra.mxu0 %v313
  %351 = vmatprep.subr.bf16.mxu0 0
  %352 = vmatpush1.bf16.msra.mxu0 %v314
  %353 = vmatprep.subr.bf16.mxu0 0
  %354 = vmatpush1.bf16.msra.mxu0 %v315
  %355 = vmatprep.subr.bf16.mxu0 0
  %356 = vmatpush1.bf16.msra.mxu0 %v316
  %357 = vmatprep.subr.bf16.mxu0 0
  %358 = vmatpush1.bf16.msra.mxu0 %v317
  %359 = vmatprep.subr.bf16.mxu0 0
  %360 = vmatpush1.bf16.msra.mxu0 %v318
  %361 = vmatprep.subr.bf16.mxu0 0
  %362 = vmatpush1.bf16.msra.mxu0 %v319
  %363 = vmatprep.subr.bf16.mxu0 0
  %364 = vmatpush1.bf16.msra.mxu0 %v320
  %365 = vmatprep.subr.bf16.mxu0 0
  %366 = vmatpush1.bf16.msra.mxu0 %v321
  %367 = vmatprep.subr.bf16.mxu0 0
  %368 = vmatpush1.bf16.msra.mxu0 %v322
  %369 = vmatprep.subr.bf16.mxu0 0
  %370 = vmatpush1.bf16.msra.mxu0 %v323
  %371 = vmatprep.subr.bf16.mxu0 0
  %372 = vmatpush1.bf16.msra.mxu0 %v324
  %373 = vmatprep.mubr.bf16.mxu0 %v203
  %374 = vmatmul.mubr.bf16.gmra.mrb[0].mxu0 %v202
  %v375 = vpop.f32.mrb[0].mxu0
  %v376 = vadd.f32 %v243, %v375
  %v377 = vpop.f32.mrb[0].mxu0
  %v378 = vpop.f32.mrb[0].mxu0
  %v379 = vadd.f32 %v243, %v378
  %v380 = vpop.f32.mrb[0].mxu0
  %381 = vmatprep.mubr.bf16.mxu0 %v205
  %382 = vmatmul.mubr.bf16.gmra.mrb[0].mxu0 %v204
  %v383 = vpop.f32.mrb[0].mxu0
  %v384 = vadd.f32 %v243, %v383
  %v385 = vpop.f32.mrb[0].mxu0
  %v386 = vpop.f32.mrb[0].mxu0
  %v387 = vadd.f32 %v243, %v386
  %v388 = vpop.f32.mrb[0].mxu0
  %389 = vdwg.mxu0
  %v390 = vadd.f32 %v27, %v376
  %v391 = vadd.f32 %v28, %v379
  %v392 = vadd.f32 %v29, %v384
  %v393 = vadd.f32 %v30, %v387
  %v394 = vld [vmem:[%s5] sm:$0x1]
  %v395 = vld [vmem:[%s6] sm:$0x1]
  %396 = vadd.xlane.f32.xlu0 %v390
  %v397 = vpop.xlane.xlu0 %396
  %398 = vadd.xlane.f32.xlu0 %v391
  %v399 = vpop.xlane.xlu0 %398
  %400 = vadd.xlane.f32.xlu0 %v392
  %v401 = vpop.xlane.xlu0 %400
  %402 = vadd.xlane.f32.xlu0 %v393
  %v403 = vpop.xlane.xlu0 %402
  %v404 = vrcp.pop 128.0
  %v405 = vmul.f32 %v397, %v404
  %v406 = vmul.f32 %v399, %v404
  %v407 = vmul.f32 %v401, %v404
  %v408 = vmul.f32 %v403, %v404
  %v409 = vsub.f32 %v390, %v405
  %v410 = vsub.f32 %v391, %v406
  %v411 = vsub.f32 %v392, %v407
  %v412 = vsub.f32 %v393, %v408
  %v413 = vmul.f32 %v409, %v409
  %v414 = vmul.f32 %v410, %v410
  %v415 = vmul.f32 %v411, %v411
  %v416 = vmul.f32 %v412, %v412
  %417 = vadd.xlane.f32.xlu0 %v413
  %v418 = vpop.xlane.xlu0 %417
  %419 = vadd.xlane.f32.xlu0 %v414
  %v420 = vpop.xlane.xlu0 %419
  %421 = vadd.xlane.f32.xlu0 %v415
  %v422 = vpop.xlane.xlu0 %421
  %423 = vadd.xlane.f32.xlu0 %v416
  %v424 = vpop.xlane.xlu0 %423
  %v425 = vmul.f32 %v418, %v404
  %v426 = vmul.f32 %v420, %v404
  %v427 = vmul.f32 %v422, %v404
  %v428 = vmul.f32 %v424, %v404
  %v429 = vadd.f32 %v425, 1e-05
  %v430 = vadd.f32 %v426, 1e-05
  %v431 = vadd.f32 %v427, 1e-05
  %v432 = vadd.f32 %v428, 1e-05
  %v433 = vrsqrt.pop %v429
  %v434 = vrsqrt.pop %v430
  %v435 = vrsqrt.pop %v431
  %v436 = vrsqrt.pop %v432
  %v437 = vmul.f32 %v409, %v433
  %v438 = vmul.f32 %v410, %v434
  %v439 = vmul.f32 %v411, %v435
  %v440 = vmul.f32 %v412, %v436
  %v442 = vlaneseq
  %v443 = vshrl.u32 %v442, 7
  %v444 = vsub.s32 0, %v443
  %v445 = vrot.slane %v394, %v444
  %v447 = vmul.f32 %v437, %v445
  %v448 = vmul.f32 %v438, %v445
  %v449 = vmul.f32 %v439, %v445
  %v450 = vmul.f32 %v440, %v445
  %v452 = vlaneseq
  %v453 = vshrl.u32 %v452, 7
  %v454 = vsub.s32 0, %v453
  %v455 = vrot.slane %v395, %v454
  %v457 = vadd.f32 %v447, %v455
  %v458 = vadd.f32 %v448, %v455
  %v459 = vadd.f32 %v449, %v455
  %v460 = vadd.f32 %v450, %v455
  %461 = vst [vmem:[%s7] sm:$0xff] %v457
  %462 = vst [vmem:[%s7 + $0x8] sm:$0xff] %v458
  %463 = vst [vmem:[%s7 + $0x10] sm:$0xff] %v459
  %464 = vst [vmem:[%s7 + $0x18] sm:$0xff] %v460
  // Predicated region
  $region30: #{transformer_forward.40} parent=0 // pred_check
    _
  $region31: #{transformer_forward.40} parent=0 // pred_check_branch
    %466 = sbr.rel (0) target = $region33
  $region32: #{transformer_forward.40} parent=0 // pred_region
    _
  $region33: #{transformer_forward.40} parent=0 // pred_fallthru
    _
  // Predicated region
  $region34: #{transformer_forward.40} parent=0 // pred_check
    _
  $region35: #{transformer_forward.40} parent=0 // pred_check_branch
    %468 = sbr.rel (0) target = $region37
  $region36: #{transformer_forward.40} parent=0 // pred_region
    _
  $region37: #{transformer_forward.40} parent=0 // pred_fallthru
    _

</llo_original>
